<compile_context>
chip_gen: v7x
topology: tpu7x:2x2x1
jax: 0.10.0
libtpu: 0.0.40
codegen_flags: <defaults>
</compile_context>

<pallas_src>
import math

import jax
import jax.numpy as jnp
from jax.experimental import pallas as pl
from jax.experimental.pallas import tpu as pltpu

# ---- config (from ESM2IntegratedPositiveConfig) ----
SEQ = 20            # config.seq_len
VOCAB = 20          # config.vocab_size
EMB = 256           # config.embedding_dim
ESM_DIM = 320       # config.esm2_embedding_dim
HEADS = 8           # config.attention_heads
HEAD_DIM = EMB // HEADS
FF = EMB * 3        # TransformerEncoderLayer dim_feedforward
LAYERS = 4          # config.transformer_layers
EPS = 1e-5          # nn.LayerNorm default eps
LOGIT_PAD = 128     # lane-dense padded logits width (>= VOCAB)
ATTN_SCALE = 1.0 / math.sqrt(HEAD_DIM)
NEG_BIG = -1e30     # additive mask value (exp underflows to exactly 0)


def _gelu(x):
    # TODO(synk): PyTorch nn.GELU / activation='gelu' use the exact erf form;
    # tanh-approx GELU is used here for robust Mosaic lowering (tiny delta).
    return jax.nn.gelu(x, approximate=True)


def _mm(x, w):
    """MXU matmul: cast activation to the (bf16) weight dtype, accumulate f32."""
    return jnp.dot(x.astype(w.dtype), w, preferred_element_type=jnp.float32)


def _ln(x, g, b):
    x = x.astype(jnp.float32)
    mean = jnp.mean(x, axis=-1, keepdims=True)
    xc = x - mean
    var = jnp.mean(xc * xc, axis=-1, keepdims=True)
    return xc * jax.lax.rsqrt(var + EPS) * g + b


# ---------------- fused whole-model kernel (one transformer layer per step) ----------------

def _make_fused_kernel(use_esm: bool):
    def kernel(*refs):
        it = iter(refs)
        nxt = lambda: next(it)

        x_ref = nxt(); t_ref = nxt()
        esm_ref = nxt() if use_esm else None
        pos_ref = nxt(); mask_ref = nxt()
        tw1 = nxt(); tb1 = nxt(); tw2 = nxt(); tb2 = nxt()
        if use_esm:
            esw = nxt(); esb = nxt()
            fw1x = nxt(); fw1e = nxt(); fb1 = nxt(); fw2 = nxt(); fb2 = nxt()
        lng = nxt(); lnb = nxt()
        ln1g = nxt(); ln1b = nxt(); wqkv = nxt(); bqkv = nxt()
        wo = nxt(); bo = nxt(); ln2g = nxt(); ln2b = nxt()
        ffw1 = nxt(); ffb1 = nxt(); ffw2 = nxt(); ffb2 = nxt()
        ow1 = nxt(); ob1 = nxt(); ow2 = nxt(); ob2 = nxt()
        out_ref = nxt(); h_scr = nxt()

        layer = pl.program_id(1)

        # ---- front end: time embed + ESM2 fusion + pos + first LayerNorm ----
        @pl.when(layer == 0)
        def _front():
            x = x_ref[...]                                        # (M, E) bf16
            tval = t_ref[...]                                     # (M, 1) f32
            # time embedding: Linear(1,E) -> GELU -> Linear(E,E) -> GELU
            t1 = _gelu(tval * tw1[...] + tb1[...])                # (M, E) f32
            t_emb = _gelu(_mm(t1, tw2[...]) + tb2[...])           # (M, E) f32
            if use_esm:
                esm_proj = _mm(esm_ref[...], esw[...]) + esb[...]  # (M, E)
                # cat([x, esm_proj], -1) @ W1 == x @ W1[:E] + esm_proj @ W1[E:]
                f1 = _gelu(_mm(x, fw1x[...]) + _mm(esm_proj, fw1e[...]) + fb1[...])
                fused = _mm(f1, fw2[...]) + fb2[...]              # (M, E)
            else:
                fused = x.astype(jnp.float32)
            h_scr[...] = _ln(fused + pos_ref[...] + t_emb, lng[...], lnb[...])

        # ---- one pre-norm TransformerEncoderLayer (batch_first, norm_first, gelu) ----
        h = h_scr[...]                                            # (M, E) f32
        hn = _ln(h, ln1g[...], ln1b[...])
        qkv = _mm(hn, wqkv[...]) + bqkv[...]                      # (M, 3E); Q pre-scaled
        neg = mask_ref[...]                                       # (M, M) block-diag mask
        heads = []
        for hd in range(HEADS):
            lo = hd * HEAD_DIM
            hi = lo + HEAD_DIM
            q = qkv[:, lo:hi]                                     # (M, Dh)
            k = qkv[:, EMB + lo:EMB + hi]
            v = qkv[:, 2 * EMB + lo:2 * EMB + hi]
            s = jax.lax.dot_general(q, k, (((1,), (1,)), ((), ())),
                                    preferred_element_type=jnp.float32) + neg
            mx = jnp.max(s, axis=-1, keepdims=True)
            p = jnp.exp(s - mx)
            p = p * pl.reciprocal(jnp.sum(p, axis=-1, keepdims=True), approx=True)
            heads.append(jnp.dot(p, v, preferred_element_type=jnp.float32))
        attn = jnp.concatenate(heads, axis=-1)                    # (M, E), stays in vregs
        h = _mm(attn, wo[...]) + bo[...] + h                      # x + SA(LN(x))
        hn2 = _ln(h, ln2g[...], ln2b[...])
        f = _gelu(_mm(hn2, ffw1[...]) + ffb1[...])
        h = _mm(f, ffw2[...]) + ffb2[...] + h                     # x + FF(LN(x))
        h_scr[...] = h

        # ---- output head: Linear -> GELU -> Linear (padded to 128 lanes) ----
        # (nn.TransformerEncoder built without norm= -> no final LayerNorm)
        @pl.when(layer == LAYERS - 1)
        def _head():
            o1 = _gelu(_mm(h, ow1[...]) + ob1[...])
            logits = _mm(o1, ow2[...]) + ob2[...]                 # (M, 128)
            out_ref[...] = logits.astype(out_ref.dtype)

    return kernel


# ---------------- wrapper ----------------

_W_FRONT = ["time_w1", "time_b1", "time_w2", "time_b2"]
_W_ESM = ["esm_w", "esm_b", "fuse_w1x", "fuse_w1e", "fuse_b1", "fuse_w2", "fuse_b2"]
_W_MID = ["ln_g", "ln_b"]
_W_LAYER = ["l_ln1_g", "l_ln1_b", "l_w_qkv", "l_b_qkv", "l_w_o", "l_b_o",
            "l_ln2_g", "l_ln2_b", "l_ff_w1", "l_ff_b1", "l_ff_w2", "l_ff_b2"]
_W_HEAD = ["out_w1", "out_b1", "out_w2", "out_b2"]


def forward(packed, x, t, esm2_features=None, b_tile=8):
    """Mirrors ESM2IntegratedDiffusionModel.forward (inference, dropout = identity).

    b_tile: sequences folded into the matmul M dimension per grid step
            (8 -> 160 rows, good for v5e; use 16 on v6e/v7x for larger batches).
    """
    b, s = x.shape
    assert s == SEQ, "kernel specialized to config.seq_len"
    use_esm = esm2_features is not None

    # --- batch tiling: fold b_tile sequences into the matmul M dimension ---
    if b <= b_tile:
        bt = b                                   # single tile, any size works
    else:
        bt = b_tile if b_tile % 2 == 0 else b_tile + 1   # keep bt*SEQ % 16 == 0
    bp = -(-b // bt) * bt                        # batch padded to a tile multiple
    ntiles = bp // bt
    m = bt * SEQ                                 # rows per grid step
    pad = bp - b

    x_p = jnp.pad(x, ((0, pad), (0, 0))) if pad else x
    t_p = jnp.pad(t.astype(jnp.float32), (0, pad)) if pad else t.astype(jnp.float32)

    # token-embedding gather + row flattening are plain-JAX glue
    x_emb = packed["embedding"][x_p].astype(jnp.bfloat16).reshape(bp * SEQ, EMB)
    t_row = jnp.repeat(t_p, SEQ).reshape(bp * SEQ, 1)                 # per-row timestep
    pos_tiled = jnp.tile(packed["pos_embedding"].astype(jnp.float32), (bt, 1))  # (m, E)
    row_batch = jnp.arange(m, dtype=jnp.int32) // SEQ
    neg_mask = jnp.where(row_batch[:, None] == row_batch[None, :],
                         0.0, NEG_BIG).astype(jnp.float32)            # (m, m)

    def row_spec(cols):
        return pl.BlockSpec((m, cols), lambda i, l: (i, 0))

    def const_spec(shape):
        zeros = (0,) * len(shape)
        return pl.BlockSpec(tuple(shape), lambda i, l: zeros)

    def layer_spec(shape):
        # (LAYERS, r, c) stacked weights; stream layer l's slice per grid step
        return pl.BlockSpec((None,) + tuple(shape[1:]), lambda i, l: (l, 0, 0))

    args = [x_emb, t_row]
    specs = [row_spec(EMB), row_spec(1)]
    if use_esm:
        esm_p = esm2_features.astype(jnp.bfloat16)
        if pad:
            esm_p = jnp.pad(esm_p, ((0, pad), (0, 0), (0, 0)))
        args.append(esm_p.reshape(bp * SEQ, ESM_DIM))
        specs.append(row_spec(ESM_DIM))
    args += [pos_tiled, neg_mask]
    specs += [const_spec(pos_tiled.shape), const_spec(neg_mask.shape)]

    names = list(_W_FRONT)
    if use_esm:
        names += _W_ESM
    names += _W_MID
    for name in names:
        w = packed[name]
        args.append(w)
        specs.append(const_spec(w.shape))
    for name in _W_LAYER:
        w = packed[name]
        args.append(w)
        specs.append(layer_spec(w.shape))
    for name in _W_HEAD:
        w = packed[name]
        args.append(w)
        specs.append(const_spec(w.shape))

    out = pl.pallas_call(
        _make_fused_kernel(use_esm),
        grid=(ntiles, LAYERS),
        in_specs=specs,
        out_specs=pl.BlockSpec((m, LOGIT_PAD), lambda i, l: (i, 0)),
        out_shape=jax.ShapeDtypeStruct((bp * SEQ, LOGIT_PAD), jnp.float32),
        scratch_shapes=[pltpu.VMEM((m, EMB), jnp.float32)],   # running activation h
        compiler_params=pltpu.CompilerParams(
            dimension_semantics=("parallel", "arbitrary"),
            vmem_limit_bytes=32 * 1024 * 1024),
    )(*args)
    return out.reshape(bp, SEQ, LOGIT_PAD)[:b, :, :VOCAB]


# ---------------- parameter init (deterministic, synthetic) + packing ----------------

def init_params(key):
    keys = iter(jax.random.split(key, 64))

    def xavier(shape):
        fan_in, fan_out = shape
        lim = math.sqrt(6.0 / (fan_in + fan_out))
        return jax.random.uniform(next(keys), shape, jnp.float32, -lim, lim)

    p = {}
    p["embedding"] = 0.02 * jax.random.normal(next(keys), (VOCAB, EMB), jnp.float32)
    p["pos_embedding"] = jax.random.normal(next(keys), (SEQ, EMB), jnp.float32)
    p["esm_w"] = xavier((ESM_DIM, EMB)); p["esm_b"] = jnp.zeros((EMB,), jnp.float32)
    p["time_w1"] = xavier((1, EMB));     p["time_b1"] = jnp.zeros((EMB,), jnp.float32)
    p["time_w2"] = xavier((EMB, EMB));   p["time_b2"] = jnp.zeros((EMB,), jnp.float32)
    p["fuse_w1"] = xavier((2 * EMB, EMB)); p["fuse_b1"] = jnp.zeros((EMB,), jnp.float32)
    p["fuse_w2"] = xavier((EMB, EMB));     p["fuse_b2"] = jnp.zeros((EMB,), jnp.float32)
    p["ln_g"] = jnp.ones((EMB,), jnp.float32); p["ln_b"] = jnp.zeros((EMB,), jnp.float32)
    layers = []
    for _ in range(LAYERS):
        # TODO(synk): synthetic init; a real checkpoint import must transpose PyTorch
        # (out,in) weights and match MultiheadAttention's [q|k|v] in_proj packing.
        layers.append(dict(
            ln1_g=jnp.ones((EMB,), jnp.float32), ln1_b=jnp.zeros((EMB,), jnp.float32),
            w_qkv=xavier((EMB, 3 * EMB)),        b_qkv=jnp.zeros((3 * EMB,), jnp.float32),
            w_o=xavier((EMB, EMB)),              b_o=jnp.zeros((EMB,), jnp.float32),
            ln2_g=jnp.ones((EMB,), jnp.float32), ln2_b=jnp.zeros((EMB,), jnp.float32),
            ff_w1=xavier((EMB, FF)),             ff_b1=jnp.zeros((FF,), jnp.float32),
            ff_w2=xavier((FF, EMB)),             ff_b2=jnp.zeros((EMB,), jnp.float32),
        ))
    p["layers"] = layers
    p["out_w1"] = xavier((EMB, EMB));   p["out_b1"] = jnp.zeros((EMB,), jnp.float32)
    p["out_w2"] = xavier((EMB, VOCAB)); p["out_b2"] = jnp.zeros((VOCAB,), jnp.float32)
    return p


def pack_params(p):
    """Pack weights for the fused kernel: bf16 matmul weights, per-layer stacks
    (streamed one layer per grid step), (1, D) biases, attention scale folded
    into Q, lane-dense padded logits projection."""
    bf = lambda a: a.astype(jnp.bfloat16)
    row = lambda a: a.reshape(1, -1).astype(jnp.float32)

    packed = {
        "embedding": p["embedding"],
        "pos_embedding": p["pos_embedding"],
        "time_w1": p["time_w1"].reshape(1, EMB).astype(jnp.float32),
        "time_b1": row(p["time_b1"]),
        "time_w2": bf(p["time_w2"]),
        "time_b2": row(p["time_b2"]),
        "esm_w": bf(p["esm_w"]),
        "esm_b": row(p["esm_b"]),
        "fuse_w1x": bf(p["fuse_w1"][:EMB, :]),
        "fuse_w1e": bf(p["fuse_w1"][EMB:, :]),
        "fuse_b1": row(p["fuse_b1"]),
        "fuse_w2": bf(p["fuse_w2"]),
        "fuse_b2": row(p["fuse_b2"]),
        "ln_g": row(p["ln_g"]),
        "ln_b": row(p["ln_b"]),
        "out_w1": bf(p["out_w1"]),
        "out_b1": row(p["out_b1"]),
    }
    w2 = jnp.zeros((EMB, LOGIT_PAD), jnp.float32).at[:, :VOCAB].set(p["out_w2"])
    b2 = jnp.zeros((1, LOGIT_PAD), jnp.float32).at[:, :VOCAB].set(p["out_b2"][None, :])
    packed["out_w2"] = bf(w2)
    packed["out_b2"] = b2

    def stack(name):
        return jnp.stack([lp[name] for lp in p["layers"]], axis=0)

    # fold 1/sqrt(head_dim) into the Q projection (pure pack-time rescale)
    w_qkv = stack("w_qkv")
    b_qkv = stack("b_qkv")
    w_qkv = w_qkv.at[:, :, :EMB].multiply(ATTN_SCALE)
    b_qkv = b_qkv.at[:, :EMB].multiply(ATTN_SCALE)

    packed["l_ln1_g"] = stack("ln1_g").reshape(LAYERS, 1, EMB)
    packed["l_ln1_b"] = stack("ln1_b").reshape(LAYERS, 1, EMB)
    packed["l_w_qkv"] = bf(w_qkv)                                  # (L, E, 3E)
    packed["l_b_qkv"] = b_qkv.reshape(LAYERS, 1, 3 * EMB)
    packed["l_w_o"] = bf(stack("w_o"))                             # (L, E, E)
    packed["l_b_o"] = stack("b_o").reshape(LAYERS, 1, EMB)
    packed["l_ln2_g"] = stack("ln2_g").reshape(LAYERS, 1, EMB)
    packed["l_ln2_b"] = stack("ln2_b").reshape(LAYERS, 1, EMB)
    packed["l_ff_w1"] = bf(stack("ff_w1"))                         # (L, E, FF)
    packed["l_ff_b1"] = stack("ff_b1").reshape(LAYERS, 1, FF)
    packed["l_ff_w2"] = bf(stack("ff_w2"))                         # (L, FF, E)
    packed["l_ff_b2"] = stack("ff_b2").reshape(LAYERS, 1, EMB)
    return packed


if __name__ == "__main__":
    key = jax.random.PRNGKey(0)
    kp, kx, kt, ke = jax.random.split(key, 4)
    params = init_params(kp)
    packed = pack_params(params)

    B = 2
    x = jax.random.randint(kx, (B, SEQ), 0, VOCAB, dtype=jnp.int32)     # token ids
    t = jax.random.randint(kt, (B,), 0, 1000, dtype=jnp.int32)          # timesteps
    esm2 = jax.random.normal(ke, (B, SEQ, ESM_DIM), jnp.float32)        # ESM2 features

    logits = forward(packed, x, t, esm2)
    jax.block_until_ready(logits)
    assert logits.shape == (B, SEQ, VOCAB)
    assert bool(jnp.all(jnp.isfinite(logits)))
    print("KERNEL_OK")
</pallas_src>

<mosaic_0001>
module attributes {stable_mosaic.version = 11 : i64} {
  func.func @kernel(%arg0: i32, %arg1: i32, %arg2: memref<40x256xbf16, #tpu.memory_space<vmem>>, %arg3: memref<40x1xf32, #tpu.memory_space<vmem>>, %arg4: memref<40x320xbf16, #tpu.memory_space<vmem>>, %arg5: memref<40x256xf32, #tpu.memory_space<vmem>>, %arg6: memref<40x40xf32, #tpu.memory_space<vmem>>, %arg7: memref<1x256xf32, #tpu.memory_space<vmem>>, %arg8: memref<1x256xf32, #tpu.memory_space<vmem>>, %arg9: memref<256x256xbf16, #tpu.memory_space<vmem>>, %arg10: memref<1x256xf32, #tpu.memory_space<vmem>>, %arg11: memref<320x256xbf16, #tpu.memory_space<vmem>>, %arg12: memref<1x256xf32, #tpu.memory_space<vmem>>, %arg13: memref<256x256xbf16, #tpu.memory_space<vmem>>, %arg14: memref<256x256xbf16, #tpu.memory_space<vmem>>, %arg15: memref<1x256xf32, #tpu.memory_space<vmem>>, %arg16: memref<256x256xbf16, #tpu.memory_space<vmem>>, %arg17: memref<1x256xf32, #tpu.memory_space<vmem>>, %arg18: memref<1x256xf32, #tpu.memory_space<vmem>>, %arg19: memref<1x256xf32, #tpu.memory_space<vmem>>, %arg20: memref<1x1x256xf32, #tpu.memory_space<vmem>>, %arg21: memref<1x1x256xf32, #tpu.memory_space<vmem>>, %arg22: memref<1x256x768xbf16, #tpu.memory_space<vmem>>, %arg23: memref<1x1x768xf32, #tpu.memory_space<vmem>>, %arg24: memref<1x256x256xbf16, #tpu.memory_space<vmem>>, %arg25: memref<1x1x256xf32, #tpu.memory_space<vmem>>, %arg26: memref<1x1x256xf32, #tpu.memory_space<vmem>>, %arg27: memref<1x1x256xf32, #tpu.memory_space<vmem>>, %arg28: memref<1x256x768xbf16, #tpu.memory_space<vmem>>, %arg29: memref<1x1x768xf32, #tpu.memory_space<vmem>>, %arg30: memref<1x768x256xbf16, #tpu.memory_space<vmem>>, %arg31: memref<1x1x256xf32, #tpu.memory_space<vmem>>, %arg32: memref<256x256xbf16, #tpu.memory_space<vmem>>, %arg33: memref<1x256xf32, #tpu.memory_space<vmem>>, %arg34: memref<256x128xbf16, #tpu.memory_space<vmem>>, %arg35: memref<1x128xf32, #tpu.memory_space<vmem>>, %arg36: memref<40x128xf32, #tpu.memory_space<vmem>>, %arg37: memref<40x256xf32, #tpu.memory_space<vmem>>) attributes {dimension_semantics = [#tpu.dimension_semantics<parallel>, #tpu.dimension_semantics<arbitrary>], iteration_bounds = array<i64: 1, 4>, scalar_prefetch = 0 : i64, scratch_operands = 1 : i64, tpu.core_type = #tpu.core_type<tc>, window_params = [{transform_indices = @transform_0, window_bounds = array<i64: 40, 256>}, {transform_indices = @transform_1, window_bounds = array<i64: 40, 1>}, {transform_indices = @transform_2, window_bounds = array<i64: 40, 320>}, {pipeline_mode = #tpu.pipeline_mode<synchronous>, transform_indices = @transform_3, window_bounds = array<i64: 40, 256>}, {pipeline_mode = #tpu.pipeline_mode<synchronous>, transform_indices = @transform_4, window_bounds = array<i64: 40, 40>}, {pipeline_mode = #tpu.pipeline_mode<synchronous>, transform_indices = @transform_5, window_bounds = array<i64: 1, 256>}, {pipeline_mode = #tpu.pipeline_mode<synchronous>, transform_indices = @transform_6, window_bounds = array<i64: 1, 256>}, {pipeline_mode = #tpu.pipeline_mode<synchronous>, transform_indices = @transform_7, window_bounds = array<i64: 256, 256>}, {pipeline_mode = #tpu.pipeline_mode<synchronous>, transform_indices = @transform_8, window_bounds = array<i64: 1, 256>}, {pipeline_mode = #tpu.pipeline_mode<synchronous>, transform_indices = @transform_9, window_bounds = array<i64: 320, 256>}, {pipeline_mode = #tpu.pipeline_mode<synchronous>, transform_indices = @transform_10, window_bounds = array<i64: 1, 256>}, {pipeline_mode = #tpu.pipeline_mode<synchronous>, transform_indices = @transform_11, window_bounds = array<i64: 256, 256>}, {pipeline_mode = #tpu.pipeline_mode<synchronous>, transform_indices = @transform_12, window_bounds = array<i64: 256, 256>}, {pipeline_mode = #tpu.pipeline_mode<synchronous>, transform_indices = @transform_13, window_bounds = array<i64: 1, 256>}, {pipeline_mode = #tpu.pipeline_mode<synchronous>, transform_indices = @transform_14, window_bounds = array<i64: 256, 256>}, {pipeline_mode = #tpu.pipeline_mode<synchronous>, transform_indices = @transform_15, window_bounds = array<i64: 1, 256>}, {pipeline_mode = #tpu.pipeline_mode<synchronous>, transform_indices = @transform_16, window_bounds = array<i64: 1, 256>}, {pipeline_mode = #tpu.pipeline_mode<synchronous>, transform_indices = @transform_17, window_bounds = array<i64: 1, 256>}, {transform_indices = @transform_18, window_bounds = array<i64: 1, 1, 256>}, {transform_indices = @transform_19, window_bounds = array<i64: 1, 1, 256>}, {transform_indices = @transform_20, window_bounds = array<i64: 1, 256, 768>}, {transform_indices = @transform_21, window_bounds = array<i64: 1, 1, 768>}, {transform_indices = @transform_22, window_bounds = array<i64: 1, 256, 256>}, {transform_indices = @transform_23, window_bounds = array<i64: 1, 1, 256>}, {transform_indices = @transform_24, window_bounds = array<i64: 1, 1, 256>}, {transform_indices = @transform_25, window_bounds = array<i64: 1, 1, 256>}, {transform_indices = @transform_26, window_bounds = array<i64: 1, 256, 768>}, {transform_indices = @transform_27, window_bounds = array<i64: 1, 1, 768>}, {transform_indices = @transform_28, window_bounds = array<i64: 1, 768, 256>}, {transform_indices = @transform_29, window_bounds = array<i64: 1, 1, 256>}, {pipeline_mode = #tpu.pipeline_mode<synchronous>, transform_indices = @transform_30, window_bounds = array<i64: 256, 256>}, {pipeline_mode = #tpu.pipeline_mode<synchronous>, transform_indices = @transform_31, window_bounds = array<i64: 1, 256>}, {pipeline_mode = #tpu.pipeline_mode<synchronous>, transform_indices = @transform_32, window_bounds = array<i64: 256, 128>}, {pipeline_mode = #tpu.pipeline_mode<synchronous>, transform_indices = @transform_33, window_bounds = array<i64: 1, 128>}, {transform_indices = @transform_34, window_bounds = array<i64: 40, 128>}]} {
    %c0_i32 = arith.constant 0 : i32
    %0 = arith.cmpi eq, %arg1, %c0_i32 : i32
    %1 = arith.extui %0 : i1 to i32
    %c0_i32_0 = arith.constant 0 : i32
    %2 = arith.cmpi ne, %1, %c0_i32_0 : i32
    scf.if %2 {
      %c0_92 = arith.constant 0 : index
      %c0_93 = arith.constant 0 : index
      %233 = vector.load %arg2[%c0_92, %c0_93] : memref<40x256xbf16, #tpu.memory_space<vmem>>, vector<40x256xbf16>
      %c0_94 = arith.constant 0 : index
      %c0_95 = arith.constant 0 : index
      %234 = vector.load %arg3[%c0_94, %c0_95] : memref<40x1xf32, #tpu.memory_space<vmem>>, vector<40x1xf32>
      %c0_96 = arith.constant 0 : index
      %c0_97 = arith.constant 0 : index
      %235 = vector.load %arg7[%c0_96, %c0_97] : memref<1x256xf32, #tpu.memory_space<vmem>>, vector<1x256xf32>
      %236 = vector.broadcast %234 : vector<40x1xf32> to vector<40x256xf32>
      %237 = vector.broadcast %235 : vector<1x256xf32> to vector<40x256xf32>
      %238 = arith.mulf %236, %237 : vector<40x256xf32>
      %c0_98 = arith.constant 0 : index
      %c0_99 = arith.constant 0 : index
      %239 = vector.load %arg8[%c0_98, %c0_99] : memref<1x256xf32, #tpu.memory_space<vmem>>, vector<1x256xf32>
      %240 = vector.broadcast %239 : vector<1x256xf32> to vector<40x256xf32>
      %241 = arith.addf %238, %240 : vector<40x256xf32>
      %242 = arith.mulf %241, %241 : vector<40x256xf32>
      %243 = arith.mulf %241, %242 : vector<40x256xf32>
      %cst_100 = arith.constant 4.471500e-02 : f32
      %244 = vector.broadcast %cst_100 : f32 to vector<40x256xf32>
      %245 = arith.mulf %244, %243 : vector<40x256xf32>
      %246 = arith.addf %241, %245 : vector<40x256xf32>
      %cst_101 = arith.constant 0.797884583 : f32
      %247 = vector.broadcast %cst_101 : f32 to vector<40x256xf32>
      %248 = arith.mulf %247, %246 : vector<40x256xf32>
      %249 = math.tanh %248 : vector<40x256xf32>
      %cst_102 = arith.constant 1.000000e+00 : f32
      %250 = vector.broadcast %cst_102 : f32 to vector<40x256xf32>
      %251 = arith.addf %250, %249 : vector<40x256xf32>
      %cst_103 = arith.constant 5.000000e-01 : f32
      %252 = vector.broadcast %cst_103 : f32 to vector<40x256xf32>
      %253 = arith.mulf %252, %251 : vector<40x256xf32>
      %254 = arith.mulf %241, %253 : vector<40x256xf32>
      %c0_104 = arith.constant 0 : index
      %c0_105 = arith.constant 0 : index
      %255 = vector.load %arg9[%c0_104, %c0_105] : memref<256x256xbf16, #tpu.memory_space<vmem>>, vector<256x256xbf16>
      %256 = arith.truncf %254 : vector<40x256xf32> to vector<40x256xbf16>
      %cst_106 = arith.constant dense<0.000000e+00> : vector<40x256xf32>
      %257 = tpu.matmul %256, %255, %cst_106 {dimension_numbers = #tpu.dot_dimension_numbers<[1], [0], [0], [1], [0, 0, 1, 1], [], []>} : vector<40x256xbf16>, vector<256x256xbf16>, vector<40x256xf32> -> vector<40x256xf32>
      %c0_107 = arith.constant 0 : index
      %c0_108 = arith.constant 0 : index
      %258 = vector.load %arg10[%c0_107, %c0_108] : memref<1x256xf32, #tpu.memory_space<vmem>>, vector<1x256xf32>
      %259 = vector.broadcast %258 : vector<1x256xf32> to vector<40x256xf32>
      %260 = arith.addf %257, %259 : vector<40x256xf32>
      %261 = arith.mulf %260, %260 : vector<40x256xf32>
      %262 = arith.mulf %260, %261 : vector<40x256xf32>
      %cst_109 = arith.constant 4.471500e-02 : f32
      %263 = vector.broadcast %cst_109 : f32 to vector<40x256xf32>
      %264 = arith.mulf %263, %262 : vector<40x256xf32>
      %265 = arith.addf %260, %264 : vector<40x256xf32>
      %cst_110 = arith.constant 0.797884583 : f32
      %266 = vector.broadcast %cst_110 : f32 to vector<40x256xf32>
      %267 = arith.mulf %266, %265 : vector<40x256xf32>
      %268 = math.tanh %267 : vector<40x256xf32>
      %cst_111 = arith.constant 1.000000e+00 : f32
      %269 = vector.broadcast %cst_111 : f32 to vector<40x256xf32>
      %270 = arith.addf %269, %268 : vector<40x256xf32>
      %cst_112 = arith.constant 5.000000e-01 : f32
      %271 = vector.broadcast %cst_112 : f32 to vector<40x256xf32>
      %272 = arith.mulf %271, %270 : vector<40x256xf32>
      %273 = arith.mulf %260, %272 : vector<40x256xf32>
      %c0_113 = arith.constant 0 : index
      %c0_114 = arith.constant 0 : index
      %274 = vector.load %arg4[%c0_113, %c0_114] : memref<40x320xbf16, #tpu.memory_space<vmem>>, vector<40x320xbf16>
      %c0_115 = arith.constant 0 : index
      %c0_116 = arith.constant 0 : index
      %275 = vector.load %arg11[%c0_115, %c0_116] : memref<320x256xbf16, #tpu.memory_space<vmem>>, vector<320x256xbf16>
      %cst_117 = arith.constant dense<0.000000e+00> : vector<40x256xf32>
      %276 = tpu.matmul %274, %275, %cst_117 {dimension_numbers = #tpu.dot_dimension_numbers<[1], [0], [0], [1], [0, 0, 1, 1], [], []>} : vector<40x320xbf16>, vector<320x256xbf16>, vector<40x256xf32> -> vector<40x256xf32>
      %c0_118 = arith.constant 0 : index
      %c0_119 = arith.constant 0 : index
      %277 = vector.load %arg12[%c0_118, %c0_119] : memref<1x256xf32, #tpu.memory_space<vmem>>, vector<1x256xf32>
      %278 = vector.broadcast %277 : vector<1x256xf32> to vector<40x256xf32>
      %279 = arith.addf %276, %278 : vector<40x256xf32>
      %c0_120 = arith.constant 0 : index
      %c0_121 = arith.constant 0 : index
      %280 = vector.load %arg13[%c0_120, %c0_121] : memref<256x256xbf16, #tpu.memory_space<vmem>>, vector<256x256xbf16>
      %cst_122 = arith.constant dense<0.000000e+00> : vector<40x256xf32>
      %281 = tpu.matmul %233, %280, %cst_122 {dimension_numbers = #tpu.dot_dimension_numbers<[1], [0], [0], [1], [0, 0, 1, 1], [], []>} : vector<40x256xbf16>, vector<256x256xbf16>, vector<40x256xf32> -> vector<40x256xf32>
      %c0_123 = arith.constant 0 : index
      %c0_124 = arith.constant 0 : index
      %282 = vector.load %arg14[%c0_123, %c0_124] : memref<256x256xbf16, #tpu.memory_space<vmem>>, vector<256x256xbf16>
      %283 = arith.truncf %279 : vector<40x256xf32> to vector<40x256xbf16>
      %cst_125 = arith.constant dense<0.000000e+00> : vector<40x256xf32>
      %284 = tpu.matmul %283, %282, %cst_125 {dimension_numbers = #tpu.dot_dimension_numbers<[1], [0], [0], [1], [0, 0, 1, 1], [], []>} : vector<40x256xbf16>, vector<256x256xbf16>, vector<40x256xf32> -> vector<40x256xf32>
      %285 = arith.addf %281, %284 : vector<40x256xf32>
      %c0_126 = arith.constant 0 : index
      %c0_127 = arith.constant 0 : index
      %286 = vector.load %arg15[%c0_126, %c0_127] : memref<1x256xf32, #tpu.memory_space<vmem>>, vector<1x256xf32>
      %287 = vector.broadcast %286 : vector<1x256xf32> to vector<40x256xf32>
      %288 = arith.addf %285, %287 : vector<40x256xf32>
      %289 = arith.mulf %288, %288 : vector<40x256xf32>
      %290 = arith.mulf %288, %289 : vector<40x256xf32>
      %cst_128 = arith.constant 4.471500e-02 : f32
      %291 = vector.broadcast %cst_128 : f32 to vector<40x256xf32>
      %292 = arith.mulf %291, %290 : vector<40x256xf32>
      %293 = arith.addf %288, %292 : vector<40x256xf32>
      %cst_129 = arith.constant 0.797884583 : f32
      %294 = vector.broadcast %cst_129 : f32 to vector<40x256xf32>
      %295 = arith.mulf %294, %293 : vector<40x256xf32>
      %296 = math.tanh %295 : vector<40x256xf32>
      %cst_130 = arith.constant 1.000000e+00 : f32
      %297 = vector.broadcast %cst_130 : f32 to vector<40x256xf32>
      %298 = arith.addf %297, %296 : vector<40x256xf32>
      %cst_131 = arith.constant 5.000000e-01 : f32
      %299 = vector.broadcast %cst_131 : f32 to vector<40x256xf32>
      %300 = arith.mulf %299, %298 : vector<40x256xf32>
      %301 = arith.mulf %288, %300 : vector<40x256xf32>
      %c0_132 = arith.constant 0 : index
      %c0_133 = arith.constant 0 : index
      %302 = vector.load %arg16[%c0_132, %c0_133] : memref<256x256xbf16, #tpu.memory_space<vmem>>, vector<256x256xbf16>
      %303 = arith.truncf %301 : vector<40x256xf32> to vector<40x256xbf16>
      %cst_134 = arith.constant dense<0.000000e+00> : vector<40x256xf32>
      %304 = tpu.matmul %303, %302, %cst_134 {dimension_numbers = #tpu.dot_dimension_numbers<[1], [0], [0], [1], [0, 0, 1, 1], [], []>} : vector<40x256xbf16>, vector<256x256xbf16>, vector<40x256xf32> -> vector<40x256xf32>
      %c0_135 = arith.constant 0 : index
      %c0_136 = arith.constant 0 : index
      %305 = vector.load %arg17[%c0_135, %c0_136] : memref<1x256xf32, #tpu.memory_space<vmem>>, vector<1x256xf32>
      %306 = vector.broadcast %305 : vector<1x256xf32> to vector<40x256xf32>
      %307 = arith.addf %304, %306 : vector<40x256xf32>
      %c0_137 = arith.constant 0 : index
      %c0_138 = arith.constant 0 : index
      %308 = vector.load %arg5[%c0_137, %c0_138] : memref<40x256xf32, #tpu.memory_space<vmem>>, vector<40x256xf32>
      %309 = arith.addf %307, %308 : vector<40x256xf32>
      %310 = arith.addf %309, %273 : vector<40x256xf32>
      %c0_139 = arith.constant 0 : index
      %c0_140 = arith.constant 0 : index
      %311 = vector.load %arg18[%c0_139, %c0_140] : memref<1x256xf32, #tpu.memory_space<vmem>>, vector<1x256xf32>
      %c0_141 = arith.constant 0 : index
      %c0_142 = arith.constant 0 : index
      %312 = vector.load %arg19[%c0_141, %c0_142] : memref<1x256xf32, #tpu.memory_space<vmem>>, vector<1x256xf32>
      %cst_143 = arith.constant dense<0.000000e+00> : vector<40xf32>
      %313 = vector.multi_reduction <add>, %310, %cst_143 [1] : vector<40x256xf32> to vector<40xf32>
      %314 = vector.shape_cast %313 : vector<40xf32> to vector<40x1xf32>
      %cst_144 = arith.constant 2.560000e+02 : f32
      %315 = vector.broadcast %cst_144 : f32 to vector<40x1xf32>
      %316 = arith.divf %314, %315 : vector<40x1xf32>
      %317 = vector.broadcast %316 : vector<40x1xf32> to vector<40x256xf32>
      %318 = arith.subf %310, %317 : vector<40x256xf32>
      %319 = arith.mulf %318, %318 : vector<40x256xf32>
      %cst_145 = arith.constant dense<0.000000e+00> : vector<40xf32>
      %320 = vector.multi_reduction <add>, %319, %cst_145 [1] : vector<40x256xf32> to vector<40xf32>
      %321 = vector.shape_cast %320 : vector<40xf32> to vector<40x1xf32>
      %cst_146 = arith.constant 2.560000e+02 : f32
      %322 = vector.broadcast %cst_146 : f32 to vector<40x1xf32>
      %323 = arith.divf %321, %322 : vector<40x1xf32>
      %cst_147 = arith.constant 9.99999974E-6 : f32
      %324 = vector.broadcast %cst_147 : f32 to vector<40x1xf32>
      %325 = arith.addf %323, %324 : vector<40x1xf32>
      %326 = math.rsqrt %325 : vector<40x1xf32>
      %327 = vector.broadcast %326 : vector<40x1xf32> to vector<40x256xf32>
      %328 = arith.mulf %318, %327 : vector<40x256xf32>
      %329 = vector.broadcast %311 : vector<1x256xf32> to vector<40x256xf32>
      %330 = arith.mulf %328, %329 : vector<40x256xf32>
      %331 = vector.broadcast %312 : vector<1x256xf32> to vector<40x256xf32>
      %332 = arith.addf %330, %331 : vector<40x256xf32>
      %c0_148 = arith.constant 0 : index
      %c0_149 = arith.constant 0 : index
      %333 = vector.load %arg37[%c0_148, %c0_149] : memref<40x256xf32, #tpu.memory_space<vmem>>, vector<40x256xf32>
      tpu.vector_store %arg37[%c0_148, %c0_149], %332 {strides = array<i32>} : memref<40x256xf32, #tpu.memory_space<vmem>>, vector<40x256xf32>,
    } else {
    }
    %c0 = arith.constant 0 : index
    %c0_1 = arith.constant 0 : index
    %3 = vector.load %arg37[%c0, %c0_1] : memref<40x256xf32, #tpu.memory_space<vmem>>, vector<40x256xf32>
    %c0_2 = arith.constant 0 : index
    %c0_3 = arith.constant 0 : index
    %c0_4 = arith.constant 0 : index
    %4 = vector.load %arg20[%c0_2, %c0_3, %c0_4] : memref<1x1x256xf32, #tpu.memory_space<vmem>>, vector<1x1x256xf32>
    %5 = vector.shape_cast %4 : vector<1x1x256xf32> to vector<1x256xf32>
    %c0_5 = arith.constant 0 : index
    %c0_6 = arith.constant 0 : index
    %c0_7 = arith.constant 0 : index
    %6 = vector.load %arg21[%c0_5, %c0_6, %c0_7] : memref<1x1x256xf32, #tpu.memory_space<vmem>>, vector<1x1x256xf32>
    %7 = vector.shape_cast %6 : vector<1x1x256xf32> to vector<1x256xf32>
    %cst = arith.constant dense<0.000000e+00> : vector<40xf32>
    %8 = vector.multi_reduction <add>, %3, %cst [1] : vector<40x256xf32> to vector<40xf32>
    %9 = vector.shape_cast %8 : vector<40xf32> to vector<40x1xf32>
    %cst_8 = arith.constant 2.560000e+02 : f32
    %10 = vector.broadcast %cst_8 : f32 to vector<40x1xf32>
    %11 = arith.divf %9, %10 : vector<40x1xf32>
    %12 = vector.broadcast %11 : vector<40x1xf32> to vector<40x256xf32>
    %13 = arith.subf %3, %12 : vector<40x256xf32>
    %14 = arith.mulf %13, %13 : vector<40x256xf32>
    %cst_9 = arith.constant dense<0.000000e+00> : vector<40xf32>
    %15 = vector.multi_reduction <add>, %14, %cst_9 [1] : vector<40x256xf32> to vector<40xf32>
    %16 = vector.shape_cast %15 : vector<40xf32> to vector<40x1xf32>
    %cst_10 = arith.constant 2.560000e+02 : f32
    %17 = vector.broadcast %cst_10 : f32 to vector<40x1xf32>
    %18 = arith.divf %16, %17 : vector<40x1xf32>
    %cst_11 = arith.constant 9.99999974E-6 : f32
    %19 = vector.broadcast %cst_11 : f32 to vector<40x1xf32>
    %20 = arith.addf %18, %19 : vector<40x1xf32>
    %21 = math.rsqrt %20 : vector<40x1xf32>
    %22 = vector.broadcast %21 : vector<40x1xf32> to vector<40x256xf32>
    %23 = arith.mulf %13, %22 : vector<40x256xf32>
    %24 = vector.broadcast %5 : vector<1x256xf32> to vector<40x256xf32>
    %25 = arith.mulf %23, %24 : vector<40x256xf32>
    %26 = vector.broadcast %7 : vector<1x256xf32> to vector<40x256xf32>
    %27 = arith.addf %25, %26 : vector<40x256xf32>
    %c0_12 = arith.constant 0 : index
    %c0_13 = arith.constant 0 : index
    %c0_14 = arith.constant 0 : index
    %28 = vector.load %arg22[%c0_12, %c0_13, %c0_14] : memref<1x256x768xbf16, #tpu.memory_space<vmem>>, vector<1x256x768xbf16>
    %29 = vector.shape_cast %28 : vector<1x256x768xbf16> to vector<256x768xbf16>
    %30 = arith.truncf %27 : vector<40x256xf32> to vector<40x256xbf16>
    %cst_15 = arith.constant dense<0.000000e+00> : vector<40x768xf32>
    %31 = tpu.matmul %30, %29, %cst_15 {dimension_numbers = #tpu.dot_dimension_numbers<[1], [0], [0], [1], [0, 0, 1, 1], [], []>} : vector<40x256xbf16>, vector<256x768xbf16>, vector<40x768xf32> -> vector<40x768xf32>
    %c0_16 = arith.constant 0 : index
    %c0_17 = arith.constant 0 : index
    %c0_18 = arith.constant 0 : index
    %32 = vector.load %arg23[%c0_16, %c0_17, %c0_18] : memref<1x1x768xf32, #tpu.memory_space<vmem>>, vector<1x1x768xf32>
    %33 = vector.shape_cast %32 : vector<1x1x768xf32> to vector<1x768xf32>
    %34 = vector.broadcast %33 : vector<1x768xf32> to vector<40x768xf32>
    %35 = arith.addf %31, %34 : vector<40x768xf32>
    %c0_19 = arith.constant 0 : index
    %c0_20 = arith.constant 0 : index
    %36 = vector.load %arg6[%c0_19, %c0_20] : memref<40x40xf32, #tpu.memory_space<vmem>>, vector<40x40xf32>
    %37 = vector.extract_strided_slice %35 {offsets = [0, 0], sizes = [40, 32], strides = [1, 1]} : vector<40x768xf32> to vector<40x32xf32>
    %38 = vector.extract_strided_slice %35 {offsets = [0, 256], sizes = [40, 32], strides = [1, 1]} : vector<40x768xf32> to vector<40x32xf32>
    %39 = vector.extract_strided_slice %35 {offsets = [0, 512], sizes = [40, 32], strides = [1, 1]} : vector<40x768xf32> to vector<40x32xf32>
    %cst_21 = arith.constant dense<0.000000e+00> : vector<40x40xf32>
    %40 = tpu.matmul %37, %38, %cst_21 {dimension_numbers = #tpu.dot_dimension_numbers<[1], [1], [0], [0], [0, 0, 1, 0], [], []>} : vector<40x32xf32>, vector<40x32xf32>, vector<40x40xf32> -> vector<40x40xf32>
    %41 = arith.addf %40, %36 : vector<40x40xf32>
    %cst_22 = arith.constant dense<0xFF800000> : vector<40xf32>
    %42 = vector.multi_reduction <maximumf>, %41, %cst_22 [1] : vector<40x40xf32> to vector<40xf32>
    %43 = vector.shape_cast %42 : vector<40xf32> to vector<40x1xf32>
    %44 = vector.broadcast %43 : vector<40x1xf32> to vector<40x40xf32>
    %45 = arith.subf %41, %44 : vector<40x40xf32>
    %46 = math.exp %45 : vector<40x40xf32>
    %cst_23 = arith.constant dense<0.000000e+00> : vector<40xf32>
    %47 = vector.multi_reduction <add>, %46, %cst_23 [1] : vector<40x40xf32> to vector<40xf32>
    %48 = vector.shape_cast %47 : vector<40xf32> to vector<40x1xf32>
    %49 = tpu.reciprocal %48 {approx = true} : vector<40x1xf32> -> vector<40x1xf32>
    %50 = vector.broadcast %49 : vector<40x1xf32> to vector<40x40xf32>
    %51 = arith.mulf %46, %50 : vector<40x40xf32>
    %cst_24 = arith.constant dense<0.000000e+00> : vector<40x32xf32>
    %52 = tpu.matmul %51, %39, %cst_24 {dimension_numbers = #tpu.dot_dimension_numbers<[1], [0], [0], [1], [0, 0, 1, 1], [], []>} : vector<40x40xf32>, vector<40x32xf32>, vector<40x32xf32> -> vector<40x32xf32>
    %53 = vector.extract_strided_slice %35 {offsets = [0, 32], sizes = [40, 32], strides = [1, 1]} : vector<40x768xf32> to vector<40x32xf32>
    %54 = vector.extract_strided_slice %35 {offsets = [0, 288], sizes = [40, 32], strides = [1, 1]} : vector<40x768xf32> to vector<40x32xf32>
    %55 = vector.extract_strided_slice %35 {offsets = [0, 544], sizes = [40, 32], strides = [1, 1]} : vector<40x768xf32> to vector<40x32xf32>
    %cst_25 = arith.constant dense<0.000000e+00> : vector<40x40xf32>
    %56 = tpu.matmul %53, %54, %cst_25 {dimension_numbers = #tpu.dot_dimension_numbers<[1], [1], [0], [0], [0, 0, 1, 0], [], []>} : vector<40x32xf32>, vector<40x32xf32>, vector<40x40xf32> -> vector<40x40xf32>
    %57 = arith.addf %56, %36 : vector<40x40xf32>
    %cst_26 = arith.constant dense<0xFF800000> : vector<40xf32>
    %58 = vector.multi_reduction <maximumf>, %57, %cst_26 [1] : vector<40x40xf32> to vector<40xf32>
    %59 = vector.shape_cast %58 : vector<40xf32> to vector<40x1xf32>
    %60 = vector.broadcast %59 : vector<40x1xf32> to vector<40x40xf32>
    %61 = arith.subf %57, %60 : vector<40x40xf32>
    %62 = math.exp %61 : vector<40x40xf32>
    %cst_27 = arith.constant dense<0.000000e+00> : vector<40xf32>
    %63 = vector.multi_reduction <add>, %62, %cst_27 [1] : vector<40x40xf32> to vector<40xf32>
    %64 = vector.shape_cast %63 : vector<40xf32> to vector<40x1xf32>
    %65 = tpu.reciprocal %64 {approx = true} : vector<40x1xf32> -> vector<40x1xf32>
    %66 = vector.broadcast %65 : vector<40x1xf32> to vector<40x40xf32>
    %67 = arith.mulf %62, %66 : vector<40x40xf32>
    %cst_28 = arith.constant dense<0.000000e+00> : vector<40x32xf32>
    %68 = tpu.matmul %67, %55, %cst_28 {dimension_numbers = #tpu.dot_dimension_numbers<[1], [0], [0], [1], [0, 0, 1, 1], [], []>} : vector<40x40xf32>, vector<40x32xf32>, vector<40x32xf32> -> vector<40x32xf32>
    %69 = vector.extract_strided_slice %35 {offsets = [0, 64], sizes = [40, 32], strides = [1, 1]} : vector<40x768xf32> to vector<40x32xf32>
    %70 = vector.extract_strided_slice %35 {offsets = [0, 320], sizes = [40, 32], strides = [1, 1]} : vector<40x768xf32> to vector<40x32xf32>
    %71 = vector.extract_strided_slice %35 {offsets = [0, 576], sizes = [40, 32], strides = [1, 1]} : vector<40x768xf32> to vector<40x32xf32>
    %cst_29 = arith.constant dense<0.000000e+00> : vector<40x40xf32>
    %72 = tpu.matmul %69, %70, %cst_29 {dimension_numbers = #tpu.dot_dimension_numbers<[1], [1], [0], [0], [0, 0, 1, 0], [], []>} : vector<40x32xf32>, vector<40x32xf32>, vector<40x40xf32> -> vector<40x40xf32>
    %73 = arith.addf %72, %36 : vector<40x40xf32>
    %cst_30 = arith.constant dense<0xFF800000> : vector<40xf32>
    %74 = vector.multi_reduction <maximumf>, %73, %cst_30 [1] : vector<40x40xf32> to vector<40xf32>
    %75 = vector.shape_cast %74 : vector<40xf32> to vector<40x1xf32>
    %76 = vector.broadcast %75 : vector<40x1xf32> to vector<40x40xf32>
    %77 = arith.subf %73, %76 : vector<40x40xf32>
    %78 = math.exp %77 : vector<40x40xf32>
    %cst_31 = arith.constant dense<0.000000e+00> : vector<40xf32>
    %79 = vector.multi_reduction <add>, %78, %cst_31 [1] : vector<40x40xf32> to vector<40xf32>
    %80 = vector.shape_cast %79 : vector<40xf32> to vector<40x1xf32>
    %81 = tpu.reciprocal %80 {approx = true} : vector<40x1xf32> -> vector<40x1xf32>
    %82 = vector.broadcast %81 : vector<40x1xf32> to vector<40x40xf32>
    %83 = arith.mulf %78, %82 : vector<40x40xf32>
    %cst_32 = arith.constant dense<0.000000e+00> : vector<40x32xf32>
    %84 = tpu.matmul %83, %71, %cst_32 {dimension_numbers = #tpu.dot_dimension_numbers<[1], [0], [0], [1], [0, 0, 1, 1], [], []>} : vector<40x40xf32>, vector<40x32xf32>, vector<40x32xf32> -> vector<40x32xf32>
    %85 = vector.extract_strided_slice %35 {offsets = [0, 96], sizes = [40, 32], strides = [1, 1]} : vector<40x768xf32> to vector<40x32xf32>
    %86 = vector.extract_strided_slice %35 {offsets = [0, 352], sizes = [40, 32], strides = [1, 1]} : vector<40x768xf32> to vector<40x32xf32>
    %87 = vector.extract_strided_slice %35 {offsets = [0, 608], sizes = [40, 32], strides = [1, 1]} : vector<40x768xf32> to vector<40x32xf32>
    %cst_33 = arith.constant dense<0.000000e+00> : vector<40x40xf32>
    %88 = tpu.matmul %85, %86, %cst_33 {dimension_numbers = #tpu.dot_dimension_numbers<[1], [1], [0], [0], [0, 0, 1, 0], [], []>} : vector<40x32xf32>, vector<40x32xf32>, vector<40x40xf32> -> vector<40x40xf32>
    %89 = arith.addf %88, %36 : vector<40x40xf32>
    %cst_34 = arith.constant dense<0xFF800000> : vector<40xf32>
    %90 = vector.multi_reduction <maximumf>, %89, %cst_34 [1] : vector<40x40xf32> to vector<40xf32>
    %91 = vector.shape_cast %90 : vector<40xf32> to vector<40x1xf32>
    %92 = vector.broadcast %91 : vector<40x1xf32> to vector<40x40xf32>
    %93 = arith.subf %89, %92 : vector<40x40xf32>
    %94 = math.exp %93 : vector<40x40xf32>
    %cst_35 = arith.constant dense<0.000000e+00> : vector<40xf32>
    %95 = vector.multi_reduction <add>, %94, %cst_35 [1] : vector<40x40xf32> to vector<40xf32>
    %96 = vector.shape_cast %95 : vector<40xf32> to vector<40x1xf32>
    %97 = tpu.reciprocal %96 {approx = true} : vector<40x1xf32> -> vector<40x1xf32>
    %98 = vector.broadcast %97 : vector<40x1xf32> to vector<40x40xf32>
    %99 = arith.mulf %94, %98 : vector<40x40xf32>
    %cst_36 = arith.constant dense<0.000000e+00> : vector<40x32xf32>
    %100 = tpu.matmul %99, %87, %cst_36 {dimension_numbers = #tpu.dot_dimension_numbers<[1], [0], [0], [1], [0, 0, 1, 1], [], []>} : vector<40x40xf32>, vector<40x32xf32>, vector<40x32xf32> -> vector<40x32xf32>
    %101 = vector.extract_strided_slice %35 {offsets = [0, 128], sizes = [40, 32], strides = [1, 1]} : vector<40x768xf32> to vector<40x32xf32>
    %102 = vector.extract_strided_slice %35 {offsets = [0, 384], sizes = [40, 32], strides = [1, 1]} : vector<40x768xf32> to vector<40x32xf32>
    %103 = vector.extract_strided_slice %35 {offsets = [0, 640], sizes = [40, 32], strides = [1, 1]} : vector<40x768xf32> to vector<40x32xf32>
    %cst_37 = arith.constant dense<0.000000e+00> : vector<40x40xf32>
    %104 = tpu.matmul %101, %102, %cst_37 {dimension_numbers = #tpu.dot_dimension_numbers<[1], [1], [0], [0], [0, 0, 1, 0], [], []>} : vector<40x32xf32>, vector<40x32xf32>, vector<40x40xf32> -> vector<40x40xf32>
    %105 = arith.addf %104, %36 : vector<40x40xf32>
    %cst_38 = arith.constant dense<0xFF800000> : vector<40xf32>
    %106 = vector.multi_reduction <maximumf>, %105, %cst_38 [1] : vector<40x40xf32> to vector<40xf32>
    %107 = vector.shape_cast %106 : vector<40xf32> to vector<40x1xf32>
    %108 = vector.broadcast %107 : vector<40x1xf32> to vector<40x40xf32>
    %109 = arith.subf %105, %108 : vector<40x40xf32>
    %110 = math.exp %109 : vector<40x40xf32>
    %cst_39 = arith.constant dense<0.000000e+00> : vector<40xf32>
    %111 = vector.multi_reduction <add>, %110, %cst_39 [1] : vector<40x40xf32> to vector<40xf32>
    %112 = vector.shape_cast %111 : vector<40xf32> to vector<40x1xf32>
    %113 = tpu.reciprocal %112 {approx = true} : vector<40x1xf32> -> vector<40x1xf32>
    %114 = vector.broadcast %113 : vector<40x1xf32> to vector<40x40xf32>
    %115 = arith.mulf %110, %114 : vector<40x40xf32>
    %cst_40 = arith.constant dense<0.000000e+00> : vector<40x32xf32>
    %116 = tpu.matmul %115, %103, %cst_40 {dimension_numbers = #tpu.dot_dimension_numbers<[1], [0], [0], [1], [0, 0, 1, 1], [], []>} : vector<40x40xf32>, vector<40x32xf32>, vector<40x32xf32> -> vector<40x32xf32>
    %117 = vector.extract_strided_slice %35 {offsets = [0, 160], sizes = [40, 32], strides = [1, 1]} : vector<40x768xf32> to vector<40x32xf32>
    %118 = vector.extract_strided_slice %35 {offsets = [0, 416], sizes = [40, 32], strides = [1, 1]} : vector<40x768xf32> to vector<40x32xf32>
    %119 = vector.extract_strided_slice %35 {offsets = [0, 672], sizes = [40, 32], strides = [1, 1]} : vector<40x768xf32> to vector<40x32xf32>
    %cst_41 = arith.constant dense<0.000000e+00> : vector<40x40xf32>
    %120 = tpu.matmul %117, %118, %cst_41 {dimension_numbers = #tpu.dot_dimension_numbers<[1], [1], [0], [0], [0, 0, 1, 0], [], []>} : vector<40x32xf32>, vector<40x32xf32>, vector<40x40xf32> -> vector<40x40xf32>
    %121 = arith.addf %120, %36 : vector<40x40xf32>
    %cst_42 = arith.constant dense<0xFF800000> : vector<40xf32>
    %122 = vector.multi_reduction <maximumf>, %121, %cst_42 [1] : vector<40x40xf32> to vector<40xf32>
    %123 = vector.shape_cast %122 : vector<40xf32> to vector<40x1xf32>
    %124 = vector.broadcast %123 : vector<40x1xf32> to vector<40x40xf32>
    %125 = arith.subf %121, %124 : vector<40x40xf32>
    %126 = math.exp %125 : vector<40x40xf32>
    %cst_43 = arith.constant dense<0.000000e+00> : vector<40xf32>
    %127 = vector.multi_reduction <add>, %126, %cst_43 [1] : vector<40x40xf32> to vector<40xf32>
    %128 = vector.shape_cast %127 : vector<40xf32> to vector<40x1xf32>
    %129 = tpu.reciprocal %128 {approx = true} : vector<40x1xf32> -> vector<40x1xf32>
    %130 = vector.broadcast %129 : vector<40x1xf32> to vector<40x40xf32>
    %131 = arith.mulf %126, %130 : vector<40x40xf32>
    %cst_44 = arith.constant dense<0.000000e+00> : vector<40x32xf32>
    %132 = tpu.matmul %131, %119, %cst_44 {dimension_numbers = #tpu.dot_dimension_numbers<[1], [0], [0], [1], [0, 0, 1, 1], [], []>} : vector<40x40xf32>, vector<40x32xf32>, vector<40x32xf32> -> vector<40x32xf32>
    %133 = vector.extract_strided_slice %35 {offsets = [0, 192], sizes = [40, 32], strides = [1, 1]} : vector<40x768xf32> to vector<40x32xf32>
    %134 = vector.extract_strided_slice %35 {offsets = [0, 448], sizes = [40, 32], strides = [1, 1]} : vector<40x768xf32> to vector<40x32xf32>
    %135 = vector.extract_strided_slice %35 {offsets = [0, 704], sizes = [40, 32], strides = [1, 1]} : vector<40x768xf32> to vector<40x32xf32>
    %cst_45 = arith.constant dense<0.000000e+00> : vector<40x40xf32>
    %136 = tpu.matmul %133, %134, %cst_45 {dimension_numbers = #tpu.dot_dimension_numbers<[1], [1], [0], [0], [0, 0, 1, 0], [], []>} : vector<40x32xf32>, vector<40x32xf32>, vector<40x40xf32> -> vector<40x40xf32>
    %137 = arith.addf %136, %36 : vector<40x40xf32>
    %cst_46 = arith.constant dense<0xFF800000> : vector<40xf32>
    %138 = vector.multi_reduction <maximumf>, %137, %cst_46 [1] : vector<40x40xf32> to vector<40xf32>
    %139 = vector.shape_cast %138 : vector<40xf32> to vector<40x1xf32>
    %140 = vector.broadcast %139 : vector<40x1xf32> to vector<40x40xf32>
    %141 = arith.subf %137, %140 : vector<40x40xf32>
    %142 = math.exp %141 : vector<40x40xf32>
    %cst_47 = arith.constant dense<0.000000e+00> : vector<40xf32>
    %143 = vector.multi_reduction <add>, %142, %cst_47 [1] : vector<40x40xf32> to vector<40xf32>
    %144 = vector.shape_cast %143 : vector<40xf32> to vector<40x1xf32>
    %145 = tpu.reciprocal %144 {approx = true} : vector<40x1xf32> -> vector<40x1xf32>
    %146 = vector.broadcast %145 : vector<40x1xf32> to vector<40x40xf32>
    %147 = arith.mulf %142, %146 : vector<40x40xf32>
    %cst_48 = arith.constant dense<0.000000e+00> : vector<40x32xf32>
    %148 = tpu.matmul %147, %135, %cst_48 {dimension_numbers = #tpu.dot_dimension_numbers<[1], [0], [0], [1], [0, 0, 1, 1], [], []>} : vector<40x40xf32>, vector<40x32xf32>, vector<40x32xf32> -> vector<40x32xf32>
    %149 = vector.extract_strided_slice %35 {offsets = [0, 224], sizes = [40, 32], strides = [1, 1]} : vector<40x768xf32> to vector<40x32xf32>
    %150 = vector.extract_strided_slice %35 {offsets = [0, 480], sizes = [40, 32], strides = [1, 1]} : vector<40x768xf32> to vector<40x32xf32>
    %151 = vector.extract_strided_slice %35 {offsets = [0, 736], sizes = [40, 32], strides = [1, 1]} : vector<40x768xf32> to vector<40x32xf32>
    %cst_49 = arith.constant dense<0.000000e+00> : vector<40x40xf32>
    %152 = tpu.matmul %149, %150, %cst_49 {dimension_numbers = #tpu.dot_dimension_numbers<[1], [1], [0], [0], [0, 0, 1, 0], [], []>} : vector<40x32xf32>, vector<40x32xf32>, vector<40x40xf32> -> vector<40x40xf32>
    %153 = arith.addf %152, %36 : vector<40x40xf32>
    %cst_50 = arith.constant dense<0xFF800000> : vector<40xf32>
    %154 = vector.multi_reduction <maximumf>, %153, %cst_50 [1] : vector<40x40xf32> to vector<40xf32>
    %155 = vector.shape_cast %154 : vector<40xf32> to vector<40x1xf32>
    %156 = vector.broadcast %155 : vector<40x1xf32> to vector<40x40xf32>
    %157 = arith.subf %153, %156 : vector<40x40xf32>
    %158 = math.exp %157 : vector<40x40xf32>
    %cst_51 = arith.constant dense<0.000000e+00> : vector<40xf32>
    %159 = vector.multi_reduction <add>, %158, %cst_51 [1] : vector<40x40xf32> to vector<40xf32>
    %160 = vector.shape_cast %159 : vector<40xf32> to vector<40x1xf32>
    %161 = tpu.reciprocal %160 {approx = true} : vector<40x1xf32> -> vector<40x1xf32>
    %162 = vector.broadcast %161 : vector<40x1xf32> to vector<40x40xf32>
    %163 = arith.mulf %158, %162 : vector<40x40xf32>
    %cst_52 = arith.constant dense<0.000000e+00> : vector<40x32xf32>
    %164 = tpu.matmul %163, %151, %cst_52 {dimension_numbers = #tpu.dot_dimension_numbers<[1], [0], [0], [1], [0, 0, 1, 1], [], []>} : vector<40x40xf32>, vector<40x32xf32>, vector<40x32xf32> -> vector<40x32xf32>
    %165 = tpu.concatenate %52, %68, %84, %100, %116, %132, %148, %164 in 1 : vector<40x32xf32>, vector<40x32xf32>, vector<40x32xf32>, vector<40x32xf32>, vector<40x32xf32>, vector<40x32xf32>, vector<40x32xf32>, vector<40x32xf32> -> vector<40x256xf32>
    %c0_53 = arith.constant 0 : index
    %c0_54 = arith.constant 0 : index
    %c0_55 = arith.constant 0 : index
    %166 = vector.load %arg24[%c0_53, %c0_54, %c0_55] : memref<1x256x256xbf16, #tpu.memory_space<vmem>>, vector<1x256x256xbf16>
    %167 = vector.shape_cast %166 : vector<1x256x256xbf16> to vector<256x256xbf16>
    %168 = arith.truncf %165 : vector<40x256xf32> to vector<40x256xbf16>
    %cst_56 = arith.constant dense<0.000000e+00> : vector<40x256xf32>
    %169 = tpu.matmul %168, %167, %cst_56 {dimension_numbers = #tpu.dot_dimension_numbers<[1], [0], [0], [1], [0, 0, 1, 1], [], []>} : vector<40x256xbf16>, vector<256x256xbf16>, vector<40x256xf32> -> vector<40x256xf32>
    %c0_57 = arith.constant 0 : index
    %c0_58 = arith.constant 0 : index
    %c0_59 = arith.constant 0 : index
    %170 = vector.load %arg25[%c0_57, %c0_58, %c0_59] : memref<1x1x256xf32, #tpu.memory_space<vmem>>, vector<1x1x256xf32>
    %171 = vector.shape_cast %170 : vector<1x1x256xf32> to vector<1x256xf32>
    %172 = vector.broadcast %171 : vector<1x256xf32> to vector<40x256xf32>
    %173 = arith.addf %169, %172 : vector<40x256xf32>
    %174 = arith.addf %173, %3 : vector<40x256xf32>
    %c0_60 = arith.constant 0 : index
    %c0_61 = arith.constant 0 : index
    %c0_62 = arith.constant 0 : index
    %175 = vector.load %arg26[%c0_60, %c0_61, %c0_62] : memref<1x1x256xf32, #tpu.memory_space<vmem>>, vector<1x1x256xf32>
    %176 = vector.shape_cast %175 : vector<1x1x256xf32> to vector<1x256xf32>
    %c0_63 = arith.constant 0 : index
    %c0_64 = arith.constant 0 : index
    %c0_65 = arith.constant 0 : index
    %177 = vector.load %arg27[%c0_63, %c0_64, %c0_65] : memref<1x1x256xf32, #tpu.memory_space<vmem>>, vector<1x1x256xf32>
    %178 = vector.shape_cast %177 : vector<1x1x256xf32> to vector<1x256xf32>
    %cst_66 = arith.constant dense<0.000000e+00> : vector<40xf32>
    %179 = vector.multi_reduction <add>, %174, %cst_66 [1] : vector<40x256xf32> to vector<40xf32>
    %180 = vector.shape_cast %179 : vector<40xf32> to vector<40x1xf32>
    %cst_67 = arith.constant 2.560000e+02 : f32
    %181 = vector.broadcast %cst_67 : f32 to vector<40x1xf32>
    %182 = arith.divf %180, %181 : vector<40x1xf32>
    %183 = vector.broadcast %182 : vector<40x1xf32> to vector<40x256xf32>
    %184 = arith.subf %174, %183 : vector<40x256xf32>
    %185 = arith.mulf %184, %184 : vector<40x256xf32>
    %cst_68 = arith.constant dense<0.000000e+00> : vector<40xf32>
    %186 = vector.multi_reduction <add>, %185, %cst_68 [1] : vector<40x256xf32> to vector<40xf32>
    %187 = vector.shape_cast %186 : vector<40xf32> to vector<40x1xf32>
    %cst_69 = arith.constant 2.560000e+02 : f32
    %188 = vector.broadcast %cst_69 : f32 to vector<40x1xf32>
    %189 = arith.divf %187, %188 : vector<40x1xf32>
    %cst_70 = arith.constant 9.99999974E-6 : f32
    %190 = vector.broadcast %cst_70 : f32 to vector<40x1xf32>
    %191 = arith.addf %189, %190 : vector<40x1xf32>
    %192 = math.rsqrt %191 : vector<40x1xf32>
    %193 = vector.broadcast %192 : vector<40x1xf32> to vector<40x256xf32>
    %194 = arith.mulf %184, %193 : vector<40x256xf32>
    %195 = vector.broadcast %176 : vector<1x256xf32> to vector<40x256xf32>
    %196 = arith.mulf %194, %195 : vector<40x256xf32>
    %197 = vector.broadcast %178 : vector<1x256xf32> to vector<40x256xf32>
    %198 = arith.addf %196, %197 : vector<40x256xf32>
    %c0_71 = arith.constant 0 : index
    %c0_72 = arith.constant 0 : index
    %c0_73 = arith.constant 0 : index
    %199 = vector.load %arg28[%c0_71, %c0_72, %c0_73] : memref<1x256x768xbf16, #tpu.memory_space<vmem>>, vector<1x256x768xbf16>
    %200 = vector.shape_cast %199 : vector<1x256x768xbf16> to vector<256x768xbf16>
    %201 = arith.truncf %198 : vector<40x256xf32> to vector<40x256xbf16>
    %cst_74 = arith.constant dense<0.000000e+00> : vector<40x768xf32>
    %202 = tpu.matmul %201, %200, %cst_74 {dimension_numbers = #tpu.dot_dimension_numbers<[1], [0], [0], [1], [0, 0, 1, 1], [], []>} : vector<40x256xbf16>, vector<256x768xbf16>, vector<40x768xf32> -> vector<40x768xf32>
    %c0_75 = arith.constant 0 : index
    %c0_76 = arith.constant 0 : index
    %c0_77 = arith.constant 0 : index
    %203 = vector.load %arg29[%c0_75, %c0_76, %c0_77] : memref<1x1x768xf32, #tpu.memory_space<vmem>>, vector<1x1x768xf32>
    %204 = vector.shape_cast %203 : vector<1x1x768xf32> to vector<1x768xf32>
    %205 = vector.broadcast %204 : vector<1x768xf32> to vector<40x768xf32>
    %206 = arith.addf %202, %205 : vector<40x768xf32>
    %207 = arith.mulf %206, %206 : vector<40x768xf32>
    %208 = arith.mulf %206, %207 : vector<40x768xf32>
    %cst_78 = arith.constant 4.471500e-02 : f32
    %209 = vector.broadcast %cst_78 : f32 to vector<40x768xf32>
    %210 = arith.mulf %209, %208 : vector<40x768xf32>
    %211 = arith.addf %206, %210 : vector<40x768xf32>
    %cst_79 = arith.constant 0.797884583 : f32
    %212 = vector.broadcast %cst_79 : f32 to vector<40x768xf32>
    %213 = arith.mulf %212, %211 : vector<40x768xf32>
    %214 = math.tanh %213 : vector<40x768xf32>
    %cst_80 = arith.constant 1.000000e+00 : f32
    %215 = vector.broadcast %cst_80 : f32 to vector<40x768xf32>
    %216 = arith.addf %215, %214 : vector<40x768xf32>
    %cst_81 = arith.constant 5.000000e-01 : f32
    %217 = vector.broadcast %cst_81 : f32 to vector<40x768xf32>
    %218 = arith.mulf %217, %216 : vector<40x768xf32>
    %219 = arith.mulf %206, %218 : vector<40x768xf32>
    %c0_82 = arith.constant 0 : index
    %c0_83 = arith.constant 0 : index
    %c0_84 = arith.constant 0 : index
    %220 = vector.load %arg30[%c0_82, %c0_83, %c0_84] : memref<1x768x256xbf16, #tpu.memory_space<vmem>>, vector<1x768x256xbf16>
    %221 = vector.shape_cast %220 : vector<1x768x256xbf16> to vector<768x256xbf16>
    %222 = arith.truncf %219 : vector<40x768xf32> to vector<40x768xbf16>
    %cst_85 = arith.constant dense<0.000000e+00> : vector<40x256xf32>
    %223 = tpu.matmul %222, %221, %cst_85 {dimension_numbers = #tpu.dot_dimension_numbers<[1], [0], [0], [1], [0, 0, 1, 1], [], []>} : vector<40x768xbf16>, vector<768x256xbf16>, vector<40x256xf32> -> vector<40x256xf32>
    %c0_86 = arith.constant 0 : index
    %c0_87 = arith.constant 0 : index
    %c0_88 = arith.constant 0 : index
    %224 = vector.load %arg31[%c0_86, %c0_87, %c0_88] : memref<1x1x256xf32, #tpu.memory_space<vmem>>, vector<1x1x256xf32>
    %225 = vector.shape_cast %224 : vector<1x1x256xf32> to vector<1x256xf32>
    %226 = vector.broadcast %225 : vector<1x256xf32> to vector<40x256xf32>
    %227 = arith.addf %223, %226 : vector<40x256xf32>
    %228 = arith.addf %227, %174 : vector<40x256xf32>
    %c0_89 = arith.constant 0 : index
    %c0_90 = arith.constant 0 : index
    %229 = vector.load %arg37[%c0_89, %c0_90] : memref<40x256xf32, #tpu.memory_space<vmem>>, vector<40x256xf32>
    tpu.vector_store %arg37[%c0_89, %c0_90], %228 {strides = array<i32>} : memref<40x256xf32, #tpu.memory_space<vmem>>, vector<40x256xf32>,
    %c3_i32 = arith.constant 3 : i32
    %230 = arith.cmpi eq, %arg1, %c3_i32 : i32
    %231 = arith.extui %230 : i1 to i32
    %c0_i32_91 = arith.constant 0 : i32
    %232 = arith.cmpi ne, %231, %c0_i32_91 : i32
    scf.if %232 {
      %c0_92 = arith.constant 0 : index
      %c0_93 = arith.constant 0 : index
      %233 = vector.load %arg32[%c0_92, %c0_93] : memref<256x256xbf16, #tpu.memory_space<vmem>>, vector<256x256xbf16>
      %234 = arith.truncf %228 : vector<40x256xf32> to vector<40x256xbf16>
      %cst_94 = arith.constant dense<0.000000e+00> : vector<40x256xf32>
      %235 = tpu.matmul %234, %233, %cst_94 {dimension_numbers = #tpu.dot_dimension_numbers<[1], [0], [0], [1], [0, 0, 1, 1], [], []>} : vector<40x256xbf16>, vector<256x256xbf16>, vector<40x256xf32> -> vector<40x256xf32>
      %c0_95 = arith.constant 0 : index
      %c0_96 = arith.constant 0 : index
      %236 = vector.load %arg33[%c0_95, %c0_96] : memref<1x256xf32, #tpu.memory_space<vmem>>, vector<1x256xf32>
      %237 = vector.broadcast %236 : vector<1x256xf32> to vector<40x256xf32>
      %238 = arith.addf %235, %237 : vector<40x256xf32>
      %239 = arith.mulf %238, %238 : vector<40x256xf32>
      %240 = arith.mulf %238, %239 : vector<40x256xf32>
      %cst_97 = arith.constant 4.471500e-02 : f32
      %241 = vector.broadcast %cst_97 : f32 to vector<40x256xf32>
      %242 = arith.mulf %241, %240 : vector<40x256xf32>
      %243 = arith.addf %238, %242 : vector<40x256xf32>
      %cst_98 = arith.constant 0.797884583 : f32
      %244 = vector.broadcast %cst_98 : f32 to vector<40x256xf32>
      %245 = arith.mulf %244, %243 : vector<40x256xf32>
      %246 = math.tanh %245 : vector<40x256xf32>
      %cst_99 = arith.constant 1.000000e+00 : f32
      %247 = vector.broadcast %cst_99 : f32 to vector<40x256xf32>
      %248 = arith.addf %247, %246 : vector<40x256xf32>
      %cst_100 = arith.constant 5.000000e-01 : f32
      %249 = vector.broadcast %cst_100 : f32 to vector<40x256xf32>
      %250 = arith.mulf %249, %248 : vector<40x256xf32>
      %251 = arith.mulf %238, %250 : vector<40x256xf32>
      %c0_101 = arith.constant 0 : index
      %c0_102 = arith.constant 0 : index
      %252 = vector.load %arg34[%c0_101, %c0_102] : memref<256x128xbf16, #tpu.memory_space<vmem>>, vector<256x128xbf16>
      %253 = arith.truncf %251 : vector<40x256xf32> to vector<40x256xbf16>
      %cst_103 = arith.constant dense<0.000000e+00> : vector<40x128xf32>
      %254 = tpu.matmul %253, %252, %cst_103 {dimension_numbers = #tpu.dot_dimension_numbers<[1], [0], [0], [1], [0, 0, 1, 1], [], []>} : vector<40x256xbf16>, vector<256x128xbf16>, vector<40x128xf32> -> vector<40x128xf32>
      %c0_104 = arith.constant 0 : index
      %c0_105 = arith.constant 0 : index
      %255 = vector.load %arg35[%c0_104, %c0_105] : memref<1x128xf32, #tpu.memory_space<vmem>>, vector<1x128xf32>
      %256 = vector.broadcast %255 : vector<1x128xf32> to vector<40x128xf32>
      %257 = arith.addf %254, %256 : vector<40x128xf32>
      %c0_106 = arith.constant 0 : index
      %c0_107 = arith.constant 0 : index
      %258 = vector.load %arg36[%c0_106, %c0_107] : memref<40x128xf32, #tpu.memory_space<vmem>>, vector<40x128xf32>
      tpu.vector_store %arg36[%c0_106, %c0_107], %257 {strides = array<i32>} : memref<40x128xf32, #tpu.memory_space<vmem>>, vector<40x128xf32>,
    } else {
    }
    return
  }
  func.func @transform_0(%arg0: i32, %arg1: i32) -> (i32, i32) {
    %c0_i32 = arith.constant 0 : i32
    %c0_i32_0 = arith.constant 0 : i32
    return %arg0, %c0_i32 : i32, i32
  }
  func.func @transform_1(%arg0: i32, %arg1: i32) -> (i32, i32) {
    %c0_i32 = arith.constant 0 : i32
    %c0_i32_0 = arith.constant 0 : i32
    return %arg0, %c0_i32 : i32, i32
  }
  func.func @transform_2(%arg0: i32, %arg1: i32) -> (i32, i32) {
    %c0_i32 = arith.constant 0 : i32
    %c0_i32_0 = arith.constant 0 : i32
    return %arg0, %c0_i32 : i32, i32
  }
  func.func @transform_3(%arg0: i32, %arg1: i32) -> (i32, i32) {
    %c0_i32 = arith.constant 0 : i32
    %c0_i32_0 = arith.constant 0 : i32
    %c0_i32_1 = arith.constant 0 : i32
    return %c0_i32, %c0_i32_0 : i32, i32
  }
  func.func @transform_4(%arg0: i32, %arg1: i32) -> (i32, i32) {
    %c0_i32 = arith.constant 0 : i32
    %c0_i32_0 = arith.constant 0 : i32
    %c0_i32_1 = arith.constant 0 : i32
    return %c0_i32, %c0_i32_0 : i32, i32
  }
  func.func @transform_5(%arg0: i32, %arg1: i32) -> (i32, i32) {
    %c0_i32 = arith.constant 0 : i32
    %c0_i32_0 = arith.constant 0 : i32
    %c0_i32_1 = arith.constant 0 : i32
    return %c0_i32, %c0_i32_0 : i32, i32
  }
  func.func @transform_6(%arg0: i32, %arg1: i32) -> (i32, i32) {
    %c0_i32 = arith.constant 0 : i32
    %c0_i32_0 = arith.constant 0 : i32
    %c0_i32_1 = arith.constant 0 : i32
    return %c0_i32, %c0_i32_0 : i32, i32
  }
  func.func @transform_7(%arg0: i32, %arg1: i32) -> (i32, i32) {
    %c0_i32 = arith.constant 0 : i32
    %c0_i32_0 = arith.constant 0 : i32
    %c0_i32_1 = arith.constant 0 : i32
    return %c0_i32, %c0_i32_0 : i32, i32
  }
  func.func @transform_8(%arg0: i32, %arg1: i32) -> (i32, i32) {
    %c0_i32 = arith.constant 0 : i32
    %c0_i32_0 = arith.constant 0 : i32
    %c0_i32_1 = arith.constant 0 : i32
    return %c0_i32, %c0_i32_0 : i32, i32
  }
  func.func @transform_9(%arg0: i32, %arg1: i32) -> (i32, i32) {
    %c0_i32 = arith.constant 0 : i32
    %c0_i32_0 = arith.constant 0 : i32
    %c0_i32_1 = arith.constant 0 : i32
    return %c0_i32, %c0_i32_0 : i32, i32
  }
  func.func @transform_10(%arg0: i32, %arg1: i32) -> (i32, i32) {
    %c0_i32 = arith.constant 0 : i32
    %c0_i32_0 = arith.constant 0 : i32
    %c0_i32_1 = arith.constant 0 : i32
    return %c0_i32, %c0_i32_0 : i32, i32
  }
  func.func @transform_11(%arg0: i32, %arg1: i32) -> (i32, i32) {
    %c0_i32 = arith.constant 0 : i32
    %c0_i32_0 = arith.constant 0 : i32
    %c0_i32_1 = arith.constant 0 : i32
    return %c0_i32, %c0_i32_0 : i32, i32
  }
  func.func @transform_12(%arg0: i32, %arg1: i32) -> (i32, i32) {
    %c0_i32 = arith.constant 0 : i32
    %c0_i32_0 = arith.constant 0 : i32
    %c0_i32_1 = arith.constant 0 : i32
    return %c0_i32, %c0_i32_0 : i32, i32
  }
  func.func @transform_13(%arg0: i32, %arg1: i32) -> (i32, i32) {
    %c0_i32 = arith.constant 0 : i32
    %c0_i32_0 = arith.constant 0 : i32
    %c0_i32_1 = arith.constant 0 : i32
    return %c0_i32, %c0_i32_0 : i32, i32
  }
  func.func @transform_14(%arg0: i32, %arg1: i32) -> (i32, i32) {
    %c0_i32 = arith.constant 0 : i32
    %c0_i32_0 = arith.constant 0 : i32
    %c0_i32_1 = arith.constant 0 : i32
    return %c0_i32, %c0_i32_0 : i32, i32
  }
  func.func @transform_15(%arg0: i32, %arg1: i32) -> (i32, i32) {
    %c0_i32 = arith.constant 0 : i32
    %c0_i32_0 = arith.constant 0 : i32
    %c0_i32_1 = arith.constant 0 : i32
    return %c0_i32, %c0_i32_0 : i32, i32
  }
  func.func @transform_16(%arg0: i32, %arg1: i32) -> (i32, i32) {
    %c0_i32 = arith.constant 0 : i32
    %c0_i32_0 = arith.constant 0 : i32
    %c0_i32_1 = arith.constant 0 : i32
    return %c0_i32, %c0_i32_0 : i32, i32
  }
  func.func @transform_17(%arg0: i32, %arg1: i32) -> (i32, i32) {
    %c0_i32 = arith.constant 0 : i32
    %c0_i32_0 = arith.constant 0 : i32
    %c0_i32_1 = arith.constant 0 : i32
    return %c0_i32, %c0_i32_0 : i32, i32
  }
  func.func @transform_18(%arg0: i32, %arg1: i32) -> (i32, i32, i32) {
    %c0_i32 = arith.constant 0 : i32
    %c0_i32_0 = arith.constant 0 : i32
    %c0_i32_1 = arith.constant 0 : i32
    return %arg1, %c0_i32, %c0_i32_0 : i32, i32, i32
  }
  func.func @transform_19(%arg0: i32, %arg1: i32) -> (i32, i32, i32) {
    %c0_i32 = arith.constant 0 : i32
    %c0_i32_0 = arith.constant 0 : i32
    %c0_i32_1 = arith.constant 0 : i32
    return %arg1, %c0_i32, %c0_i32_0 : i32, i32, i32
  }
  func.func @transform_20(%arg0: i32, %arg1: i32) -> (i32, i32, i32) {
    %c0_i32 = arith.constant 0 : i32
    %c0_i32_0 = arith.constant 0 : i32
    %c0_i32_1 = arith.constant 0 : i32
    return %arg1, %c0_i32, %c0_i32_0 : i32, i32, i32
  }
  func.func @transform_21(%arg0: i32, %arg1: i32) -> (i32, i32, i32) {
    %c0_i32 = arith.constant 0 : i32
    %c0_i32_0 = arith.constant 0 : i32
    %c0_i32_1 = arith.constant 0 : i32
    return %arg1, %c0_i32, %c0_i32_0 : i32, i32, i32
  }
  func.func @transform_22(%arg0: i32, %arg1: i32) -> (i32, i32, i32) {
    %c0_i32 = arith.constant 0 : i32
    %c0_i32_0 = arith.constant 0 : i32
    %c0_i32_1 = arith.constant 0 : i32
    return %arg1, %c0_i32, %c0_i32_0 : i32, i32, i32
  }
  func.func @transform_23(%arg0: i32, %arg1: i32) -> (i32, i32, i32) {
    %c0_i32 = arith.constant 0 : i32
    %c0_i32_0 = arith.constant 0 : i32
    %c0_i32_1 = arith.constant 0 : i32
    return %arg1, %c0_i32, %c0_i32_0 : i32, i32, i32
  }
  func.func @transform_24(%arg0: i32, %arg1: i32) -> (i32, i32, i32) {
    %c0_i32 = arith.constant 0 : i32
    %c0_i32_0 = arith.constant 0 : i32
    %c0_i32_1 = arith.constant 0 : i32
    return %arg1, %c0_i32, %c0_i32_0 : i32, i32, i32
  }
  func.func @transform_25(%arg0: i32, %arg1: i32) -> (i32, i32, i32) {
    %c0_i32 = arith.constant 0 : i32
    %c0_i32_0 = arith.constant 0 : i32
    %c0_i32_1 = arith.constant 0 : i32
    return %arg1, %c0_i32, %c0_i32_0 : i32, i32, i32
  }
  func.func @transform_26(%arg0: i32, %arg1: i32) -> (i32, i32, i32) {
    %c0_i32 = arith.constant 0 : i32
    %c0_i32_0 = arith.constant 0 : i32
    %c0_i32_1 = arith.constant 0 : i32
    return %arg1, %c0_i32, %c0_i32_0 : i32, i32, i32
  }
  func.func @transform_27(%arg0: i32, %arg1: i32) -> (i32, i32, i32) {
    %c0_i32 = arith.constant 0 : i32
    %c0_i32_0 = arith.constant 0 : i32
    %c0_i32_1 = arith.constant 0 : i32
    return %arg1, %c0_i32, %c0_i32_0 : i32, i32, i32
  }
  func.func @transform_28(%arg0: i32, %arg1: i32) -> (i32, i32, i32) {
    %c0_i32 = arith.constant 0 : i32
    %c0_i32_0 = arith.constant 0 : i32
    %c0_i32_1 = arith.constant 0 : i32
    return %arg1, %c0_i32, %c0_i32_0 : i32, i32, i32
  }
  func.func @transform_29(%arg0: i32, %arg1: i32) -> (i32, i32, i32) {
    %c0_i32 = arith.constant 0 : i32
    %c0_i32_0 = arith.constant 0 : i32
    %c0_i32_1 = arith.constant 0 : i32
    return %arg1, %c0_i32, %c0_i32_0 : i32, i32, i32
  }
  func.func @transform_30(%arg0: i32, %arg1: i32) -> (i32, i32) {
    %c0_i32 = arith.constant 0 : i32
    %c0_i32_0 = arith.constant 0 : i32
    %c0_i32_1 = arith.constant 0 : i32
    return %c0_i32, %c0_i32_0 : i32, i32
  }
  func.func @transform_31(%arg0: i32, %arg1: i32) -> (i32, i32) {
    %c0_i32 = arith.constant 0 : i32
    %c0_i32_0 = arith.constant 0 : i32
    %c0_i32_1 = arith.constant 0 : i32
    return %c0_i32, %c0_i32_0 : i32, i32
  }
  func.func @transform_32(%arg0: i32, %arg1: i32) -> (i32, i32) {
    %c0_i32 = arith.constant 0 : i32
    %c0_i32_0 = arith.constant 0 : i32
    %c0_i32_1 = arith.constant 0 : i32
    return %c0_i32, %c0_i32_0 : i32, i32
  }
  func.func @transform_33(%arg0: i32, %arg1: i32) -> (i32, i32) {
    %c0_i32 = arith.constant 0 : i32
    %c0_i32_0 = arith.constant 0 : i32
    %c0_i32_1 = arith.constant 0 : i32
    return %c0_i32, %c0_i32_0 : i32, i32
  }
  func.func @transform_34(%arg0: i32, %arg1: i32) -> (i32, i32) {
    %c0_i32 = arith.constant 0 : i32
    %c0_i32_0 = arith.constant 0 : i32
    return %arg0, %c0_i32 : i32, i32
  }
}

</mosaic_0001>

<llo_original>
// kernel: tpu_custom_call.1
$region0: #{tpu_custom_call.1}
  #allocation0 [shape = 'u32[]', space=smem, size = 0x4, offset = 0x4, fixed_abs, tag = 'smem constant byte address 0x4 - core index']
  #allocation1 [shape = 'u32[144,128]{1,0:T(1,128)}', space=vmem, size = 0x12000, scoped, tag = 'internal scratch']
  #allocation2 [shape = 'f32[40,256]{1,0:T(8,128)}', space=vmem, size = 0xa000, scoped, tag = 'scratch operand']
  %s0 = inlined_call_operand.smem [shape: u32[35], index: -1, kind: input, shape index: {}]
  %s1 = sld [smem:[%s0]]
  %s2 = scalar_lea.smem %s0, 1
  %s3 = sld [smem:[%s2]]
  %s4 = scalar_lea.smem %s0, 2
  %s5 = sld [smem:[%s4]]
  %s6 = scalar_lea.smem %s0, 3
  %s7 = sld [smem:[%s6]]
  %s8 = scalar_lea.smem %s0, 4
  %s9 = sld [smem:[%s8]]
  %s10 = scalar_lea.smem %s0, 5
  %s11 = sld [smem:[%s10]]
  %s12 = scalar_lea.smem %s0, 6
  %s13 = sld [smem:[%s12]]
  %s14 = scalar_lea.smem %s0, 7
  %s15 = sld [smem:[%s14]]
  %s16 = scalar_lea.smem %s0, 8
  %s17 = sld [smem:[%s16]]
  %s18 = scalar_lea.smem %s0, 9
  %s19 = sld [smem:[%s18]]
  %s20 = scalar_lea.smem %s0, 10
  %s21 = sld [smem:[%s20]]
  %s22 = scalar_lea.smem %s0, 11
  %s23 = sld [smem:[%s22]]
  %s24 = scalar_lea.smem %s0, 12
  %s25 = sld [smem:[%s24]]
  %s26 = scalar_lea.smem %s0, 13
  %s27 = sld [smem:[%s26]]
  %s28 = scalar_lea.smem %s0, 14
  %s29 = sld [smem:[%s28]]
  %s30 = scalar_lea.smem %s0, 15
  %s31 = sld [smem:[%s30]]
  %s32 = scalar_lea.smem %s0, 16
  %s33 = sld [smem:[%s32]]
  %s34 = scalar_lea.smem %s0, 17
  %s35 = sld [smem:[%s34]]
  %s36 = scalar_lea.smem %s0, 18
  %s37 = sld [smem:[%s36]]
  %s38 = scalar_lea.smem %s0, 19
  %s39 = sld [smem:[%s38]]
  %s40 = scalar_lea.smem %s0, 20
  %s41 = sld [smem:[%s40]]
  %s42 = scalar_lea.smem %s0, 21
  %s43 = sld [smem:[%s42]]
  %s44 = scalar_lea.smem %s0, 22
  %s45 = sld [smem:[%s44]]
  %s46 = scalar_lea.smem %s0, 23
  %s47 = sld [smem:[%s46]]
  %s48 = scalar_lea.smem %s0, 24
  %s49 = sld [smem:[%s48]]
  %s50 = scalar_lea.smem %s0, 25
  %s51 = sld [smem:[%s50]]
  %s52 = scalar_lea.smem %s0, 26
  %s53 = sld [smem:[%s52]]
  %s54 = scalar_lea.smem %s0, 27
  %s55 = sld [smem:[%s54]]
  %s56 = scalar_lea.smem %s0, 28
  %s57 = sld [smem:[%s56]]
  %s58 = scalar_lea.smem %s0, 29
  %s59 = sld [smem:[%s58]]
  %s60 = scalar_lea.smem %s0, 30
  %s61 = sld [smem:[%s60]]
  %s62 = scalar_lea.smem %s0, 31
  %s63 = sld [smem:[%s62]]
  %s64 = scalar_lea.smem %s0, 32
  %s65 = sld [smem:[%s64]]
  %s66 = scalar_lea.smem %s0, 33
  %s67 = sld [smem:[%s66]]
  %s68 = scalar_lea.smem %s0, 34
  %s69 = sld [smem:[%s68]]
  %s70 = sld [smem:[#allocation0]]
  $region309: #{tpu_custom_call.1} parent=0
    _
  %s72 = ssub.s32 1, %s70
  %s73 = scalar_select 0, %s72, %s70
  $region1: #{tpu_custom_call.1} parent=0
    #allocation3 [shape = 'u8[20480]{0}', space=vmem, size = 0x5000, scoped, tag = 'input window, operand 0, single buffered']
    #allocation4 [shape = 's32[2]{0}', space=sflag, size = 0x8, scoped, tag = 'scoped memory for tpu_custom_call.1']
    #allocation5 [shape = 's32[2]{0}', space=sflag, size = 0x8, scoped, tag = 'scoped memory for tpu_custom_call.1']
    #allocation6 [shape = 'u8[30720]{0}', space=vmem, size = 0x7800, scoped, tag = 'input window, operand 2, single buffered']
    #allocation7 [shape = 's32[1]{0}', space=sflag, size = 0x4, scoped, tag = 'scoped memory for tpu_custom_call.1']
    #allocation8 [shape = 'u8[40960]{0}', space=vmem, size = 0xa000, scoped, tag = 'input window, operand 3, single buffered']
    #allocation9 [shape = 'u8[20480]{0}', space=vmem, size = 0x5000, scoped, tag = 'input window, operand 4, single buffered']
    #allocation10 [shape = 's32[1]{0}', space=sflag, size = 0x4, scoped, tag = 'scoped memory for tpu_custom_call.1']
    #allocation11 [shape = 'u8[1024]{0}', space=vmem, size = 0x400, scoped, tag = 'input window, operand 5, single buffered']
    #allocation12 [shape = 'u8[1024]{0}', space=vmem, size = 0x400, scoped, tag = 'input window, operand 6, single buffered']
    #allocation13 [shape = 's32[1]{0}', space=sflag, size = 0x4, scoped, tag = 'scoped memory for tpu_custom_call.1']
    #allocation14 [shape = 'u8[131072]{0}', space=vmem, size = 0x20000, scoped, tag = 'input window, operand 7, single buffered']
    #allocation15 [shape = 'u8[1024]{0}', space=vmem, size = 0x400, scoped, tag = 'input window, operand 8, single buffered']
    #allocation16 [shape = 's32[1]{0}', space=sflag, size = 0x4, scoped, tag = 'scoped memory for tpu_custom_call.1']
    #allocation17 [shape = 'u8[163840]{0}', space=vmem, size = 0x28000, scoped, tag = 'input window, operand 9, single buffered']
    #allocation18 [shape = 'u8[1024]{0}', space=vmem, size = 0x400, scoped, tag = 'input window, operand 10, single buffered']
    #allocation19 [shape = 's32[1]{0}', space=sflag, size = 0x4, scoped, tag = 'scoped memory for tpu_custom_call.1']
    #allocation20 [shape = 'u8[131072]{0}', space=vmem, size = 0x20000, scoped, tag = 'input window, operand 11, single buffered']
    #allocation21 [shape = 'u8[131072]{0}', space=vmem, size = 0x20000, scoped, tag = 'input window, operand 12, single buffered']
    #allocation22 [shape = 's32[1]{0}', space=sflag, size = 0x4, scoped, tag = 'scoped memory for tpu_custom_call.1']
    #allocation23 [shape = 'u8[1024]{0}', space=vmem, size = 0x400, scoped, tag = 'input window, operand 13, single buffered']
    #allocation24 [shape = 'u8[131072]{0}', space=vmem, size = 0x20000, scoped, tag = 'input window, operand 14, single buffered']
    #allocation25 [shape = 's32[1]{0}', space=sflag, size = 0x4, scoped, tag = 'scoped memory for tpu_custom_call.1']
    #allocation26 [shape = 'u8[1024]{0}', space=vmem, size = 0x400, scoped, tag = 'input window, operand 15, single buffered']
    #allocation27 [shape = 'u8[1024]{0}', space=vmem, size = 0x400, scoped, tag = 'input window, operand 16, single buffered']
    #allocation28 [shape = 's32[1]{0}', space=sflag, size = 0x4, scoped, tag = 'scoped memory for tpu_custom_call.1']
    #allocation29 [shape = 'u8[1024]{0}', space=vmem, size = 0x400, scoped, tag = 'input window, operand 17, single buffered']
    #allocation30 [shape = 'u8[2048]{0}', space=vmem, size = 0x800, scoped, tag = 'input window, operand 18']
    #allocation31 [shape = 's32[2]{0}', space=sflag, size = 0x8, scoped, tag = 'scoped memory for tpu_custom_call.1']
    #allocation32 [shape = 'u8[2048]{0}', space=vmem, size = 0x800, scoped, tag = 'input window, operand 19']
    #allocation33 [shape = 'u8[786432]{0}', space=vmem, size = 0xc0000, scoped, tag = 'input window, operand 20']
    #allocation34 [shape = 's32[2]{0}', space=sflag, size = 0x8, scoped, tag = 'scoped memory for tpu_custom_call.1']
    #allocation35 [shape = 'u8[6144]{0}', space=vmem, size = 0x1800, scoped, tag = 'input window, operand 21']
    #allocation36 [shape = 'u8[262144]{0}', space=vmem, size = 0x40000, scoped, tag = 'input window, operand 22']
    #allocation37 [shape = 's32[2]{0}', space=sflag, size = 0x8, scoped, tag = 'scoped memory for tpu_custom_call.1']
    #allocation38 [shape = 'u8[2048]{0}', space=vmem, size = 0x800, scoped, tag = 'input window, operand 23']
    #allocation39 [shape = 'u8[2048]{0}', space=vmem, size = 0x800, scoped, tag = 'input window, operand 24']
    #allocation40 [shape = 's32[2]{0}', space=sflag, size = 0x8, scoped, tag = 'scoped memory for tpu_custom_call.1']
    #allocation41 [shape = 'u8[2048]{0}', space=vmem, size = 0x800, scoped, tag = 'input window, operand 25']
    #allocation42 [shape = 'u8[786432]{0}', space=vmem, size = 0xc0000, scoped, tag = 'input window, operand 26']
    #allocation43 [shape = 's32[2]{0}', space=sflag, size = 0x8, scoped, tag = 'scoped memory for tpu_custom_call.1']
    #allocation44 [shape = 'u8[6144]{0}', space=vmem, size = 0x1800, scoped, tag = 'input window, operand 27']
    #allocation45 [shape = 'u8[786432]{0}', space=vmem, size = 0xc0000, scoped, tag = 'input window, operand 28']
    #allocation46 [shape = 's32[2]{0}', space=sflag, size = 0x8, scoped, tag = 'scoped memory for tpu_custom_call.1']
    #allocation47 [shape = 'u8[2048]{0}', space=vmem, size = 0x800, scoped, tag = 'input window, operand 29']
    #allocation48 [shape = 'u8[131072]{0}', space=vmem, size = 0x20000, scoped, tag = 'input window, operand 30, single buffered']
    #allocation49 [shape = 's32[1]{0}', space=sflag, size = 0x4, scoped, tag = 'scoped memory for tpu_custom_call.1']
    #allocation50 [shape = 'u8[1024]{0}', space=vmem, size = 0x400, scoped, tag = 'input window, operand 31, single buffered']
    #allocation51 [shape = 'u8[65536]{0}', space=vmem, size = 0x10000, scoped, tag = 'input window, operand 32, single buffered']
    #allocation52 [shape = 's32[1]{0}', space=sflag, size = 0x4, scoped, tag = 'scoped memory for tpu_custom_call.1']
    #allocation53 [shape = 'u8[512]{0}', space=vmem, size = 0x400, scoped, tag = 'input window, operand 33, single buffered']
    #allocation54 [shape = 'u8[20480]{0}', space=vmem, size = 0x5000, scoped, tag = 'output window, operand 0, single buffered']
    %74 = vsyncpa [#allocation4], 0
    %75 = vsyncpa [#allocation7], 0
    %76 = vsyncpa [#allocation10], 0
    %77 = vsyncpa [#allocation13], 0
    %78 = vsyncpa [#allocation16], 0
    %79 = vsyncpa [#allocation19], 0
    %80 = vsyncpa [#allocation22], 0
    %81 = vsyncpa [#allocation25], 0
    %82 = vsyncpa [#allocation28], 0
    %83 = vsyncpa [#allocation31], 0
    %s84 = scalar_lea.sflag [#allocation31], 1
    %85 = vsyncpa %s84, 0
    %86 = vsyncpa [#allocation34], 0
    %s87 = scalar_lea.sflag [#allocation34], 1
    %88 = vsyncpa %s87, 0
    %89 = vsyncpa [#allocation37], 0
    %s90 = scalar_lea.sflag [#allocation37], 1
    %91 = vsyncpa %s90, 0
    %92 = vsyncpa [#allocation40], 0
    %s93 = scalar_lea.sflag [#allocation40], 1
    %94 = vsyncpa %s93, 0
    %95 = vsyncpa [#allocation43], 0
    %s96 = scalar_lea.sflag [#allocation43], 1
    %97 = vsyncpa %s96, 0
    %98 = vsyncpa [#allocation46], 0
    %s99 = scalar_lea.sflag [#allocation46], 1
    %100 = vsyncpa %s99, 0
    %101 = vsyncpa [#allocation49], 0
    %102 = vsyncpa [#allocation52], 0
    %103 = vsyncpa [#allocation5], 0
    loop: start=0, step=1, limit=6
    $region2: #{tpu_custom_call.1} parent=1 // loop_pre_header
      _
    $region3: #{tpu_custom_call.1} parent=1 // loop_header
      %s105 = sphi 0, %s109
      %p106 = scmp.ge.s32.totalorder %s105, 6
      %s112 = sphi 0, %s124
      %s113 = sphi 0, %s120
      %s114 = sphi 0, %s112
      %s115 = sphi 0, %s113
      %s116 = sphi 0, %s114
      %s117 = sphi 0, %s115
      %s127 = sphi 0, %s129
      %s130 = sphi 0, %s127
      %s131 = sphi 0, %s130
      %s147 = sphi 0, %s131
      %s153 = sphi 0, %s155
      %s156 = sphi 0, %s153
      %s157 = sphi 0, %s156
      %s173 = sphi 0, %s157
      %s179 = sphi 0, %s181
      %s182 = sphi 0, %s179
      %s183 = sphi 0, %s182
      %s199 = sphi 0, %s183
      %s203 = sphi 0, %s203
      %s205 = sphi 0, %s203
      %s206 = sphi 0, %s205
      %s220 = sphi 0, %s206
      %s224 = sphi 0, %s224
      %s226 = sphi 0, %s224
      %s227 = sphi 0, %s226
      %s241 = sphi 0, %s227
      %s245 = sphi 0, %s245
      %s247 = sphi 0, %s245
      %s248 = sphi 0, %s247
      %s262 = sphi 0, %s248
      %s266 = sphi 0, %s266
      %s268 = sphi 0, %s266
      %s269 = sphi 0, %s268
      %s283 = sphi 0, %s269
      %s287 = sphi 0, %s287
      %s289 = sphi 0, %s287
      %s290 = sphi 0, %s289
      %s304 = sphi 0, %s290
      %s308 = sphi 0, %s308
      %s310 = sphi 0, %s308
      %s311 = sphi 0, %s310
      %s325 = sphi 0, %s311
      %s329 = sphi 0, %s329
      %s331 = sphi 0, %s329
      %s332 = sphi 0, %s331
      %s346 = sphi 0, %s332
      %s350 = sphi 0, %s350
      %s352 = sphi 0, %s350
      %s353 = sphi 0, %s352
      %s367 = sphi 0, %s353
      %s371 = sphi 0, %s371
      %s373 = sphi 0, %s371
      %s374 = sphi 0, %s373
      %s388 = sphi 0, %s374
      %s392 = sphi 0, %s392
      %s394 = sphi 0, %s392
      %s395 = sphi 0, %s394
      %s409 = sphi 0, %s395
      %s413 = sphi 0, %s413
      %s415 = sphi 0, %s413
      %s416 = sphi 0, %s415
      %s430 = sphi 0, %s416
      %s434 = sphi 0, %s434
      %s436 = sphi 0, %s434
      %s437 = sphi 0, %s436
      %s451 = sphi 0, %s437
      %s455 = sphi 0, %s455
      %s457 = sphi 0, %s455
      %s458 = sphi 0, %s457
      %s472 = sphi 0, %s458
      %s476 = sphi 0, %s476
      %s478 = sphi 0, %s476
      %s479 = sphi 0, %s478
      %s493 = sphi 0, %s479
      %s497 = sphi 0, %s497
      %s499 = sphi 0, %s497
      %s500 = sphi 0, %s499
      %s514 = sphi 0, %s500
      %s520 = sphi 0, %s522
      %s523 = sphi 0, %s520
      %s524 = sphi 0, %s523
      %s540 = sphi 0, %s524
      %s546 = sphi 0, %s548
      %s549 = sphi 0, %s546
      %s550 = sphi 0, %s549
      %s566 = sphi 0, %s550
      %s572 = sphi 0, %s574
      %s575 = sphi 0, %s572
      %s576 = sphi 0, %s575
      %s592 = sphi 0, %s576
      %s598 = sphi 0, %s600
      %s601 = sphi 0, %s598
      %s602 = sphi 0, %s601
      %s618 = sphi 0, %s602
      %s624 = sphi 0, %s626
      %s627 = sphi 0, %s624
      %s628 = sphi 0, %s627
      %s644 = sphi 0, %s628
      %s650 = sphi 0, %s652
      %s653 = sphi 0, %s650
      %s654 = sphi 0, %s653
      %s670 = sphi 0, %s654
      %s676 = sphi 0, %s678
      %s679 = sphi 0, %s676
      %s680 = sphi 0, %s679
      %s696 = sphi 0, %s680
      %s702 = sphi 0, %s704
      %s705 = sphi 0, %s702
      %s706 = sphi 0, %s705
      %s722 = sphi 0, %s706
      %s728 = sphi 0, %s730
      %s731 = sphi 0, %s728
      %s732 = sphi 0, %s731
      %s748 = sphi 0, %s732
      %s754 = sphi 0, %s756
      %s757 = sphi 0, %s754
      %s758 = sphi 0, %s757
      %s774 = sphi 0, %s758
      %s780 = sphi 0, %s782
      %s783 = sphi 0, %s780
      %s784 = sphi 0, %s783
      %s800 = sphi 0, %s784
      %s806 = sphi 0, %s808
      %s809 = sphi 0, %s806
      %s810 = sphi 0, %s809
      %s826 = sphi 0, %s810
      %s830 = sphi 0, %s830
      %s832 = sphi 0, %s830
      %s833 = sphi 0, %s832
      %s847 = sphi 0, %s833
      %s851 = sphi 0, %s851
      %s853 = sphi 0, %s851
      %s854 = sphi 0, %s853
      %s868 = sphi 0, %s854
      %s872 = sphi 0, %s872
      %s874 = sphi 0, %s872
      %s875 = sphi 0, %s874
      %s889 = sphi 0, %s875
      %s893 = sphi 0, %s893
      %s895 = sphi 0, %s893
      %s896 = sphi 0, %s895
      %s910 = sphi 0, %s896
      %s916 = sphi 0, %s918
      %s919 = sphi 0, %s916
      %s920 = sphi 0, %s919
      %s936 = sphi 0, %s920
    $region4: #{tpu_custom_call.1} parent=1 // loop_header_branch
      %108 = sbr.rel (%p106) target = $region8
    $region5: #{tpu_custom_call.1} parent=1 // loop_body
      %s110 = ssub.s32 %s105, 1
      %s111 = ssub.s32 %s105, 2
      %s118 = sadd.s32 1, %s113
      %p119 = scmp.ge.s32.totalorder %s118, 4
      %s120 = scalar_select %p119, 0, %s118
      %s121 = sadd.s32 1, %s112
      %s122 = scalar_select %p119, %s121, %s112
      %p123 = scmp.ge.s32.totalorder %s122, 1
      %s124 = scalar_select %p123, 0, %s122
      %s125 = ssub.s32 %s112, %s124
      %p126 = scmp.eq.s32.totalorder %s125, 0
      %s128 = sadd.s32 %s127, 1
      %s129 = scalar_select %p126, %s127, %s128
      %p132 = pneg %p126
      %p133 = scmp.eq.s32.totalorder %s105, 3
      %p134 = por %p132, %p133
      %p135 = scmp.ne.s32.totalorder %s127, %s130
      %p136 = scmp.eq.s32.totalorder %s105, 0
      %p137 = por %p135, %p136
      %p138 = scmp.ne.s32.totalorder %s127, %s130
      %p139 = scmp.eq.s32.totalorder %s110, 3
      %p140 = por %p138, %p139
      %p141 = scmp.ne.s32.totalorder %s130, %s131
      %p142 = scmp.eq.s32.totalorder %s110, 0
      %p143 = por %p141, %p142
      %p144 = scmp.ne.s32.totalorder %s130, %s131
      %p145 = scmp.eq.s32.totalorder %s111, 3
      %p146 = por %p144, %p145
      %p148 = scmp.ne.s32.totalorder %s131, %s147
      %p149 = scmp.eq.s32.totalorder %s111, 0
      %p150 = por %p148, %p149
      %s151 = ssub.s32 %s112, %s124
      %p152 = scmp.eq.s32.totalorder %s151, 0
      %s154 = sadd.s32 %s153, 1
      %s155 = scalar_select %p152, %s153, %s154
      %p158 = pneg %p152
      %p159 = scmp.eq.s32.totalorder %s105, 3
      %p160 = por %p158, %p159
      %p161 = scmp.ne.s32.totalorder %s153, %s156
      %p162 = scmp.eq.s32.totalorder %s105, 0
      %p163 = por %p161, %p162
      %p164 = scmp.ne.s32.totalorder %s153, %s156
      %p165 = scmp.eq.s32.totalorder %s110, 3
      %p166 = por %p164, %p165
      %p167 = scmp.ne.s32.totalorder %s156, %s157
      %p168 = scmp.eq.s32.totalorder %s110, 0
      %p169 = por %p167, %p168
      %p170 = scmp.ne.s32.totalorder %s156, %s157
      %p171 = scmp.eq.s32.totalorder %s111, 3
      %p172 = por %p170, %p171
      %p174 = scmp.ne.s32.totalorder %s157, %s173
      %p175 = scmp.eq.s32.totalorder %s111, 0
      %p176 = por %p174, %p175
      %s177 = ssub.s32 %s112, %s124
      %p178 = scmp.eq.s32.totalorder %s177, 0
      %s180 = sadd.s32 %s179, 1
      %s181 = scalar_select %p178, %s179, %s180
      %p184 = pneg %p178
      %p185 = scmp.eq.s32.totalorder %s105, 3
      %p186 = por %p184, %p185
      %p187 = scmp.ne.s32.totalorder %s179, %s182
      %p188 = scmp.eq.s32.totalorder %s105, 0
      %p189 = por %p187, %p188
      %p190 = scmp.ne.s32.totalorder %s179, %s182
      %p191 = scmp.eq.s32.totalorder %s110, 3
      %p192 = por %p190, %p191
      %p193 = scmp.ne.s32.totalorder %s182, %s183
      %p194 = scmp.eq.s32.totalorder %s110, 0
      %p195 = por %p193, %p194
      %p196 = scmp.ne.s32.totalorder %s182, %s183
      %p197 = scmp.eq.s32.totalorder %s111, 3
      %p198 = por %p196, %p197
      %p200 = scmp.ne.s32.totalorder %s183, %s199
      %p201 = scmp.eq.s32.totalorder %s111, 0
      %p202 = por %p200, %p201
      %s204 = sadd.s32 %s203, 1
      %p207 = scmp.eq.s32.totalorder %s105, 3
      %p208 = scmp.ne.s32.totalorder %s203, %s205
      %p209 = scmp.eq.s32.totalorder %s105, 0
      %p210 = por %p208, %p209
      %p211 = scmp.ne.s32.totalorder %s203, %s205
      %p212 = scmp.eq.s32.totalorder %s110, 3
      %p213 = por %p211, %p212
      %p214 = scmp.ne.s32.totalorder %s205, %s206
      %p215 = scmp.eq.s32.totalorder %s110, 0
      %p216 = por %p214, %p215
      %p217 = scmp.ne.s32.totalorder %s205, %s206
      %p218 = scmp.eq.s32.totalorder %s111, 3
      %p219 = por %p217, %p218
      %p221 = scmp.ne.s32.totalorder %s206, %s220
      %p222 = scmp.eq.s32.totalorder %s111, 0
      %p223 = por %p221, %p222
      %s225 = sadd.s32 %s224, 1
      %p228 = scmp.eq.s32.totalorder %s105, 3
      %p229 = scmp.ne.s32.totalorder %s224, %s226
      %p230 = scmp.eq.s32.totalorder %s105, 0
      %p231 = por %p229, %p230
      %p232 = scmp.ne.s32.totalorder %s224, %s226
      %p233 = scmp.eq.s32.totalorder %s110, 3
      %p234 = por %p232, %p233
      %p235 = scmp.ne.s32.totalorder %s226, %s227
      %p236 = scmp.eq.s32.totalorder %s110, 0
      %p237 = por %p235, %p236
      %p238 = scmp.ne.s32.totalorder %s226, %s227
      %p239 = scmp.eq.s32.totalorder %s111, 3
      %p240 = por %p238, %p239
      %p242 = scmp.ne.s32.totalorder %s227, %s241
      %p243 = scmp.eq.s32.totalorder %s111, 0
      %p244 = por %p242, %p243
      %s246 = sadd.s32 %s245, 1
      %p249 = scmp.eq.s32.totalorder %s105, 3
      %p250 = scmp.ne.s32.totalorder %s245, %s247
      %p251 = scmp.eq.s32.totalorder %s105, 0
      %p252 = por %p250, %p251
      %p253 = scmp.ne.s32.totalorder %s245, %s247
      %p254 = scmp.eq.s32.totalorder %s110, 3
      %p255 = por %p253, %p254
      %p256 = scmp.ne.s32.totalorder %s247, %s248
      %p257 = scmp.eq.s32.totalorder %s110, 0
      %p258 = por %p256, %p257
      %p259 = scmp.ne.s32.totalorder %s247, %s248
      %p260 = scmp.eq.s32.totalorder %s111, 3
      %p261 = por %p259, %p260
      %p263 = scmp.ne.s32.totalorder %s248, %s262
      %p264 = scmp.eq.s32.totalorder %s111, 0
      %p265 = por %p263, %p264
      %s267 = sadd.s32 %s266, 1
      %p270 = scmp.eq.s32.totalorder %s105, 3
      %p271 = scmp.ne.s32.totalorder %s266, %s268
      %p272 = scmp.eq.s32.totalorder %s105, 0
      %p273 = por %p271, %p272
      %p274 = scmp.ne.s32.totalorder %s266, %s268
      %p275 = scmp.eq.s32.totalorder %s110, 3
      %p276 = por %p274, %p275
      %p277 = scmp.ne.s32.totalorder %s268, %s269
      %p278 = scmp.eq.s32.totalorder %s110, 0
      %p279 = por %p277, %p278
      %p280 = scmp.ne.s32.totalorder %s268, %s269
      %p281 = scmp.eq.s32.totalorder %s111, 3
      %p282 = por %p280, %p281
      %p284 = scmp.ne.s32.totalorder %s269, %s283
      %p285 = scmp.eq.s32.totalorder %s111, 0
      %p286 = por %p284, %p285
      %s288 = sadd.s32 %s287, 1
      %p291 = scmp.eq.s32.totalorder %s105, 3
      %p292 = scmp.ne.s32.totalorder %s287, %s289
      %p293 = scmp.eq.s32.totalorder %s105, 0
      %p294 = por %p292, %p293
      %p295 = scmp.ne.s32.totalorder %s287, %s289
      %p296 = scmp.eq.s32.totalorder %s110, 3
      %p297 = por %p295, %p296
      %p298 = scmp.ne.s32.totalorder %s289, %s290
      %p299 = scmp.eq.s32.totalorder %s110, 0
      %p300 = por %p298, %p299
      %p301 = scmp.ne.s32.totalorder %s289, %s290
      %p302 = scmp.eq.s32.totalorder %s111, 3
      %p303 = por %p301, %p302
      %p305 = scmp.ne.s32.totalorder %s290, %s304
      %p306 = scmp.eq.s32.totalorder %s111, 0
      %p307 = por %p305, %p306
      %s309 = sadd.s32 %s308, 1
      %p312 = scmp.eq.s32.totalorder %s105, 3
      %p313 = scmp.ne.s32.totalorder %s308, %s310
      %p314 = scmp.eq.s32.totalorder %s105, 0
      %p315 = por %p313, %p314
      %p316 = scmp.ne.s32.totalorder %s308, %s310
      %p317 = scmp.eq.s32.totalorder %s110, 3
      %p318 = por %p316, %p317
      %p319 = scmp.ne.s32.totalorder %s310, %s311
      %p320 = scmp.eq.s32.totalorder %s110, 0
      %p321 = por %p319, %p320
      %p322 = scmp.ne.s32.totalorder %s310, %s311
      %p323 = scmp.eq.s32.totalorder %s111, 3
      %p324 = por %p322, %p323
      %p326 = scmp.ne.s32.totalorder %s311, %s325
      %p327 = scmp.eq.s32.totalorder %s111, 0
      %p328 = por %p326, %p327
      %s330 = sadd.s32 %s329, 1
      %p333 = scmp.eq.s32.totalorder %s105, 3
      %p334 = scmp.ne.s32.totalorder %s329, %s331
      %p335 = scmp.eq.s32.totalorder %s105, 0
      %p336 = por %p334, %p335
      %p337 = scmp.ne.s32.totalorder %s329, %s331
      %p338 = scmp.eq.s32.totalorder %s110, 3
      %p339 = por %p337, %p338
      %p340 = scmp.ne.s32.totalorder %s331, %s332
      %p341 = scmp.eq.s32.totalorder %s110, 0
      %p342 = por %p340, %p341
      %p343 = scmp.ne.s32.totalorder %s331, %s332
      %p344 = scmp.eq.s32.totalorder %s111, 3
      %p345 = por %p343, %p344
      %p347 = scmp.ne.s32.totalorder %s332, %s346
      %p348 = scmp.eq.s32.totalorder %s111, 0
      %p349 = por %p347, %p348
      %s351 = sadd.s32 %s350, 1
      %p354 = scmp.eq.s32.totalorder %s105, 3
      %p355 = scmp.ne.s32.totalorder %s350, %s352
      %p356 = scmp.eq.s32.totalorder %s105, 0
      %p357 = por %p355, %p356
      %p358 = scmp.ne.s32.totalorder %s350, %s352
      %p359 = scmp.eq.s32.totalorder %s110, 3
      %p360 = por %p358, %p359
      %p361 = scmp.ne.s32.totalorder %s352, %s353
      %p362 = scmp.eq.s32.totalorder %s110, 0
      %p363 = por %p361, %p362
      %p364 = scmp.ne.s32.totalorder %s352, %s353
      %p365 = scmp.eq.s32.totalorder %s111, 3
      %p366 = por %p364, %p365
      %p368 = scmp.ne.s32.totalorder %s353, %s367
      %p369 = scmp.eq.s32.totalorder %s111, 0
      %p370 = por %p368, %p369
      %s372 = sadd.s32 %s371, 1
      %p375 = scmp.eq.s32.totalorder %s105, 3
      %p376 = scmp.ne.s32.totalorder %s371, %s373
      %p377 = scmp.eq.s32.totalorder %s105, 0
      %p378 = por %p376, %p377
      %p379 = scmp.ne.s32.totalorder %s371, %s373
      %p380 = scmp.eq.s32.totalorder %s110, 3
      %p381 = por %p379, %p380
      %p382 = scmp.ne.s32.totalorder %s373, %s374
      %p383 = scmp.eq.s32.totalorder %s110, 0
      %p384 = por %p382, %p383
      %p385 = scmp.ne.s32.totalorder %s373, %s374
      %p386 = scmp.eq.s32.totalorder %s111, 3
      %p387 = por %p385, %p386
      %p389 = scmp.ne.s32.totalorder %s374, %s388
      %p390 = scmp.eq.s32.totalorder %s111, 0
      %p391 = por %p389, %p390
      %s393 = sadd.s32 %s392, 1
      %p396 = scmp.eq.s32.totalorder %s105, 3
      %p397 = scmp.ne.s32.totalorder %s392, %s394
      %p398 = scmp.eq.s32.totalorder %s105, 0
      %p399 = por %p397, %p398
      %p400 = scmp.ne.s32.totalorder %s392, %s394
      %p401 = scmp.eq.s32.totalorder %s110, 3
      %p402 = por %p400, %p401
      %p403 = scmp.ne.s32.totalorder %s394, %s395
      %p404 = scmp.eq.s32.totalorder %s110, 0
      %p405 = por %p403, %p404
      %p406 = scmp.ne.s32.totalorder %s394, %s395
      %p407 = scmp.eq.s32.totalorder %s111, 3
      %p408 = por %p406, %p407
      %p410 = scmp.ne.s32.totalorder %s395, %s409
      %p411 = scmp.eq.s32.totalorder %s111, 0
      %p412 = por %p410, %p411
      %s414 = sadd.s32 %s413, 1
      %p417 = scmp.eq.s32.totalorder %s105, 3
      %p418 = scmp.ne.s32.totalorder %s413, %s415
      %p419 = scmp.eq.s32.totalorder %s105, 0
      %p420 = por %p418, %p419
      %p421 = scmp.ne.s32.totalorder %s413, %s415
      %p422 = scmp.eq.s32.totalorder %s110, 3
      %p423 = por %p421, %p422
      %p424 = scmp.ne.s32.totalorder %s415, %s416
      %p425 = scmp.eq.s32.totalorder %s110, 0
      %p426 = por %p424, %p425
      %p427 = scmp.ne.s32.totalorder %s415, %s416
      %p428 = scmp.eq.s32.totalorder %s111, 3
      %p429 = por %p427, %p428
      %p431 = scmp.ne.s32.totalorder %s416, %s430
      %p432 = scmp.eq.s32.totalorder %s111, 0
      %p433 = por %p431, %p432
      %s435 = sadd.s32 %s434, 1
      %p438 = scmp.eq.s32.totalorder %s105, 3
      %p439 = scmp.ne.s32.totalorder %s434, %s436
      %p440 = scmp.eq.s32.totalorder %s105, 0
      %p441 = por %p439, %p440
      %p442 = scmp.ne.s32.totalorder %s434, %s436
      %p443 = scmp.eq.s32.totalorder %s110, 3
      %p444 = por %p442, %p443
      %p445 = scmp.ne.s32.totalorder %s436, %s437
      %p446 = scmp.eq.s32.totalorder %s110, 0
      %p447 = por %p445, %p446
      %p448 = scmp.ne.s32.totalorder %s436, %s437
      %p449 = scmp.eq.s32.totalorder %s111, 3
      %p450 = por %p448, %p449
      %p452 = scmp.ne.s32.totalorder %s437, %s451
      %p453 = scmp.eq.s32.totalorder %s111, 0
      %p454 = por %p452, %p453
      %s456 = sadd.s32 %s455, 1
      %p459 = scmp.eq.s32.totalorder %s105, 3
      %p460 = scmp.ne.s32.totalorder %s455, %s457
      %p461 = scmp.eq.s32.totalorder %s105, 0
      %p462 = por %p460, %p461
      %p463 = scmp.ne.s32.totalorder %s455, %s457
      %p464 = scmp.eq.s32.totalorder %s110, 3
      %p465 = por %p463, %p464
      %p466 = scmp.ne.s32.totalorder %s457, %s458
      %p467 = scmp.eq.s32.totalorder %s110, 0
      %p468 = por %p466, %p467
      %p469 = scmp.ne.s32.totalorder %s457, %s458
      %p470 = scmp.eq.s32.totalorder %s111, 3
      %p471 = por %p469, %p470
      %p473 = scmp.ne.s32.totalorder %s458, %s472
      %p474 = scmp.eq.s32.totalorder %s111, 0
      %p475 = por %p473, %p474
      %s477 = sadd.s32 %s476, 1
      %p480 = scmp.eq.s32.totalorder %s105, 3
      %p481 = scmp.ne.s32.totalorder %s476, %s478
      %p482 = scmp.eq.s32.totalorder %s105, 0
      %p483 = por %p481, %p482
      %p484 = scmp.ne.s32.totalorder %s476, %s478
      %p485 = scmp.eq.s32.totalorder %s110, 3
      %p486 = por %p484, %p485
      %p487 = scmp.ne.s32.totalorder %s478, %s479
      %p488 = scmp.eq.s32.totalorder %s110, 0
      %p489 = por %p487, %p488
      %p490 = scmp.ne.s32.totalorder %s478, %s479
      %p491 = scmp.eq.s32.totalorder %s111, 3
      %p492 = por %p490, %p491
      %p494 = scmp.ne.s32.totalorder %s479, %s493
      %p495 = scmp.eq.s32.totalorder %s111, 0
      %p496 = por %p494, %p495
      %s498 = sadd.s32 %s497, 1
      %p501 = scmp.eq.s32.totalorder %s105, 3
      %p502 = scmp.ne.s32.totalorder %s497, %s499
      %p503 = scmp.eq.s32.totalorder %s105, 0
      %p504 = por %p502, %p503
      %p505 = scmp.ne.s32.totalorder %s497, %s499
      %p506 = scmp.eq.s32.totalorder %s110, 3
      %p507 = por %p505, %p506
      %p508 = scmp.ne.s32.totalorder %s499, %s500
      %p509 = scmp.eq.s32.totalorder %s110, 0
      %p510 = por %p508, %p509
      %p511 = scmp.ne.s32.totalorder %s499, %s500
      %p512 = scmp.eq.s32.totalorder %s111, 3
      %p513 = por %p511, %p512
      %p515 = scmp.ne.s32.totalorder %s500, %s514
      %p516 = scmp.eq.s32.totalorder %s111, 0
      %p517 = por %p515, %p516
      %s518 = ssub.s32 %s113, %s120
      %p519 = scmp.eq.s32.totalorder %s518, 0
      %s521 = sadd.s32 %s520, 1
      %s522 = scalar_select %p519, %s520, %s521
      %p525 = pneg %p519
      %p526 = scmp.eq.s32.totalorder %s105, 3
      %p527 = por %p525, %p526
      %p528 = scmp.ne.s32.totalorder %s520, %s523
      %p529 = scmp.eq.s32.totalorder %s105, 0
      %p530 = por %p528, %p529
      %p531 = scmp.ne.s32.totalorder %s520, %s523
      %p532 = scmp.eq.s32.totalorder %s110, 3
      %p533 = por %p531, %p532
      %p534 = scmp.ne.s32.totalorder %s523, %s524
      %p535 = scmp.eq.s32.totalorder %s110, 0
      %p536 = por %p534, %p535
      %p537 = scmp.ne.s32.totalorder %s523, %s524
      %p538 = scmp.eq.s32.totalorder %s111, 3
      %p539 = por %p537, %p538
      %p541 = scmp.ne.s32.totalorder %s524, %s540
      %p542 = scmp.eq.s32.totalorder %s111, 0
      %p543 = por %p541, %p542
      %s544 = ssub.s32 %s113, %s120
      %p545 = scmp.eq.s32.totalorder %s544, 0
      %s547 = sadd.s32 %s546, 1
      %s548 = scalar_select %p545, %s546, %s547
      %p551 = pneg %p545
      %p552 = scmp.eq.s32.totalorder %s105, 3
      %p553 = por %p551, %p552
      %p554 = scmp.ne.s32.totalorder %s546, %s549
      %p555 = scmp.eq.s32.totalorder %s105, 0
      %p556 = por %p554, %p555
      %p557 = scmp.ne.s32.totalorder %s546, %s549
      %p558 = scmp.eq.s32.totalorder %s110, 3
      %p559 = por %p557, %p558
      %p560 = scmp.ne.s32.totalorder %s549, %s550
      %p561 = scmp.eq.s32.totalorder %s110, 0
      %p562 = por %p560, %p561
      %p563 = scmp.ne.s32.totalorder %s549, %s550
      %p564 = scmp.eq.s32.totalorder %s111, 3
      %p565 = por %p563, %p564
      %p567 = scmp.ne.s32.totalorder %s550, %s566
      %p568 = scmp.eq.s32.totalorder %s111, 0
      %p569 = por %p567, %p568
      %s570 = ssub.s32 %s113, %s120
      %p571 = scmp.eq.s32.totalorder %s570, 0
      %s573 = sadd.s32 %s572, 1
      %s574 = scalar_select %p571, %s572, %s573
      %p577 = pneg %p571
      %p578 = scmp.eq.s32.totalorder %s105, 3
      %p579 = por %p577, %p578
      %p580 = scmp.ne.s32.totalorder %s572, %s575
      %p581 = scmp.eq.s32.totalorder %s105, 0
      %p582 = por %p580, %p581
      %p583 = scmp.ne.s32.totalorder %s572, %s575
      %p584 = scmp.eq.s32.totalorder %s110, 3
      %p585 = por %p583, %p584
      %p586 = scmp.ne.s32.totalorder %s575, %s576
      %p587 = scmp.eq.s32.totalorder %s110, 0
      %p588 = por %p586, %p587
      %p589 = scmp.ne.s32.totalorder %s575, %s576
      %p590 = scmp.eq.s32.totalorder %s111, 3
      %p591 = por %p589, %p590
      %p593 = scmp.ne.s32.totalorder %s576, %s592
      %p594 = scmp.eq.s32.totalorder %s111, 0
      %p595 = por %p593, %p594
      %s596 = ssub.s32 %s113, %s120
      %p597 = scmp.eq.s32.totalorder %s596, 0
      %s599 = sadd.s32 %s598, 1
      %s600 = scalar_select %p597, %s598, %s599
      %p603 = pneg %p597
      %p604 = scmp.eq.s32.totalorder %s105, 3
      %p605 = por %p603, %p604
      %p606 = scmp.ne.s32.totalorder %s598, %s601
      %p607 = scmp.eq.s32.totalorder %s105, 0
      %p608 = por %p606, %p607
      %p609 = scmp.ne.s32.totalorder %s598, %s601
      %p610 = scmp.eq.s32.totalorder %s110, 3
      %p611 = por %p609, %p610
      %p612 = scmp.ne.s32.totalorder %s601, %s602
      %p613 = scmp.eq.s32.totalorder %s110, 0
      %p614 = por %p612, %p613
      %p615 = scmp.ne.s32.totalorder %s601, %s602
      %p616 = scmp.eq.s32.totalorder %s111, 3
      %p617 = por %p615, %p616
      %p619 = scmp.ne.s32.totalorder %s602, %s618
      %p620 = scmp.eq.s32.totalorder %s111, 0
      %p621 = por %p619, %p620
      %s622 = ssub.s32 %s113, %s120
      %p623 = scmp.eq.s32.totalorder %s622, 0
      %s625 = sadd.s32 %s624, 1
      %s626 = scalar_select %p623, %s624, %s625
      %p629 = pneg %p623
      %p630 = scmp.eq.s32.totalorder %s105, 3
      %p631 = por %p629, %p630
      %p632 = scmp.ne.s32.totalorder %s624, %s627
      %p633 = scmp.eq.s32.totalorder %s105, 0
      %p634 = por %p632, %p633
      %p635 = scmp.ne.s32.totalorder %s624, %s627
      %p636 = scmp.eq.s32.totalorder %s110, 3
      %p637 = por %p635, %p636
      %p638 = scmp.ne.s32.totalorder %s627, %s628
      %p639 = scmp.eq.s32.totalorder %s110, 0
      %p640 = por %p638, %p639
      %p641 = scmp.ne.s32.totalorder %s627, %s628
      %p642 = scmp.eq.s32.totalorder %s111, 3
      %p643 = por %p641, %p642
      %p645 = scmp.ne.s32.totalorder %s628, %s644
      %p646 = scmp.eq.s32.totalorder %s111, 0
      %p647 = por %p645, %p646
      %s648 = ssub.s32 %s113, %s120
      %p649 = scmp.eq.s32.totalorder %s648, 0
      %s651 = sadd.s32 %s650, 1
      %s652 = scalar_select %p649, %s650, %s651
      %p655 = pneg %p649
      %p656 = scmp.eq.s32.totalorder %s105, 3
      %p657 = por %p655, %p656
      %p658 = scmp.ne.s32.totalorder %s650, %s653
      %p659 = scmp.eq.s32.totalorder %s105, 0
      %p660 = por %p658, %p659
      %p661 = scmp.ne.s32.totalorder %s650, %s653
      %p662 = scmp.eq.s32.totalorder %s110, 3
      %p663 = por %p661, %p662
      %p664 = scmp.ne.s32.totalorder %s653, %s654
      %p665 = scmp.eq.s32.totalorder %s110, 0
      %p666 = por %p664, %p665
      %p667 = scmp.ne.s32.totalorder %s653, %s654
      %p668 = scmp.eq.s32.totalorder %s111, 3
      %p669 = por %p667, %p668
      %p671 = scmp.ne.s32.totalorder %s654, %s670
      %p672 = scmp.eq.s32.totalorder %s111, 0
      %p673 = por %p671, %p672
      %s674 = ssub.s32 %s113, %s120
      %p675 = scmp.eq.s32.totalorder %s674, 0
      %s677 = sadd.s32 %s676, 1
      %s678 = scalar_select %p675, %s676, %s677
      %p681 = pneg %p675
      %p682 = scmp.eq.s32.totalorder %s105, 3
      %p683 = por %p681, %p682
      %p684 = scmp.ne.s32.totalorder %s676, %s679
      %p685 = scmp.eq.s32.totalorder %s105, 0
      %p686 = por %p684, %p685
      %p687 = scmp.ne.s32.totalorder %s676, %s679
      %p688 = scmp.eq.s32.totalorder %s110, 3
      %p689 = por %p687, %p688
      %p690 = scmp.ne.s32.totalorder %s679, %s680
      %p691 = scmp.eq.s32.totalorder %s110, 0
      %p692 = por %p690, %p691
      %p693 = scmp.ne.s32.totalorder %s679, %s680
      %p694 = scmp.eq.s32.totalorder %s111, 3
      %p695 = por %p693, %p694
      %p697 = scmp.ne.s32.totalorder %s680, %s696
      %p698 = scmp.eq.s32.totalorder %s111, 0
      %p699 = por %p697, %p698
      %s700 = ssub.s32 %s113, %s120
      %p701 = scmp.eq.s32.totalorder %s700, 0
      %s703 = sadd.s32 %s702, 1
      %s704 = scalar_select %p701, %s702, %s703
      %p707 = pneg %p701
      %p708 = scmp.eq.s32.totalorder %s105, 3
      %p709 = por %p707, %p708
      %p710 = scmp.ne.s32.totalorder %s702, %s705
      %p711 = scmp.eq.s32.totalorder %s105, 0
      %p712 = por %p710, %p711
      %p713 = scmp.ne.s32.totalorder %s702, %s705
      %p714 = scmp.eq.s32.totalorder %s110, 3
      %p715 = por %p713, %p714
      %p716 = scmp.ne.s32.totalorder %s705, %s706
      %p717 = scmp.eq.s32.totalorder %s110, 0
      %p718 = por %p716, %p717
      %p719 = scmp.ne.s32.totalorder %s705, %s706
      %p720 = scmp.eq.s32.totalorder %s111, 3
      %p721 = por %p719, %p720
      %p723 = scmp.ne.s32.totalorder %s706, %s722
      %p724 = scmp.eq.s32.totalorder %s111, 0
      %p725 = por %p723, %p724
      %s726 = ssub.s32 %s113, %s120
      %p727 = scmp.eq.s32.totalorder %s726, 0
      %s729 = sadd.s32 %s728, 1
      %s730 = scalar_select %p727, %s728, %s729
      %p733 = pneg %p727
      %p734 = scmp.eq.s32.totalorder %s105, 3
      %p735 = por %p733, %p734
      %p736 = scmp.ne.s32.totalorder %s728, %s731
      %p737 = scmp.eq.s32.totalorder %s105, 0
      %p738 = por %p736, %p737
      %p739 = scmp.ne.s32.totalorder %s728, %s731
      %p740 = scmp.eq.s32.totalorder %s110, 3
      %p741 = por %p739, %p740
      %p742 = scmp.ne.s32.totalorder %s731, %s732
      %p743 = scmp.eq.s32.totalorder %s110, 0
      %p744 = por %p742, %p743
      %p745 = scmp.ne.s32.totalorder %s731, %s732
      %p746 = scmp.eq.s32.totalorder %s111, 3
      %p747 = por %p745, %p746
      %p749 = scmp.ne.s32.totalorder %s732, %s748
      %p750 = scmp.eq.s32.totalorder %s111, 0
      %p751 = por %p749, %p750
      %s752 = ssub.s32 %s113, %s120
      %p753 = scmp.eq.s32.totalorder %s752, 0
      %s755 = sadd.s32 %s754, 1
      %s756 = scalar_select %p753, %s754, %s755
      %p759 = pneg %p753
      %p760 = scmp.eq.s32.totalorder %s105, 3
      %p761 = por %p759, %p760
      %p762 = scmp.ne.s32.totalorder %s754, %s757
      %p763 = scmp.eq.s32.totalorder %s105, 0
      %p764 = por %p762, %p763
      %p765 = scmp.ne.s32.totalorder %s754, %s757
      %p766 = scmp.eq.s32.totalorder %s110, 3
      %p767 = por %p765, %p766
      %p768 = scmp.ne.s32.totalorder %s757, %s758
      %p769 = scmp.eq.s32.totalorder %s110, 0
      %p770 = por %p768, %p769
      %p771 = scmp.ne.s32.totalorder %s757, %s758
      %p772 = scmp.eq.s32.totalorder %s111, 3
      %p773 = por %p771, %p772
      %p775 = scmp.ne.s32.totalorder %s758, %s774
      %p776 = scmp.eq.s32.totalorder %s111, 0
      %p777 = por %p775, %p776
      %s778 = ssub.s32 %s113, %s120
      %p779 = scmp.eq.s32.totalorder %s778, 0
      %s781 = sadd.s32 %s780, 1
      %s782 = scalar_select %p779, %s780, %s781
      %p785 = pneg %p779
      %p786 = scmp.eq.s32.totalorder %s105, 3
      %p787 = por %p785, %p786
      %p788 = scmp.ne.s32.totalorder %s780, %s783
      %p789 = scmp.eq.s32.totalorder %s105, 0
      %p790 = por %p788, %p789
      %p791 = scmp.ne.s32.totalorder %s780, %s783
      %p792 = scmp.eq.s32.totalorder %s110, 3
      %p793 = por %p791, %p792
      %p794 = scmp.ne.s32.totalorder %s783, %s784
      %p795 = scmp.eq.s32.totalorder %s110, 0
      %p796 = por %p794, %p795
      %p797 = scmp.ne.s32.totalorder %s783, %s784
      %p798 = scmp.eq.s32.totalorder %s111, 3
      %p799 = por %p797, %p798
      %p801 = scmp.ne.s32.totalorder %s784, %s800
      %p802 = scmp.eq.s32.totalorder %s111, 0
      %p803 = por %p801, %p802
      %s804 = ssub.s32 %s113, %s120
      %p805 = scmp.eq.s32.totalorder %s804, 0
      %s807 = sadd.s32 %s806, 1
      %s808 = scalar_select %p805, %s806, %s807
      %p811 = pneg %p805
      %p812 = scmp.eq.s32.totalorder %s105, 3
      %p813 = por %p811, %p812
      %p814 = scmp.ne.s32.totalorder %s806, %s809
      %p815 = scmp.eq.s32.totalorder %s105, 0
      %p816 = por %p814, %p815
      %p817 = scmp.ne.s32.totalorder %s806, %s809
      %p818 = scmp.eq.s32.totalorder %s110, 3
      %p819 = por %p817, %p818
      %p820 = scmp.ne.s32.totalorder %s809, %s810
      %p821 = scmp.eq.s32.totalorder %s110, 0
      %p822 = por %p820, %p821
      %p823 = scmp.ne.s32.totalorder %s809, %s810
      %p824 = scmp.eq.s32.totalorder %s111, 3
      %p825 = por %p823, %p824
      %p827 = scmp.ne.s32.totalorder %s810, %s826
      %p828 = scmp.eq.s32.totalorder %s111, 0
      %p829 = por %p827, %p828
      %s831 = sadd.s32 %s830, 1
      %p834 = scmp.eq.s32.totalorder %s105, 3
      %p835 = scmp.ne.s32.totalorder %s830, %s832
      %p836 = scmp.eq.s32.totalorder %s105, 0
      %p837 = por %p835, %p836
      %p838 = scmp.ne.s32.totalorder %s830, %s832
      %p839 = scmp.eq.s32.totalorder %s110, 3
      %p840 = por %p838, %p839
      %p841 = scmp.ne.s32.totalorder %s832, %s833
      %p842 = scmp.eq.s32.totalorder %s110, 0
      %p843 = por %p841, %p842
      %p844 = scmp.ne.s32.totalorder %s832, %s833
      %p845 = scmp.eq.s32.totalorder %s111, 3
      %p846 = por %p844, %p845
      %p848 = scmp.ne.s32.totalorder %s833, %s847
      %p849 = scmp.eq.s32.totalorder %s111, 0
      %p850 = por %p848, %p849
      %s852 = sadd.s32 %s851, 1
      %p855 = scmp.eq.s32.totalorder %s105, 3
      %p856 = scmp.ne.s32.totalorder %s851, %s853
      %p857 = scmp.eq.s32.totalorder %s105, 0
      %p858 = por %p856, %p857
      %p859 = scmp.ne.s32.totalorder %s851, %s853
      %p860 = scmp.eq.s32.totalorder %s110, 3
      %p861 = por %p859, %p860
      %p862 = scmp.ne.s32.totalorder %s853, %s854
      %p863 = scmp.eq.s32.totalorder %s110, 0
      %p864 = por %p862, %p863
      %p865 = scmp.ne.s32.totalorder %s853, %s854
      %p866 = scmp.eq.s32.totalorder %s111, 3
      %p867 = por %p865, %p866
      %p869 = scmp.ne.s32.totalorder %s854, %s868
      %p870 = scmp.eq.s32.totalorder %s111, 0
      %p871 = por %p869, %p870
      %s873 = sadd.s32 %s872, 1
      %p876 = scmp.eq.s32.totalorder %s105, 3
      %p877 = scmp.ne.s32.totalorder %s872, %s874
      %p878 = scmp.eq.s32.totalorder %s105, 0
      %p879 = por %p877, %p878
      %p880 = scmp.ne.s32.totalorder %s872, %s874
      %p881 = scmp.eq.s32.totalorder %s110, 3
      %p882 = por %p880, %p881
      %p883 = scmp.ne.s32.totalorder %s874, %s875
      %p884 = scmp.eq.s32.totalorder %s110, 0
      %p885 = por %p883, %p884
      %p886 = scmp.ne.s32.totalorder %s874, %s875
      %p887 = scmp.eq.s32.totalorder %s111, 3
      %p888 = por %p886, %p887
      %p890 = scmp.ne.s32.totalorder %s875, %s889
      %p891 = scmp.eq.s32.totalorder %s111, 0
      %p892 = por %p890, %p891
      %s894 = sadd.s32 %s893, 1
      %p897 = scmp.eq.s32.totalorder %s105, 3
      %p898 = scmp.ne.s32.totalorder %s893, %s895
      %p899 = scmp.eq.s32.totalorder %s105, 0
      %p900 = por %p898, %p899
      %p901 = scmp.ne.s32.totalorder %s893, %s895
      %p902 = scmp.eq.s32.totalorder %s110, 3
      %p903 = por %p901, %p902
      %p904 = scmp.ne.s32.totalorder %s895, %s896
      %p905 = scmp.eq.s32.totalorder %s110, 0
      %p906 = por %p904, %p905
      %p907 = scmp.ne.s32.totalorder %s895, %s896
      %p908 = scmp.eq.s32.totalorder %s111, 3
      %p909 = por %p907, %p908
      %p911 = scmp.ne.s32.totalorder %s896, %s910
      %p912 = scmp.eq.s32.totalorder %s111, 0
      %p913 = por %p911, %p912
      %s914 = ssub.s32 %s112, %s124
      %p915 = scmp.eq.s32.totalorder %s914, 0
      %s917 = sadd.s32 %s916, 1
      %s918 = scalar_select %p915, %s916, %s917
      %p921 = pneg %p915
      %p922 = scmp.eq.s32.totalorder %s105, 3
      %p923 = por %p921, %p922
      %p924 = scmp.ne.s32.totalorder %s916, %s919
      %p925 = scmp.eq.s32.totalorder %s105, 0
      %p926 = por %p924, %p925
      %p927 = scmp.ne.s32.totalorder %s916, %s919
      %p928 = scmp.eq.s32.totalorder %s110, 3
      %p929 = por %p927, %p928
      %p930 = scmp.ne.s32.totalorder %s919, %s920
      %p931 = scmp.eq.s32.totalorder %s110, 0
      %p932 = por %p930, %p931
      %p933 = scmp.ne.s32.totalorder %s919, %s920
      %p934 = scmp.eq.s32.totalorder %s111, 3
      %p935 = por %p933, %p934
      %p937 = scmp.ne.s32.totalorder %s920, %s936
      %p938 = scmp.eq.s32.totalorder %s111, 0
      %p939 = por %p937, %p938
      %p940 = scmp.le.s32.totalorder 1, %s105
      %p941 = scmp.lt.s32.totalorder %s105, 5
      %p942 = pnand %p940, %p941
      %p943 = pneg %p942
      // Predicated region
      $region9: #{tpu_custom_call.1} parent=5 // pred_check
        _
      $region10: #{tpu_custom_call.1} parent=5 // pred_check_branch
        %945 = sbr.rel (%p942) target = $region12
      $region11: #{tpu_custom_call.1} parent=5 // pred_region
        %s946 = ssub.s32 %s105, 1
        // Predicated region
        $region13: #{tpu_custom_call.1} parent=11 // pred_check
          %p947 = pneg %p143
        $region14: #{tpu_custom_call.1} parent=11 // pred_check_branch
          %949 = sbr.rel (%p947) target = $region16
        $region15: #{tpu_custom_call.1} parent=11 // pred_region
          %s950 = smul.u32 5, %s114
          %s952 = ssub.s32 640, 640
          %953 = vsyncadd [#allocation4], %s952
          %s954 = smul.addr %s950, 2
          %s955 = smul.addr %s954, 64
          %s956 = scalar_lea.hbm %s1, %s955
          %s957 = sshll.u32 [#allocation3], 4
          %s958 = int_to_ptr.vmem [resolvable:$true] %s957
          %963 = dma.hbm_to_vmem [thread:$0]  %s956, 640, %s958, [#allocation4], 128, 128, 8
        $region16: #{tpu_custom_call.1} parent=11 // pred_fallthru
          _
        // Predicated region
        $region17: #{tpu_custom_call.1} parent=11 // pred_check
          %p964 = pneg %p169
        $region18: #{tpu_custom_call.1} parent=11 // pred_check_branch
          %966 = sbr.rel (%p964) target = $region20
        $region19: #{tpu_custom_call.1} parent=11 // pred_region
          %s967 = smul.u32 5, %s114
          %p968 = scmp.lt.s32.totalorder %s967, 4
          %s969 = scalar_select %p968, %s967, 4
          %s970 = smul.addr %s969, 8
          %s971 = scalar_lea.vmem %s3, %s970
          %s972 = smul.u32 5, %s114
        $region20: #{tpu_custom_call.1} parent=11 // pred_fallthru
          _
        // Predicated region
        $region21: #{tpu_custom_call.1} parent=11 // pred_check
          %p973 = pneg %p195
        $region22: #{tpu_custom_call.1} parent=11 // pred_check_branch
          %975 = sbr.rel (%p973) target = $region24
        $region23: #{tpu_custom_call.1} parent=11 // pred_region
          %s976 = smul.u32 5, %s114
          %s978 = ssub.s32 960, 960
          %979 = vsyncadd [#allocation7], %s978
          %s980 = smul.addr %s976, 3
          %s981 = smul.addr %s980, 64
          %s982 = scalar_lea.hbm %s5, %s981
          %s983 = sshll.u32 [#allocation6], 4
          %s984 = int_to_ptr.vmem [resolvable:$true] %s983
          %989 = dma.hbm_to_vmem [thread:$0]  %s982, 960, %s984, [#allocation7], 192, 192, 12
        $region24: #{tpu_custom_call.1} parent=11 // pred_fallthru
          _
        // Predicated region
        $region25: #{tpu_custom_call.1} parent=11 // pred_check
          %p990 = pneg %p216
        $region26: #{tpu_custom_call.1} parent=11 // pred_check_branch
          %992 = sbr.rel (%p990) target = $region28
        $region27: #{tpu_custom_call.1} parent=11 // pred_region
          %s994 = ssub.s32 1280, 1280
          %995 = vsyncadd [#allocation7], %s994
          %s996 = sshll.u32 [#allocation8], 4
          %s997 = int_to_ptr.vmem [resolvable:$true] %s996
          %1002 = dma.hbm_to_vmem [thread:$0]  %s7, 1280, %s997, [#allocation7], 256, 256, 16
        $region28: #{tpu_custom_call.1} parent=11 // pred_fallthru
          _
        // Predicated region
        $region29: #{tpu_custom_call.1} parent=11 // pred_check
          %p1003 = pneg %p237
        $region30: #{tpu_custom_call.1} parent=11 // pred_check_branch
          %1005 = sbr.rel (%p1003) target = $region32
        $region31: #{tpu_custom_call.1} parent=11 // pred_region
          %s1007 = ssub.s32 640, 640
          %1008 = vsyncadd [#allocation10], %s1007
          %s1009 = sshll.u32 [#allocation9], 4
          %s1010 = int_to_ptr.vmem [resolvable:$true] %s1009
          %1015 = dma.hbm_to_vmem [thread:$0]  %s9, 640, %s1010, [#allocation10], 128, 128, 8
        $region32: #{tpu_custom_call.1} parent=11 // pred_fallthru
          _
        // Predicated region
        $region33: #{tpu_custom_call.1} parent=11 // pred_check
          %p1016 = pneg %p258
        $region34: #{tpu_custom_call.1} parent=11 // pred_check_branch
          %1018 = sbr.rel (%p1016) target = $region36
        $region35: #{tpu_custom_call.1} parent=11 // pred_region
          %s1020 = ssub.s32 32, 32
          %1021 = vsyncadd [#allocation10], %s1020
          %s1023 = sshll.u32 [#allocation11], 4
          %s1024 = int_to_ptr.vmem [resolvable:$true] %s1023
          %1026 = dma.hbm_to_vmem [thread:$0]  %s11, 32, %s1024, [#allocation10]
        $region36: #{tpu_custom_call.1} parent=11 // pred_fallthru
          _
        // Predicated region
        $region37: #{tpu_custom_call.1} parent=11 // pred_check
          %p1027 = pneg %p279
        $region38: #{tpu_custom_call.1} parent=11 // pred_check_branch
          %1029 = sbr.rel (%p1027) target = $region40
        $region39: #{tpu_custom_call.1} parent=11 // pred_region
          %s1031 = ssub.s32 32, 32
          %1032 = vsyncadd [#allocation13], %s1031
          %s1034 = sshll.u32 [#allocation12], 4
          %s1035 = int_to_ptr.vmem [resolvable:$true] %s1034
          %1037 = dma.hbm_to_vmem [thread:$0]  %s13, 32, %s1035, [#allocation13]
        $region40: #{tpu_custom_call.1} parent=11 // pred_fallthru
          _
        // Predicated region
        $region41: #{tpu_custom_call.1} parent=11 // pred_check
          %p1038 = pneg %p300
        $region42: #{tpu_custom_call.1} parent=11 // pred_check_branch
          %1040 = sbr.rel (%p1038) target = $region44
        $region43: #{tpu_custom_call.1} parent=11 // pred_region
          %s1042 = ssub.s32 4096, 4096
          %1043 = vsyncadd [#allocation13], %s1042
          %s1044 = sshll.u32 [#allocation14], 4
          %s1045 = int_to_ptr.vmem [resolvable:$true] %s1044
          %1050 = dma.hbm_to_vmem [thread:$0]  %s15, 4096, %s1045, [#allocation13], 128, 128, 8
        $region44: #{tpu_custom_call.1} parent=11 // pred_fallthru
          _
        // Predicated region
        $region45: #{tpu_custom_call.1} parent=11 // pred_check
          %p1051 = pneg %p321
        $region46: #{tpu_custom_call.1} parent=11 // pred_check_branch
          %1053 = sbr.rel (%p1051) target = $region48
        $region47: #{tpu_custom_call.1} parent=11 // pred_region
          %s1055 = ssub.s32 32, 32
          %1056 = vsyncadd [#allocation16], %s1055
          %s1058 = sshll.u32 [#allocation15], 4
          %s1059 = int_to_ptr.vmem [resolvable:$true] %s1058
          %1061 = dma.hbm_to_vmem [thread:$0]  %s17, 32, %s1059, [#allocation16]
        $region48: #{tpu_custom_call.1} parent=11 // pred_fallthru
          _
        // Predicated region
        $region49: #{tpu_custom_call.1} parent=11 // pred_check
          %p1062 = pneg %p342
        $region50: #{tpu_custom_call.1} parent=11 // pred_check_branch
          %1064 = sbr.rel (%p1062) target = $region52
        $region51: #{tpu_custom_call.1} parent=11 // pred_region
          %s1066 = ssub.s32 5120, 5120
          %1067 = vsyncadd [#allocation16], %s1066
          %s1068 = sshll.u32 [#allocation17], 4
          %s1069 = int_to_ptr.vmem [resolvable:$true] %s1068
          %1074 = dma.hbm_to_vmem [thread:$0]  %s19, 5120, %s1069, [#allocation16], 128, 128, 8
        $region52: #{tpu_custom_call.1} parent=11 // pred_fallthru
          _
        // Predicated region
        $region53: #{tpu_custom_call.1} parent=11 // pred_check
          %p1075 = pneg %p363
        $region54: #{tpu_custom_call.1} parent=11 // pred_check_branch
          %1077 = sbr.rel (%p1075) target = $region56
        $region55: #{tpu_custom_call.1} parent=11 // pred_region
          %s1079 = ssub.s32 32, 32
          %1080 = vsyncadd [#allocation19], %s1079
          %s1082 = sshll.u32 [#allocation18], 4
          %s1083 = int_to_ptr.vmem [resolvable:$true] %s1082
          %1085 = dma.hbm_to_vmem [thread:$0]  %s21, 32, %s1083, [#allocation19]
        $region56: #{tpu_custom_call.1} parent=11 // pred_fallthru
          _
        // Predicated region
        $region57: #{tpu_custom_call.1} parent=11 // pred_check
          %p1086 = pneg %p384
        $region58: #{tpu_custom_call.1} parent=11 // pred_check_branch
          %1088 = sbr.rel (%p1086) target = $region60
        $region59: #{tpu_custom_call.1} parent=11 // pred_region
          %s1090 = ssub.s32 4096, 4096
          %1091 = vsyncadd [#allocation19], %s1090
          %s1092 = sshll.u32 [#allocation20], 4
          %s1093 = int_to_ptr.vmem [resolvable:$true] %s1092
          %1098 = dma.hbm_to_vmem [thread:$0]  %s23, 4096, %s1093, [#allocation19], 128, 128, 8
        $region60: #{tpu_custom_call.1} parent=11 // pred_fallthru
          _
        // Predicated region
        $region61: #{tpu_custom_call.1} parent=11 // pred_check
          %p1099 = pneg %p405
        $region62: #{tpu_custom_call.1} parent=11 // pred_check_branch
          %1101 = sbr.rel (%p1099) target = $region64
        $region63: #{tpu_custom_call.1} parent=11 // pred_region
          %s1103 = ssub.s32 4096, 4096
          %1104 = vsyncadd [#allocation22], %s1103
          %s1105 = sshll.u32 [#allocation21], 4
          %s1106 = int_to_ptr.vmem [resolvable:$true] %s1105
          %1111 = dma.hbm_to_vmem [thread:$0]  %s25, 4096, %s1106, [#allocation22], 128, 128, 8
        $region64: #{tpu_custom_call.1} parent=11 // pred_fallthru
          _
        // Predicated region
        $region65: #{tpu_custom_call.1} parent=11 // pred_check
          %p1112 = pneg %p426
        $region66: #{tpu_custom_call.1} parent=11 // pred_check_branch
          %1114 = sbr.rel (%p1112) target = $region68
        $region67: #{tpu_custom_call.1} parent=11 // pred_region
          %s1116 = ssub.s32 32, 32
          %1117 = vsyncadd [#allocation22], %s1116
          %s1119 = sshll.u32 [#allocation23], 4
          %s1120 = int_to_ptr.vmem [resolvable:$true] %s1119
          %1122 = dma.hbm_to_vmem [thread:$0]  %s27, 32, %s1120, [#allocation22]
        $region68: #{tpu_custom_call.1} parent=11 // pred_fallthru
          _
        // Predicated region
        $region69: #{tpu_custom_call.1} parent=11 // pred_check
          %p1123 = pneg %p447
        $region70: #{tpu_custom_call.1} parent=11 // pred_check_branch
          %1125 = sbr.rel (%p1123) target = $region72
        $region71: #{tpu_custom_call.1} parent=11 // pred_region
          %s1127 = ssub.s32 4096, 4096
          %1128 = vsyncadd [#allocation25], %s1127
          %s1129 = sshll.u32 [#allocation24], 4
          %s1130 = int_to_ptr.vmem [resolvable:$true] %s1129
          %1135 = dma.hbm_to_vmem [thread:$0]  %s29, 4096, %s1130, [#allocation25], 128, 128, 8
        $region72: #{tpu_custom_call.1} parent=11 // pred_fallthru
          _
        // Predicated region
        $region73: #{tpu_custom_call.1} parent=11 // pred_check
          %p1136 = pneg %p468
        $region74: #{tpu_custom_call.1} parent=11 // pred_check_branch
          %1138 = sbr.rel (%p1136) target = $region76
        $region75: #{tpu_custom_call.1} parent=11 // pred_region
          %s1140 = ssub.s32 32, 32
          %1141 = vsyncadd [#allocation25], %s1140
          %s1143 = sshll.u32 [#allocation26], 4
          %s1144 = int_to_ptr.vmem [resolvable:$true] %s1143
          %1146 = dma.hbm_to_vmem [thread:$0]  %s31, 32, %s1144, [#allocation25]
        $region76: #{tpu_custom_call.1} parent=11 // pred_fallthru
          _
        // Predicated region
        $region77: #{tpu_custom_call.1} parent=11 // pred_check
          %p1147 = pneg %p489
        $region78: #{tpu_custom_call.1} parent=11 // pred_check_branch
          %1149 = sbr.rel (%p1147) target = $region80
        $region79: #{tpu_custom_call.1} parent=11 // pred_region
          %s1151 = ssub.s32 32, 32
          %1152 = vsyncadd [#allocation28], %s1151
          %s1154 = sshll.u32 [#allocation27], 4
          %s1155 = int_to_ptr.vmem [resolvable:$true] %s1154
          %1157 = dma.hbm_to_vmem [thread:$0]  %s33, 32, %s1155, [#allocation28]
        $region80: #{tpu_custom_call.1} parent=11 // pred_fallthru
          _
        // Predicated region
        $region81: #{tpu_custom_call.1} parent=11 // pred_check
          %p1158 = pneg %p510
        $region82: #{tpu_custom_call.1} parent=11 // pred_check_branch
          %1160 = sbr.rel (%p1158) target = $region84
        $region83: #{tpu_custom_call.1} parent=11 // pred_region
          %s1162 = ssub.s32 32, 32
          %1163 = vsyncadd [#allocation28], %s1162
          %s1165 = sshll.u32 [#allocation29], 4
          %s1166 = int_to_ptr.vmem [resolvable:$true] %s1165
          %1168 = dma.hbm_to_vmem [thread:$0]  %s35, 32, %s1166, [#allocation28]
        $region84: #{tpu_custom_call.1} parent=11 // pred_fallthru
          _
        // Predicated region
        $region85: #{tpu_custom_call.1} parent=11 // pred_check
          %p1169 = pneg %p843
        $region86: #{tpu_custom_call.1} parent=11 // pred_check_branch
          %1171 = sbr.rel (%p1169) target = $region88
        $region87: #{tpu_custom_call.1} parent=11 // pred_region
          %s1173 = ssub.s32 4096, 4096
          %1174 = vsyncadd [#allocation49], %s1173
          %s1175 = sshll.u32 [#allocation48], 4
          %s1176 = int_to_ptr.vmem [resolvable:$true] %s1175
          %1181 = dma.hbm_to_vmem [thread:$0]  %s61, 4096, %s1176, [#allocation49], 128, 128, 8
        $region88: #{tpu_custom_call.1} parent=11 // pred_fallthru
          _
        // Predicated region
        $region89: #{tpu_custom_call.1} parent=11 // pred_check
          %p1182 = pneg %p864
        $region90: #{tpu_custom_call.1} parent=11 // pred_check_branch
          %1184 = sbr.rel (%p1182) target = $region92
        $region91: #{tpu_custom_call.1} parent=11 // pred_region
          %s1186 = ssub.s32 32, 32
          %1187 = vsyncadd [#allocation49], %s1186
          %s1189 = sshll.u32 [#allocation50], 4
          %s1190 = int_to_ptr.vmem [resolvable:$true] %s1189
          %1192 = dma.hbm_to_vmem [thread:$0]  %s63, 32, %s1190, [#allocation49]
        $region92: #{tpu_custom_call.1} parent=11 // pred_fallthru
          _
        // Predicated region
        $region93: #{tpu_custom_call.1} parent=11 // pred_check
          %p1193 = pneg %p885
        $region94: #{tpu_custom_call.1} parent=11 // pred_check_branch
          %1195 = sbr.rel (%p1193) target = $region96
        $region95: #{tpu_custom_call.1} parent=11 // pred_region
          %s1197 = ssub.s32 2048, 2048
          %1198 = vsyncadd [#allocation52], %s1197
          %s1199 = sshll.u32 [#allocation51], 4
          %s1200 = int_to_ptr.vmem [resolvable:$true] %s1199
          %1205 = dma.hbm_to_vmem [thread:$0]  %s65, 2048, %s1200, [#allocation52], 64, 64, 4
        $region96: #{tpu_custom_call.1} parent=11 // pred_fallthru
          _
        // Predicated region
        $region97: #{tpu_custom_call.1} parent=11 // pred_check
          %p1206 = pneg %p906
        $region98: #{tpu_custom_call.1} parent=11 // pred_check_branch
          %1208 = sbr.rel (%p1206) target = $region100
        $region99: #{tpu_custom_call.1} parent=11 // pred_region
          %s1210 = ssub.s32 16, 16
          %1211 = vsyncadd [#allocation52], %s1210
          %s1213 = sshll.u32 [#allocation53], 4
          %s1214 = int_to_ptr.vmem [resolvable:$true] %s1213
          %1216 = dma.hbm_to_vmem [thread:$0]  %s67, 16, %s1214, [#allocation52]
        $region100: #{tpu_custom_call.1} parent=11 // pred_fallthru
          _
      $region12: #{tpu_custom_call.1} parent=5 // pred_fallthru
        _
      %p1217 = scmp.lt.s32.totalorder %s105, 4
      // Predicated region
      $region101: #{tpu_custom_call.1} parent=5 // pred_check
        %p1218 = pneg %p1217
      $region102: #{tpu_custom_call.1} parent=5 // pred_check_branch
        %1220 = sbr.rel (%p1218) target = $region104
      $region103: #{tpu_custom_call.1} parent=5 // pred_region
        // Predicated region
        $region105: #{tpu_custom_call.1} parent=103 // pred_check
          %p1221 = pneg %p530
        $region106: #{tpu_custom_call.1} parent=103 // pred_check_branch
          %1223 = sbr.rel (%p1221) target = $region108
        $region107: #{tpu_custom_call.1} parent=103 // pred_region
          %s1224 = sand.u32 %s105, 1
          %s1225 = scalar_lea.sflag [#allocation31], %s1224
          %s1226 = sand.u32 %s520, 1
          %s1227 = smul.addr %s1226, 2
          %s1228 = scalar_lea.vmem [#allocation30], %s1227
          %s1230 = ssub.s32 32, 32
          %1231 = vsyncadd %s1225, %s1230
          %s1232 = smul.addr %s113, 2
          %s1233 = smul.addr %s1232, 16
          %s1234 = scalar_lea.hbm %s37, %s1233
          %s1236 = sshll.u32 %s1228, 4
          %s1237 = int_to_ptr.vmem [resolvable:$true] %s1236
          %1239 = dma.hbm_to_vmem [thread:$0]  %s1234, 32, %s1237, %s1225
        $region108: #{tpu_custom_call.1} parent=103 // pred_fallthru
          _
        // Predicated region
        $region109: #{tpu_custom_call.1} parent=103 // pred_check
          %p1240 = pneg %p556
        $region110: #{tpu_custom_call.1} parent=103 // pred_check_branch
          %1242 = sbr.rel (%p1240) target = $region112
        $region111: #{tpu_custom_call.1} parent=103 // pred_region
          %s1243 = sand.u32 %s105, 1
          %s1244 = scalar_lea.sflag [#allocation31], %s1243
          %s1245 = sand.u32 %s546, 1
          %s1246 = smul.addr %s1245, 2
          %s1247 = scalar_lea.vmem [#allocation32], %s1246
          %s1249 = ssub.s32 32, 32
          %1250 = vsyncadd %s1244, %s1249
          %s1251 = smul.addr %s113, 2
          %s1252 = smul.addr %s1251, 16
          %s1253 = scalar_lea.hbm %s39, %s1252
          %s1255 = sshll.u32 %s1247, 4
          %s1256 = int_to_ptr.vmem [resolvable:$true] %s1255
          %1258 = dma.hbm_to_vmem [thread:$0]  %s1253, 32, %s1256, %s1244
        $region112: #{tpu_custom_call.1} parent=103 // pred_fallthru
          _
        // Predicated region
        $region113: #{tpu_custom_call.1} parent=103 // pred_check
          %p1259 = pneg %p582
        $region114: #{tpu_custom_call.1} parent=103 // pred_check_branch
          %1261 = sbr.rel (%p1259) target = $region116
        $region115: #{tpu_custom_call.1} parent=103 // pred_region
          %s1262 = sand.u32 %s105, 1
          %s1263 = scalar_lea.sflag [#allocation34], %s1262
          %s1264 = sand.u32 %s572, 1
          %s1265 = smul.addr %s1264, 768
          %s1266 = scalar_lea.vmem [#allocation33], %s1265
          %s1268 = ssub.s32 12288, 12288
          %1269 = vsyncadd %s1263, %s1268
          %s1270 = smul.addr %s113, 192
          %s1271 = smul.addr %s1270, 64
          %s1272 = scalar_lea.hbm %s41, %s1271
          %s1273 = sshll.u32 %s1266, 4
          %s1274 = int_to_ptr.vmem [resolvable:$true] %s1273
          %1279 = dma.hbm_to_vmem [thread:$0]  %s1272, 12288, %s1274, %s1263, 384, 384, 24
        $region116: #{tpu_custom_call.1} parent=103 // pred_fallthru
          _
        // Predicated region
        $region117: #{tpu_custom_call.1} parent=103 // pred_check
          %p1280 = pneg %p608
        $region118: #{tpu_custom_call.1} parent=103 // pred_check_branch
          %1282 = sbr.rel (%p1280) target = $region120
        $region119: #{tpu_custom_call.1} parent=103 // pred_region
          %s1283 = sand.u32 %s105, 1
          %s1284 = scalar_lea.sflag [#allocation34], %s1283
          %s1285 = sand.u32 %s598, 1
          %s1286 = smul.addr %s1285, 6
          %s1287 = scalar_lea.vmem [#allocation35], %s1286
          %s1289 = ssub.s32 96, 96
          %1290 = vsyncadd %s1284, %s1289
          %s1291 = smul.addr %s113, 6
          %s1292 = smul.addr %s1291, 16
          %s1293 = scalar_lea.hbm %s43, %s1292
          %s1295 = sshll.u32 %s1287, 4
          %s1296 = int_to_ptr.vmem [resolvable:$true] %s1295
          %1298 = dma.hbm_to_vmem [thread:$0]  %s1293, 96, %s1296, %s1284
        $region120: #{tpu_custom_call.1} parent=103 // pred_fallthru
          _
        // Predicated region
        $region121: #{tpu_custom_call.1} parent=103 // pred_check
          %p1299 = pneg %p634
        $region122: #{tpu_custom_call.1} parent=103 // pred_check_branch
          %1301 = sbr.rel (%p1299) target = $region124
        $region123: #{tpu_custom_call.1} parent=103 // pred_region
          %s1302 = sand.u32 %s105, 1
          %s1303 = scalar_lea.sflag [#allocation37], %s1302
          %s1304 = sand.u32 %s624, 1
          %s1305 = smul.addr %s1304, 256
          %s1306 = scalar_lea.vmem [#allocation36], %s1305
          %s1308 = ssub.s32 4096, 4096
          %1309 = vsyncadd %s1303, %s1308
          %s1310 = smul.addr %s113, 64
          %s1311 = smul.addr %s1310, 64
          %s1312 = scalar_lea.hbm %s45, %s1311
          %s1313 = sshll.u32 %s1306, 4
          %s1314 = int_to_ptr.vmem [resolvable:$true] %s1313
          %1319 = dma.hbm_to_vmem [thread:$0]  %s1312, 4096, %s1314, %s1303, 128, 128, 8
        $region124: #{tpu_custom_call.1} parent=103 // pred_fallthru
          _
        // Predicated region
        $region125: #{tpu_custom_call.1} parent=103 // pred_check
          %p1320 = pneg %p660
        $region126: #{tpu_custom_call.1} parent=103 // pred_check_branch
          %1322 = sbr.rel (%p1320) target = $region128
        $region127: #{tpu_custom_call.1} parent=103 // pred_region
          %s1323 = sand.u32 %s105, 1
          %s1324 = scalar_lea.sflag [#allocation37], %s1323
          %s1325 = sand.u32 %s650, 1
          %s1326 = smul.addr %s1325, 2
          %s1327 = scalar_lea.vmem [#allocation38], %s1326
          %s1329 = ssub.s32 32, 32
          %1330 = vsyncadd %s1324, %s1329
          %s1331 = smul.addr %s113, 2
          %s1332 = smul.addr %s1331, 16
          %s1333 = scalar_lea.hbm %s47, %s1332
          %s1335 = sshll.u32 %s1327, 4
          %s1336 = int_to_ptr.vmem [resolvable:$true] %s1335
          %1338 = dma.hbm_to_vmem [thread:$0]  %s1333, 32, %s1336, %s1324
        $region128: #{tpu_custom_call.1} parent=103 // pred_fallthru
          _
        // Predicated region
        $region129: #{tpu_custom_call.1} parent=103 // pred_check
          %p1339 = pneg %p686
        $region130: #{tpu_custom_call.1} parent=103 // pred_check_branch
          %1341 = sbr.rel (%p1339) target = $region132
        $region131: #{tpu_custom_call.1} parent=103 // pred_region
          %s1342 = sand.u32 %s105, 1
          %s1343 = scalar_lea.sflag [#allocation40], %s1342
          %s1344 = sand.u32 %s676, 1
          %s1345 = smul.addr %s1344, 2
          %s1346 = scalar_lea.vmem [#allocation39], %s1345
          %s1348 = ssub.s32 32, 32
          %1349 = vsyncadd %s1343, %s1348
          %s1350 = smul.addr %s113, 2
          %s1351 = smul.addr %s1350, 16
          %s1352 = scalar_lea.hbm %s49, %s1351
          %s1354 = sshll.u32 %s1346, 4
          %s1355 = int_to_ptr.vmem [resolvable:$true] %s1354
          %1357 = dma.hbm_to_vmem [thread:$0]  %s1352, 32, %s1355, %s1343
        $region132: #{tpu_custom_call.1} parent=103 // pred_fallthru
          _
        // Predicated region
        $region133: #{tpu_custom_call.1} parent=103 // pred_check
          %p1358 = pneg %p712
        $region134: #{tpu_custom_call.1} parent=103 // pred_check_branch
          %1360 = sbr.rel (%p1358) target = $region136
        $region135: #{tpu_custom_call.1} parent=103 // pred_region
          %s1361 = sand.u32 %s105, 1
          %s1362 = scalar_lea.sflag [#allocation40], %s1361
          %s1363 = sand.u32 %s702, 1
          %s1364 = smul.addr %s1363, 2
          %s1365 = scalar_lea.vmem [#allocation41], %s1364
          %s1367 = ssub.s32 32, 32
          %1368 = vsyncadd %s1362, %s1367
          %s1369 = smul.addr %s113, 2
          %s1370 = smul.addr %s1369, 16
          %s1371 = scalar_lea.hbm %s51, %s1370
          %s1373 = sshll.u32 %s1365, 4
          %s1374 = int_to_ptr.vmem [resolvable:$true] %s1373
          %1376 = dma.hbm_to_vmem [thread:$0]  %s1371, 32, %s1374, %s1362
        $region136: #{tpu_custom_call.1} parent=103 // pred_fallthru
          _
        // Predicated region
        $region137: #{tpu_custom_call.1} parent=103 // pred_check
          %p1377 = pneg %p738
        $region138: #{tpu_custom_call.1} parent=103 // pred_check_branch
          %1379 = sbr.rel (%p1377) target = $region140
        $region139: #{tpu_custom_call.1} parent=103 // pred_region
          %s1380 = sand.u32 %s105, 1
          %s1381 = scalar_lea.sflag [#allocation43], %s1380
          %s1382 = sand.u32 %s728, 1
          %s1383 = smul.addr %s1382, 768
          %s1384 = scalar_lea.vmem [#allocation42], %s1383
          %s1386 = ssub.s32 12288, 12288
          %1387 = vsyncadd %s1381, %s1386
          %s1388 = smul.addr %s113, 192
          %s1389 = smul.addr %s1388, 64
          %s1390 = scalar_lea.hbm %s53, %s1389
          %s1391 = sshll.u32 %s1384, 4
          %s1392 = int_to_ptr.vmem [resolvable:$true] %s1391
          %1397 = dma.hbm_to_vmem [thread:$0]  %s1390, 12288, %s1392, %s1381, 384, 384, 24
        $region140: #{tpu_custom_call.1} parent=103 // pred_fallthru
          _
        // Predicated region
        $region141: #{tpu_custom_call.1} parent=103 // pred_check
          %p1398 = pneg %p764
        $region142: #{tpu_custom_call.1} parent=103 // pred_check_branch
          %1400 = sbr.rel (%p1398) target = $region144
        $region143: #{tpu_custom_call.1} parent=103 // pred_region
          %s1401 = sand.u32 %s105, 1
          %s1402 = scalar_lea.sflag [#allocation43], %s1401
          %s1403 = sand.u32 %s754, 1
          %s1404 = smul.addr %s1403, 6
          %s1405 = scalar_lea.vmem [#allocation44], %s1404
          %s1407 = ssub.s32 96, 96
          %1408 = vsyncadd %s1402, %s1407
          %s1409 = smul.addr %s113, 6
          %s1410 = smul.addr %s1409, 16
          %s1411 = scalar_lea.hbm %s55, %s1410
          %s1413 = sshll.u32 %s1405, 4
          %s1414 = int_to_ptr.vmem [resolvable:$true] %s1413
          %1416 = dma.hbm_to_vmem [thread:$0]  %s1411, 96, %s1414, %s1402
        $region144: #{tpu_custom_call.1} parent=103 // pred_fallthru
          _
        // Predicated region
        $region145: #{tpu_custom_call.1} parent=103 // pred_check
          %p1417 = pneg %p790
        $region146: #{tpu_custom_call.1} parent=103 // pred_check_branch
          %1419 = sbr.rel (%p1417) target = $region148
        $region147: #{tpu_custom_call.1} parent=103 // pred_region
          %s1420 = sand.u32 %s105, 1
          %s1421 = scalar_lea.sflag [#allocation46], %s1420
          %s1422 = sand.u32 %s780, 1
          %s1423 = smul.addr %s1422, 768
          %s1424 = scalar_lea.vmem [#allocation45], %s1423
          %s1426 = ssub.s32 12288, 12288
          %1427 = vsyncadd %s1421, %s1426
          %s1428 = smul.addr %s113, 192
          %s1429 = smul.addr %s1428, 64
          %s1430 = scalar_lea.hbm %s57, %s1429
          %s1431 = sshll.u32 %s1424, 4
          %s1432 = int_to_ptr.vmem [resolvable:$true] %s1431
          %1437 = dma.hbm_to_vmem [thread:$0]  %s1430, 12288, %s1432, %s1421, 128, 128, 8
        $region148: #{tpu_custom_call.1} parent=103 // pred_fallthru
          _
        // Predicated region
        $region149: #{tpu_custom_call.1} parent=103 // pred_check
          %p1438 = pneg %p816
        $region150: #{tpu_custom_call.1} parent=103 // pred_check_branch
          %1440 = sbr.rel (%p1438) target = $region152
        $region151: #{tpu_custom_call.1} parent=103 // pred_region
          %s1441 = sand.u32 %s105, 1
          %s1442 = scalar_lea.sflag [#allocation46], %s1441
          %s1443 = sand.u32 %s806, 1
          %s1444 = smul.addr %s1443, 2
          %s1445 = scalar_lea.vmem [#allocation47], %s1444
          %s1447 = ssub.s32 32, 32
          %1448 = vsyncadd %s1442, %s1447
          %s1449 = smul.addr %s113, 2
          %s1450 = smul.addr %s1449, 16
          %s1451 = scalar_lea.hbm %s59, %s1450
          %s1453 = sshll.u32 %s1445, 4
          %s1454 = int_to_ptr.vmem [resolvable:$true] %s1453
          %1456 = dma.hbm_to_vmem [thread:$0]  %s1451, 32, %s1454, %s1442
        $region152: #{tpu_custom_call.1} parent=103 // pred_fallthru
          _
      $region104: #{tpu_custom_call.1} parent=5 // pred_fallthru
        _
      %p1457 = scmp.le.s32.totalorder 1, %s105
      %p1458 = scmp.lt.s32.totalorder %s105, 5
      %p1459 = pnand %p1457, %p1458
      %p1460 = pneg %p1459
      // Predicated region
      $region153: #{tpu_custom_call.1} parent=5 // pred_check
        _
      $region154: #{tpu_custom_call.1} parent=5 // pred_check_branch
        %1462 = sbr.rel (%p1459) target = $region156
      $region155: #{tpu_custom_call.1} parent=5 // pred_region
        %s1463 = ssub.s32 %s105, 1
        // Predicated region
        $region157: #{tpu_custom_call.1} parent=155 // pred_check
          %p1464 = pneg %p143
        $region158: #{tpu_custom_call.1} parent=155 // pred_check_branch
          %1466 = sbr.rel (%p1464) target = $region160
        $region159: #{tpu_custom_call.1} parent=155 // pred_region
          %1467 = dma.done [#allocation4], 640
        $region160: #{tpu_custom_call.1} parent=155 // pred_fallthru
          _
        // Predicated region
        $region161: #{tpu_custom_call.1} parent=155 // pred_check
          %p1468 = pneg %p195
        $region162: #{tpu_custom_call.1} parent=155 // pred_check_branch
          %1470 = sbr.rel (%p1468) target = $region164
        $region163: #{tpu_custom_call.1} parent=155 // pred_region
          %1471 = dma.done [#allocation7], 960
        $region164: #{tpu_custom_call.1} parent=155 // pred_fallthru
          _
        // Predicated region
        $region165: #{tpu_custom_call.1} parent=155 // pred_check
          %p1472 = pneg %p216
        $region166: #{tpu_custom_call.1} parent=155 // pred_check_branch
          %1474 = sbr.rel (%p1472) target = $region168
        $region167: #{tpu_custom_call.1} parent=155 // pred_region
          %1475 = dma.done [#allocation7], 1280
        $region168: #{tpu_custom_call.1} parent=155 // pred_fallthru
          _
        // Predicated region
        $region169: #{tpu_custom_call.1} parent=155 // pred_check
          %p1476 = pneg %p237
        $region170: #{tpu_custom_call.1} parent=155 // pred_check_branch
          %1478 = sbr.rel (%p1476) target = $region172
        $region171: #{tpu_custom_call.1} parent=155 // pred_region
          %1479 = dma.done [#allocation10], 640
        $region172: #{tpu_custom_call.1} parent=155 // pred_fallthru
          _
        // Predicated region
        $region173: #{tpu_custom_call.1} parent=155 // pred_check
          %p1480 = pneg %p258
        $region174: #{tpu_custom_call.1} parent=155 // pred_check_branch
          %1482 = sbr.rel (%p1480) target = $region176
        $region175: #{tpu_custom_call.1} parent=155 // pred_region
          %1483 = dma.done [#allocation10], 32
        $region176: #{tpu_custom_call.1} parent=155 // pred_fallthru
          _
        // Predicated region
        $region177: #{tpu_custom_call.1} parent=155 // pred_check
          %p1484 = pneg %p279
        $region178: #{tpu_custom_call.1} parent=155 // pred_check_branch
          %1486 = sbr.rel (%p1484) target = $region180
        $region179: #{tpu_custom_call.1} parent=155 // pred_region
          %1487 = dma.done [#allocation13], 32
        $region180: #{tpu_custom_call.1} parent=155 // pred_fallthru
          _
        // Predicated region
        $region181: #{tpu_custom_call.1} parent=155 // pred_check
          %p1488 = pneg %p300
        $region182: #{tpu_custom_call.1} parent=155 // pred_check_branch
          %1490 = sbr.rel (%p1488) target = $region184
        $region183: #{tpu_custom_call.1} parent=155 // pred_region
          %1491 = dma.done [#allocation13], 4096
        $region184: #{tpu_custom_call.1} parent=155 // pred_fallthru
          _
        // Predicated region
        $region185: #{tpu_custom_call.1} parent=155 // pred_check
          %p1492 = pneg %p321
        $region186: #{tpu_custom_call.1} parent=155 // pred_check_branch
          %1494 = sbr.rel (%p1492) target = $region188
        $region187: #{tpu_custom_call.1} parent=155 // pred_region
          %1495 = dma.done [#allocation16], 32
        $region188: #{tpu_custom_call.1} parent=155 // pred_fallthru
          _
        // Predicated region
        $region189: #{tpu_custom_call.1} parent=155 // pred_check
          %p1496 = pneg %p342
        $region190: #{tpu_custom_call.1} parent=155 // pred_check_branch
          %1498 = sbr.rel (%p1496) target = $region192
        $region191: #{tpu_custom_call.1} parent=155 // pred_region
          %1499 = dma.done [#allocation16], 5120
        $region192: #{tpu_custom_call.1} parent=155 // pred_fallthru
          _
        // Predicated region
        $region193: #{tpu_custom_call.1} parent=155 // pred_check
          %p1500 = pneg %p363
        $region194: #{tpu_custom_call.1} parent=155 // pred_check_branch
          %1502 = sbr.rel (%p1500) target = $region196
        $region195: #{tpu_custom_call.1} parent=155 // pred_region
          %1503 = dma.done [#allocation19], 32
        $region196: #{tpu_custom_call.1} parent=155 // pred_fallthru
          _
        // Predicated region
        $region197: #{tpu_custom_call.1} parent=155 // pred_check
          %p1504 = pneg %p384
        $region198: #{tpu_custom_call.1} parent=155 // pred_check_branch
          %1506 = sbr.rel (%p1504) target = $region200
        $region199: #{tpu_custom_call.1} parent=155 // pred_region
          %1507 = dma.done [#allocation19], 4096
        $region200: #{tpu_custom_call.1} parent=155 // pred_fallthru
          _
        // Predicated region
        $region201: #{tpu_custom_call.1} parent=155 // pred_check
          %p1508 = pneg %p405
        $region202: #{tpu_custom_call.1} parent=155 // pred_check_branch
          %1510 = sbr.rel (%p1508) target = $region204
        $region203: #{tpu_custom_call.1} parent=155 // pred_region
          %1511 = dma.done [#allocation22], 4096
        $region204: #{tpu_custom_call.1} parent=155 // pred_fallthru
          _
        // Predicated region
        $region205: #{tpu_custom_call.1} parent=155 // pred_check
          %p1512 = pneg %p426
        $region206: #{tpu_custom_call.1} parent=155 // pred_check_branch
          %1514 = sbr.rel (%p1512) target = $region208
        $region207: #{tpu_custom_call.1} parent=155 // pred_region
          %1515 = dma.done [#allocation22], 32
        $region208: #{tpu_custom_call.1} parent=155 // pred_fallthru
          _
        // Predicated region
        $region209: #{tpu_custom_call.1} parent=155 // pred_check
          %p1516 = pneg %p447
        $region210: #{tpu_custom_call.1} parent=155 // pred_check_branch
          %1518 = sbr.rel (%p1516) target = $region212
        $region211: #{tpu_custom_call.1} parent=155 // pred_region
          %1519 = dma.done [#allocation25], 4096
        $region212: #{tpu_custom_call.1} parent=155 // pred_fallthru
          _
        // Predicated region
        $region213: #{tpu_custom_call.1} parent=155 // pred_check
          %p1520 = pneg %p468
        $region214: #{tpu_custom_call.1} parent=155 // pred_check_branch
          %1522 = sbr.rel (%p1520) target = $region216
        $region215: #{tpu_custom_call.1} parent=155 // pred_region
          %1523 = dma.done [#allocation25], 32
        $region216: #{tpu_custom_call.1} parent=155 // pred_fallthru
          _
        // Predicated region
        $region217: #{tpu_custom_call.1} parent=155 // pred_check
          %p1524 = pneg %p489
        $region218: #{tpu_custom_call.1} parent=155 // pred_check_branch
          %1526 = sbr.rel (%p1524) target = $region220
        $region219: #{tpu_custom_call.1} parent=155 // pred_region
          %1527 = dma.done [#allocation28], 32
        $region220: #{tpu_custom_call.1} parent=155 // pred_fallthru
          _
        // Predicated region
        $region221: #{tpu_custom_call.1} parent=155 // pred_check
          %p1528 = pneg %p510
        $region222: #{tpu_custom_call.1} parent=155 // pred_check_branch
          %1530 = sbr.rel (%p1528) target = $region224
        $region223: #{tpu_custom_call.1} parent=155 // pred_region
          %1531 = dma.done [#allocation28], 32
        $region224: #{tpu_custom_call.1} parent=155 // pred_fallthru
          _
        %s1532 = sand.u32 %s110, 1
        %s1533 = scalar_lea.sflag [#allocation31], %s1532
        %s1534 = sand.u32 %s523, 1
        %s1535 = smul.addr %s1534, 2
        %s1536 = scalar_lea.vmem [#allocation30], %s1535
        // Predicated region
        $region225: #{tpu_custom_call.1} parent=155 // pred_check
          %p1537 = pneg %p536
        $region226: #{tpu_custom_call.1} parent=155 // pred_check_branch
          %1539 = sbr.rel (%p1537) target = $region228
        $region227: #{tpu_custom_call.1} parent=155 // pred_region
          %1540 = dma.done %s1533, 32
        $region228: #{tpu_custom_call.1} parent=155 // pred_fallthru
          _
        %s1541 = sand.u32 %s110, 1
        %s1542 = scalar_lea.sflag [#allocation31], %s1541
        %s1543 = sand.u32 %s549, 1
        %s1544 = smul.addr %s1543, 2
        %s1545 = scalar_lea.vmem [#allocation32], %s1544
        // Predicated region
        $region229: #{tpu_custom_call.1} parent=155 // pred_check
          %p1546 = pneg %p562
        $region230: #{tpu_custom_call.1} parent=155 // pred_check_branch
          %1548 = sbr.rel (%p1546) target = $region232
        $region231: #{tpu_custom_call.1} parent=155 // pred_region
          %1549 = dma.done %s1542, 32
        $region232: #{tpu_custom_call.1} parent=155 // pred_fallthru
          _
        %s1550 = sand.u32 %s110, 1
        %s1551 = scalar_lea.sflag [#allocation34], %s1550
        %s1552 = sand.u32 %s575, 1
        %s1553 = smul.addr %s1552, 768
        %s1554 = scalar_lea.vmem [#allocation33], %s1553
        // Predicated region
        $region233: #{tpu_custom_call.1} parent=155 // pred_check
          %p1555 = pneg %p588
        $region234: #{tpu_custom_call.1} parent=155 // pred_check_branch
          %1557 = sbr.rel (%p1555) target = $region236
        $region235: #{tpu_custom_call.1} parent=155 // pred_region
          %1558 = dma.done %s1551, 12288
        $region236: #{tpu_custom_call.1} parent=155 // pred_fallthru
          _
        %s1559 = sand.u32 %s110, 1
        %s1560 = scalar_lea.sflag [#allocation34], %s1559
        %s1561 = sand.u32 %s601, 1
        %s1562 = smul.addr %s1561, 6
        %s1563 = scalar_lea.vmem [#allocation35], %s1562
        // Predicated region
        $region237: #{tpu_custom_call.1} parent=155 // pred_check
          %p1564 = pneg %p614
        $region238: #{tpu_custom_call.1} parent=155 // pred_check_branch
          %1566 = sbr.rel (%p1564) target = $region240
        $region239: #{tpu_custom_call.1} parent=155 // pred_region
          %1567 = dma.done %s1560, 96
        $region240: #{tpu_custom_call.1} parent=155 // pred_fallthru
          _
        %s1568 = sand.u32 %s110, 1
        %s1569 = scalar_lea.sflag [#allocation37], %s1568
        %s1570 = sand.u32 %s627, 1
        %s1571 = smul.addr %s1570, 256
        %s1572 = scalar_lea.vmem [#allocation36], %s1571
        // Predicated region
        $region241: #{tpu_custom_call.1} parent=155 // pred_check
          %p1573 = pneg %p640
        $region242: #{tpu_custom_call.1} parent=155 // pred_check_branch
          %1575 = sbr.rel (%p1573) target = $region244
        $region243: #{tpu_custom_call.1} parent=155 // pred_region
          %1576 = dma.done %s1569, 4096
        $region244: #{tpu_custom_call.1} parent=155 // pred_fallthru
          _
        %s1577 = sand.u32 %s110, 1
        %s1578 = scalar_lea.sflag [#allocation37], %s1577
        %s1579 = sand.u32 %s653, 1
        %s1580 = smul.addr %s1579, 2
        %s1581 = scalar_lea.vmem [#allocation38], %s1580
        // Predicated region
        $region245: #{tpu_custom_call.1} parent=155 // pred_check
          %p1582 = pneg %p666
        $region246: #{tpu_custom_call.1} parent=155 // pred_check_branch
          %1584 = sbr.rel (%p1582) target = $region248
        $region247: #{tpu_custom_call.1} parent=155 // pred_region
          %1585 = dma.done %s1578, 32
        $region248: #{tpu_custom_call.1} parent=155 // pred_fallthru
          _
        %s1586 = sand.u32 %s110, 1
        %s1587 = scalar_lea.sflag [#allocation40], %s1586
        %s1588 = sand.u32 %s679, 1
        %s1589 = smul.addr %s1588, 2
        %s1590 = scalar_lea.vmem [#allocation39], %s1589
        // Predicated region
        $region249: #{tpu_custom_call.1} parent=155 // pred_check
          %p1591 = pneg %p692
        $region250: #{tpu_custom_call.1} parent=155 // pred_check_branch
          %1593 = sbr.rel (%p1591) target = $region252
        $region251: #{tpu_custom_call.1} parent=155 // pred_region
          %1594 = dma.done %s1587, 32
        $region252: #{tpu_custom_call.1} parent=155 // pred_fallthru
          _
        %s1595 = sand.u32 %s110, 1
        %s1596 = scalar_lea.sflag [#allocation40], %s1595
        %s1597 = sand.u32 %s705, 1
        %s1598 = smul.addr %s1597, 2
        %s1599 = scalar_lea.vmem [#allocation41], %s1598
        // Predicated region
        $region253: #{tpu_custom_call.1} parent=155 // pred_check
          %p1600 = pneg %p718
        $region254: #{tpu_custom_call.1} parent=155 // pred_check_branch
          %1602 = sbr.rel (%p1600) target = $region256
        $region255: #{tpu_custom_call.1} parent=155 // pred_region
          %1603 = dma.done %s1596, 32
        $region256: #{tpu_custom_call.1} parent=155 // pred_fallthru
          _
        %s1604 = sand.u32 %s110, 1
        %s1605 = scalar_lea.sflag [#allocation43], %s1604
        %s1606 = sand.u32 %s731, 1
        %s1607 = smul.addr %s1606, 768
        %s1608 = scalar_lea.vmem [#allocation42], %s1607
        // Predicated region
        $region257: #{tpu_custom_call.1} parent=155 // pred_check
          %p1609 = pneg %p744
        $region258: #{tpu_custom_call.1} parent=155 // pred_check_branch
          %1611 = sbr.rel (%p1609) target = $region260
        $region259: #{tpu_custom_call.1} parent=155 // pred_region
          %1612 = dma.done %s1605, 12288
        $region260: #{tpu_custom_call.1} parent=155 // pred_fallthru
          _
        %s1613 = sand.u32 %s110, 1
        %s1614 = scalar_lea.sflag [#allocation43], %s1613
        %s1615 = sand.u32 %s757, 1
        %s1616 = smul.addr %s1615, 6
        %s1617 = scalar_lea.vmem [#allocation44], %s1616
        // Predicated region
        $region261: #{tpu_custom_call.1} parent=155 // pred_check
          %p1618 = pneg %p770
        $region262: #{tpu_custom_call.1} parent=155 // pred_check_branch
          %1620 = sbr.rel (%p1618) target = $region264
        $region263: #{tpu_custom_call.1} parent=155 // pred_region
          %1621 = dma.done %s1614, 96
        $region264: #{tpu_custom_call.1} parent=155 // pred_fallthru
          _
        %s1622 = sand.u32 %s110, 1
        %s1623 = scalar_lea.sflag [#allocation46], %s1622
        %s1624 = sand.u32 %s783, 1
        %s1625 = smul.addr %s1624, 768
        %s1626 = scalar_lea.vmem [#allocation45], %s1625
        // Predicated region
        $region265: #{tpu_custom_call.1} parent=155 // pred_check
          %p1627 = pneg %p796
        $region266: #{tpu_custom_call.1} parent=155 // pred_check_branch
          %1629 = sbr.rel (%p1627) target = $region268
        $region267: #{tpu_custom_call.1} parent=155 // pred_region
          %1630 = dma.done %s1623, 12288
        $region268: #{tpu_custom_call.1} parent=155 // pred_fallthru
          _
        %s1631 = sand.u32 %s110, 1
        %s1632 = scalar_lea.sflag [#allocation46], %s1631
        %s1633 = sand.u32 %s809, 1
        %s1634 = smul.addr %s1633, 2
        %s1635 = scalar_lea.vmem [#allocation47], %s1634
        // Predicated region
        $region269: #{tpu_custom_call.1} parent=155 // pred_check
          %p1636 = pneg %p822
        $region270: #{tpu_custom_call.1} parent=155 // pred_check_branch
          %1638 = sbr.rel (%p1636) target = $region272
        $region271: #{tpu_custom_call.1} parent=155 // pred_region
          %1639 = dma.done %s1632, 32
        $region272: #{tpu_custom_call.1} parent=155 // pred_fallthru
          _
        // Predicated region
        $region273: #{tpu_custom_call.1} parent=155 // pred_check
          %p1640 = pneg %p843
        $region274: #{tpu_custom_call.1} parent=155 // pred_check_branch
          %1642 = sbr.rel (%p1640) target = $region276
        $region275: #{tpu_custom_call.1} parent=155 // pred_region
          %1643 = dma.done [#allocation49], 4096
        $region276: #{tpu_custom_call.1} parent=155 // pred_fallthru
          _
        // Predicated region
        $region277: #{tpu_custom_call.1} parent=155 // pred_check
          %p1644 = pneg %p864
        $region278: #{tpu_custom_call.1} parent=155 // pred_check_branch
          %1646 = sbr.rel (%p1644) target = $region280
        $region279: #{tpu_custom_call.1} parent=155 // pred_region
          %1647 = dma.done [#allocation49], 32
        $region280: #{tpu_custom_call.1} parent=155 // pred_fallthru
          _
        // Predicated region
        $region281: #{tpu_custom_call.1} parent=155 // pred_check
          %p1648 = pneg %p885
        $region282: #{tpu_custom_call.1} parent=155 // pred_check_branch
          %1650 = sbr.rel (%p1648) target = $region284
        $region283: #{tpu_custom_call.1} parent=155 // pred_region
          %1651 = dma.done [#allocation52], 2048
        $region284: #{tpu_custom_call.1} parent=155 // pred_fallthru
          _
        // Predicated region
        $region285: #{tpu_custom_call.1} parent=155 // pred_check
          %p1652 = pneg %p906
        $region286: #{tpu_custom_call.1} parent=155 // pred_check_branch
          %1654 = sbr.rel (%p1652) target = $region288
        $region287: #{tpu_custom_call.1} parent=155 // pred_region
          %1655 = dma.done [#allocation52], 16
        $region288: #{tpu_custom_call.1} parent=155 // pred_fallthru
          _
        %p1656 = pneg %p143
        %p1657 = pneg %p140
        %s1658 = smul.u32 5, %s114
        %p1659 = scmp.lt.s32.totalorder %s1658, 4
        %s1660 = scalar_select %p1659, %s1658, 4
        %s1661 = smul.addr %s1660, 8
        %s1662 = scalar_lea.vmem %s3, %s1661
        %p1663 = pneg %p169
        %p1664 = pneg %p166
        %p1665 = pneg %p195
        %p1666 = pneg %p192
        %p1667 = pneg %p216
        %p1668 = pneg %p213
        %p1669 = pneg %p237
        %p1670 = pneg %p234
        %p1671 = pneg %p258
        %p1672 = pneg %p255
        %p1673 = pneg %p279
        %p1674 = pneg %p276
        %p1675 = pneg %p300
        %p1676 = pneg %p297
        %p1677 = pneg %p321
        %p1678 = pneg %p318
        %p1679 = pneg %p342
        %p1680 = pneg %p339
        %p1681 = pneg %p363
        %p1682 = pneg %p360
        %p1683 = pneg %p384
        %p1684 = pneg %p381
        %p1685 = pneg %p405
        %p1686 = pneg %p402
        %p1687 = pneg %p426
        %p1688 = pneg %p423
        %p1689 = pneg %p447
        %p1690 = pneg %p444
        %p1691 = pneg %p468
        %p1692 = pneg %p465
        %p1693 = pneg %p489
        %p1694 = pneg %p486
        %p1695 = pneg %p510
        %p1696 = pneg %p507
        %s1697 = sand.u32 %s110, 1
        %s1698 = scalar_lea.sflag [#allocation31], %s1697
        %s1699 = sand.u32 %s523, 1
        %s1700 = smul.addr %s1699, 2
        %s1701 = scalar_lea.vmem [#allocation30], %s1700
        %p1702 = pneg %p536
        %p1703 = pneg %p533
        %s1704 = sand.u32 %s110, 1
        %s1705 = scalar_lea.sflag [#allocation31], %s1704
        %s1706 = sand.u32 %s549, 1
        %s1707 = smul.addr %s1706, 2
        %s1708 = scalar_lea.vmem [#allocation32], %s1707
        %p1709 = pneg %p562
        %p1710 = pneg %p559
        %s1711 = sand.u32 %s110, 1
        %s1712 = scalar_lea.sflag [#allocation34], %s1711
        %s1713 = sand.u32 %s575, 1
        %s1714 = smul.addr %s1713, 768
        %s1715 = scalar_lea.vmem [#allocation33], %s1714
        %p1716 = pneg %p588
        %p1717 = pneg %p585
        %s1718 = sand.u32 %s110, 1
        %s1719 = scalar_lea.sflag [#allocation34], %s1718
        %s1720 = sand.u32 %s601, 1
        %s1721 = smul.addr %s1720, 6
        %s1722 = scalar_lea.vmem [#allocation35], %s1721
        %p1723 = pneg %p614
        %p1724 = pneg %p611
        %s1725 = sand.u32 %s110, 1
        %s1726 = scalar_lea.sflag [#allocation37], %s1725
        %s1727 = sand.u32 %s627, 1
        %s1728 = smul.addr %s1727, 256
        %s1729 = scalar_lea.vmem [#allocation36], %s1728
        %p1730 = pneg %p640
        %p1731 = pneg %p637
        %s1732 = sand.u32 %s110, 1
        %s1733 = scalar_lea.sflag [#allocation37], %s1732
        %s1734 = sand.u32 %s653, 1
        %s1735 = smul.addr %s1734, 2
        %s1736 = scalar_lea.vmem [#allocation38], %s1735
        %p1737 = pneg %p666
        %p1738 = pneg %p663
        %s1739 = sand.u32 %s110, 1
        %s1740 = scalar_lea.sflag [#allocation40], %s1739
        %s1741 = sand.u32 %s679, 1
        %s1742 = smul.addr %s1741, 2
        %s1743 = scalar_lea.vmem [#allocation39], %s1742
        %p1744 = pneg %p692
        %p1745 = pneg %p689
        %s1746 = sand.u32 %s110, 1
        %s1747 = scalar_lea.sflag [#allocation40], %s1746
        %s1748 = sand.u32 %s705, 1
        %s1749 = smul.addr %s1748, 2
        %s1750 = scalar_lea.vmem [#allocation41], %s1749
        %p1751 = pneg %p718
        %p1752 = pneg %p715
        %s1753 = sand.u32 %s110, 1
        %s1754 = scalar_lea.sflag [#allocation43], %s1753
        %s1755 = sand.u32 %s731, 1
        %s1756 = smul.addr %s1755, 768
        %s1757 = scalar_lea.vmem [#allocation42], %s1756
        %p1758 = pneg %p744
        %p1759 = pneg %p741
        %s1760 = sand.u32 %s110, 1
        %s1761 = scalar_lea.sflag [#allocation43], %s1760
        %s1762 = sand.u32 %s757, 1
        %s1763 = smul.addr %s1762, 6
        %s1764 = scalar_lea.vmem [#allocation44], %s1763
        %p1765 = pneg %p770
        %p1766 = pneg %p767
        %s1767 = sand.u32 %s110, 1
        %s1768 = scalar_lea.sflag [#allocation46], %s1767
        %s1769 = sand.u32 %s783, 1
        %s1770 = smul.addr %s1769, 768
        %s1771 = scalar_lea.vmem [#allocation45], %s1770
        %p1772 = pneg %p796
        %p1773 = pneg %p793
        %s1774 = sand.u32 %s110, 1
        %s1775 = scalar_lea.sflag [#allocation46], %s1774
        %s1776 = sand.u32 %s809, 1
        %s1777 = smul.addr %s1776, 2
        %s1778 = scalar_lea.vmem [#allocation47], %s1777
        %p1779 = pneg %p822
        %p1780 = pneg %p819
        %p1781 = pneg %p843
        %p1782 = pneg %p840
        %p1783 = pneg %p864
        %p1784 = pneg %p861
        %p1785 = pneg %p885
        %p1786 = pneg %p882
        %p1787 = pneg %p906
        %p1788 = pneg %p903
        %p1789 = pneg %p932
        %p1790 = pneg %p929
        %s1791 = smul.u32 5, %s114
        %s1792 = smul.u32 5, %s114
        %p1793 = scmp.lt.s32.totalorder %s1792, 4
        %s1794 = scalar_select %p1793, %s1792, 4
        %s1795 = smul.addr %s1794, 8
        %s1796 = scalar_lea.vmem %s3, %s1795
        %s1797 = smul.u32 5, %s114
        %s1798 = smul.u32 5, %s114
        %s1799 = smul.u32 5, %s114
        %p1801 = scmp.eq.s32.totalorder %s115, 0
        // Predicated region
        $region289: #{tpu_custom_call.1} parent=155 // pred_check
          %p1802 = pneg %p1801
        $region290: #{tpu_custom_call.1} parent=155 // pred_check_branch
          %1804 = sbr.rel (%p1802) target = $region292
        $region291: #{tpu_custom_call.1} parent=155 // pred_region
          %v1805 = vld [vmem:[#allocation3] sm:$0xff]
          %v1806 = vld [vmem:[#allocation3 + $0x8] sm:$0xff]
          %v1807 = vld [vmem:[#allocation3 + $0x10] sm:$0xff]
          %v1808 = vld [vmem:[#allocation3 + $0x18] sm:$0xff]
          %v1809 = vld [vmem:[#allocation3 + $0x20] sm:$0xff]
          %v1810 = vld [vmem:[%s1796] sm:$0xff]
          %v1811 = vld [vmem:[%s1796 + $0x8] sm:$0xff]
          %v1812 = vld [vmem:[%s1796 + $0x10] sm:$0xff]
          %v1813 = vld [vmem:[%s1796 + $0x18] sm:$0xff]
          %v1814 = vld [vmem:[%s1796 + $0x20] sm:$0xff]
          %v1815 = vld [vmem:[#allocation11] sm:$0x3]
          %1817 = vset.pattern.permute.xlu0 0
          %1818 = vperm.xlu0 %1817, %v1810
          %v1819 = vpop.permute.xlu0 %1818
          %1822 = vset.pattern.permute.xlu0 0
          %1823 = vperm.xlu0 %1822, %v1811
          %v1824 = vpop.permute.xlu0 %1823
          %1827 = vset.pattern.permute.xlu0 0
          %1828 = vperm.xlu0 %1827, %v1812
          %v1829 = vpop.permute.xlu0 %1828
          %1832 = vset.pattern.permute.xlu0 0
          %1833 = vperm.xlu0 %1832, %v1813
          %v1834 = vpop.permute.xlu0 %1833
          %1837 = vset.pattern.permute.xlu0 0
          %1838 = vperm.xlu0 %1837, %v1814
          %v1839 = vpop.permute.xlu0 %1838
          %v1842 = vlaneseq
          %v1843 = vshrl.u32 %v1842, 7
          %v1844 = vsub.s32 0, %v1843
          %v1845 = vrot.slane %v1815, %v1844
          %v1846 = vlaneseq
          %v1847 = vshrl.u32 %v1846, 7
          %v1848 = vsub.s32 1, %v1847
          %v1849 = vrot.slane %v1815, %v1848
          %v1852 = vmul.f32 %v1819, %v1845
          %v1853 = vmul.f32 %v1819, %v1849
          %v1854 = vmul.f32 %v1824, %v1845
          %v1855 = vmul.f32 %v1824, %v1849
          %v1856 = vmul.f32 %v1829, %v1845
          %v1857 = vmul.f32 %v1829, %v1849
          %v1858 = vmul.f32 %v1834, %v1845
          %v1859 = vmul.f32 %v1834, %v1849
          %v1860 = vmul.f32 %v1839, %v1845
          %v1861 = vmul.f32 %v1839, %v1849
          %v1862 = vld [vmem:[#allocation12] sm:$0x3]
          %v1864 = vlaneseq
          %v1865 = vshrl.u32 %v1864, 7
          %v1866 = vsub.s32 0, %v1865
          %v1867 = vrot.slane %v1862, %v1866
          %v1868 = vlaneseq
          %v1869 = vshrl.u32 %v1868, 7
          %v1870 = vsub.s32 1, %v1869
          %v1871 = vrot.slane %v1862, %v1870
          %v1874 = vadd.f32 %v1852, %v1867
          %v1875 = vadd.f32 %v1853, %v1871
          %v1876 = vadd.f32 %v1854, %v1867
          %v1877 = vadd.f32 %v1855, %v1871
          %v1878 = vadd.f32 %v1856, %v1867
          %v1879 = vadd.f32 %v1857, %v1871
          %v1880 = vadd.f32 %v1858, %v1867
          %v1881 = vadd.f32 %v1859, %v1871
          %v1882 = vadd.f32 %v1860, %v1867
          %v1883 = vadd.f32 %v1861, %v1871
          %v1884 = vmul.f32 %v1874, %v1874
          %v1885 = vmul.f32 %v1875, %v1875
          %v1886 = vmul.f32 %v1876, %v1876
          %v1887 = vmul.f32 %v1877, %v1877
          %v1888 = vmul.f32 %v1878, %v1878
          %v1889 = vmul.f32 %v1879, %v1879
          %v1890 = vmul.f32 %v1880, %v1880
          %v1891 = vmul.f32 %v1881, %v1881
          %v1892 = vmul.f32 %v1882, %v1882
          %v1893 = vmul.f32 %v1883, %v1883
          %v1894 = vmul.f32 %v1874, %v1884
          %v1895 = vmul.f32 %v1875, %v1885
          %v1896 = vmul.f32 %v1876, %v1886
          %v1897 = vmul.f32 %v1877, %v1887
          %v1898 = vmul.f32 %v1878, %v1888
          %v1899 = vmul.f32 %v1879, %v1889
          %v1900 = vmul.f32 %v1880, %v1890
          %v1901 = vmul.f32 %v1881, %v1891
          %v1902 = vmul.f32 %v1882, %v1892
          %v1903 = vmul.f32 %v1883, %v1893
          %v1904 = vmul.f32 %v1894, 0.044715
          %v1905 = vmul.f32 %v1895, 0.044715
          %v1906 = vmul.f32 %v1896, 0.044715
          %v1907 = vmul.f32 %v1897, 0.044715
          %v1908 = vmul.f32 %v1898, 0.044715
          %v1909 = vmul.f32 %v1899, 0.044715
          %v1910 = vmul.f32 %v1900, 0.044715
          %v1911 = vmul.f32 %v1901, 0.044715
          %v1912 = vmul.f32 %v1902, 0.044715
          %v1913 = vmul.f32 %v1903, 0.044715
          %v1914 = vadd.f32 %v1874, %v1904
          %v1915 = vadd.f32 %v1875, %v1905
          %v1916 = vadd.f32 %v1876, %v1906
          %v1917 = vadd.f32 %v1877, %v1907
          %v1918 = vadd.f32 %v1878, %v1908
          %v1919 = vadd.f32 %v1879, %v1909
          %v1920 = vadd.f32 %v1880, %v1910
          %v1921 = vadd.f32 %v1881, %v1911
          %v1922 = vadd.f32 %v1882, %v1912
          %v1923 = vadd.f32 %v1883, %v1913
          %v1924 = vmul.f32 %v1914, 0.7978846
          %v1925 = vmul.f32 %v1915, 0.7978846
          %v1926 = vmul.f32 %v1916, 0.7978846
          %v1927 = vmul.f32 %v1917, 0.7978846
          %v1928 = vmul.f32 %v1918, 0.7978846
          %v1929 = vmul.f32 %v1919, 0.7978846
          %v1930 = vmul.f32 %v1920, 0.7978846
          %v1931 = vmul.f32 %v1921, 0.7978846
          %v1932 = vmul.f32 %v1922, 0.7978846
          %v1933 = vmul.f32 %v1923, 0.7978846
          %v1934 = vtanh.pop %v1924
          %v1935 = vtanh.pop %v1925
          %v1936 = vtanh.pop %v1926
          %v1937 = vtanh.pop %v1927
          %v1938 = vtanh.pop %v1928
          %v1939 = vtanh.pop %v1929
          %v1940 = vtanh.pop %v1930
          %v1941 = vtanh.pop %v1931
          %v1942 = vtanh.pop %v1932
          %v1943 = vtanh.pop %v1933
          %v1944 = vadd.f32 %v1934, 1.0
          %v1945 = vadd.f32 %v1935, 1.0
          %v1946 = vadd.f32 %v1936, 1.0
          %v1947 = vadd.f32 %v1937, 1.0
          %v1948 = vadd.f32 %v1938, 1.0
          %v1949 = vadd.f32 %v1939, 1.0
          %v1950 = vadd.f32 %v1940, 1.0
          %v1951 = vadd.f32 %v1941, 1.0
          %v1952 = vadd.f32 %v1942, 1.0
          %v1953 = vadd.f32 %v1943, 1.0
          %v1954 = vmul.f32 %v1944, 0.5
          %v1955 = vmul.f32 %v1945, 0.5
          %v1956 = vmul.f32 %v1946, 0.5
          %v1957 = vmul.f32 %v1947, 0.5
          %v1958 = vmul.f32 %v1948, 0.5
          %v1959 = vmul.f32 %v1949, 0.5
          %v1960 = vmul.f32 %v1950, 0.5
          %v1961 = vmul.f32 %v1951, 0.5
          %v1962 = vmul.f32 %v1952, 0.5
          %v1963 = vmul.f32 %v1953, 0.5
          %v1964 = vmul.f32 %v1874, %v1954
          %v1965 = vmul.f32 %v1875, %v1955
          %v1966 = vmul.f32 %v1876, %v1956
          %v1967 = vmul.f32 %v1877, %v1957
          %v1968 = vmul.f32 %v1878, %v1958
          %v1969 = vmul.f32 %v1879, %v1959
          %v1970 = vmul.f32 %v1880, %v1960
          %v1971 = vmul.f32 %v1881, %v1961
          %v1972 = vmul.f32 %v1882, %v1962
          %v1973 = vmul.f32 %v1883, %v1963
          %v1974 = vld [vmem:[#allocation14] sm:$0xff]
          %v1975 = vld [vmem:[#allocation14 + $0x8] sm:$0xff]
          %v1976 = vld [vmem:[#allocation14 + $0x10] sm:$0xff]
          %v1977 = vld [vmem:[#allocation14 + $0x18] sm:$0xff]
          %v1978 = vld [vmem:[#allocation14 + $0x20] sm:$0xff]
          %v1979 = vld [vmem:[#allocation14 + $0x28] sm:$0xff]
          %v1980 = vld [vmem:[#allocation14 + $0x30] sm:$0xff]
          %v1981 = vld [vmem:[#allocation14 + $0x38] sm:$0xff]
          %v1982 = vld [vmem:[#allocation14 + $0x40] sm:$0xff]
          %v1983 = vld [vmem:[#allocation14 + $0x48] sm:$0xff]
          %v1984 = vld [vmem:[#allocation14 + $0x50] sm:$0xff]
          %v1985 = vld [vmem:[#allocation14 + $0x58] sm:$0xff]
          %v1986 = vld [vmem:[#allocation14 + $0x60] sm:$0xff]
          %v1987 = vld [vmem:[#allocation14 + $0x68] sm:$0xff]
          %v1988 = vld [vmem:[#allocation14 + $0x70] sm:$0xff]
          %v1989 = vld [vmem:[#allocation14 + $0x78] sm:$0xff]
          %v1990 = vld [vmem:[#allocation14 + $0x80] sm:$0xff]
          %v1991 = vld [vmem:[#allocation14 + $0x88] sm:$0xff]
          %v1992 = vld [vmem:[#allocation14 + $0x90] sm:$0xff]
          %v1993 = vld [vmem:[#allocation14 + $0x98] sm:$0xff]
          %v1994 = vld [vmem:[#allocation14 + $0xa0] sm:$0xff]
          %v1995 = vld [vmem:[#allocation14 + $0xa8] sm:$0xff]
          %v1996 = vld [vmem:[#allocation14 + $0xb0] sm:$0xff]
          %v1997 = vld [vmem:[#allocation14 + $0xb8] sm:$0xff]
          %v1998 = vld [vmem:[#allocation14 + $0xc0] sm:$0xff]
          %v1999 = vld [vmem:[#allocation14 + $0xc8] sm:$0xff]
          %v2000 = vld [vmem:[#allocation14 + $0xd0] sm:$0xff]
          %v2001 = vld [vmem:[#allocation14 + $0xd8] sm:$0xff]
          %v2002 = vld [vmem:[#allocation14 + $0xe0] sm:$0xff]
          %v2003 = vld [vmem:[#allocation14 + $0xe8] sm:$0xff]
          %v2004 = vld [vmem:[#allocation14 + $0xf0] sm:$0xff]
          %v2005 = vld [vmem:[#allocation14 + $0xf8] sm:$0xff]
          %v2006 = vpack.c.bf16 %v1966, %v1964
          %v2007 = vpack.c.bf16 %v1967, %v1965
          %v2008 = vpack.c.bf16 %v1970, %v1968
          %v2009 = vpack.c.bf16 %v1971, %v1969
          %v2010 = vpack.c.bf16 %v1972, %v1972
          %v2011 = vpack.c.bf16 %v1973, %v1973
          %v2012 = vld [vmem:[#allocation15] sm:$0x3]
          %v2014 = vlaneseq
          %v2015 = vshrl.u32 %v2014, 7
          %v2016 = vsub.s32 0, %v2015
          %v2017 = vrot.slane %v2012, %v2016
          %v2018 = vlaneseq
          %v2019 = vshrl.u32 %v2018, 7
          %v2020 = vsub.s32 1, %v2019
          %v2021 = vrot.slane %v2012, %v2020
          %v2056 = vunpack.c.l.b16 %v1974
          %v2057 = vunpack.c.h.b16 %v1974
          %v2058 = vunpack.c.l.b16 %v1975
          %v2059 = vunpack.c.h.b16 %v1975
          %v2060 = vunpack.c.l.b16 %v1976
          %v2061 = vunpack.c.h.b16 %v1976
          %v2062 = vunpack.c.l.b16 %v1977
          %v2063 = vunpack.c.h.b16 %v1977
          %v2064 = vunpack.c.l.b16 %v1978
          %v2065 = vunpack.c.h.b16 %v1978
          %v2066 = vunpack.c.l.b16 %v1979
          %v2067 = vunpack.c.h.b16 %v1979
          %v2068 = vunpack.c.l.b16 %v1980
          %v2069 = vunpack.c.h.b16 %v1980
          %v2070 = vunpack.c.l.b16 %v1981
          %v2071 = vunpack.c.h.b16 %v1981
          %v2072 = vunpack.c.l.b16 %v1982
          %v2073 = vunpack.c.h.b16 %v1982
          %v2074 = vunpack.c.l.b16 %v1983
          %v2075 = vunpack.c.h.b16 %v1983
          %v2076 = vunpack.c.l.b16 %v1984
          %v2077 = vunpack.c.h.b16 %v1984
          %v2078 = vunpack.c.l.b16 %v1985
          %v2079 = vunpack.c.h.b16 %v1985
          %v2080 = vunpack.c.l.b16 %v1986
          %v2081 = vunpack.c.h.b16 %v1986
          %v2082 = vunpack.c.l.b16 %v1987
          %v2083 = vunpack.c.h.b16 %v1987
          %v2084 = vunpack.c.l.b16 %v1988
          %v2085 = vunpack.c.h.b16 %v1988
          %v2086 = vunpack.c.l.b16 %v1989
          %v2087 = vunpack.c.h.b16 %v1989
          %v2088 = vunpack.c.l.b16 %v1990
          %v2089 = vunpack.c.h.b16 %v1990
          %v2090 = vunpack.c.l.b16 %v1991
          %v2091 = vunpack.c.h.b16 %v1991
          %v2092 = vunpack.c.l.b16 %v1992
          %v2093 = vunpack.c.h.b16 %v1992
          %v2094 = vunpack.c.l.b16 %v1993
          %v2095 = vunpack.c.h.b16 %v1993
          %v2096 = vunpack.c.l.b16 %v1994
          %v2097 = vunpack.c.h.b16 %v1994
          %v2098 = vunpack.c.l.b16 %v1995
          %v2099 = vunpack.c.h.b16 %v1995
          %v2100 = vunpack.c.l.b16 %v1996
          %v2101 = vunpack.c.h.b16 %v1996
          %v2102 = vunpack.c.l.b16 %v1997
          %v2103 = vunpack.c.h.b16 %v1997
          %v2104 = vunpack.c.l.b16 %v1998
          %v2105 = vunpack.c.h.b16 %v1998
          %v2106 = vunpack.c.l.b16 %v1999
          %v2107 = vunpack.c.h.b16 %v1999
          %v2108 = vunpack.c.l.b16 %v2000
          %v2109 = vunpack.c.h.b16 %v2000
          %v2110 = vunpack.c.l.b16 %v2001
          %v2111 = vunpack.c.h.b16 %v2001
          %v2112 = vunpack.c.l.b16 %v2002
          %v2113 = vunpack.c.h.b16 %v2002
          %v2114 = vunpack.c.l.b16 %v2003
          %v2115 = vunpack.c.h.b16 %v2003
          %v2116 = vunpack.c.l.b16 %v2004
          %v2117 = vunpack.c.h.b16 %v2004
          %v2118 = vunpack.c.l.b16 %v2005
          %v2119 = vunpack.c.h.b16 %v2005
          %v2120 = vpack.c.b16 %v2058, %v2056
          %v2121 = vpack.c.b16 %v2059, %v2057
          %v2122 = vpack.c.b16 %v2062, %v2060
          %v2123 = vpack.c.b16 %v2063, %v2061
          %v2124 = vpack.c.b16 %v2066, %v2064
          %v2125 = vpack.c.b16 %v2067, %v2065
          %v2126 = vpack.c.b16 %v2070, %v2068
          %v2127 = vpack.c.b16 %v2071, %v2069
          %v2128 = vpack.c.b16 %v2074, %v2072
          %v2129 = vpack.c.b16 %v2075, %v2073
          %v2130 = vpack.c.b16 %v2078, %v2076
          %v2131 = vpack.c.b16 %v2079, %v2077
          %v2132 = vpack.c.b16 %v2082, %v2080
          %v2133 = vpack.c.b16 %v2083, %v2081
          %v2134 = vpack.c.b16 %v2086, %v2084
          %v2135 = vpack.c.b16 %v2087, %v2085
          %v2136 = vpack.c.b16 %v2090, %v2088
          %v2137 = vpack.c.b16 %v2091, %v2089
          %v2138 = vpack.c.b16 %v2094, %v2092
          %v2139 = vpack.c.b16 %v2095, %v2093
          %v2140 = vpack.c.b16 %v2098, %v2096
          %v2141 = vpack.c.b16 %v2099, %v2097
          %v2142 = vpack.c.b16 %v2102, %v2100
          %v2143 = vpack.c.b16 %v2103, %v2101
          %v2144 = vpack.c.b16 %v2106, %v2104
          %v2145 = vpack.c.b16 %v2107, %v2105
          %v2146 = vpack.c.b16 %v2110, %v2108
          %v2147 = vpack.c.b16 %v2111, %v2109
          %v2148 = vpack.c.b16 %v2114, %v2112
          %v2149 = vpack.c.b16 %v2115, %v2113
          %v2150 = vpack.c.b16 %v2118, %v2116
          %v2151 = vpack.c.b16 %v2119, %v2117
          %2184 = vmatprep.subr.bf16.mxu0 %v2121
          %2185 = vmatpush1.bf16.msra.mxu0 %v2120
          %2186 = vmatprep.subr.bf16.mxu0 %v2123
          %2187 = vmatpush1.bf16.msra.mxu0 %v2122
          %2188 = vmatprep.subr.bf16.mxu0 %v2125
          %2189 = vmatpush1.bf16.msra.mxu0 %v2124
          %2190 = vmatprep.subr.bf16.mxu0 %v2127
          %2191 = vmatpush1.bf16.msra.mxu0 %v2126
          %2192 = vmatprep.subr.bf16.mxu0 %v2129
          %2193 = vmatpush1.bf16.msra.mxu0 %v2128
          %2194 = vmatprep.subr.bf16.mxu0 %v2131
          %2195 = vmatpush1.bf16.msra.mxu0 %v2130
          %2196 = vmatprep.subr.bf16.mxu0 %v2133
          %2197 = vmatpush1.bf16.msra.mxu0 %v2132
          %2198 = vmatprep.subr.bf16.mxu0 %v2135
          %2199 = vmatpush1.bf16.msra.mxu0 %v2134
          %2200 = vmatprep.subr.bf16.mxu0 %v2137
          %2201 = vmatpush1.bf16.msra.mxu0 %v2136
          %2202 = vmatprep.subr.bf16.mxu0 %v2139
          %2203 = vmatpush1.bf16.msra.mxu0 %v2138
          %2204 = vmatprep.subr.bf16.mxu0 %v2141
          %2205 = vmatpush1.bf16.msra.mxu0 %v2140
          %2206 = vmatprep.subr.bf16.mxu0 %v2143
          %2207 = vmatpush1.bf16.msra.mxu0 %v2142
          %2208 = vmatprep.subr.bf16.mxu0 %v2145
          %2209 = vmatpush1.bf16.msra.mxu0 %v2144
          %2210 = vmatprep.subr.bf16.mxu0 %v2147
          %2211 = vmatpush1.bf16.msra.mxu0 %v2146
          %2212 = vmatprep.subr.bf16.mxu0 %v2149
          %2213 = vmatpush1.bf16.msra.mxu0 %v2148
          %2214 = vmatprep.subr.bf16.mxu0 %v2151
          %2215 = vmatpush1.bf16.msra.mxu0 %v2150
          %2216 = vmatprep.mubr.bf16.mxu0 %v2007
          %2217 = vmatmul.mubr.bf16.gmra.mrb[0].mxu0 %v2006
          %v2218 = vpop.f32.mrb[0].mxu0
          %v2219 = vadd.f32 %v2017, %v2218
          %v2220 = vpop.f32.mrb[0].mxu0
          %v2221 = vadd.f32 %v2021, %v2220
          %v2222 = vpop.f32.mrb[0].mxu0
          %v2223 = vadd.f32 %v2017, %v2222
          %v2224 = vpop.f32.mrb[0].mxu0
          %v2225 = vadd.f32 %v2021, %v2224
          %2226 = vmatprep.mubr.bf16.mxu0 %v2009
          %2227 = vmatmul.mubr.bf16.gmra.mrb[0].mxu0 %v2008
          %v2228 = vpop.f32.mrb[0].mxu0
          %v2229 = vadd.f32 %v2017, %v2228
          %v2230 = vpop.f32.mrb[0].mxu0
          %v2231 = vadd.f32 %v2021, %v2230
          %v2232 = vpop.f32.mrb[0].mxu0
          %v2233 = vadd.f32 %v2017, %v2232
          %v2234 = vpop.f32.mrb[0].mxu0
          %v2235 = vadd.f32 %v2021, %v2234
          %2236 = vmatprep.mubr.bf16.mxu0 %v2011
          %2237 = vmatmul.mubr.bf16.gmra.mrb[0].mxu0 %v2010
          %v2238 = vpop.f32.mrb[0].mxu0
          %v2239 = vadd.f32 %v2017, %v2238
          %v2240 = vpop.f32.mrb[0].mxu0
          %v2241 = vadd.f32 %v2021, %v2240
          %v2242 = vpop.f32.mrb[0].mxu0
          %v2243 = vpop.f32.mrb[0].mxu0
          %2244 = vdwg.mxu0
          %v2245 = vmul.f32 %v2219, %v2219
          %v2246 = vmul.f32 %v2221, %v2221
          %v2247 = vmul.f32 %v2223, %v2223
          %v2248 = vmul.f32 %v2225, %v2225
          %v2249 = vmul.f32 %v2229, %v2229
          %v2250 = vmul.f32 %v2231, %v2231
          %v2251 = vmul.f32 %v2233, %v2233
          %v2252 = vmul.f32 %v2235, %v2235
          %v2253 = vmul.f32 %v2239, %v2239
          %v2254 = vmul.f32 %v2241, %v2241
          %v2255 = vmul.f32 %v2219, %v2245
          %v2256 = vmul.f32 %v2221, %v2246
          %v2257 = vmul.f32 %v2223, %v2247
          %v2258 = vmul.f32 %v2225, %v2248
          %v2259 = vmul.f32 %v2229, %v2249
          %v2260 = vmul.f32 %v2231, %v2250
          %v2261 = vmul.f32 %v2233, %v2251
          %v2262 = vmul.f32 %v2235, %v2252
          %v2263 = vmul.f32 %v2239, %v2253
          %v2264 = vmul.f32 %v2241, %v2254
          %v2265 = vmul.f32 %v2255, 0.044715
          %v2266 = vmul.f32 %v2256, 0.044715
          %v2267 = vmul.f32 %v2257, 0.044715
          %v2268 = vmul.f32 %v2258, 0.044715
          %v2269 = vmul.f32 %v2259, 0.044715
          %v2270 = vmul.f32 %v2260, 0.044715
          %v2271 = vmul.f32 %v2261, 0.044715
          %v2272 = vmul.f32 %v2262, 0.044715
          %v2273 = vmul.f32 %v2263, 0.044715
          %v2274 = vmul.f32 %v2264, 0.044715
          %v2275 = vadd.f32 %v2219, %v2265
          %v2276 = vadd.f32 %v2221, %v2266
          %v2277 = vadd.f32 %v2223, %v2267
          %v2278 = vadd.f32 %v2225, %v2268
          %v2279 = vadd.f32 %v2229, %v2269
          %v2280 = vadd.f32 %v2231, %v2270
          %v2281 = vadd.f32 %v2233, %v2271
          %v2282 = vadd.f32 %v2235, %v2272
          %v2283 = vadd.f32 %v2239, %v2273
          %v2284 = vadd.f32 %v2241, %v2274
          %v2285 = vmul.f32 %v2275, 0.7978846
          %v2286 = vmul.f32 %v2276, 0.7978846
          %v2287 = vmul.f32 %v2277, 0.7978846
          %v2288 = vmul.f32 %v2278, 0.7978846
          %v2289 = vmul.f32 %v2279, 0.7978846
          %v2290 = vmul.f32 %v2280, 0.7978846
          %v2291 = vmul.f32 %v2281, 0.7978846
          %v2292 = vmul.f32 %v2282, 0.7978846
          %v2293 = vmul.f32 %v2283, 0.7978846
          %v2294 = vmul.f32 %v2284, 0.7978846
          %v2295 = vtanh.pop %v2285
          %v2296 = vtanh.pop %v2286
          %v2297 = vtanh.pop %v2287
          %v2298 = vtanh.pop %v2288
          %v2299 = vtanh.pop %v2289
          %v2300 = vtanh.pop %v2290
          %v2301 = vtanh.pop %v2291
          %v2302 = vtanh.pop %v2292
          %v2303 = vtanh.pop %v2293
          %v2304 = vtanh.pop %v2294
          %v2305 = vadd.f32 %v2295, 1.0
          %v2306 = vadd.f32 %v2296, 1.0
          %v2307 = vadd.f32 %v2297, 1.0
          %v2308 = vadd.f32 %v2298, 1.0
          %v2309 = vadd.f32 %v2299, 1.0
          %v2310 = vadd.f32 %v2300, 1.0
          %v2311 = vadd.f32 %v2301, 1.0
          %v2312 = vadd.f32 %v2302, 1.0
          %v2313 = vadd.f32 %v2303, 1.0
          %v2314 = vadd.f32 %v2304, 1.0
          %v2315 = vmul.f32 %v2305, 0.5
          %v2316 = vmul.f32 %v2306, 0.5
          %v2317 = vmul.f32 %v2307, 0.5
          %v2318 = vmul.f32 %v2308, 0.5
          %v2319 = vmul.f32 %v2309, 0.5
          %v2320 = vmul.f32 %v2310, 0.5
          %v2321 = vmul.f32 %v2311, 0.5
          %v2322 = vmul.f32 %v2312, 0.5
          %v2323 = vmul.f32 %v2313, 0.5
          %v2324 = vmul.f32 %v2314, 0.5
          %v2325 = vmul.f32 %v2219, %v2315
          %v2326 = vmul.f32 %v2221, %v2316
          %v2327 = vmul.f32 %v2223, %v2317
          %v2328 = vmul.f32 %v2225, %v2318
          %v2329 = vmul.f32 %v2229, %v2319
          %v2330 = vmul.f32 %v2231, %v2320
          %v2331 = vmul.f32 %v2233, %v2321
          %v2332 = vmul.f32 %v2235, %v2322
          %v2333 = vmul.f32 %v2239, %v2323
          %v2334 = vmul.f32 %v2241, %v2324
          %v2335 = vld [vmem:[#allocation6] sm:$0xff]
          %v2336 = vld [vmem:[#allocation6 + $0x8] sm:$0xf]
          %v2337 = vld [vmem:[#allocation6 + $0xc] sm:$0xff]
          %v2338 = vld [vmem:[#allocation6 + $0x14] sm:$0xf]
          %v2339 = vld [vmem:[#allocation6 + $0x18] sm:$0xff]
          %v2340 = vld [vmem:[#allocation6 + $0x20] sm:$0xf]
          %v2341 = vld [vmem:[#allocation6 + $0x24] sm:$0xff]
          %v2342 = vld [vmem:[#allocation6 + $0x2c] sm:$0xf]
          %v2343 = vld [vmem:[#allocation6 + $0x30] sm:$0xff]
          %v2344 = vld [vmem:[#allocation6 + $0x38] sm:$0xf]
          %v2345 = vld [vmem:[#allocation17] sm:$0xff]
          %v2346 = vld [vmem:[#allocation17 + $0x8] sm:$0xff]
          %v2347 = vld [vmem:[#allocation17 + $0x10] sm:$0xff]
          %v2348 = vld [vmem:[#allocation17 + $0x18] sm:$0xff]
          %v2349 = vld [vmem:[#allocation17 + $0x20] sm:$0xff]
          %v2350 = vld [vmem:[#allocation17 + $0x28] sm:$0xff]
          %v2351 = vld [vmem:[#allocation17 + $0x30] sm:$0xff]
          %v2352 = vld [vmem:[#allocation17 + $0x38] sm:$0xff]
          %v2353 = vld [vmem:[#allocation17 + $0x40] sm:$0xff]
          %v2354 = vld [vmem:[#allocation17 + $0x48] sm:$0xff]
          %v2355 = vld [vmem:[#allocation17 + $0x50] sm:$0xff]
          %v2356 = vld [vmem:[#allocation17 + $0x58] sm:$0xff]
          %v2357 = vld [vmem:[#allocation17 + $0x60] sm:$0xff]
          %v2358 = vld [vmem:[#allocation17 + $0x68] sm:$0xff]
          %v2359 = vld [vmem:[#allocation17 + $0x70] sm:$0xff]
          %v2360 = vld [vmem:[#allocation17 + $0x78] sm:$0xff]
          %v2361 = vld [vmem:[#allocation17 + $0x80] sm:$0xff]
          %v2362 = vld [vmem:[#allocation17 + $0x88] sm:$0xff]
          %v2363 = vld [vmem:[#allocation17 + $0x90] sm:$0xff]
          %v2364 = vld [vmem:[#allocation17 + $0x98] sm:$0xff]
          %v2365 = vld [vmem:[#allocation17 + $0xa0] sm:$0xff]
          %v2366 = vld [vmem:[#allocation17 + $0xa8] sm:$0xff]
          %v2367 = vld [vmem:[#allocation17 + $0xb0] sm:$0xff]
          %v2368 = vld [vmem:[#allocation17 + $0xb8] sm:$0xff]
          %v2369 = vld [vmem:[#allocation17 + $0xc0] sm:$0xff]
          %v2370 = vld [vmem:[#allocation17 + $0xc8] sm:$0xff]
          %v2371 = vld [vmem:[#allocation17 + $0xd0] sm:$0xff]
          %v2372 = vld [vmem:[#allocation17 + $0xd8] sm:$0xff]
          %v2373 = vld [vmem:[#allocation17 + $0xe0] sm:$0xff]
          %v2374 = vld [vmem:[#allocation17 + $0xe8] sm:$0xff]
          %v2375 = vld [vmem:[#allocation17 + $0xf0] sm:$0xff]
          %v2376 = vld [vmem:[#allocation17 + $0xf8] sm:$0xff]
          %v2377 = vld [vmem:[#allocation17 + $0x100] sm:$0xff]
          %v2378 = vld [vmem:[#allocation17 + $0x108] sm:$0xff]
          %v2379 = vld [vmem:[#allocation17 + $0x110] sm:$0xff]
          %v2380 = vld [vmem:[#allocation17 + $0x118] sm:$0xff]
          %v2381 = vld [vmem:[#allocation17 + $0x120] sm:$0xff]
          %v2382 = vld [vmem:[#allocation17 + $0x128] sm:$0xff]
          %v2383 = vld [vmem:[#allocation17 + $0x130] sm:$0xff]
          %v2384 = vld [vmem:[#allocation17 + $0x138] sm:$0xff]
          %v2385 = vld [vmem:[#allocation18] sm:$0x3]
          %v2387 = vlaneseq
          %v2388 = vshrl.u32 %v2387, 7
          %v2389 = vsub.s32 0, %v2388
          %v2390 = vrot.slane %v2385, %v2389
          %v2391 = vlaneseq
          %v2392 = vshrl.u32 %v2391, 7
          %v2393 = vsub.s32 1, %v2392
          %v2394 = vrot.slane %v2385, %v2393
          %v2407 = vunpack.c.l.b16 %v2335
          %v2408 = vunpack.c.h.b16 %v2335
          %v2409 = vunpack.c.l.b16 %v2336
          %v2410 = vunpack.c.l.b16 %v2337
          %v2411 = vunpack.c.h.b16 %v2337
          %v2412 = vunpack.c.l.b16 %v2338
          %v2413 = vunpack.c.l.b16 %v2339
          %v2414 = vunpack.c.h.b16 %v2339
          %v2415 = vunpack.c.l.b16 %v2340
          %v2416 = vunpack.c.l.b16 %v2341
          %v2417 = vunpack.c.h.b16 %v2341
          %v2418 = vunpack.c.l.b16 %v2342
          %v2419 = vunpack.c.l.b16 %v2343
          %v2420 = vunpack.c.h.b16 %v2343
          %v2421 = vunpack.c.l.b16 %v2344
          %v2422 = vpack.c.b16 %v2410, %v2407
          %v2423 = vpack.c.b16 %v2411, %v2408
          %v2424 = vpack.c.b16 %v2412, %v2409
          %v2425 = vpack.c.b16 %v2416, %v2413
          %v2426 = vpack.c.b16 %v2417, %v2414
          %v2427 = vpack.c.b16 %v2418, %v2415
          %v2428 = vpack.c.b16 %v2419, %v2419
          %v2429 = vpack.c.b16 %v2420, %v2420
          %v2430 = vpack.c.b16 %v2421, %v2421
          %v2477 = vunpack.c.l.b16 %v2345
          %v2478 = vunpack.c.h.b16 %v2345
          %v2479 = vunpack.c.l.b16 %v2346
          %v2480 = vunpack.c.h.b16 %v2346
          %v2481 = vunpack.c.l.b16 %v2347
          %v2482 = vunpack.c.h.b16 %v2347
          %v2483 = vunpack.c.l.b16 %v2348
          %v2484 = vunpack.c.h.b16 %v2348
          %v2485 = vunpack.c.l.b16 %v2349
          %v2486 = vunpack.c.h.b16 %v2349
          %v2487 = vunpack.c.l.b16 %v2350
          %v2488 = vunpack.c.h.b16 %v2350
          %v2489 = vunpack.c.l.b16 %v2351
          %v2490 = vunpack.c.h.b16 %v2351
          %v2491 = vunpack.c.l.b16 %v2352
          %v2492 = vunpack.c.h.b16 %v2352
          %v2493 = vunpack.c.l.b16 %v2353
          %v2494 = vunpack.c.h.b16 %v2353
          %v2495 = vunpack.c.l.b16 %v2354
          %v2496 = vunpack.c.h.b16 %v2354
          %v2497 = vunpack.c.l.b16 %v2355
          %v2498 = vunpack.c.h.b16 %v2355
          %v2499 = vunpack.c.l.b16 %v2356
          %v2500 = vunpack.c.h.b16 %v2356
          %v2501 = vunpack.c.l.b16 %v2357
          %v2502 = vunpack.c.h.b16 %v2357
          %v2503 = vunpack.c.l.b16 %v2358
          %v2504 = vunpack.c.h.b16 %v2358
          %v2505 = vunpack.c.l.b16 %v2359
          %v2506 = vunpack.c.h.b16 %v2359
          %v2507 = vunpack.c.l.b16 %v2360
          %v2508 = vunpack.c.h.b16 %v2360
          %v2509 = vunpack.c.l.b16 %v2361
          %v2510 = vunpack.c.h.b16 %v2361
          %v2511 = vunpack.c.l.b16 %v2362
          %v2512 = vunpack.c.h.b16 %v2362
          %v2513 = vunpack.c.l.b16 %v2363
          %v2514 = vunpack.c.h.b16 %v2363
          %v2515 = vunpack.c.l.b16 %v2364
          %v2516 = vunpack.c.h.b16 %v2364
          %v2517 = vunpack.c.l.b16 %v2365
          %v2518 = vunpack.c.h.b16 %v2365
          %v2519 = vunpack.c.l.b16 %v2366
          %v2520 = vunpack.c.h.b16 %v2366
          %v2521 = vunpack.c.l.b16 %v2367
          %v2522 = vunpack.c.h.b16 %v2367
          %v2523 = vunpack.c.l.b16 %v2368
          %v2524 = vunpack.c.h.b16 %v2368
          %v2525 = vunpack.c.l.b16 %v2369
          %v2526 = vunpack.c.h.b16 %v2369
          %v2527 = vunpack.c.l.b16 %v2370
          %v2528 = vunpack.c.h.b16 %v2370
          %v2529 = vunpack.c.l.b16 %v2371
          %v2530 = vunpack.c.h.b16 %v2371
          %v2531 = vunpack.c.l.b16 %v2372
          %v2532 = vunpack.c.h.b16 %v2372
          %v2533 = vunpack.c.l.b16 %v2373
          %v2534 = vunpack.c.h.b16 %v2373
          %v2535 = vunpack.c.l.b16 %v2374
          %v2536 = vunpack.c.h.b16 %v2374
          %v2537 = vunpack.c.l.b16 %v2375
          %v2538 = vunpack.c.h.b16 %v2375
          %v2539 = vunpack.c.l.b16 %v2376
          %v2540 = vunpack.c.h.b16 %v2376
          %v2541 = vunpack.c.l.b16 %v2377
          %v2542 = vunpack.c.h.b16 %v2377
          %v2543 = vunpack.c.l.b16 %v2378
          %v2544 = vunpack.c.h.b16 %v2378
          %v2545 = vunpack.c.l.b16 %v2379
          %v2546 = vunpack.c.h.b16 %v2379
          %v2547 = vunpack.c.l.b16 %v2380
          %v2548 = vunpack.c.h.b16 %v2380
          %v2549 = vunpack.c.l.b16 %v2381
          %v2550 = vunpack.c.h.b16 %v2381
          %v2551 = vunpack.c.l.b16 %v2382
          %v2552 = vunpack.c.h.b16 %v2382
          %v2553 = vunpack.c.l.b16 %v2383
          %v2554 = vunpack.c.h.b16 %v2383
          %v2555 = vunpack.c.l.b16 %v2384
          %v2556 = vunpack.c.h.b16 %v2384
          %v2557 = vpack.c.b16 %v2479, %v2477
          %v2558 = vpack.c.b16 %v2480, %v2478
          %v2559 = vpack.c.b16 %v2483, %v2481
          %v2560 = vpack.c.b16 %v2484, %v2482
          %v2561 = vpack.c.b16 %v2487, %v2485
          %v2562 = vpack.c.b16 %v2488, %v2486
          %v2563 = vpack.c.b16 %v2491, %v2489
          %v2564 = vpack.c.b16 %v2492, %v2490
          %v2565 = vpack.c.b16 %v2495, %v2493
          %v2566 = vpack.c.b16 %v2496, %v2494
          %v2567 = vpack.c.b16 %v2499, %v2497
          %v2568 = vpack.c.b16 %v2500, %v2498
          %v2569 = vpack.c.b16 %v2503, %v2501
          %v2570 = vpack.c.b16 %v2504, %v2502
          %v2571 = vpack.c.b16 %v2507, %v2505
          %v2572 = vpack.c.b16 %v2508, %v2506
          %v2573 = vpack.c.b16 %v2511, %v2509
          %v2574 = vpack.c.b16 %v2512, %v2510
          %v2575 = vpack.c.b16 %v2515, %v2513
          %v2576 = vpack.c.b16 %v2516, %v2514
          %v2577 = vpack.c.b16 %v2519, %v2517
          %v2578 = vpack.c.b16 %v2520, %v2518
          %v2579 = vpack.c.b16 %v2523, %v2521
          %v2580 = vpack.c.b16 %v2524, %v2522
          %v2581 = vpack.c.b16 %v2527, %v2525
          %v2582 = vpack.c.b16 %v2528, %v2526
          %v2583 = vpack.c.b16 %v2531, %v2529
          %v2584 = vpack.c.b16 %v2532, %v2530
          %v2585 = vpack.c.b16 %v2535, %v2533
          %v2586 = vpack.c.b16 %v2536, %v2534
          %v2587 = vpack.c.b16 %v2539, %v2537
          %v2588 = vpack.c.b16 %v2540, %v2538
          %v2589 = vpack.c.b16 %v2543, %v2541
          %v2590 = vpack.c.b16 %v2544, %v2542
          %v2591 = vpack.c.b16 %v2547, %v2545
          %v2592 = vpack.c.b16 %v2548, %v2546
          %v2593 = vpack.c.b16 %v2551, %v2549
          %v2594 = vpack.c.b16 %v2552, %v2550
          %v2595 = vpack.c.b16 %v2555, %v2553
          %v2596 = vpack.c.b16 %v2556, %v2554
          %vm2637 = vcmask 523264
          %v2639 = vsel %vm2637, %v2424, 0
          %v2642 = vsel %vm2637, %v2427, 0
          %v2645 = vsel %vm2637, %v2430, 0
          %2647 = vmatprep.subr.bf16.mxu0 %v2558
          %2648 = vmatpush1.bf16.msra.mxu0 %v2557
          %2649 = vmatprep.subr.bf16.mxu0 %v2560
          %2650 = vmatpush1.bf16.msra.mxu0 %v2559
          %2651 = vmatprep.subr.bf16.mxu0 %v2562
          %2652 = vmatpush1.bf16.msra.mxu0 %v2561
          %2653 = vmatprep.subr.bf16.mxu0 %v2564
          %2654 = vmatpush1.bf16.msra.mxu0 %v2563
          %2655 = vmatprep.subr.bf16.mxu0 %v2566
          %2656 = vmatpush1.bf16.msra.mxu0 %v2565
          %2657 = vmatprep.subr.bf16.mxu0 %v2568
          %2658 = vmatpush1.bf16.msra.mxu0 %v2567
          %2659 = vmatprep.subr.bf16.mxu0 %v2570
          %2660 = vmatpush1.bf16.msra.mxu0 %v2569
          %2661 = vmatprep.subr.bf16.mxu0 %v2572
          %2662 = vmatpush1.bf16.msra.mxu0 %v2571
          %2663 = vmatprep.subr.bf16.mxu0 %v2574
          %2664 = vmatpush1.bf16.msra.mxu0 %v2573
          %2665 = vmatprep.subr.bf16.mxu0 %v2576
          %2666 = vmatpush1.bf16.msra.mxu0 %v2575
          %2667 = vmatprep.subr.bf16.mxu0 %v2578
          %2668 = vmatpush1.bf16.msra.mxu0 %v2577
          %2669 = vmatprep.subr.bf16.mxu0 %v2580
          %2670 = vmatpush1.bf16.msra.mxu0 %v2579
          %2671 = vmatprep.subr.bf16.mxu0 %v2582
          %2672 = vmatpush1.bf16.msra.mxu0 %v2581
          %2673 = vmatprep.subr.bf16.mxu0 %v2584
          %2674 = vmatpush1.bf16.msra.mxu0 %v2583
          %2675 = vmatprep.subr.bf16.mxu0 %v2586
          %2676 = vmatpush1.bf16.msra.mxu0 %v2585
          %2677 = vmatprep.subr.bf16.mxu0 %v2588
          %2678 = vmatpush1.bf16.msra.mxu0 %v2587
          %2679 = vmatprep.mubr.bf16.mxu0 %v2423
          %2680 = vmatmul.mubr.bf16.gmra.mrb[0].mxu0 %v2422
          %v2681 = vpop.f32.mrb[0].mxu0
          %v2682 = vadd.f32 %v2390, %v2681
          %v2683 = vpop.f32.mrb[0].mxu0
          %v2684 = vadd.f32 %v2394, %v2683
          %v2685 = vpop.f32.mrb[0].mxu0
          %v2686 = vadd.f32 %v2390, %v2685
          %v2687 = vpop.f32.mrb[0].mxu0
          %v2688 = vadd.f32 %v2394, %v2687
          %2689 = vmatprep.mubr.bf16.mxu0 %v2426
          %2690 = vmatmul.mubr.bf16.gmra.mrb[0].mxu0 %v2425
          %v2691 = vpop.f32.mrb[0].mxu0
          %v2692 = vadd.f32 %v2390, %v2691
          %v2693 = vpop.f32.mrb[0].mxu0
          %v2694 = vadd.f32 %v2394, %v2693
          %v2695 = vpop.f32.mrb[0].mxu0
          %v2696 = vadd.f32 %v2390, %v2695
          %v2697 = vpop.f32.mrb[0].mxu0
          %v2698 = vadd.f32 %v2394, %v2697
          %2699 = vmatprep.mubr.bf16.mxu0 %v2429
          %2700 = vmatmul.mubr.bf16.gmra.mrb[0].mxu0 %v2428
          %v2701 = vpop.f32.mrb[0].mxu0
          %v2702 = vadd.f32 %v2390, %v2701
          %v2703 = vpop.f32.mrb[0].mxu0
          %v2704 = vadd.f32 %v2394, %v2703
          %v2705 = vpop.f32.mrb[0].mxu0
          %v2706 = vpop.f32.mrb[0].mxu0
          %2707 = vdwg.mxu0
          %2708 = vmatprep.subr.bf16.mxu0 %v2590
          %2709 = vmatpush1.bf16.msra.mxu0 %v2589
          %2710 = vmatprep.subr.bf16.mxu0 %v2592
          %2711 = vmatpush1.bf16.msra.mxu0 %v2591
          %2712 = vmatprep.subr.bf16.mxu0 %v2594
          %2713 = vmatpush1.bf16.msra.mxu0 %v2593
          %2714 = vmatprep.subr.bf16.mxu0 %v2596
          %2715 = vmatpush1.bf16.msra.mxu0 %v2595
          %2716 = vmatprep.subr.bf16.mxu0 0
          %2717 = vmatpush1.bf16.msra.mxu0 0
          %2718 = vmatprep.subr.bf16.mxu0 0
          %2719 = vmatpush1.bf16.msra.mxu0 0
          %2720 = vmatprep.subr.bf16.mxu0 0
          %2721 = vmatpush1.bf16.msra.mxu0 0
          %2722 = vmatprep.subr.bf16.mxu0 0
          %2723 = vmatpush1.bf16.msra.mxu0 0
          %2724 = vmatprep.subr.bf16.mxu0 0
          %2725 = vmatpush1.bf16.msra.mxu0 0
          %2726 = vmatprep.subr.bf16.mxu0 0
          %2727 = vmatpush1.bf16.msra.mxu0 0
          %2728 = vmatprep.subr.bf16.mxu0 0
          %2729 = vmatpush1.bf16.msra.mxu0 0
          %2730 = vmatprep.subr.bf16.mxu0 0
          %2731 = vmatpush1.bf16.msra.mxu0 0
          %2732 = vmatprep.subr.bf16.mxu0 0
          %2733 = vmatpush1.bf16.msra.mxu0 0
          %2734 = vmatprep.subr.bf16.mxu0 0
          %2735 = vmatpush1.bf16.msra.mxu0 0
          %2736 = vmatprep.subr.bf16.mxu0 0
          %2737 = vmatpush1.bf16.msra.mxu0 0
          %2738 = vmatprep.subr.bf16.mxu0 0
          %2739 = vmatpush1.bf16.msra.mxu0 0
          %2740 = vmatprep.mubr.bf16.mxu0 0
          %2741 = vmatmul.mubr.bf16.gmra.mrb[0].mxu0 %v2639
          %v2742 = vpop.f32.mrb[0].mxu0
          %v2743 = vadd.f32 %v2682, %v2742
          %v2744 = vpop.f32.mrb[0].mxu0
          %v2745 = vadd.f32 %v2684, %v2744
          %v2746 = vpop.f32.mrb[0].mxu0
          %v2747 = vadd.f32 %v2686, %v2746
          %v2748 = vpop.f32.mrb[0].mxu0
          %v2749 = vadd.f32 %v2688, %v2748
          %2750 = vmatprep.mubr.bf16.mxu0 0
          %2751 = vmatmul.mubr.bf16.gmra.mrb[0].mxu0 %v2642
          %v2752 = vpop.f32.mrb[0].mxu0
          %v2753 = vadd.f32 %v2692, %v2752
          %v2754 = vpop.f32.mrb[0].mxu0
          %v2755 = vadd.f32 %v2694, %v2754
          %v2756 = vpop.f32.mrb[0].mxu0
          %v2757 = vadd.f32 %v2696, %v2756
          %v2758 = vpop.f32.mrb[0].mxu0
          %v2759 = vadd.f32 %v2698, %v2758
          %2760 = vmatprep.mubr.bf16.mxu0 0
          %2761 = vmatmul.mubr.bf16.gmra.mrb[0].mxu0 %v2645
          %v2762 = vpop.f32.mrb[0].mxu0
          %v2763 = vadd.f32 %v2702, %v2762
          %v2764 = vpop.f32.mrb[0].mxu0
          %v2765 = vadd.f32 %v2704, %v2764
          %v2766 = vpop.f32.mrb[0].mxu0
          %v2767 = vpop.f32.mrb[0].mxu0
          %2768 = vdwg.mxu0
          %v2769 = vld [vmem:[#allocation20] sm:$0xff]
          %v2770 = vld [vmem:[#allocation20 + $0x8] sm:$0xff]
          %v2771 = vld [vmem:[#allocation20 + $0x10] sm:$0xff]
          %v2772 = vld [vmem:[#allocation20 + $0x18] sm:$0xff]
          %v2773 = vld [vmem:[#allocation20 + $0x20] sm:$0xff]
          %v2774 = vld [vmem:[#allocation20 + $0x28] sm:$0xff]
          %v2775 = vld [vmem:[#allocation20 + $0x30] sm:$0xff]
          %v2776 = vld [vmem:[#allocation20 + $0x38] sm:$0xff]
          %v2777 = vld [vmem:[#allocation20 + $0x40] sm:$0xff]
          %v2778 = vld [vmem:[#allocation20 + $0x48] sm:$0xff]
          %v2779 = vld [vmem:[#allocation20 + $0x50] sm:$0xff]
          %v2780 = vld [vmem:[#allocation20 + $0x58] sm:$0xff]
          %v2781 = vld [vmem:[#allocation20 + $0x60] sm:$0xff]
          %v2782 = vld [vmem:[#allocation20 + $0x68] sm:$0xff]
          %v2783 = vld [vmem:[#allocation20 + $0x70] sm:$0xff]
          %v2784 = vld [vmem:[#allocation20 + $0x78] sm:$0xff]
          %v2785 = vld [vmem:[#allocation20 + $0x80] sm:$0xff]
          %v2786 = vld [vmem:[#allocation20 + $0x88] sm:$0xff]
          %v2787 = vld [vmem:[#allocation20 + $0x90] sm:$0xff]
          %v2788 = vld [vmem:[#allocation20 + $0x98] sm:$0xff]
          %v2789 = vld [vmem:[#allocation20 + $0xa0] sm:$0xff]
          %v2790 = vld [vmem:[#allocation20 + $0xa8] sm:$0xff]
          %v2791 = vld [vmem:[#allocation20 + $0xb0] sm:$0xff]
          %v2792 = vld [vmem:[#allocation20 + $0xb8] sm:$0xff]
          %v2793 = vld [vmem:[#allocation20 + $0xc0] sm:$0xff]
          %v2794 = vld [vmem:[#allocation20 + $0xc8] sm:$0xff]
          %v2795 = vld [vmem:[#allocation20 + $0xd0] sm:$0xff]
          %v2796 = vld [vmem:[#allocation20 + $0xd8] sm:$0xff]
          %v2797 = vld [vmem:[#allocation20 + $0xe0] sm:$0xff]
          %v2798 = vld [vmem:[#allocation20 + $0xe8] sm:$0xff]
          %v2799 = vld [vmem:[#allocation20 + $0xf0] sm:$0xff]
          %v2800 = vld [vmem:[#allocation20 + $0xf8] sm:$0xff]
          %v2801 = vld [vmem:[#allocation21] sm:$0xff]
          %v2802 = vld [vmem:[#allocation21 + $0x8] sm:$0xff]
          %v2803 = vld [vmem:[#allocation21 + $0x10] sm:$0xff]
          %v2804 = vld [vmem:[#allocation21 + $0x18] sm:$0xff]
          %v2805 = vld [vmem:[#allocation21 + $0x20] sm:$0xff]
          %v2806 = vld [vmem:[#allocation21 + $0x28] sm:$0xff]
          %v2807 = vld [vmem:[#allocation21 + $0x30] sm:$0xff]
          %v2808 = vld [vmem:[#allocation21 + $0x38] sm:$0xff]
          %v2809 = vld [vmem:[#allocation21 + $0x40] sm:$0xff]
          %v2810 = vld [vmem:[#allocation21 + $0x48] sm:$0xff]
          %v2811 = vld [vmem:[#allocation21 + $0x50] sm:$0xff]
          %v2812 = vld [vmem:[#allocation21 + $0x58] sm:$0xff]
          %v2813 = vld [vmem:[#allocation21 + $0x60] sm:$0xff]
          %v2814 = vld [vmem:[#allocation21 + $0x68] sm:$0xff]
          %v2815 = vld [vmem:[#allocation21 + $0x70] sm:$0xff]
          %v2816 = vld [vmem:[#allocation21 + $0x78] sm:$0xff]
          %v2817 = vld [vmem:[#allocation21 + $0x80] sm:$0xff]
          %v2818 = vld [vmem:[#allocation21 + $0x88] sm:$0xff]
          %v2819 = vld [vmem:[#allocation21 + $0x90] sm:$0xff]
          %v2820 = vld [vmem:[#allocation21 + $0x98] sm:$0xff]
          %v2821 = vld [vmem:[#allocation21 + $0xa0] sm:$0xff]
          %v2822 = vld [vmem:[#allocation21 + $0xa8] sm:$0xff]
          %v2823 = vld [vmem:[#allocation21 + $0xb0] sm:$0xff]
          %v2824 = vld [vmem:[#allocation21 + $0xb8] sm:$0xff]
          %v2825 = vld [vmem:[#allocation21 + $0xc0] sm:$0xff]
          %v2826 = vld [vmem:[#allocation21 + $0xc8] sm:$0xff]
          %v2827 = vld [vmem:[#allocation21 + $0xd0] sm:$0xff]
          %v2828 = vld [vmem:[#allocation21 + $0xd8] sm:$0xff]
          %v2829 = vld [vmem:[#allocation21 + $0xe0] sm:$0xff]
          %v2830 = vld [vmem:[#allocation21 + $0xe8] sm:$0xff]
          %v2831 = vld [vmem:[#allocation21 + $0xf0] sm:$0xff]
          %v2832 = vld [vmem:[#allocation21 + $0xf8] sm:$0xff]
          %v2833 = vpack.c.bf16 %v2747, %v2743
          %v2834 = vpack.c.bf16 %v2749, %v2745
          %v2835 = vpack.c.bf16 %v2757, %v2753
          %v2836 = vpack.c.bf16 %v2759, %v2755
          %v2837 = vpack.c.bf16 %v2763, %v2763
          %v2838 = vpack.c.bf16 %v2765, %v2765
          %v2871 = vunpack.c.l.b16 %v2801
          %v2872 = vunpack.c.h.b16 %v2801
          %v2873 = vunpack.c.l.b16 %v2802
          %v2874 = vunpack.c.h.b16 %v2802
          %v2875 = vunpack.c.l.b16 %v2803
          %v2876 = vunpack.c.h.b16 %v2803
          %v2877 = vunpack.c.l.b16 %v2804
          %v2878 = vunpack.c.h.b16 %v2804
          %v2879 = vunpack.c.l.b16 %v2805
          %v2880 = vunpack.c.h.b16 %v2805
          %v2881 = vunpack.c.l.b16 %v2806
          %v2882 = vunpack.c.h.b16 %v2806
          %v2883 = vunpack.c.l.b16 %v2807
          %v2884 = vunpack.c.h.b16 %v2807
          %v2885 = vunpack.c.l.b16 %v2808
          %v2886 = vunpack.c.h.b16 %v2808
          %v2887 = vunpack.c.l.b16 %v2809
          %v2888 = vunpack.c.h.b16 %v2809
          %v2889 = vunpack.c.l.b16 %v2810
          %v2890 = vunpack.c.h.b16 %v2810
          %v2891 = vunpack.c.l.b16 %v2811
          %v2892 = vunpack.c.h.b16 %v2811
          %v2893 = vunpack.c.l.b16 %v2812
          %v2894 = vunpack.c.h.b16 %v2812
          %v2895 = vunpack.c.l.b16 %v2813
          %v2896 = vunpack.c.h.b16 %v2813
          %v2897 = vunpack.c.l.b16 %v2814
          %v2898 = vunpack.c.h.b16 %v2814
          %v2899 = vunpack.c.l.b16 %v2815
          %v2900 = vunpack.c.h.b16 %v2815
          %v2901 = vunpack.c.l.b16 %v2816
          %v2902 = vunpack.c.h.b16 %v2816
          %v2903 = vunpack.c.l.b16 %v2817
          %v2904 = vunpack.c.h.b16 %v2817
          %v2905 = vunpack.c.l.b16 %v2818
          %v2906 = vunpack.c.h.b16 %v2818
          %v2907 = vunpack.c.l.b16 %v2819
          %v2908 = vunpack.c.h.b16 %v2819
          %v2909 = vunpack.c.l.b16 %v2820
          %v2910 = vunpack.c.h.b16 %v2820
          %v2911 = vunpack.c.l.b16 %v2821
          %v2912 = vunpack.c.h.b16 %v2821
          %v2913 = vunpack.c.l.b16 %v2822
          %v2914 = vunpack.c.h.b16 %v2822
          %v2915 = vunpack.c.l.b16 %v2823
          %v2916 = vunpack.c.h.b16 %v2823
          %v2917 = vunpack.c.l.b16 %v2824
          %v2918 = vunpack.c.h.b16 %v2824
          %v2919 = vunpack.c.l.b16 %v2825
          %v2920 = vunpack.c.h.b16 %v2825
          %v2921 = vunpack.c.l.b16 %v2826
          %v2922 = vunpack.c.h.b16 %v2826
          %v2923 = vunpack.c.l.b16 %v2827
          %v2924 = vunpack.c.h.b16 %v2827
          %v2925 = vunpack.c.l.b16 %v2828
          %v2926 = vunpack.c.h.b16 %v2828
          %v2927 = vunpack.c.l.b16 %v2829
          %v2928 = vunpack.c.h.b16 %v2829
          %v2929 = vunpack.c.l.b16 %v2830
          %v2930 = vunpack.c.h.b16 %v2830
          %v2931 = vunpack.c.l.b16 %v2831
          %v2932 = vunpack.c.h.b16 %v2831
          %v2933 = vunpack.c.l.b16 %v2832
          %v2934 = vunpack.c.h.b16 %v2832
          %v2935 = vpack.c.b16 %v2873, %v2871
          %v2936 = vpack.c.b16 %v2874, %v2872
          %v2937 = vpack.c.b16 %v2877, %v2875
          %v2938 = vpack.c.b16 %v2878, %v2876
          %v2939 = vpack.c.b16 %v2881, %v2879
          %v2940 = vpack.c.b16 %v2882, %v2880
          %v2941 = vpack.c.b16 %v2885, %v2883
          %v2942 = vpack.c.b16 %v2886, %v2884
          %v2943 = vpack.c.b16 %v2889, %v2887
          %v2944 = vpack.c.b16 %v2890, %v2888
          %v2945 = vpack.c.b16 %v2893, %v2891
          %v2946 = vpack.c.b16 %v2894, %v2892
          %v2947 = vpack.c.b16 %v2897, %v2895
          %v2948 = vpack.c.b16 %v2898, %v2896
          %v2949 = vpack.c.b16 %v2901, %v2899
          %v2950 = vpack.c.b16 %v2902, %v2900
          %v2951 = vpack.c.b16 %v2905, %v2903
          %v2952 = vpack.c.b16 %v2906, %v2904
          %v2953 = vpack.c.b16 %v2909, %v2907
          %v2954 = vpack.c.b16 %v2910, %v2908
          %v2955 = vpack.c.b16 %v2913, %v2911
          %v2956 = vpack.c.b16 %v2914, %v2912
          %v2957 = vpack.c.b16 %v2917, %v2915
          %v2958 = vpack.c.b16 %v2918, %v2916
          %v2959 = vpack.c.b16 %v2921, %v2919
          %v2960 = vpack.c.b16 %v2922, %v2920
          %v2961 = vpack.c.b16 %v2925, %v2923
          %v2962 = vpack.c.b16 %v2926, %v2924
          %v2963 = vpack.c.b16 %v2929, %v2927
          %v2964 = vpack.c.b16 %v2930, %v2928
          %v2965 = vpack.c.b16 %v2933, %v2931
          %v2966 = vpack.c.b16 %v2934, %v2932
          %2999 = vmatprep.subr.bf16.mxu0 %v2936
          %3000 = vmatpush1.bf16.msra.mxu0 %v2935
          %3001 = vmatprep.subr.bf16.mxu0 %v2938
          %3002 = vmatpush1.bf16.msra.mxu0 %v2937
          %3003 = vmatprep.subr.bf16.mxu0 %v2940
          %3004 = vmatpush1.bf16.msra.mxu0 %v2939
          %3005 = vmatprep.subr.bf16.mxu0 %v2942
          %3006 = vmatpush1.bf16.msra.mxu0 %v2941
          %3007 = vmatprep.subr.bf16.mxu0 %v2944
          %3008 = vmatpush1.bf16.msra.mxu0 %v2943
          %3009 = vmatprep.subr.bf16.mxu0 %v2946
          %3010 = vmatpush1.bf16.msra.mxu0 %v2945
          %3011 = vmatprep.subr.bf16.mxu0 %v2948
          %3012 = vmatpush1.bf16.msra.mxu0 %v2947
          %3013 = vmatprep.subr.bf16.mxu0 %v2950
          %3014 = vmatpush1.bf16.msra.mxu0 %v2949
          %3015 = vmatprep.subr.bf16.mxu0 %v2952
          %3016 = vmatpush1.bf16.msra.mxu0 %v2951
          %3017 = vmatprep.subr.bf16.mxu0 %v2954
          %3018 = vmatpush1.bf16.msra.mxu0 %v2953
          %3019 = vmatprep.subr.bf16.mxu0 %v2956
          %3020 = vmatpush1.bf16.msra.mxu0 %v2955
          %3021 = vmatprep.subr.bf16.mxu0 %v2958
          %3022 = vmatpush1.bf16.msra.mxu0 %v2957
          %3023 = vmatprep.subr.bf16.mxu0 %v2960
          %3024 = vmatpush1.bf16.msra.mxu0 %v2959
          %3025 = vmatprep.subr.bf16.mxu0 %v2962
          %3026 = vmatpush1.bf16.msra.mxu0 %v2961
          %3027 = vmatprep.subr.bf16.mxu0 %v2964
          %3028 = vmatpush1.bf16.msra.mxu0 %v2963
          %3029 = vmatprep.subr.bf16.mxu0 %v2966
          %3030 = vmatpush1.bf16.msra.mxu0 %v2965
          %3031 = vmatprep.mubr.bf16.mxu0 %v2834
          %3032 = vmatmul.mubr.bf16.gmra.mrb[0].mxu0 %v2833
          %v3033 = vpop.f32.mrb[0].mxu0
          %v3034 = vadd.f32 0.0, %v3033
          %v3035 = vpop.f32.mrb[0].mxu0
          %v3036 = vadd.f32 0.0, %v3035
          %v3037 = vpop.f32.mrb[0].mxu0
          %v3038 = vadd.f32 0.0, %v3037
          %v3039 = vpop.f32.mrb[0].mxu0
          %v3040 = vadd.f32 0.0, %v3039
          %3041 = vmatprep.mubr.bf16.mxu0 %v2836
          %3042 = vmatmul.mubr.bf16.gmra.mrb[0].mxu0 %v2835
          %v3043 = vpop.f32.mrb[0].mxu0
          %v3044 = vadd.f32 0.0, %v3043
          %v3045 = vpop.f32.mrb[0].mxu0
          %v3046 = vadd.f32 0.0, %v3045
          %v3047 = vpop.f32.mrb[0].mxu0
          %v3048 = vadd.f32 0.0, %v3047
          %v3049 = vpop.f32.mrb[0].mxu0
          %v3050 = vadd.f32 0.0, %v3049
          %3051 = vmatprep.mubr.bf16.mxu0 %v2838
          %3052 = vmatmul.mubr.bf16.gmra.mrb[0].mxu0 %v2837
          %v3053 = vpop.f32.mrb[0].mxu0
          %v3054 = vadd.f32 0.0, %v3053
          %v3055 = vpop.f32.mrb[0].mxu0
          %v3056 = vadd.f32 0.0, %v3055
          %v3057 = vpop.f32.mrb[0].mxu0
          %v3058 = vpop.f32.mrb[0].mxu0
          %3059 = vdwg.mxu0
          %v3065 = vunpack.c.l.b16 %v1805
          %v3066 = vunpack.c.h.b16 %v1805
          %v3067 = vunpack.c.l.b16 %v1806
          %v3068 = vunpack.c.h.b16 %v1806
          %v3069 = vunpack.c.l.b16 %v1807
          %v3070 = vunpack.c.h.b16 %v1807
          %v3071 = vunpack.c.l.b16 %v1808
          %v3072 = vunpack.c.h.b16 %v1808
          %v3073 = vunpack.c.l.b16 %v1809
          %v3074 = vunpack.c.h.b16 %v1809
          %v3075 = vpack.c.b16 %v3067, %v3065
          %v3076 = vpack.c.b16 %v3068, %v3066
          %v3077 = vpack.c.b16 %v3071, %v3069
          %v3078 = vpack.c.b16 %v3072, %v3070
          %v3079 = vpack.c.b16 %v3073, %v3073
          %v3080 = vpack.c.b16 %v3074, %v3074
          %v3119 = vunpack.c.l.b16 %v2769
          %v3120 = vunpack.c.h.b16 %v2769
          %v3121 = vunpack.c.l.b16 %v2770
          %v3122 = vunpack.c.h.b16 %v2770
          %v3123 = vunpack.c.l.b16 %v2771
          %v3124 = vunpack.c.h.b16 %v2771
          %v3125 = vunpack.c.l.b16 %v2772
          %v3126 = vunpack.c.h.b16 %v2772
          %v3127 = vunpack.c.l.b16 %v2773
          %v3128 = vunpack.c.h.b16 %v2773
          %v3129 = vunpack.c.l.b16 %v2774
          %v3130 = vunpack.c.h.b16 %v2774
          %v3131 = vunpack.c.l.b16 %v2775
          %v3132 = vunpack.c.h.b16 %v2775
          %v3133 = vunpack.c.l.b16 %v2776
          %v3134 = vunpack.c.h.b16 %v2776
          %v3135 = vunpack.c.l.b16 %v2777
          %v3136 = vunpack.c.h.b16 %v2777
          %v3137 = vunpack.c.l.b16 %v2778
          %v3138 = vunpack.c.h.b16 %v2778
          %v3139 = vunpack.c.l.b16 %v2779
          %v3140 = vunpack.c.h.b16 %v2779
          %v3141 = vunpack.c.l.b16 %v2780
          %v3142 = vunpack.c.h.b16 %v2780
          %v3143 = vunpack.c.l.b16 %v2781
          %v3144 = vunpack.c.h.b16 %v2781
          %v3145 = vunpack.c.l.b16 %v2782
          %v3146 = vunpack.c.h.b16 %v2782
          %v3147 = vunpack.c.l.b16 %v2783
          %v3148 = vunpack.c.h.b16 %v2783
          %v3149 = vunpack.c.l.b16 %v2784
          %v3150 = vunpack.c.h.b16 %v2784
          %v3151 = vunpack.c.l.b16 %v2785
          %v3152 = vunpack.c.h.b16 %v2785
          %v3153 = vunpack.c.l.b16 %v2786
          %v3154 = vunpack.c.h.b16 %v2786
          %v3155 = vunpack.c.l.b16 %v2787
          %v3156 = vunpack.c.h.b16 %v2787
          %v3157 = vunpack.c.l.b16 %v2788
          %v3158 = vunpack.c.h.b16 %v2788
          %v3159 = vunpack.c.l.b16 %v2789
          %v3160 = vunpack.c.h.b16 %v2789
          %v3161 = vunpack.c.l.b16 %v2790
          %v3162 = vunpack.c.h.b16 %v2790
          %v3163 = vunpack.c.l.b16 %v2791
          %v3164 = vunpack.c.h.b16 %v2791
          %v3165 = vunpack.c.l.b16 %v2792
          %v3166 = vunpack.c.h.b16 %v2792
          %v3167 = vunpack.c.l.b16 %v2793
          %v3168 = vunpack.c.h.b16 %v2793
          %v3169 = vunpack.c.l.b16 %v2794
          %v3170 = vunpack.c.h.b16 %v2794
          %v3171 = vunpack.c.l.b16 %v2795
          %v3172 = vunpack.c.h.b16 %v2795
          %v3173 = vunpack.c.l.b16 %v2796
          %v3174 = vunpack.c.h.b16 %v2796
          %v3175 = vunpack.c.l.b16 %v2797
          %v3176 = vunpack.c.h.b16 %v2797
          %v3177 = vunpack.c.l.b16 %v2798
          %v3178 = vunpack.c.h.b16 %v2798
          %v3179 = vunpack.c.l.b16 %v2799
          %v3180 = vunpack.c.h.b16 %v2799
          %v3181 = vunpack.c.l.b16 %v2800
          %v3182 = vunpack.c.h.b16 %v2800
          %v3183 = vpack.c.b16 %v3121, %v3119
          %v3184 = vpack.c.b16 %v3122, %v3120
          %v3185 = vpack.c.b16 %v3125, %v3123
          %v3186 = vpack.c.b16 %v3126, %v3124
          %v3187 = vpack.c.b16 %v3129, %v3127
          %v3188 = vpack.c.b16 %v3130, %v3128
          %v3189 = vpack.c.b16 %v3133, %v3131
          %v3190 = vpack.c.b16 %v3134, %v3132
          %v3191 = vpack.c.b16 %v3137, %v3135
          %v3192 = vpack.c.b16 %v3138, %v3136
          %v3193 = vpack.c.b16 %v3141, %v3139
          %v3194 = vpack.c.b16 %v3142, %v3140
          %v3195 = vpack.c.b16 %v3145, %v3143
          %v3196 = vpack.c.b16 %v3146, %v3144
          %v3197 = vpack.c.b16 %v3149, %v3147
          %v3198 = vpack.c.b16 %v3150, %v3148
          %v3199 = vpack.c.b16 %v3153, %v3151
          %v3200 = vpack.c.b16 %v3154, %v3152
          %v3201 = vpack.c.b16 %v3157, %v3155
          %v3202 = vpack.c.b16 %v3158, %v3156
          %v3203 = vpack.c.b16 %v3161, %v3159
          %v3204 = vpack.c.b16 %v3162, %v3160
          %v3205 = vpack.c.b16 %v3165, %v3163
          %v3206 = vpack.c.b16 %v3166, %v3164
          %v3207 = vpack.c.b16 %v3169, %v3167
          %v3208 = vpack.c.b16 %v3170, %v3168
          %v3209 = vpack.c.b16 %v3173, %v3171
          %v3210 = vpack.c.b16 %v3174, %v3172
          %v3211 = vpack.c.b16 %v3177, %v3175
          %v3212 = vpack.c.b16 %v3178, %v3176
          %v3213 = vpack.c.b16 %v3181, %v3179
          %v3214 = vpack.c.b16 %v3182, %v3180
          %3247 = vmatprep.subr.bf16.mxu0 %v3184
          %3248 = vmatpush1.bf16.msra.mxu0 %v3183
          %3249 = vmatprep.subr.bf16.mxu0 %v3186
          %3250 = vmatpush1.bf16.msra.mxu0 %v3185
          %3251 = vmatprep.subr.bf16.mxu0 %v3188
          %3252 = vmatpush1.bf16.msra.mxu0 %v3187
          %3253 = vmatprep.subr.bf16.mxu0 %v3190
          %3254 = vmatpush1.bf16.msra.mxu0 %v3189
          %3255 = vmatprep.subr.bf16.mxu0 %v3192
          %3256 = vmatpush1.bf16.msra.mxu0 %v3191
          %3257 = vmatprep.subr.bf16.mxu0 %v3194
          %3258 = vmatpush1.bf16.msra.mxu0 %v3193
          %3259 = vmatprep.subr.bf16.mxu0 %v3196
          %3260 = vmatpush1.bf16.msra.mxu0 %v3195
          %3261 = vmatprep.subr.bf16.mxu0 %v3198
          %3262 = vmatpush1.bf16.msra.mxu0 %v3197
          %3263 = vmatprep.subr.bf16.mxu0 %v3200
          %3264 = vmatpush1.bf16.msra.mxu0 %v3199
          %3265 = vmatprep.subr.bf16.mxu0 %v3202
          %3266 = vmatpush1.bf16.msra.mxu0 %v3201
          %3267 = vmatprep.subr.bf16.mxu0 %v3204
          %3268 = vmatpush1.bf16.msra.mxu0 %v3203
          %3269 = vmatprep.subr.bf16.mxu0 %v3206
          %3270 = vmatpush1.bf16.msra.mxu0 %v3205
          %3271 = vmatprep.subr.bf16.mxu0 %v3208
          %3272 = vmatpush1.bf16.msra.mxu0 %v3207
          %3273 = vmatprep.subr.bf16.mxu0 %v3210
          %3274 = vmatpush1.bf16.msra.mxu0 %v3209
          %3275 = vmatprep.subr.bf16.mxu0 %v3212
          %3276 = vmatpush1.bf16.msra.mxu0 %v3211
          %3277 = vmatprep.subr.bf16.mxu0 %v3214
          %3278 = vmatpush1.bf16.msra.mxu0 %v3213
          %3279 = vmatprep.mubr.bf16.mxu0 %v3076
          %3280 = vmatmul.mubr.bf16.gmra.mrb[0].mxu0 %v3075
          %v3281 = vpop.f32.mrb[0].mxu0
          %v3282 = vadd.f32 %v3034, %v3281
          %v3283 = vpop.f32.mrb[0].mxu0
          %v3284 = vadd.f32 %v3036, %v3283
          %v3285 = vpop.f32.mrb[0].mxu0
          %v3286 = vadd.f32 %v3038, %v3285
          %v3287 = vpop.f32.mrb[0].mxu0
          %v3288 = vadd.f32 %v3040, %v3287
          %3289 = vmatprep.mubr.bf16.mxu0 %v3078
          %3290 = vmatmul.mubr.bf16.gmra.mrb[0].mxu0 %v3077
          %v3291 = vpop.f32.mrb[0].mxu0
          %v3292 = vadd.f32 %v3044, %v3291
          %v3293 = vpop.f32.mrb[0].mxu0
          %v3294 = vadd.f32 %v3046, %v3293
          %v3295 = vpop.f32.mrb[0].mxu0
          %v3296 = vadd.f32 %v3048, %v3295
          %v3297 = vpop.f32.mrb[0].mxu0
          %v3298 = vadd.f32 %v3050, %v3297
          %3299 = vmatprep.mubr.bf16.mxu0 %v3080
          %3300 = vmatmul.mubr.bf16.gmra.mrb[0].mxu0 %v3079
          %v3301 = vpop.f32.mrb[0].mxu0
          %v3302 = vadd.f32 %v3054, %v3301
          %v3303 = vpop.f32.mrb[0].mxu0
          %v3304 = vadd.f32 %v3056, %v3303
          %v3305 = vpop.f32.mrb[0].mxu0
          %v3306 = vpop.f32.mrb[0].mxu0
          %3307 = vdwg.mxu0
          %v3308 = vld [vmem:[#allocation23] sm:$0x3]
          %v3310 = vlaneseq
          %v3311 = vshrl.u32 %v3310, 7
          %v3312 = vsub.s32 0, %v3311
          %v3313 = vrot.slane %v3308, %v3312
          %v3314 = vlaneseq
          %v3315 = vshrl.u32 %v3314, 7
          %v3316 = vsub.s32 1, %v3315
          %v3317 = vrot.slane %v3308, %v3316
          %v3320 = vadd.f32 %v3282, %v3313
          %v3321 = vadd.f32 %v3284, %v3317
          %v3322 = vadd.f32 %v3286, %v3313
          %v3323 = vadd.f32 %v3288, %v3317
          %v3324 = vadd.f32 %v3292, %v3313
          %v3325 = vadd.f32 %v3294, %v3317
          %v3326 = vadd.f32 %v3296, %v3313
          %v3327 = vadd.f32 %v3298, %v3317
          %v3328 = vadd.f32 %v3302, %v3313
          %v3329 = vadd.f32 %v3304, %v3317
          %v3330 = vmul.f32 %v3320, %v3320
          %v3331 = vmul.f32 %v3321, %v3321
          %v3332 = vmul.f32 %v3322, %v3322
          %v3333 = vmul.f32 %v3323, %v3323
          %v3334 = vmul.f32 %v3324, %v3324
          %v3335 = vmul.f32 %v3325, %v3325
          %v3336 = vmul.f32 %v3326, %v3326
          %v3337 = vmul.f32 %v3327, %v3327
          %v3338 = vmul.f32 %v3328, %v3328
          %v3339 = vmul.f32 %v3329, %v3329
          %v3340 = vmul.f32 %v3320, %v3330
          %v3341 = vmul.f32 %v3321, %v3331
          %v3342 = vmul.f32 %v3322, %v3332
          %v3343 = vmul.f32 %v3323, %v3333
          %v3344 = vmul.f32 %v3324, %v3334
          %v3345 = vmul.f32 %v3325, %v3335
          %v3346 = vmul.f32 %v3326, %v3336
          %v3347 = vmul.f32 %v3327, %v3337
          %v3348 = vmul.f32 %v3328, %v3338
          %v3349 = vmul.f32 %v3329, %v3339
          %v3350 = vmul.f32 %v3340, 0.044715
          %v3351 = vmul.f32 %v3341, 0.044715
          %v3352 = vmul.f32 %v3342, 0.044715
          %v3353 = vmul.f32 %v3343, 0.044715
          %v3354 = vmul.f32 %v3344, 0.044715
          %v3355 = vmul.f32 %v3345, 0.044715
          %v3356 = vmul.f32 %v3346, 0.044715
          %v3357 = vmul.f32 %v3347, 0.044715
          %v3358 = vmul.f32 %v3348, 0.044715
          %v3359 = vmul.f32 %v3349, 0.044715
          %v3360 = vadd.f32 %v3320, %v3350
          %v3361 = vadd.f32 %v3321, %v3351
          %v3362 = vadd.f32 %v3322, %v3352
          %v3363 = vadd.f32 %v3323, %v3353
          %v3364 = vadd.f32 %v3324, %v3354
          %v3365 = vadd.f32 %v3325, %v3355
          %v3366 = vadd.f32 %v3326, %v3356
          %v3367 = vadd.f32 %v3327, %v3357
          %v3368 = vadd.f32 %v3328, %v3358
          %v3369 = vadd.f32 %v3329, %v3359
          %v3370 = vmul.f32 %v3360, 0.7978846
          %v3371 = vmul.f32 %v3361, 0.7978846
          %v3372 = vmul.f32 %v3362, 0.7978846
          %v3373 = vmul.f32 %v3363, 0.7978846
          %v3374 = vmul.f32 %v3364, 0.7978846
          %v3375 = vmul.f32 %v3365, 0.7978846
          %v3376 = vmul.f32 %v3366, 0.7978846
          %v3377 = vmul.f32 %v3367, 0.7978846
          %v3378 = vmul.f32 %v3368, 0.7978846
          %v3379 = vmul.f32 %v3369, 0.7978846
          %v3380 = vtanh.pop %v3370
          %v3381 = vtanh.pop %v3371
          %v3382 = vtanh.pop %v3372
          %v3383 = vtanh.pop %v3373
          %v3384 = vtanh.pop %v3374
          %v3385 = vtanh.pop %v3375
          %v3386 = vtanh.pop %v3376
          %v3387 = vtanh.pop %v3377
          %v3388 = vtanh.pop %v3378
          %v3389 = vtanh.pop %v3379
          %v3390 = vadd.f32 %v3380, 1.0
          %v3391 = vadd.f32 %v3381, 1.0
          %v3392 = vadd.f32 %v3382, 1.0
          %v3393 = vadd.f32 %v3383, 1.0
          %v3394 = vadd.f32 %v3384, 1.0
          %v3395 = vadd.f32 %v3385, 1.0
          %v3396 = vadd.f32 %v3386, 1.0
          %v3397 = vadd.f32 %v3387, 1.0
          %v3398 = vadd.f32 %v3388, 1.0
          %v3399 = vadd.f32 %v3389, 1.0
          %v3400 = vmul.f32 %v3390, 0.5
          %v3401 = vmul.f32 %v3391, 0.5
          %v3402 = vmul.f32 %v3392, 0.5
          %v3403 = vmul.f32 %v3393, 0.5
          %v3404 = vmul.f32 %v3394, 0.5
          %v3405 = vmul.f32 %v3395, 0.5
          %v3406 = vmul.f32 %v3396, 0.5
          %v3407 = vmul.f32 %v3397, 0.5
          %v3408 = vmul.f32 %v3398, 0.5
          %v3409 = vmul.f32 %v3399, 0.5
          %v3410 = vmul.f32 %v3320, %v3400
          %v3411 = vmul.f32 %v3321, %v3401
          %v3412 = vmul.f32 %v3322, %v3402
          %v3413 = vmul.f32 %v3323, %v3403
          %v3414 = vmul.f32 %v3324, %v3404
          %v3415 = vmul.f32 %v3325, %v3405
          %v3416 = vmul.f32 %v3326, %v3406
          %v3417 = vmul.f32 %v3327, %v3407
          %v3418 = vmul.f32 %v3328, %v3408
          %v3419 = vmul.f32 %v3329, %v3409
          %v3420 = vld [vmem:[#allocation24] sm:$0xff]
          %v3421 = vld [vmem:[#allocation24 + $0x8] sm:$0xff]
          %v3422 = vld [vmem:[#allocation24 + $0x10] sm:$0xff]
          %v3423 = vld [vmem:[#allocation24 + $0x18] sm:$0xff]
          %v3424 = vld [vmem:[#allocation24 + $0x20] sm:$0xff]
          %v3425 = vld [vmem:[#allocation24 + $0x28] sm:$0xff]
          %v3426 = vld [vmem:[#allocation24 + $0x30] sm:$0xff]
          %v3427 = vld [vmem:[#allocation24 + $0x38] sm:$0xff]
          %v3428 = vld [vmem:[#allocation24 + $0x40] sm:$0xff]
          %v3429 = vld [vmem:[#allocation24 + $0x48] sm:$0xff]
          %v3430 = vld [vmem:[#allocation24 + $0x50] sm:$0xff]
          %v3431 = vld [vmem:[#allocation24 + $0x58] sm:$0xff]
          %v3432 = vld [vmem:[#allocation24 + $0x60] sm:$0xff]
          %v3433 = vld [vmem:[#allocation24 + $0x68] sm:$0xff]
          %v3434 = vld [vmem:[#allocation24 + $0x70] sm:$0xff]
          %v3435 = vld [vmem:[#allocation24 + $0x78] sm:$0xff]
          %v3436 = vld [vmem:[#allocation24 + $0x80] sm:$0xff]
          %v3437 = vld [vmem:[#allocation24 + $0x88] sm:$0xff]
          %v3438 = vld [vmem:[#allocation24 + $0x90] sm:$0xff]
          %v3439 = vld [vmem:[#allocation24 + $0x98] sm:$0xff]
          %v3440 = vld [vmem:[#allocation24 + $0xa0] sm:$0xff]
          %v3441 = vld [vmem:[#allocation24 + $0xa8] sm:$0xff]
          %v3442 = vld [vmem:[#allocation24 + $0xb0] sm:$0xff]
          %v3443 = vld [vmem:[#allocation24 + $0xb8] sm:$0xff]
          %v3444 = vld [vmem:[#allocation24 + $0xc0] sm:$0xff]
          %v3445 = vld [vmem:[#allocation24 + $0xc8] sm:$0xff]
          %v3446 = vld [vmem:[#allocation24 + $0xd0] sm:$0xff]
          %v3447 = vld [vmem:[#allocation24 + $0xd8] sm:$0xff]
          %v3448 = vld [vmem:[#allocation24 + $0xe0] sm:$0xff]
          %v3449 = vld [vmem:[#allocation24 + $0xe8] sm:$0xff]
          %v3450 = vld [vmem:[#allocation24 + $0xf0] sm:$0xff]
          %v3451 = vld [vmem:[#allocation24 + $0xf8] sm:$0xff]
          %v3452 = vpack.c.bf16 %v3412, %v3410
          %v3453 = vpack.c.bf16 %v3413, %v3411
          %v3454 = vpack.c.bf16 %v3416, %v3414
          %v3455 = vpack.c.bf16 %v3417, %v3415
          %v3456 = vpack.c.bf16 %v3418, %v3418
          %v3457 = vpack.c.bf16 %v3419, %v3419
          %v3458 = vld [vmem:[#allocation26] sm:$0x3]
          %v3460 = vlaneseq
          %v3461 = vshrl.u32 %v3460, 7
          %v3462 = vsub.s32 0, %v3461
          %v3463 = vrot.slane %v3458, %v3462
          %v3464 = vlaneseq
          %v3465 = vshrl.u32 %v3464, 7
          %v3466 = vsub.s32 1, %v3465
          %v3467 = vrot.slane %v3458, %v3466
          %v3502 = vunpack.c.l.b16 %v3420
          %v3503 = vunpack.c.h.b16 %v3420
          %v3504 = vunpack.c.l.b16 %v3421
          %v3505 = vunpack.c.h.b16 %v3421
          %v3506 = vunpack.c.l.b16 %v3422
          %v3507 = vunpack.c.h.b16 %v3422
          %v3508 = vunpack.c.l.b16 %v3423
          %v3509 = vunpack.c.h.b16 %v3423
          %v3510 = vunpack.c.l.b16 %v3424
          %v3511 = vunpack.c.h.b16 %v3424
          %v3512 = vunpack.c.l.b16 %v3425
          %v3513 = vunpack.c.h.b16 %v3425
          %v3514 = vunpack.c.l.b16 %v3426
          %v3515 = vunpack.c.h.b16 %v3426
          %v3516 = vunpack.c.l.b16 %v3427
          %v3517 = vunpack.c.h.b16 %v3427
          %v3518 = vunpack.c.l.b16 %v3428
          %v3519 = vunpack.c.h.b16 %v3428
          %v3520 = vunpack.c.l.b16 %v3429
          %v3521 = vunpack.c.h.b16 %v3429
          %v3522 = vunpack.c.l.b16 %v3430
          %v3523 = vunpack.c.h.b16 %v3430
          %v3524 = vunpack.c.l.b16 %v3431
          %v3525 = vunpack.c.h.b16 %v3431
          %v3526 = vunpack.c.l.b16 %v3432
          %v3527 = vunpack.c.h.b16 %v3432
          %v3528 = vunpack.c.l.b16 %v3433
          %v3529 = vunpack.c.h.b16 %v3433
          %v3530 = vunpack.c.l.b16 %v3434
          %v3531 = vunpack.c.h.b16 %v3434
          %v3532 = vunpack.c.l.b16 %v3435
          %v3533 = vunpack.c.h.b16 %v3435
          %v3534 = vunpack.c.l.b16 %v3436
          %v3535 = vunpack.c.h.b16 %v3436
          %v3536 = vunpack.c.l.b16 %v3437
          %v3537 = vunpack.c.h.b16 %v3437
          %v3538 = vunpack.c.l.b16 %v3438
          %v3539 = vunpack.c.h.b16 %v3438
          %v3540 = vunpack.c.l.b16 %v3439
          %v3541 = vunpack.c.h.b16 %v3439
          %v3542 = vunpack.c.l.b16 %v3440
          %v3543 = vunpack.c.h.b16 %v3440
          %v3544 = vunpack.c.l.b16 %v3441
          %v3545 = vunpack.c.h.b16 %v3441
          %v3546 = vunpack.c.l.b16 %v3442
          %v3547 = vunpack.c.h.b16 %v3442
          %v3548 = vunpack.c.l.b16 %v3443
          %v3549 = vunpack.c.h.b16 %v3443
          %v3550 = vunpack.c.l.b16 %v3444
          %v3551 = vunpack.c.h.b16 %v3444
          %v3552 = vunpack.c.l.b16 %v3445
          %v3553 = vunpack.c.h.b16 %v3445
          %v3554 = vunpack.c.l.b16 %v3446
          %v3555 = vunpack.c.h.b16 %v3446
          %v3556 = vunpack.c.l.b16 %v3447
          %v3557 = vunpack.c.h.b16 %v3447
          %v3558 = vunpack.c.l.b16 %v3448
          %v3559 = vunpack.c.h.b16 %v3448
          %v3560 = vunpack.c.l.b16 %v3449
          %v3561 = vunpack.c.h.b16 %v3449
          %v3562 = vunpack.c.l.b16 %v3450
          %v3563 = vunpack.c.h.b16 %v3450
          %v3564 = vunpack.c.l.b16 %v3451
          %v3565 = vunpack.c.h.b16 %v3451
          %v3566 = vpack.c.b16 %v3504, %v3502
          %v3567 = vpack.c.b16 %v3505, %v3503
          %v3568 = vpack.c.b16 %v3508, %v3506
          %v3569 = vpack.c.b16 %v3509, %v3507
          %v3570 = vpack.c.b16 %v3512, %v3510
          %v3571 = vpack.c.b16 %v3513, %v3511
          %v3572 = vpack.c.b16 %v3516, %v3514
          %v3573 = vpack.c.b16 %v3517, %v3515
          %v3574 = vpack.c.b16 %v3520, %v3518
          %v3575 = vpack.c.b16 %v3521, %v3519
          %v3576 = vpack.c.b16 %v3524, %v3522
          %v3577 = vpack.c.b16 %v3525, %v3523
          %v3578 = vpack.c.b16 %v3528, %v3526
          %v3579 = vpack.c.b16 %v3529, %v3527
          %v3580 = vpack.c.b16 %v3532, %v3530
          %v3581 = vpack.c.b16 %v3533, %v3531
          %v3582 = vpack.c.b16 %v3536, %v3534
          %v3583 = vpack.c.b16 %v3537, %v3535
          %v3584 = vpack.c.b16 %v3540, %v3538
          %v3585 = vpack.c.b16 %v3541, %v3539
          %v3586 = vpack.c.b16 %v3544, %v3542
          %v3587 = vpack.c.b16 %v3545, %v3543
          %v3588 = vpack.c.b16 %v3548, %v3546
          %v3589 = vpack.c.b16 %v3549, %v3547
          %v3590 = vpack.c.b16 %v3552, %v3550
          %v3591 = vpack.c.b16 %v3553, %v3551
          %v3592 = vpack.c.b16 %v3556, %v3554
          %v3593 = vpack.c.b16 %v3557, %v3555
          %v3594 = vpack.c.b16 %v3560, %v3558
          %v3595 = vpack.c.b16 %v3561, %v3559
          %v3596 = vpack.c.b16 %v3564, %v3562
          %v3597 = vpack.c.b16 %v3565, %v3563
          %3630 = vmatprep.subr.bf16.mxu0 %v3567
          %3631 = vmatpush1.bf16.msra.mxu0 %v3566
          %3632 = vmatprep.subr.bf16.mxu0 %v3569
          %3633 = vmatpush1.bf16.msra.mxu0 %v3568
          %3634 = vmatprep.subr.bf16.mxu0 %v3571
          %3635 = vmatpush1.bf16.msra.mxu0 %v3570
          %3636 = vmatprep.subr.bf16.mxu0 %v3573
          %3637 = vmatpush1.bf16.msra.mxu0 %v3572
          %3638 = vmatprep.subr.bf16.mxu0 %v3575
          %3639 = vmatpush1.bf16.msra.mxu0 %v3574
          %3640 = vmatprep.subr.bf16.mxu0 %v3577
          %3641 = vmatpush1.bf16.msra.mxu0 %v3576
          %3642 = vmatprep.subr.bf16.mxu0 %v3579
          %3643 = vmatpush1.bf16.msra.mxu0 %v3578
          %3644 = vmatprep.subr.bf16.mxu0 %v3581
          %3645 = vmatpush1.bf16.msra.mxu0 %v3580
          %3646 = vmatprep.subr.bf16.mxu0 %v3583
          %3647 = vmatpush1.bf16.msra.mxu0 %v3582
          %3648 = vmatprep.subr.bf16.mxu0 %v3585
          %3649 = vmatpush1.bf16.msra.mxu0 %v3584
          %3650 = vmatprep.subr.bf16.mxu0 %v3587
          %3651 = vmatpush1.bf16.msra.mxu0 %v3586
          %3652 = vmatprep.subr.bf16.mxu0 %v3589
          %3653 = vmatpush1.bf16.msra.mxu0 %v3588
          %3654 = vmatprep.subr.bf16.mxu0 %v3591
          %3655 = vmatpush1.bf16.msra.mxu0 %v3590
          %3656 = vmatprep.subr.bf16.mxu0 %v3593
          %3657 = vmatpush1.bf16.msra.mxu0 %v3592
          %3658 = vmatprep.subr.bf16.mxu0 %v3595
          %3659 = vmatpush1.bf16.msra.mxu0 %v3594
          %3660 = vmatprep.subr.bf16.mxu0 %v3597
          %3661 = vmatpush1.bf16.msra.mxu0 %v3596
          %3662 = vmatprep.mubr.bf16.mxu0 %v3453
          %3663 = vmatmul.mubr.bf16.gmra.mrb[0].mxu0 %v3452
          %v3664 = vpop.f32.mrb[0].mxu0
          %v3665 = vadd.f32 %v3463, %v3664
          %v3666 = vpop.f32.mrb[0].mxu0
          %v3667 = vadd.f32 %v3467, %v3666
          %v3668 = vpop.f32.mrb[0].mxu0
          %v3669 = vadd.f32 %v3463, %v3668
          %v3670 = vpop.f32.mrb[0].mxu0
          %v3671 = vadd.f32 %v3467, %v3670
          %3672 = vmatprep.mubr.bf16.mxu0 %v3455
          %3673 = vmatmul.mubr.bf16.gmra.mrb[0].mxu0 %v3454
          %v3674 = vpop.f32.mrb[0].mxu0
          %v3675 = vadd.f32 %v3463, %v3674
          %v3676 = vpop.f32.mrb[0].mxu0
          %v3677 = vadd.f32 %v3467, %v3676
          %v3678 = vpop.f32.mrb[0].mxu0
          %v3679 = vadd.f32 %v3463, %v3678
          %v3680 = vpop.f32.mrb[0].mxu0
          %v3681 = vadd.f32 %v3467, %v3680
          %3682 = vmatprep.mubr.bf16.mxu0 %v3457
          %3683 = vmatmul.mubr.bf16.gmra.mrb[0].mxu0 %v3456
          %v3684 = vpop.f32.mrb[0].mxu0
          %v3685 = vadd.f32 %v3463, %v3684
          %v3686 = vpop.f32.mrb[0].mxu0
          %v3687 = vadd.f32 %v3467, %v3686
          %v3688 = vpop.f32.mrb[0].mxu0
          %v3689 = vpop.f32.mrb[0].mxu0
          %3690 = vdwg.mxu0
          %v3691 = vld [vmem:[#allocation8] sm:$0xff]
          %v3692 = vld [vmem:[#allocation8 + $0x8] sm:$0xff]
          %v3693 = vld [vmem:[#allocation8 + $0x10] sm:$0xff]
          %v3694 = vld [vmem:[#allocation8 + $0x18] sm:$0xff]
          %v3695 = vld [vmem:[#allocation8 + $0x20] sm:$0xff]
          %v3696 = vld [vmem:[#allocation8 + $0x28] sm:$0xff]
          %v3697 = vld [vmem:[#allocation8 + $0x30] sm:$0xff]
          %v3698 = vld [vmem:[#allocation8 + $0x38] sm:$0xff]
          %v3699 = vld [vmem:[#allocation8 + $0x40] sm:$0xff]
          %v3700 = vld [vmem:[#allocation8 + $0x48] sm:$0xff]
          %v3701 = vadd.f32 %v3665, %v3691
          %v3702 = vadd.f32 %v3667, %v3692
          %v3703 = vadd.f32 %v3669, %v3693
          %v3704 = vadd.f32 %v3671, %v3694
          %v3705 = vadd.f32 %v3675, %v3695
          %v3706 = vadd.f32 %v3677, %v3696
          %v3707 = vadd.f32 %v3679, %v3697
          %v3708 = vadd.f32 %v3681, %v3698
          %v3709 = vadd.f32 %v3685, %v3699
          %v3710 = vadd.f32 %v3687, %v3700
          %v3711 = vadd.f32 %v3701, %v2325
          %v3712 = vadd.f32 %v3702, %v2326
          %v3713 = vadd.f32 %v3703, %v2327
          %v3714 = vadd.f32 %v3704, %v2328
          %v3715 = vadd.f32 %v3705, %v2329
          %v3716 = vadd.f32 %v3706, %v2330
          %v3717 = vadd.f32 %v3707, %v2331
          %v3718 = vadd.f32 %v3708, %v2332
          %v3719 = vadd.f32 %v3709, %v2333
          %v3720 = vadd.f32 %v3710, %v2334
          %v3721 = vld [vmem:[#allocation27] sm:$0x3]
          %v3722 = vld [vmem:[#allocation29] sm:$0x3]
          %v3723 = vadd.f32 %v3711, %v3712
          %3724 = vadd.xlane.f32.xlu0 %v3723
          %v3725 = vpop.xlane.xlu0 %3724
          %v3726 = vadd.f32 %v3713, %v3714
          %3727 = vadd.xlane.f32.xlu0 %v3726
          %v3728 = vpop.xlane.xlu0 %3727
          %v3729 = vadd.f32 %v3715, %v3716
          %3730 = vadd.xlane.f32.xlu0 %v3729
          %v3731 = vpop.xlane.xlu0 %3730
          %v3732 = vadd.f32 %v3717, %v3718
          %3733 = vadd.xlane.f32.xlu0 %v3732
          %v3734 = vpop.xlane.xlu0 %3733
          %v3735 = vadd.f32 %v3719, %v3720
          %3736 = vadd.xlane.f32.xlu0 %v3735
          %v3737 = vpop.xlane.xlu0 %3736
          %v3738 = vrcp.pop 256.0
          %v3739 = vmul.f32 %v3725, %v3738
          %v3740 = vmul.f32 %v3728, %v3738
          %v3741 = vmul.f32 %v3731, %v3738
          %v3742 = vmul.f32 %v3734, %v3738
          %v3743 = vmul.f32 %v3737, %v3738
          %v3744 = vsub.f32 %v3711, %v3739
          %v3745 = vsub.f32 %v3712, %v3739
          %v3746 = vsub.f32 %v3713, %v3740
          %v3747 = vsub.f32 %v3714, %v3740
          %v3748 = vsub.f32 %v3715, %v3741
          %v3749 = vsub.f32 %v3716, %v3741
          %v3750 = vsub.f32 %v3717, %v3742
          %v3751 = vsub.f32 %v3718, %v3742
          %v3752 = vsub.f32 %v3719, %v3743
          %v3753 = vsub.f32 %v3720, %v3743
          %v3754 = vmul.f32 %v3744, %v3744
          %v3755 = vmul.f32 %v3745, %v3745
          %v3756 = vmul.f32 %v3746, %v3746
          %v3757 = vmul.f32 %v3747, %v3747
          %v3758 = vmul.f32 %v3748, %v3748
          %v3759 = vmul.f32 %v3749, %v3749
          %v3760 = vmul.f32 %v3750, %v3750
          %v3761 = vmul.f32 %v3751, %v3751
          %v3762 = vmul.f32 %v3752, %v3752
          %v3763 = vmul.f32 %v3753, %v3753
          %v3764 = vadd.f32 %v3754, %v3755
          %3765 = vadd.xlane.f32.xlu0 %v3764
          %v3766 = vpop.xlane.xlu0 %3765
          %v3767 = vadd.f32 %v3756, %v3757
          %3768 = vadd.xlane.f32.xlu0 %v3767
          %v3769 = vpop.xlane.xlu0 %3768
          %v3770 = vadd.f32 %v3758, %v3759
          %3771 = vadd.xlane.f32.xlu0 %v3770
          %v3772 = vpop.xlane.xlu0 %3771
          %v3773 = vadd.f32 %v3760, %v3761
          %3774 = vadd.xlane.f32.xlu0 %v3773
          %v3775 = vpop.xlane.xlu0 %3774
          %v3776 = vadd.f32 %v3762, %v3763
          %3777 = vadd.xlane.f32.xlu0 %v3776
          %v3778 = vpop.xlane.xlu0 %3777
          %v3779 = vmul.f32 %v3766, %v3738
          %v3780 = vmul.f32 %v3769, %v3738
          %v3781 = vmul.f32 %v3772, %v3738
          %v3782 = vmul.f32 %v3775, %v3738
          %v3783 = vmul.f32 %v3778, %v3738
          %v3784 = vadd.f32 %v3779, 1e-05
          %v3785 = vadd.f32 %v3780, 1e-05
          %v3786 = vadd.f32 %v3781, 1e-05
          %v3787 = vadd.f32 %v3782, 1e-05
          %v3788 = vadd.f32 %v3783, 1e-05
          %v3789 = vrsqrt.pop %v3784
          %v3790 = vrsqrt.pop %v3785
          %v3791 = vrsqrt.pop %v3786
          %v3792 = vrsqrt.pop %v3787
          %v3793 = vrsqrt.pop %v3788
          %v3794 = vmul.f32 %v3744, %v3789
          %v3795 = vmul.f32 %v3745, %v3789
          %v3796 = vmul.f32 %v3746, %v3790
          %v3797 = vmul.f32 %v3747, %v3790
          %v3798 = vmul.f32 %v3748, %v3791
          %v3799 = vmul.f32 %v3749, %v3791
          %v3800 = vmul.f32 %v3750, %v3792
          %v3801 = vmul.f32 %v3751, %v3792
          %v3802 = vmul.f32 %v3752, %v3793
          %v3803 = vmul.f32 %v3753, %v3793
          %v3805 = vlaneseq
          %v3806 = vshrl.u32 %v3805, 7
          %v3807 = vsub.s32 0, %v3806
          %v3808 = vrot.slane %v3721, %v3807
          %v3809 = vlaneseq
          %v3810 = vshrl.u32 %v3809, 7
          %v3811 = vsub.s32 1, %v3810
          %v3812 = vrot.slane %v3721, %v3811
          %v3815 = vmul.f32 %v3794, %v3808
          %v3816 = vmul.f32 %v3795, %v3812
          %v3817 = vmul.f32 %v3796, %v3808
          %v3818 = vmul.f32 %v3797, %v3812
          %v3819 = vmul.f32 %v3798, %v3808
          %v3820 = vmul.f32 %v3799, %v3812
          %v3821 = vmul.f32 %v3800, %v3808
          %v3822 = vmul.f32 %v3801, %v3812
          %v3823 = vmul.f32 %v3802, %v3808
          %v3824 = vmul.f32 %v3803, %v3812
          %v3826 = vlaneseq
          %v3827 = vshrl.u32 %v3826, 7
          %v3828 = vsub.s32 0, %v3827
          %v3829 = vrot.slane %v3722, %v3828
          %v3830 = vlaneseq
          %v3831 = vshrl.u32 %v3830, 7
          %v3832 = vsub.s32 1, %v3831
          %v3833 = vrot.slane %v3722, %v3832
          %v3836 = vadd.f32 %v3815, %v3829
          %v3837 = vadd.f32 %v3816, %v3833
          %v3838 = vadd.f32 %v3817, %v3829
          %v3839 = vadd.f32 %v3818, %v3833
          %v3840 = vadd.f32 %v3819, %v3829
          %v3841 = vadd.f32 %v3820, %v3833
          %v3842 = vadd.f32 %v3821, %v3829
          %v3843 = vadd.f32 %v3822, %v3833
          %v3844 = vadd.f32 %v3823, %v3829
          %v3845 = vadd.f32 %v3824, %v3833
          %3846 = vst [vmem:[#allocation2] sm:$0xff] %v3836
          %3847 = vst [vmem:[#allocation2 + $0x8] sm:$0xff] %v3837
          %3848 = vst [vmem:[#allocation2 + $0x10] sm:$0xff] %v3838
          %3849 = vst [vmem:[#allocation2 + $0x18] sm:$0xff] %v3839
          %3850 = vst [vmem:[#allocation2 + $0x20] sm:$0xff] %v3840
          %3851 = vst [vmem:[#allocation2 + $0x28] sm:$0xff] %v3841
          %3852 = vst [vmem:[#allocation2 + $0x30] sm:$0xff] %v3842
          %3853 = vst [vmem:[#allocation2 + $0x38] sm:$0xff] %v3843
          %3854 = vst [vmem:[#allocation2 + $0x40] sm:$0xff] %v3844
          %3855 = vst [vmem:[#allocation2 + $0x48] sm:$0xff] %v3845
        $region292: #{tpu_custom_call.1} parent=155 // pred_fallthru
          _
        %v3856 = vld [vmem:[#allocation2] sm:$0xff]
        %v3857 = vld [vmem:[#allocation2 + $0x8] sm:$0xff]
        %v3858 = vld [vmem:[#allocation2 + $0x10] sm:$0xff]
        %v3859 = vld [vmem:[#allocation2 + $0x18] sm:$0xff]
        %v3860 = vld [vmem:[#allocation2 + $0x20] sm:$0xff]
        %v3861 = vld [vmem:[#allocation2 + $0x28] sm:$0xff]
        %v3862 = vld [vmem:[#allocation2 + $0x30] sm:$0xff]
        %v3863 = vld [vmem:[#allocation2 + $0x38] sm:$0xff]
        %v3864 = vld [vmem:[#allocation2 + $0x40] sm:$0xff]
        %v3865 = vld [vmem:[#allocation2 + $0x48] sm:$0xff]
        %v3866 = vld [vmem:[%s1536] sm:$0x3]
        %v3867 = vld [vmem:[%s1545] sm:$0x3]
        %v3868 = vadd.f32 %v3856, %v3857
        %3869 = vadd.xlane.f32.xlu0 %v3868
        %v3870 = vpop.xlane.xlu0 %3869
        %v3871 = vadd.f32 %v3858, %v3859
        %3872 = vadd.xlane.f32.xlu0 %v3871
        %v3873 = vpop.xlane.xlu0 %3872
        %v3874 = vadd.f32 %v3860, %v3861
        %3875 = vadd.xlane.f32.xlu0 %v3874
        %v3876 = vpop.xlane.xlu0 %3875
        %v3877 = vadd.f32 %v3862, %v3863
        %3878 = vadd.xlane.f32.xlu0 %v3877
        %v3879 = vpop.xlane.xlu0 %3878
        %v3880 = vadd.f32 %v3864, %v3865
        %3881 = vadd.xlane.f32.xlu0 %v3880
        %v3882 = vpop.xlane.xlu0 %3881
        %v3883 = vrcp.pop 256.0
        %v3884 = vmul.f32 %v3870, %v3883
        %v3885 = vmul.f32 %v3873, %v3883
        %v3886 = vmul.f32 %v3876, %v3883
        %v3887 = vmul.f32 %v3879, %v3883
        %v3888 = vmul.f32 %v3882, %v3883
        %v3889 = vsub.f32 %v3856, %v3884
        %v3890 = vsub.f32 %v3857, %v3884
        %v3891 = vsub.f32 %v3858, %v3885
        %v3892 = vsub.f32 %v3859, %v3885
        %v3893 = vsub.f32 %v3860, %v3886
        %v3894 = vsub.f32 %v3861, %v3886
        %v3895 = vsub.f32 %v3862, %v3887
        %v3896 = vsub.f32 %v3863, %v3887
        %v3897 = vsub.f32 %v3864, %v3888
        %v3898 = vsub.f32 %v3865, %v3888
        %v3899 = vmul.f32 %v3889, %v3889
        %v3900 = vmul.f32 %v3890, %v3890
        %v3901 = vmul.f32 %v3891, %v3891
        %v3902 = vmul.f32 %v3892, %v3892
        %v3903 = vmul.f32 %v3893, %v3893
        %v3904 = vmul.f32 %v3894, %v3894
        %v3905 = vmul.f32 %v3895, %v3895
        %v3906 = vmul.f32 %v3896, %v3896
        %v3907 = vmul.f32 %v3897, %v3897
        %v3908 = vmul.f32 %v3898, %v3898
        %v3909 = vadd.f32 %v3899, %v3900
        %3910 = vadd.xlane.f32.xlu0 %v3909
        %v3911 = vpop.xlane.xlu0 %3910
        %v3912 = vadd.f32 %v3901, %v3902
        %3913 = vadd.xlane.f32.xlu0 %v3912
        %v3914 = vpop.xlane.xlu0 %3913
        %v3915 = vadd.f32 %v3903, %v3904
        %3916 = vadd.xlane.f32.xlu0 %v3915
        %v3917 = vpop.xlane.xlu0 %3916
        %v3918 = vadd.f32 %v3905, %v3906
        %3919 = vadd.xlane.f32.xlu0 %v3918
        %v3920 = vpop.xlane.xlu0 %3919
        %v3921 = vadd.f32 %v3907, %v3908
        %3922 = vadd.xlane.f32.xlu0 %v3921
        %v3923 = vpop.xlane.xlu0 %3922
        %v3924 = vmul.f32 %v3911, %v3883
        %v3925 = vmul.f32 %v3914, %v3883
        %v3926 = vmul.f32 %v3917, %v3883
        %v3927 = vmul.f32 %v3920, %v3883
        %v3928 = vmul.f32 %v3923, %v3883
        %v3929 = vadd.f32 %v3924, 1e-05
        %v3930 = vadd.f32 %v3925, 1e-05
        %v3931 = vadd.f32 %v3926, 1e-05
        %v3932 = vadd.f32 %v3927, 1e-05
        %v3933 = vadd.f32 %v3928, 1e-05
        %v3934 = vrsqrt.pop %v3929
        %v3935 = vrsqrt.pop %v3930
        %v3936 = vrsqrt.pop %v3931
        %v3937 = vrsqrt.pop %v3932
        %v3938 = vrsqrt.pop %v3933
        %v3939 = vmul.f32 %v3889, %v3934
        %v3940 = vmul.f32 %v3890, %v3934
        %v3941 = vmul.f32 %v3891, %v3935
        %v3942 = vmul.f32 %v3892, %v3935
        %v3943 = vmul.f32 %v3893, %v3936
        %v3944 = vmul.f32 %v3894, %v3936
        %v3945 = vmul.f32 %v3895, %v3937
        %v3946 = vmul.f32 %v3896, %v3937
        %v3947 = vmul.f32 %v3897, %v3938
        %v3948 = vmul.f32 %v3898, %v3938
        %v3950 = vlaneseq
        %v3951 = vshrl.u32 %v3950, 7
        %v3952 = vsub.s32 0, %v3951
        %v3953 = vrot.slane %v3866, %v3952
        %v3954 = vlaneseq
        %v3955 = vshrl.u32 %v3954, 7
        %v3956 = vsub.s32 1, %v3955
        %v3957 = vrot.slane %v3866, %v3956
        %v3960 = vmul.f32 %v3939, %v3953
        %v3961 = vmul.f32 %v3940, %v3957
        %v3962 = vmul.f32 %v3941, %v3953
        %v3963 = vmul.f32 %v3942, %v3957
        %v3964 = vmul.f32 %v3943, %v3953
        %v3965 = vmul.f32 %v3944, %v3957
        %v3966 = vmul.f32 %v3945, %v3953
        %v3967 = vmul.f32 %v3946, %v3957
        %v3968 = vmul.f32 %v3947, %v3953
        %v3969 = vmul.f32 %v3948, %v3957
        %v3971 = vlaneseq
        %v3972 = vshrl.u32 %v3971, 7
        %v3973 = vsub.s32 0, %v3972
        %v3974 = vrot.slane %v3867, %v3973
        %v3975 = vlaneseq
        %v3976 = vshrl.u32 %v3975, 7
        %v3977 = vsub.s32 1, %v3976
        %v3978 = vrot.slane %v3867, %v3977
        %v3981 = vadd.f32 %v3960, %v3974
        %v3982 = vadd.f32 %v3961, %v3978
        %v3983 = vadd.f32 %v3962, %v3974
        %v3984 = vadd.f32 %v3963, %v3978
        %v3985 = vadd.f32 %v3964, %v3974
        %v3986 = vadd.f32 %v3965, %v3978
        %v3987 = vadd.f32 %v3966, %v3974
        %v3988 = vadd.f32 %v3967, %v3978
        %v3989 = vadd.f32 %v3968, %v3974
        %v3990 = vadd.f32 %v3969, %v3978
        %v3991 = vld [vmem:[%s1554] sm:$0xff]
        %v3992 = vld [vmem:[%s1554 + $0x8] sm:$0xff]
        %v3993 = vld [vmem:[%s1554 + $0x10] sm:$0xff]
        %v3994 = vld [vmem:[%s1554 + $0x18] sm:$0xff]
        %v3995 = vld [vmem:[%s1554 + $0x20] sm:$0xff]
        %v3996 = vld [vmem:[%s1554 + $0x28] sm:$0xff]
        %v3997 = vld [vmem:[%s1554 + $0x30] sm:$0xff]
        %v3998 = vld [vmem:[%s1554 + $0x38] sm:$0xff]
        %v3999 = vld [vmem:[%s1554 + $0x40] sm:$0xff]
        %v4000 = vld [vmem:[%s1554 + $0x48] sm:$0xff]
        %v4001 = vld [vmem:[%s1554 + $0x50] sm:$0xff]
        %v4002 = vld [vmem:[%s1554 + $0x58] sm:$0xff]
        %v4003 = vld [vmem:[%s1554 + $0x60] sm:$0xff]
        %v4004 = vld [vmem:[%s1554 + $0x68] sm:$0xff]
        %v4005 = vld [vmem:[%s1554 + $0x70] sm:$0xff]
        %v4006 = vld [vmem:[%s1554 + $0x78] sm:$0xff]
        %v4007 = vld [vmem:[%s1554 + $0x80] sm:$0xff]
        %v4008 = vld [vmem:[%s1554 + $0x88] sm:$0xff]
        %v4009 = vld [vmem:[%s1554 + $0x90] sm:$0xff]
        %v4010 = vld [vmem:[%s1554 + $0x98] sm:$0xff]
        %v4011 = vld [vmem:[%s1554 + $0xa0] sm:$0xff]
        %v4012 = vld [vmem:[%s1554 + $0xa8] sm:$0xff]
        %v4013 = vld [vmem:[%s1554 + $0xb0] sm:$0xff]
        %v4014 = vld [vmem:[%s1554 + $0xb8] sm:$0xff]
        %v4015 = vld [vmem:[%s1554 + $0xc0] sm:$0xff]
        %v4016 = vld [vmem:[%s1554 + $0xc8] sm:$0xff]
        %v4017 = vld [vmem:[%s1554 + $0xd0] sm:$0xff]
        %v4018 = vld [vmem:[%s1554 + $0xd8] sm:$0xff]
        %v4019 = vld [vmem:[%s1554 + $0xe0] sm:$0xff]
        %v4020 = vld [vmem:[%s1554 + $0xe8] sm:$0xff]
        %v4021 = vld [vmem:[%s1554 + $0xf0] sm:$0xff]
        %v4022 = vld [vmem:[%s1554 + $0xf8] sm:$0xff]
        %v4023 = vld [vmem:[%s1554 + $0x100] sm:$0xff]
        %v4024 = vld [vmem:[%s1554 + $0x108] sm:$0xff]
        %v4025 = vld [vmem:[%s1554 + $0x110] sm:$0xff]
        %v4026 = vld [vmem:[%s1554 + $0x118] sm:$0xff]
        %v4027 = vld [vmem:[%s1554 + $0x120] sm:$0xff]
        %v4028 = vld [vmem:[%s1554 + $0x128] sm:$0xff]
        %v4029 = vld [vmem:[%s1554 + $0x130] sm:$0xff]
        %v4030 = vld [vmem:[%s1554 + $0x138] sm:$0xff]
        %v4031 = vld [vmem:[%s1554 + $0x140] sm:$0xff]
        %v4032 = vld [vmem:[%s1554 + $0x148] sm:$0xff]
        %v4033 = vld [vmem:[%s1554 + $0x150] sm:$0xff]
        %v4034 = vld [vmem:[%s1554 + $0x158] sm:$0xff]
        %v4035 = vld [vmem:[%s1554 + $0x160] sm:$0xff]
        %v4036 = vld [vmem:[%s1554 + $0x168] sm:$0xff]
        %v4037 = vld [vmem:[%s1554 + $0x170] sm:$0xff]
        %v4038 = vld [vmem:[%s1554 + $0x178] sm:$0xff]
        %v4039 = vld [vmem:[%s1554 + $0x180] sm:$0xff]
        %v4040 = vld [vmem:[%s1554 + $0x188] sm:$0xff]
        %v4041 = vld [vmem:[%s1554 + $0x190] sm:$0xff]
        %v4042 = vld [vmem:[%s1554 + $0x198] sm:$0xff]
        %v4043 = vld [vmem:[%s1554 + $0x1a0] sm:$0xff]
        %v4044 = vld [vmem:[%s1554 + $0x1a8] sm:$0xff]
        %v4045 = vld [vmem:[%s1554 + $0x1b0] sm:$0xff]
        %v4046 = vld [vmem:[%s1554 + $0x1b8] sm:$0xff]
        %v4047 = vld [vmem:[%s1554 + $0x1c0] sm:$0xff]
        %v4048 = vld [vmem:[%s1554 + $0x1c8] sm:$0xff]
        %v4049 = vld [vmem:[%s1554 + $0x1d0] sm:$0xff]
        %v4050 = vld [vmem:[%s1554 + $0x1d8] sm:$0xff]
        %v4051 = vld [vmem:[%s1554 + $0x1e0] sm:$0xff]
        %v4052 = vld [vmem:[%s1554 + $0x1e8] sm:$0xff]
        %v4053 = vld [vmem:[%s1554 + $0x1f0] sm:$0xff]
        %v4054 = vld [vmem:[%s1554 + $0x1f8] sm:$0xff]
        %v4055 = vld [vmem:[%s1554 + $0x200] sm:$0xff]
        %v4056 = vld [vmem:[%s1554 + $0x208] sm:$0xff]
        %v4057 = vld [vmem:[%s1554 + $0x210] sm:$0xff]
        %v4058 = vld [vmem:[%s1554 + $0x218] sm:$0xff]
        %v4059 = vld [vmem:[%s1554 + $0x220] sm:$0xff]
        %v4060 = vld [vmem:[%s1554 + $0x228] sm:$0xff]
        %v4061 = vld [vmem:[%s1554 + $0x230] sm:$0xff]
        %v4062 = vld [vmem:[%s1554 + $0x238] sm:$0xff]
        %v4063 = vld [vmem:[%s1554 + $0x240] sm:$0xff]
        %v4064 = vld [vmem:[%s1554 + $0x248] sm:$0xff]
        %v4065 = vld [vmem:[%s1554 + $0x250] sm:$0xff]
        %v4066 = vld [vmem:[%s1554 + $0x258] sm:$0xff]
        %v4067 = vld [vmem:[%s1554 + $0x260] sm:$0xff]
        %v4068 = vld [vmem:[%s1554 + $0x268] sm:$0xff]
        %v4069 = vld [vmem:[%s1554 + $0x270] sm:$0xff]
        %v4070 = vld [vmem:[%s1554 + $0x278] sm:$0xff]
        %v4071 = vld [vmem:[%s1554 + $0x280] sm:$0xff]
        %v4072 = vld [vmem:[%s1554 + $0x288] sm:$0xff]
        %v4073 = vld [vmem:[%s1554 + $0x290] sm:$0xff]
        %v4074 = vld [vmem:[%s1554 + $0x298] sm:$0xff]
        %v4075 = vld [vmem:[%s1554 + $0x2a0] sm:$0xff]
        %v4076 = vld [vmem:[%s1554 + $0x2a8] sm:$0xff]
        %v4077 = vld [vmem:[%s1554 + $0x2b0] sm:$0xff]
        %v4078 = vld [vmem:[%s1554 + $0x2b8] sm:$0xff]
        %v4079 = vld [vmem:[%s1554 + $0x2c0] sm:$0xff]
        %v4080 = vld [vmem:[%s1554 + $0x2c8] sm:$0xff]
        %v4081 = vld [vmem:[%s1554 + $0x2d0] sm:$0xff]
        %v4082 = vld [vmem:[%s1554 + $0x2d8] sm:$0xff]
        %v4083 = vld [vmem:[%s1554 + $0x2e0] sm:$0xff]
        %v4084 = vld [vmem:[%s1554 + $0x2e8] sm:$0xff]
        %v4085 = vld [vmem:[%s1554 + $0x2f0] sm:$0xff]
        %v4086 = vld [vmem:[%s1554 + $0x2f8] sm:$0xff]
        %v4087 = vpack.c.bf16 %v3983, %v3981
        %v4088 = vpack.c.bf16 %v3984, %v3982
        %v4089 = vpack.c.bf16 %v3987, %v3985
        %v4090 = vpack.c.bf16 %v3988, %v3986
        %v4091 = vpack.c.bf16 %v3989, %v3989
        %v4092 = vpack.c.bf16 %v3990, %v3990
        %v4093 = vld [vmem:[%s1563] sm:$0x3f]
        %v4095 = vlaneseq
        %v4096 = vshrl.u32 %v4095, 7
        %v4097 = vsub.s32 0, %v4096
        %v4098 = vrot.slane %v4093, %v4097
        %v4099 = vlaneseq
        %v4100 = vshrl.u32 %v4099, 7
        %v4101 = vsub.s32 1, %v4100
        %v4102 = vrot.slane %v4093, %v4101
        %v4103 = vlaneseq
        %v4104 = vshrl.u32 %v4103, 7
        %v4105 = vsub.s32 2, %v4104
        %v4106 = vrot.slane %v4093, %v4105
        %v4107 = vlaneseq
        %v4108 = vshrl.u32 %v4107, 7
        %v4109 = vsub.s32 3, %v4108
        %v4110 = vrot.slane %v4093, %v4109
        %v4111 = vlaneseq
        %v4112 = vshrl.u32 %v4111, 7
        %v4113 = vsub.s32 4, %v4112
        %v4114 = vrot.slane %v4093, %v4113
        %v4115 = vlaneseq
        %v4116 = vshrl.u32 %v4115, 7
        %v4117 = vsub.s32 5, %v4116
        %v4118 = vrot.slane %v4093, %v4117
        %v4221 = vunpack.c.l.b16 %v3991
        %v4222 = vunpack.c.h.b16 %v3991
        %v4223 = vunpack.c.l.b16 %v3992
        %v4224 = vunpack.c.h.b16 %v3992
        %v4225 = vunpack.c.l.b16 %v3993
        %v4226 = vunpack.c.h.b16 %v3993
        %v4227 = vunpack.c.l.b16 %v3994
        %v4228 = vunpack.c.h.b16 %v3994
        %v4229 = vunpack.c.l.b16 %v3995
        %v4230 = vunpack.c.h.b16 %v3995
        %v4231 = vunpack.c.l.b16 %v3996
        %v4232 = vunpack.c.h.b16 %v3996
        %v4233 = vunpack.c.l.b16 %v3997
        %v4234 = vunpack.c.h.b16 %v3997
        %v4235 = vunpack.c.l.b16 %v3998
        %v4236 = vunpack.c.h.b16 %v3998
        %v4237 = vunpack.c.l.b16 %v3999
        %v4238 = vunpack.c.h.b16 %v3999
        %v4239 = vunpack.c.l.b16 %v4000
        %v4240 = vunpack.c.h.b16 %v4000
        %v4241 = vunpack.c.l.b16 %v4001
        %v4242 = vunpack.c.h.b16 %v4001
        %v4243 = vunpack.c.l.b16 %v4002
        %v4244 = vunpack.c.h.b16 %v4002
        %v4245 = vunpack.c.l.b16 %v4003
        %v4246 = vunpack.c.h.b16 %v4003
        %v4247 = vunpack.c.l.b16 %v4004
        %v4248 = vunpack.c.h.b16 %v4004
        %v4249 = vunpack.c.l.b16 %v4005
        %v4250 = vunpack.c.h.b16 %v4005
        %v4251 = vunpack.c.l.b16 %v4006
        %v4252 = vunpack.c.h.b16 %v4006
        %v4253 = vunpack.c.l.b16 %v4007
        %v4254 = vunpack.c.h.b16 %v4007
        %v4255 = vunpack.c.l.b16 %v4008
        %v4256 = vunpack.c.h.b16 %v4008
        %v4257 = vunpack.c.l.b16 %v4009
        %v4258 = vunpack.c.h.b16 %v4009
        %v4259 = vunpack.c.l.b16 %v4010
        %v4260 = vunpack.c.h.b16 %v4010
        %v4261 = vunpack.c.l.b16 %v4011
        %v4262 = vunpack.c.h.b16 %v4011
        %v4263 = vunpack.c.l.b16 %v4012
        %v4264 = vunpack.c.h.b16 %v4012
        %v4265 = vunpack.c.l.b16 %v4013
        %v4266 = vunpack.c.h.b16 %v4013
        %v4267 = vunpack.c.l.b16 %v4014
        %v4268 = vunpack.c.h.b16 %v4014
        %v4269 = vunpack.c.l.b16 %v4015
        %v4270 = vunpack.c.h.b16 %v4015
        %v4271 = vunpack.c.l.b16 %v4016
        %v4272 = vunpack.c.h.b16 %v4016
        %v4273 = vunpack.c.l.b16 %v4017
        %v4274 = vunpack.c.h.b16 %v4017
        %v4275 = vunpack.c.l.b16 %v4018
        %v4276 = vunpack.c.h.b16 %v4018
        %v4277 = vunpack.c.l.b16 %v4019
        %v4278 = vunpack.c.h.b16 %v4019
        %v4279 = vunpack.c.l.b16 %v4020
        %v4280 = vunpack.c.h.b16 %v4020
        %v4281 = vunpack.c.l.b16 %v4021
        %v4282 = vunpack.c.h.b16 %v4021
        %v4283 = vunpack.c.l.b16 %v4022
        %v4284 = vunpack.c.h.b16 %v4022
        %v4285 = vunpack.c.l.b16 %v4023
        %v4286 = vunpack.c.h.b16 %v4023
        %v4287 = vunpack.c.l.b16 %v4024
        %v4288 = vunpack.c.h.b16 %v4024
        %v4289 = vunpack.c.l.b16 %v4025
        %v4290 = vunpack.c.h.b16 %v4025
        %v4291 = vunpack.c.l.b16 %v4026
        %v4292 = vunpack.c.h.b16 %v4026
        %v4293 = vunpack.c.l.b16 %v4027
        %v4294 = vunpack.c.h.b16 %v4027
        %v4295 = vunpack.c.l.b16 %v4028
        %v4296 = vunpack.c.h.b16 %v4028
        %v4297 = vunpack.c.l.b16 %v4029
        %v4298 = vunpack.c.h.b16 %v4029
        %v4299 = vunpack.c.l.b16 %v4030
        %v4300 = vunpack.c.h.b16 %v4030
        %v4301 = vunpack.c.l.b16 %v4031
        %v4302 = vunpack.c.h.b16 %v4031
        %v4303 = vunpack.c.l.b16 %v4032
        %v4304 = vunpack.c.h.b16 %v4032
        %v4305 = vunpack.c.l.b16 %v4033
        %v4306 = vunpack.c.h.b16 %v4033
        %v4307 = vunpack.c.l.b16 %v4034
        %v4308 = vunpack.c.h.b16 %v4034
        %v4309 = vunpack.c.l.b16 %v4035
        %v4310 = vunpack.c.h.b16 %v4035
        %v4311 = vunpack.c.l.b16 %v4036
        %v4312 = vunpack.c.h.b16 %v4036
        %v4313 = vunpack.c.l.b16 %v4037
        %v4314 = vunpack.c.h.b16 %v4037
        %v4315 = vunpack.c.l.b16 %v4038
        %v4316 = vunpack.c.h.b16 %v4038
        %v4317 = vunpack.c.l.b16 %v4039
        %v4318 = vunpack.c.h.b16 %v4039
        %v4319 = vunpack.c.l.b16 %v4040
        %v4320 = vunpack.c.h.b16 %v4040
        %v4321 = vunpack.c.l.b16 %v4041
        %v4322 = vunpack.c.h.b16 %v4041
        %v4323 = vunpack.c.l.b16 %v4042
        %v4324 = vunpack.c.h.b16 %v4042
        %v4325 = vunpack.c.l.b16 %v4043
        %v4326 = vunpack.c.h.b16 %v4043
        %v4327 = vunpack.c.l.b16 %v4044
        %v4328 = vunpack.c.h.b16 %v4044
        %v4329 = vunpack.c.l.b16 %v4045
        %v4330 = vunpack.c.h.b16 %v4045
        %v4331 = vunpack.c.l.b16 %v4046
        %v4332 = vunpack.c.h.b16 %v4046
        %v4333 = vunpack.c.l.b16 %v4047
        %v4334 = vunpack.c.h.b16 %v4047
        %v4335 = vunpack.c.l.b16 %v4048
        %v4336 = vunpack.c.h.b16 %v4048
        %v4337 = vunpack.c.l.b16 %v4049
        %v4338 = vunpack.c.h.b16 %v4049
        %v4339 = vunpack.c.l.b16 %v4050
        %v4340 = vunpack.c.h.b16 %v4050
        %v4341 = vunpack.c.l.b16 %v4051
        %v4342 = vunpack.c.h.b16 %v4051
        %v4343 = vunpack.c.l.b16 %v4052
        %v4344 = vunpack.c.h.b16 %v4052
        %v4345 = vunpack.c.l.b16 %v4053
        %v4346 = vunpack.c.h.b16 %v4053
        %v4347 = vunpack.c.l.b16 %v4054
        %v4348 = vunpack.c.h.b16 %v4054
        %v4349 = vunpack.c.l.b16 %v4055
        %v4350 = vunpack.c.h.b16 %v4055
        %v4351 = vunpack.c.l.b16 %v4056
        %v4352 = vunpack.c.h.b16 %v4056
        %v4353 = vunpack.c.l.b16 %v4057
        %v4354 = vunpack.c.h.b16 %v4057
        %v4355 = vunpack.c.l.b16 %v4058
        %v4356 = vunpack.c.h.b16 %v4058
        %v4357 = vunpack.c.l.b16 %v4059
        %v4358 = vunpack.c.h.b16 %v4059
        %v4359 = vunpack.c.l.b16 %v4060
        %v4360 = vunpack.c.h.b16 %v4060
        %v4361 = vunpack.c.l.b16 %v4061
        %v4362 = vunpack.c.h.b16 %v4061
        %v4363 = vunpack.c.l.b16 %v4062
        %v4364 = vunpack.c.h.b16 %v4062
        %v4365 = vunpack.c.l.b16 %v4063
        %v4366 = vunpack.c.h.b16 %v4063
        %v4367 = vunpack.c.l.b16 %v4064
        %v4368 = vunpack.c.h.b16 %v4064
        %v4369 = vunpack.c.l.b16 %v4065
        %v4370 = vunpack.c.h.b16 %v4065
        %v4371 = vunpack.c.l.b16 %v4066
        %v4372 = vunpack.c.h.b16 %v4066
        %v4373 = vunpack.c.l.b16 %v4067
        %v4374 = vunpack.c.h.b16 %v4067
        %v4375 = vunpack.c.l.b16 %v4068
        %v4376 = vunpack.c.h.b16 %v4068
        %v4377 = vunpack.c.l.b16 %v4069
        %v4378 = vunpack.c.h.b16 %v4069
        %v4379 = vunpack.c.l.b16 %v4070
        %v4380 = vunpack.c.h.b16 %v4070
        %v4381 = vunpack.c.l.b16 %v4071
        %v4382 = vunpack.c.h.b16 %v4071
        %v4383 = vunpack.c.l.b16 %v4072
        %v4384 = vunpack.c.h.b16 %v4072
        %v4385 = vunpack.c.l.b16 %v4073
        %v4386 = vunpack.c.h.b16 %v4073
        %v4387 = vunpack.c.l.b16 %v4074
        %v4388 = vunpack.c.h.b16 %v4074
        %v4389 = vunpack.c.l.b16 %v4075
        %v4390 = vunpack.c.h.b16 %v4075
        %v4391 = vunpack.c.l.b16 %v4076
        %v4392 = vunpack.c.h.b16 %v4076
        %v4393 = vunpack.c.l.b16 %v4077
        %v4394 = vunpack.c.h.b16 %v4077
        %v4395 = vunpack.c.l.b16 %v4078
        %v4396 = vunpack.c.h.b16 %v4078
        %v4397 = vunpack.c.l.b16 %v4079
        %v4398 = vunpack.c.h.b16 %v4079
        %v4399 = vunpack.c.l.b16 %v4080
        %v4400 = vunpack.c.h.b16 %v4080
        %v4401 = vunpack.c.l.b16 %v4081
        %v4402 = vunpack.c.h.b16 %v4081
        %v4403 = vunpack.c.l.b16 %v4082
        %v4404 = vunpack.c.h.b16 %v4082
        %v4405 = vunpack.c.l.b16 %v4083
        %v4406 = vunpack.c.h.b16 %v4083
        %v4407 = vunpack.c.l.b16 %v4084
        %v4408 = vunpack.c.h.b16 %v4084
        %v4409 = vunpack.c.l.b16 %v4085
        %v4410 = vunpack.c.h.b16 %v4085
        %v4411 = vunpack.c.l.b16 %v4086
        %v4412 = vunpack.c.h.b16 %v4086
        %v4413 = vpack.c.b16 %v4227, %v4221
        %v4414 = vpack.c.b16 %v4228, %v4222
        %v4415 = vpack.c.b16 %v4229, %v4223
        %v4416 = vpack.c.b16 %v4230, %v4224
        %v4417 = vpack.c.b16 %v4231, %v4225
        %v4418 = vpack.c.b16 %v4232, %v4226
        %v4419 = vpack.c.b16 %v4239, %v4233
        %v4420 = vpack.c.b16 %v4240, %v4234
        %v4421 = vpack.c.b16 %v4241, %v4235
        %v4422 = vpack.c.b16 %v4242, %v4236
        %v4423 = vpack.c.b16 %v4243, %v4237
        %v4424 = vpack.c.b16 %v4244, %v4238
        %v4425 = vpack.c.b16 %v4251, %v4245
        %v4426 = vpack.c.b16 %v4252, %v4246
        %v4427 = vpack.c.b16 %v4253, %v4247
        %v4428 = vpack.c.b16 %v4254, %v4248
        %v4429 = vpack.c.b16 %v4255, %v4249
        %v4430 = vpack.c.b16 %v4256, %v4250
        %v4431 = vpack.c.b16 %v4263, %v4257
        %v4432 = vpack.c.b16 %v4264, %v4258
        %v4433 = vpack.c.b16 %v4265, %v4259
        %v4434 = vpack.c.b16 %v4266, %v4260
        %v4435 = vpack.c.b16 %v4267, %v4261
        %v4436 = vpack.c.b16 %v4268, %v4262
        %v4437 = vpack.c.b16 %v4275, %v4269
        %v4438 = vpack.c.b16 %v4276, %v4270
        %v4439 = vpack.c.b16 %v4277, %v4271
        %v4440 = vpack.c.b16 %v4278, %v4272
        %v4441 = vpack.c.b16 %v4279, %v4273
        %v4442 = vpack.c.b16 %v4280, %v4274
        %v4443 = vpack.c.b16 %v4287, %v4281
        %v4444 = vpack.c.b16 %v4288, %v4282
        %v4445 = vpack.c.b16 %v4289, %v4283
        %v4446 = vpack.c.b16 %v4290, %v4284
        %v4447 = vpack.c.b16 %v4291, %v4285
        %v4448 = vpack.c.b16 %v4292, %v4286
        %v4449 = vpack.c.b16 %v4299, %v4293
        %v4450 = vpack.c.b16 %v4300, %v4294
        %v4451 = vpack.c.b16 %v4301, %v4295
        %v4452 = vpack.c.b16 %v4302, %v4296
        %v4453 = vpack.c.b16 %v4303, %v4297
        %v4454 = vpack.c.b16 %v4304, %v4298
        %v4455 = vpack.c.b16 %v4311, %v4305
        %v4456 = vpack.c.b16 %v4312, %v4306
        %v4457 = vpack.c.b16 %v4313, %v4307
        %v4458 = vpack.c.b16 %v4314, %v4308
        %v4459 = vpack.c.b16 %v4315, %v4309
        %v4460 = vpack.c.b16 %v4316, %v4310
        %v4461 = vpack.c.b16 %v4323, %v4317
        %v4462 = vpack.c.b16 %v4324, %v4318
        %v4463 = vpack.c.b16 %v4325, %v4319
        %v4464 = vpack.c.b16 %v4326, %v4320
        %v4465 = vpack.c.b16 %v4327, %v4321
        %v4466 = vpack.c.b16 %v4328, %v4322
        %v4467 = vpack.c.b16 %v4335, %v4329
        %v4468 = vpack.c.b16 %v4336, %v4330
        %v4469 = vpack.c.b16 %v4337, %v4331
        %v4470 = vpack.c.b16 %v4338, %v4332
        %v4471 = vpack.c.b16 %v4339, %v4333
        %v4472 = vpack.c.b16 %v4340, %v4334
        %v4473 = vpack.c.b16 %v4347, %v4341
        %v4474 = vpack.c.b16 %v4348, %v4342
        %v4475 = vpack.c.b16 %v4349, %v4343
        %v4476 = vpack.c.b16 %v4350, %v4344
        %v4477 = vpack.c.b16 %v4351, %v4345
        %v4478 = vpack.c.b16 %v4352, %v4346
        %v4479 = vpack.c.b16 %v4359, %v4353
        %v4480 = vpack.c.b16 %v4360, %v4354
        %v4481 = vpack.c.b16 %v4361, %v4355
        %v4482 = vpack.c.b16 %v4362, %v4356
        %v4483 = vpack.c.b16 %v4363, %v4357
        %v4484 = vpack.c.b16 %v4364, %v4358
        %v4485 = vpack.c.b16 %v4371, %v4365
        %v4486 = vpack.c.b16 %v4372, %v4366
        %v4487 = vpack.c.b16 %v4373, %v4367
        %v4488 = vpack.c.b16 %v4374, %v4368
        %v4489 = vpack.c.b16 %v4375, %v4369
        %v4490 = vpack.c.b16 %v4376, %v4370
        %v4491 = vpack.c.b16 %v4383, %v4377
        %v4492 = vpack.c.b16 %v4384, %v4378
        %v4493 = vpack.c.b16 %v4385, %v4379
        %v4494 = vpack.c.b16 %v4386, %v4380
        %v4495 = vpack.c.b16 %v4387, %v4381
        %v4496 = vpack.c.b16 %v4388, %v4382
        %v4497 = vpack.c.b16 %v4395, %v4389
        %v4498 = vpack.c.b16 %v4396, %v4390
        %v4499 = vpack.c.b16 %v4397, %v4391
        %v4500 = vpack.c.b16 %v4398, %v4392
        %v4501 = vpack.c.b16 %v4399, %v4393
        %v4502 = vpack.c.b16 %v4400, %v4394
        %v4503 = vpack.c.b16 %v4407, %v4401
        %v4504 = vpack.c.b16 %v4408, %v4402
        %v4505 = vpack.c.b16 %v4409, %v4403
        %v4506 = vpack.c.b16 %v4410, %v4404
        %v4507 = vpack.c.b16 %v4411, %v4405
        %v4508 = vpack.c.b16 %v4412, %v4406
        %4605 = vmatprep.subr.bf16.mxu0 %v4414
        %4606 = vmatpush1.bf16.msra.mxu0 %v4413
        %4607 = vmatprep.subr.bf16.mxu0 %v4420
        %4608 = vmatpush1.bf16.msra.mxu0 %v4419
        %4609 = vmatprep.subr.bf16.mxu0 %v4426
        %4610 = vmatpush1.bf16.msra.mxu0 %v4425
        %4611 = vmatprep.subr.bf16.mxu0 %v4432
        %4612 = vmatpush1.bf16.msra.mxu0 %v4431
        %4613 = vmatprep.subr.bf16.mxu0 %v4438
        %4614 = vmatpush1.bf16.msra.mxu0 %v4437
        %4615 = vmatprep.subr.bf16.mxu0 %v4444
        %4616 = vmatpush1.bf16.msra.mxu0 %v4443
        %4617 = vmatprep.subr.bf16.mxu0 %v4450
        %4618 = vmatpush1.bf16.msra.mxu0 %v4449
        %4619 = vmatprep.subr.bf16.mxu0 %v4456
        %4620 = vmatpush1.bf16.msra.mxu0 %v4455
        %4621 = vmatprep.subr.bf16.mxu0 %v4462
        %4622 = vmatpush1.bf16.msra.mxu0 %v4461
        %4623 = vmatprep.subr.bf16.mxu0 %v4468
        %4624 = vmatpush1.bf16.msra.mxu0 %v4467
        %4625 = vmatprep.subr.bf16.mxu0 %v4474
        %4626 = vmatpush1.bf16.msra.mxu0 %v4473
        %4627 = vmatprep.subr.bf16.mxu0 %v4480
        %4628 = vmatpush1.bf16.msra.mxu0 %v4479
        %4629 = vmatprep.subr.bf16.mxu0 %v4486
        %4630 = vmatpush1.bf16.msra.mxu0 %v4485
        %4631 = vmatprep.subr.bf16.mxu0 %v4492
        %4632 = vmatpush1.bf16.msra.mxu0 %v4491
        %4633 = vmatprep.subr.bf16.mxu0 %v4498
        %4634 = vmatpush1.bf16.msra.mxu0 %v4497
        %4635 = vmatprep.subr.bf16.mxu0 %v4504
        %4636 = vmatpush1.bf16.msra.mxu0 %v4503
        %4637 = vmatprep.mubr.bf16.mxu0 %v4088
        %4638 = vmatmul.mubr.bf16.gmra.mrb[0].mxu0 %v4087
        %v4639 = vpop.f32.mrb[0].mxu0
        %v4640 = vadd.f32 %v4098, %v4639
        %v4641 = vpop.f32.mrb[0].mxu0
        %v4642 = vadd.f32 %v4102, %v4641
        %v4643 = vpop.f32.mrb[0].mxu0
        %v4644 = vadd.f32 %v4098, %v4643
        %v4645 = vpop.f32.mrb[0].mxu0
        %v4646 = vadd.f32 %v4102, %v4645
        %4647 = vmatprep.mubr.bf16.mxu0 %v4090
        %4648 = vmatmul.mubr.bf16.gmra.mrb[0].mxu0 %v4089
        %v4649 = vpop.f32.mrb[0].mxu0
        %v4650 = vadd.f32 %v4098, %v4649
        %v4651 = vpop.f32.mrb[0].mxu0
        %v4652 = vadd.f32 %v4102, %v4651
        %v4653 = vpop.f32.mrb[0].mxu0
        %v4654 = vadd.f32 %v4098, %v4653
        %v4655 = vpop.f32.mrb[0].mxu0
        %v4656 = vadd.f32 %v4102, %v4655
        %4657 = vmatprep.mubr.bf16.mxu0 %v4092
        %4658 = vmatmul.mubr.bf16.gmra.mrb[0].mxu0 %v4091
        %v4659 = vpop.f32.mrb[0].mxu0
        %v4660 = vadd.f32 %v4098, %v4659
        %v4661 = vpop.f32.mrb[0].mxu0
        %v4662 = vadd.f32 %v4102, %v4661
        %v4663 = vpop.f32.mrb[0].mxu0
        %v4664 = vpop.f32.mrb[0].mxu0
        %4665 = vdwg.mxu0
        %4666 = vmatprep.subr.bf16.mxu0 %v4416
        %4667 = vmatpush1.bf16.msra.mxu0 %v4415
        %4668 = vmatprep.subr.bf16.mxu0 %v4422
        %4669 = vmatpush1.bf16.msra.mxu0 %v4421
        %4670 = vmatprep.subr.bf16.mxu0 %v4428
        %4671 = vmatpush1.bf16.msra.mxu0 %v4427
        %4672 = vmatprep.subr.bf16.mxu0 %v4434
        %4673 = vmatpush1.bf16.msra.mxu0 %v4433
        %4674 = vmatprep.subr.bf16.mxu0 %v4440
        %4675 = vmatpush1.bf16.msra.mxu0 %v4439
        %4676 = vmatprep.subr.bf16.mxu0 %v4446
        %4677 = vmatpush1.bf16.msra.mxu0 %v4445
        %4678 = vmatprep.subr.bf16.mxu0 %v4452
        %4679 = vmatpush1.bf16.msra.mxu0 %v4451
        %4680 = vmatprep.subr.bf16.mxu0 %v4458
        %4681 = vmatpush1.bf16.msra.mxu0 %v4457
        %4682 = vmatprep.subr.bf16.mxu0 %v4464
        %4683 = vmatpush1.bf16.msra.mxu0 %v4463
        %4684 = vmatprep.subr.bf16.mxu0 %v4470
        %4685 = vmatpush1.bf16.msra.mxu0 %v4469
        %4686 = vmatprep.subr.bf16.mxu0 %v4476
        %4687 = vmatpush1.bf16.msra.mxu0 %v4475
        %4688 = vmatprep.subr.bf16.mxu0 %v4482
        %4689 = vmatpush1.bf16.msra.mxu0 %v4481
        %4690 = vmatprep.subr.bf16.mxu0 %v4488
        %4691 = vmatpush1.bf16.msra.mxu0 %v4487
        %4692 = vmatprep.subr.bf16.mxu0 %v4494
        %4693 = vmatpush1.bf16.msra.mxu0 %v4493
        %4694 = vmatprep.subr.bf16.mxu0 %v4500
        %4695 = vmatpush1.bf16.msra.mxu0 %v4499
        %4696 = vmatprep.subr.bf16.mxu0 %v4506
        %4697 = vmatpush1.bf16.msra.mxu0 %v4505
        %4698 = vmatprep.mubr.bf16.mxu0 %v4088
        %4699 = vmatmul.mubr.bf16.gmra.mrb[0].mxu0 %v4087
        %v4700 = vpop.f32.mrb[0].mxu0
        %v4701 = vadd.f32 %v4106, %v4700
        %v4702 = vpop.f32.mrb[0].mxu0
        %v4703 = vadd.f32 %v4110, %v4702
        %v4704 = vpop.f32.mrb[0].mxu0
        %v4705 = vadd.f32 %v4106, %v4704
        %v4706 = vpop.f32.mrb[0].mxu0
        %v4707 = vadd.f32 %v4110, %v4706
        %4708 = vmatprep.mubr.bf16.mxu0 %v4090
        %4709 = vmatmul.mubr.bf16.gmra.mrb[0].mxu0 %v4089
        %v4710 = vpop.f32.mrb[0].mxu0
        %v4711 = vadd.f32 %v4106, %v4710
        %v4712 = vpop.f32.mrb[0].mxu0
        %v4713 = vadd.f32 %v4110, %v4712
        %v4714 = vpop.f32.mrb[0].mxu0
        %v4715 = vadd.f32 %v4106, %v4714
        %v4716 = vpop.f32.mrb[0].mxu0
        %v4717 = vadd.f32 %v4110, %v4716
        %4718 = vmatprep.mubr.bf16.mxu0 %v4092
        %4719 = vmatmul.mubr.bf16.gmra.mrb[0].mxu0 %v4091
        %v4720 = vpop.f32.mrb[0].mxu0
        %v4721 = vadd.f32 %v4106, %v4720
        %v4722 = vpop.f32.mrb[0].mxu0
        %v4723 = vadd.f32 %v4110, %v4722
        %v4724 = vpop.f32.mrb[0].mxu0
        %v4725 = vpop.f32.mrb[0].mxu0
        %4726 = vdwg.mxu0
        %4727 = vmatprep.subr.bf16.mxu0 %v4418
        %4728 = vmatpush1.bf16.msra.mxu0 %v4417
        %4729 = vmatprep.subr.bf16.mxu0 %v4424
        %4730 = vmatpush1.bf16.msra.mxu0 %v4423
        %4731 = vmatprep.subr.bf16.mxu0 %v4430
        %4732 = vmatpush1.bf16.msra.mxu0 %v4429
        %4733 = vmatprep.subr.bf16.mxu0 %v4436
        %4734 = vmatpush1.bf16.msra.mxu0 %v4435
        %4735 = vmatprep.subr.bf16.mxu0 %v4442
        %4736 = vmatpush1.bf16.msra.mxu0 %v4441
        %4737 = vmatprep.subr.bf16.mxu0 %v4448
        %4738 = vmatpush1.bf16.msra.mxu0 %v4447
        %4739 = vmatprep.subr.bf16.mxu0 %v4454
        %4740 = vmatpush1.bf16.msra.mxu0 %v4453
        %4741 = vmatprep.subr.bf16.mxu0 %v4460
        %4742 = vmatpush1.bf16.msra.mxu0 %v4459
        %4743 = vmatprep.subr.bf16.mxu0 %v4466
        %4744 = vmatpush1.bf16.msra.mxu0 %v4465
        %4745 = vmatprep.subr.bf16.mxu0 %v4472
        %4746 = vmatpush1.bf16.msra.mxu0 %v4471
        %4747 = vmatprep.subr.bf16.mxu0 %v4478
        %4748 = vmatpush1.bf16.msra.mxu0 %v4477
        %4749 = vmatprep.subr.bf16.mxu0 %v4484
        %4750 = vmatpush1.bf16.msra.mxu0 %v4483
        %4751 = vmatprep.subr.bf16.mxu0 %v4490
        %4752 = vmatpush1.bf16.msra.mxu0 %v4489
        %4753 = vmatprep.subr.bf16.mxu0 %v4496
        %4754 = vmatpush1.bf16.msra.mxu0 %v4495
        %4755 = vmatprep.subr.bf16.mxu0 %v4502
        %4756 = vmatpush1.bf16.msra.mxu0 %v4501
        %4757 = vmatprep.subr.bf16.mxu0 %v4508
        %4758 = vmatpush1.bf16.msra.mxu0 %v4507
        %4759 = vmatprep.mubr.bf16.mxu0 %v4088
        %4760 = vmatmul.mubr.bf16.gmra.mrb[0].mxu0 %v4087
        %v4761 = vpop.f32.mrb[0].mxu0
        %v4762 = vadd.f32 %v4114, %v4761
        %v4763 = vpop.f32.mrb[0].mxu0
        %v4764 = vadd.f32 %v4118, %v4763
        %v4765 = vpop.f32.mrb[0].mxu0
        %v4766 = vadd.f32 %v4114, %v4765
        %v4767 = vpop.f32.mrb[0].mxu0
        %v4768 = vadd.f32 %v4118, %v4767
        %4769 = vmatprep.mubr.bf16.mxu0 %v4090
        %4770 = vmatmul.mubr.bf16.gmra.mrb[0].mxu0 %v4089
        %v4771 = vpop.f32.mrb[0].mxu0
        %v4772 = vadd.f32 %v4114, %v4771
        %v4773 = vpop.f32.mrb[0].mxu0
        %v4774 = vadd.f32 %v4118, %v4773
        %v4775 = vpop.f32.mrb[0].mxu0
        %v4776 = vadd.f32 %v4114, %v4775
        %v4777 = vpop.f32.mrb[0].mxu0
        %v4778 = vadd.f32 %v4118, %v4777
        %4779 = vmatprep.mubr.bf16.mxu0 %v4092
        %4780 = vmatmul.mubr.bf16.gmra.mrb[0].mxu0 %v4091
        %v4781 = vpop.f32.mrb[0].mxu0
        %v4782 = vadd.f32 %v4114, %v4781
        %v4783 = vpop.f32.mrb[0].mxu0
        %v4784 = vadd.f32 %v4118, %v4783
        %v4785 = vpop.f32.mrb[0].mxu0
        %v4786 = vpop.f32.mrb[0].mxu0
        %4787 = vdwg.mxu0
        %v4788 = vld [vmem:[#allocation9] sm:$0xff]
        %v4789 = vld [vmem:[#allocation9 + $0x8] sm:$0xff]
        %v4790 = vld [vmem:[#allocation9 + $0x10] sm:$0xff]
        %v4791 = vld [vmem:[#allocation9 + $0x18] sm:$0xff]
        %v4792 = vld [vmem:[#allocation9 + $0x20] sm:$0xff]
        %vm4793 = vcmask 261120
        %v4795 = vsel %vm4793, %v4640, 0
        %v4798 = vsel %vm4793, %v4644, 0
        %v4801 = vsel %vm4793, %v4650, 0
        %v4804 = vsel %vm4793, %v4654, 0
        %v4807 = vsel %vm4793, %v4660, 0
        %v4810 = vsel %vm4793, %v4701, 0
        %v4813 = vsel %vm4793, %v4705, 0
        %v4816 = vsel %vm4793, %v4711, 0
        %v4819 = vsel %vm4793, %v4715, 0
        %v4822 = vsel %vm4793, %v4721, 0
        %4824 = vmatprep.subr.mxu0 0.0
        %4825 = vmatpush1.xpose.msra.mxu0 %v4810
        %4826 = vmatprep.subr.mxu0 0.0
        %4827 = vmatpush1.xpose.msra.mxu0 %v4813
        %4828 = vmatprep.subr.mxu0 0.0
        %4829 = vmatpush1.xpose.msra.mxu0 %v4816
        %4830 = vmatprep.subr.mxu0 0.0
        %4831 = vmatpush1.xpose.msra.mxu0 %v4819
        %4832 = vmatprep.subr.mxu0 0.0
        %4833 = vmatpush1.xpose.msra.mxu0 %v4822
        %4834 = vmatprep.subr.mxu0 0.0
        %4835 = vmatpush1.xpose.msra.mxu0 0.0
        %4836 = vmatprep.subr.mxu0 0.0
        %4837 = vmatpush1.xpose.msra.mxu0 0.0
        %4838 = vmatprep.subr.mxu0 0.0
        %4839 = vmatpush1.xpose.msra.mxu0 0.0
        %4840 = vmatprep.subr.mxu0 0.0
        %4841 = vmatpush1.xpose.msra.mxu0 0.0
        %4842 = vmatprep.subr.mxu0 0.0
        %4843 = vmatpush1.xpose.msra.mxu0 0.0
        %4844 = vmatprep.subr.mxu0 0.0
        %4845 = vmatpush1.xpose.msra.mxu0 0.0
        %4846 = vmatprep.subr.mxu0 0.0
        %4847 = vmatpush1.xpose.msra.mxu0 0.0
        %4848 = vmatprep.subr.mxu0 0.0
        %4849 = vmatpush1.xpose.msra.mxu0 0.0
        %4850 = vmatprep.subr.mxu0 0.0
        %4851 = vmatpush1.xpose.msra.mxu0 0.0
        %4852 = vmatprep.subr.mxu0 0.0
        %4853 = vmatpush1.xpose.msra.mxu0 0.0
        %4854 = vmatprep.subr.mxu0 0.0
        %4855 = vmatpush1.xpose.msra.mxu0 0.0
        %4856 = vmatprep.subr.mxu0 0.0
        %4857 = vmatpush1.xpose.msra.mxu0 0.0
        %4858 = vmatprep.subr.mxu0 0.0
        %4859 = vmatpush1.xpose.msra.mxu0 0.0
        %4860 = vmatprep.subr.mxu0 0.0
        %4861 = vmatpush1.xpose.msra.mxu0 0.0
        %4862 = vmatprep.subr.mxu0 0.0
        %4863 = vmatpush1.xpose.msra.mxu0 0.0
        %4864 = vmatprep.subr.mxu0 0.0
        %4865 = vmatpush1.xpose.msra.mxu0 0.0
        %4866 = vmatprep.subr.mxu0 0.0
        %4867 = vmatpush1.xpose.msra.mxu0 0.0
        %4868 = vmatprep.subr.mxu0 0.0
        %4869 = vmatpush1.xpose.msra.mxu0 0.0
        %4870 = vmatprep.subr.mxu0 0.0
        %4871 = vmatpush1.xpose.msra.mxu0 0.0
        %4872 = vmatprep.subr.mxu0 0.0
        %4873 = vmatpush1.xpose.msra.mxu0 0.0
        %4874 = vmatprep.subr.mxu0 0.0
        %4875 = vmatpush1.xpose.msra.mxu0 0.0
        %4876 = vmatprep.subr.mxu0 0.0
        %4877 = vmatpush1.xpose.msra.mxu0 0.0
        %4878 = vmatprep.subr.mxu0 0.0
        %4879 = vmatpush1.xpose.msra.mxu0 0.0
        %4880 = vmatprep.subr.mxu0 0.0
        %4881 = vmatpush1.xpose.msra.mxu0 0.0
        %4882 = vmatprep.subr.mxu0 0.0
        %4883 = vmatpush1.xpose.msra.mxu0 0.0
        %4884 = vmatprep.subr.mxu0 0.0
        %4885 = vmatpush1.xpose.msra.mxu0 0.0
        %4886 = vmatprep.subr.mxu0 0.0
        %4887 = vmatpush1.xpose.msra.mxu0 0.0
        %4888 = vmatprep.mubr.f32.mxu0 0.0
        %4889 = vmatmul.mubr.f32.gmra.mrb[0].mxu0 %v4795
        %v4890 = vpop.f32.mrb[0].mxu0
        %v4891 = vadd.f32 %v4788, %v4890
        %v4892 = vpop.f32.mrb[0].mxu0
        %4893 = vmatprep.mubr.f32.mxu0 0.0
        %4894 = vmatmul.mubr.f32.gmra.mrb[0].mxu0 %v4798
        %v4895 = vpop.f32.mrb[0].mxu0
        %v4896 = vadd.f32 %v4789, %v4895
        %v4897 = vpop.f32.mrb[0].mxu0
        %4898 = vmatprep.mubr.f32.mxu0 0.0
        %4899 = vmatmul.mubr.f32.gmra.mrb[0].mxu0 %v4801
        %v4900 = vpop.f32.mrb[0].mxu0
        %v4901 = vadd.f32 %v4790, %v4900
        %v4902 = vpop.f32.mrb[0].mxu0
        %4903 = vmatprep.mubr.f32.mxu0 0.0
        %4904 = vmatmul.mubr.f32.gmra.mrb[0].mxu0 %v4804
        %v4905 = vpop.f32.mrb[0].mxu0
        %v4906 = vadd.f32 %v4791, %v4905
        %v4907 = vpop.f32.mrb[0].mxu0
        %4908 = vmatprep.mubr.f32.mxu0 0.0
        %4909 = vmatmul.mubr.f32.gmra.mrb[0].mxu0 %v4807
        %v4910 = vpop.f32.mrb[0].mxu0
        %v4911 = vadd.f32 %v4792, %v4910
        %v4912 = vpop.f32.mrb[0].mxu0
        %4913 = vdwg.mxu0
        %vm4914 = vcmask 326656
        %v4915 = vsel %vm4914, %v4891, -inf
        %4916 = vmax.xlane.f32.xlu0 %v4915
        %v4917 = vpop.xlane.xlu0 %4916
        %v4918 = vsel %vm4914, %v4896, -inf
        %4919 = vmax.xlane.f32.xlu0 %v4918
        %v4920 = vpop.xlane.xlu0 %4919
        %v4921 = vsel %vm4914, %v4901, -inf
        %4922 = vmax.xlane.f32.xlu0 %v4921
        %v4923 = vpop.xlane.xlu0 %4922
        %v4924 = vsel %vm4914, %v4906, -inf
        %4925 = vmax.xlane.f32.xlu0 %v4924
        %v4926 = vpop.xlane.xlu0 %4925
        %v4927 = vsel %vm4914, %v4911, -inf
        %4928 = vmax.xlane.f32.xlu0 %v4927
        %v4929 = vpop.xlane.xlu0 %4928
        %v4930 = vsub.f32 %v4891, %v4917
        %v4931 = vsub.f32 %v4896, %v4920
        %v4932 = vsub.f32 %v4901, %v4923
        %v4933 = vsub.f32 %v4906, %v4926
        %v4934 = vsub.f32 %v4911, %v4929
        %v4935 = vmul.f32 %v4930, 1.442695
        %v4936 = vpow.pop %v4935
        %v4937 = vmul.f32 %v4931, 1.442695
        %v4938 = vpow.pop %v4937
        %v4939 = vmul.f32 %v4932, 1.442695
        %v4940 = vpow.pop %v4939
        %v4941 = vmul.f32 %v4933, 1.442695
        %v4942 = vpow.pop %v4941
        %v4943 = vmul.f32 %v4934, 1.442695
        %v4944 = vpow.pop %v4943
        %v4945 = vsel %vm4914, %v4936, 0.0
        %4946 = vadd.xlane.f32.xlu0 %v4945
        %v4947 = vpop.xlane.xlu0 %4946
        %v4948 = vsel %vm4914, %v4938, 0.0
        %4949 = vadd.xlane.f32.xlu0 %v4948
        %v4950 = vpop.xlane.xlu0 %4949
        %v4951 = vsel %vm4914, %v4940, 0.0
        %4952 = vadd.xlane.f32.xlu0 %v4951
        %v4953 = vpop.xlane.xlu0 %4952
        %v4954 = vsel %vm4914, %v4942, 0.0
        %4955 = vadd.xlane.f32.xlu0 %v4954
        %v4956 = vpop.xlane.xlu0 %4955
        %v4957 = vsel %vm4914, %v4944, 0.0
        %4958 = vadd.xlane.f32.xlu0 %v4957
        %v4959 = vpop.xlane.xlu0 %4958
        %v4960 = vrcp.pop %v4947
        %v4961 = vrcp.pop %v4950
        %v4962 = vrcp.pop %v4953
        %v4963 = vrcp.pop %v4956
        %v4964 = vrcp.pop %v4959
        %v4965 = vmul.f32 %v4936, %v4960
        %v4966 = vmul.f32 %v4938, %v4961
        %v4967 = vmul.f32 %v4940, %v4962
        %v4968 = vmul.f32 %v4942, %v4963
        %v4969 = vmul.f32 %v4944, %v4964
        %v4971 = vsel %vm4914, %v4965, 0
        %v4974 = vsel %vm4914, %v4966, 0
        %v4977 = vsel %vm4914, %v4967, 0
        %v4980 = vsel %vm4914, %v4968, 0
        %v4983 = vsel %vm4914, %v4969, 0
        %4985 = vmatprep.subr.mxu0 0.0
        %4986 = vmatpush1.msra.mxu0 %v4762
        %4987 = vmatprep.subr.mxu0 0.0
        %4988 = vmatpush1.msra.mxu0 %v4766
        %4989 = vmatprep.subr.mxu0 0.0
        %4990 = vmatpush1.msra.mxu0 %v4772
        %4991 = vmatprep.subr.mxu0 0.0
        %4992 = vmatpush1.msra.mxu0 %v4776
        %4993 = vmatprep.subr.mxu0 0.0
        %4994 = vmatpush1.msra.mxu0 %v4782
        %4995 = vmatprep.subr.mxu0 0.0
        %4996 = vmatpush1.msra.mxu0 0.0
        %4997 = vmatprep.subr.mxu0 0.0
        %4998 = vmatpush1.msra.mxu0 0.0
        %4999 = vmatprep.subr.mxu0 0.0
        %5000 = vmatpush1.msra.mxu0 0.0
        %5001 = vmatprep.subr.mxu0 0.0
        %5002 = vmatpush1.msra.mxu0 0.0
        %5003 = vmatprep.subr.mxu0 0.0
        %5004 = vmatpush1.msra.mxu0 0.0
        %5005 = vmatprep.subr.mxu0 0.0
        %5006 = vmatpush1.msra.mxu0 0.0
        %5007 = vmatprep.subr.mxu0 0.0
        %5008 = vmatpush1.msra.mxu0 0.0
        %5009 = vmatprep.subr.mxu0 0.0
        %5010 = vmatpush1.msra.mxu0 0.0
        %5011 = vmatprep.subr.mxu0 0.0
        %5012 = vmatpush1.msra.mxu0 0.0
        %5013 = vmatprep.subr.mxu0 0.0
        %5014 = vmatpush1.msra.mxu0 0.0
        %5015 = vmatprep.subr.mxu0 0.0
        %5016 = vmatpush1.msra.mxu0 0.0
        %5017 = vmatprep.subr.mxu0 0.0
        %5018 = vmatpush1.msra.mxu0 0.0
        %5019 = vmatprep.subr.mxu0 0.0
        %5020 = vmatpush1.msra.mxu0 0.0
        %5021 = vmatprep.subr.mxu0 0.0
        %5022 = vmatpush1.msra.mxu0 0.0
        %5023 = vmatprep.subr.mxu0 0.0
        %5024 = vmatpush1.msra.mxu0 0.0
        %5025 = vmatprep.subr.mxu0 0.0
        %5026 = vmatpush1.msra.mxu0 0.0
        %5027 = vmatprep.subr.mxu0 0.0
        %5028 = vmatpush1.msra.mxu0 0.0
        %5029 = vmatprep.subr.mxu0 0.0
        %5030 = vmatpush1.msra.mxu0 0.0
        %5031 = vmatprep.subr.mxu0 0.0
        %5032 = vmatpush1.msra.mxu0 0.0
        %5033 = vmatprep.subr.mxu0 0.0
        %5034 = vmatpush1.msra.mxu0 0.0
        %5035 = vmatprep.subr.mxu0 0.0
        %5036 = vmatpush1.msra.mxu0 0.0
        %5037 = vmatprep.subr.mxu0 0.0
        %5038 = vmatpush1.msra.mxu0 0.0
        %5039 = vmatprep.subr.mxu0 0.0
        %5040 = vmatpush1.msra.mxu0 0.0
        %5041 = vmatprep.subr.mxu0 0.0
        %5042 = vmatpush1.msra.mxu0 0.0
        %5043 = vmatprep.subr.mxu0 0.0
        %5044 = vmatpush1.msra.mxu0 0.0
        %5045 = vmatprep.subr.mxu0 0.0
        %5046 = vmatpush1.msra.mxu0 0.0
        %5047 = vmatprep.subr.mxu0 0.0
        %5048 = vmatpush1.msra.mxu0 0.0
        %5049 = vmatprep.mubr.f32.mxu0 0.0
        %5050 = vmatmul.mubr.f32.gmra.mrb[0].mxu0 %v4971
        %v5051 = vpop.f32.mrb[0].mxu0
        %v5052 = vadd.f32 0.0, %v5051
        %v5053 = vpop.f32.mrb[0].mxu0
        %5054 = vmatprep.mubr.f32.mxu0 0.0
        %5055 = vmatmul.mubr.f32.gmra.mrb[0].mxu0 %v4974
        %v5056 = vpop.f32.mrb[0].mxu0
        %v5057 = vadd.f32 0.0, %v5056
        %v5058 = vpop.f32.mrb[0].mxu0
        %5059 = vmatprep.mubr.f32.mxu0 0.0
        %5060 = vmatmul.mubr.f32.gmra.mrb[0].mxu0 %v4977
        %v5061 = vpop.f32.mrb[0].mxu0
        %v5062 = vadd.f32 0.0, %v5061
        %v5063 = vpop.f32.mrb[0].mxu0
        %5064 = vmatprep.mubr.f32.mxu0 0.0
        %5065 = vmatmul.mubr.f32.gmra.mrb[0].mxu0 %v4980
        %v5066 = vpop.f32.mrb[0].mxu0
        %v5067 = vadd.f32 0.0, %v5066
        %v5068 = vpop.f32.mrb[0].mxu0
        %5069 = vmatprep.mubr.f32.mxu0 0.0
        %5070 = vmatmul.mubr.f32.gmra.mrb[0].mxu0 %v4983
        %v5071 = vpop.f32.mrb[0].mxu0
        %v5072 = vadd.f32 0.0, %v5071
        %v5073 = vpop.f32.mrb[0].mxu0
        %5074 = vdwg.mxu0
        %5075 = vrot.lane.b32.xlu0 %v4640, 96
        %v5076 = vpop.permute.xlu0 %5075
        %5077 = vrot.lane.b32.xlu0 %v4644, 96
        %v5078 = vpop.permute.xlu0 %5077
        %5079 = vrot.lane.b32.xlu0 %v4650, 96
        %v5080 = vpop.permute.xlu0 %5079
        %5081 = vrot.lane.b32.xlu0 %v4654, 96
        %v5082 = vpop.permute.xlu0 %5081
        %5083 = vrot.lane.b32.xlu0 %v4660, 96
        %v5084 = vpop.permute.xlu0 %5083
        %5085 = vrot.lane.b32.xlu0 %v4701, 96
        %v5086 = vpop.permute.xlu0 %5085
        %5087 = vrot.lane.b32.xlu0 %v4705, 96
        %v5088 = vpop.permute.xlu0 %5087
        %5089 = vrot.lane.b32.xlu0 %v4711, 96
        %v5090 = vpop.permute.xlu0 %5089
        %5091 = vrot.lane.b32.xlu0 %v4715, 96
        %v5092 = vpop.permute.xlu0 %5091
        %5093 = vrot.lane.b32.xlu0 %v4721, 96
        %v5094 = vpop.permute.xlu0 %5093
        %v5095 = vsel %vm4793, %v5076, 0
        %v5097 = vsel %vm4793, %v5078, 0
        %v5099 = vsel %vm4793, %v5080, 0
        %v5101 = vsel %vm4793, %v5082, 0
        %v5103 = vsel %vm4793, %v5084, 0
        %v5105 = vsel %vm4793, %v5086, 0
        %v5107 = vsel %vm4793, %v5088, 0
        %v5109 = vsel %vm4793, %v5090, 0
        %v5111 = vsel %vm4793, %v5092, 0
        %v5113 = vsel %vm4793, %v5094, 0
        %5115 = vmatprep.subr.mxu0 0.0
        %5116 = vmatpush1.xpose.msra.mxu0 %v5105
        %5117 = vmatprep.subr.mxu0 0.0
        %5118 = vmatpush1.xpose.msra.mxu0 %v5107
        %5119 = vmatprep.subr.mxu0 0.0
        %5120 = vmatpush1.xpose.msra.mxu0 %v5109
        %5121 = vmatprep.subr.mxu0 0.0
        %5122 = vmatpush1.xpose.msra.mxu0 %v5111
        %5123 = vmatprep.subr.mxu0 0.0
        %5124 = vmatpush1.xpose.msra.mxu0 %v5113
        %5125 = vmatprep.subr.mxu0 0.0
        %5126 = vmatpush1.xpose.msra.mxu0 0.0
        %5127 = vmatprep.subr.mxu0 0.0
        %5128 = vmatpush1.xpose.msra.mxu0 0.0
        %5129 = vmatprep.subr.mxu0 0.0
        %5130 = vmatpush1.xpose.msra.mxu0 0.0
        %5131 = vmatprep.subr.mxu0 0.0
        %5132 = vmatpush1.xpose.msra.mxu0 0.0
        %5133 = vmatprep.subr.mxu0 0.0
        %5134 = vmatpush1.xpose.msra.mxu0 0.0
        %5135 = vmatprep.subr.mxu0 0.0
        %5136 = vmatpush1.xpose.msra.mxu0 0.0
        %5137 = vmatprep.subr.mxu0 0.0
        %5138 = vmatpush1.xpose.msra.mxu0 0.0
        %5139 = vmatprep.subr.mxu0 0.0
        %5140 = vmatpush1.xpose.msra.mxu0 0.0
        %5141 = vmatprep.subr.mxu0 0.0
        %5142 = vmatpush1.xpose.msra.mxu0 0.0
        %5143 = vmatprep.subr.mxu0 0.0
        %5144 = vmatpush1.xpose.msra.mxu0 0.0
        %5145 = vmatprep.subr.mxu0 0.0
        %5146 = vmatpush1.xpose.msra.mxu0 0.0
        %5147 = vmatprep.subr.mxu0 0.0
        %5148 = vmatpush1.xpose.msra.mxu0 0.0
        %5149 = vmatprep.subr.mxu0 0.0
        %5150 = vmatpush1.xpose.msra.mxu0 0.0
        %5151 = vmatprep.subr.mxu0 0.0
        %5152 = vmatpush1.xpose.msra.mxu0 0.0
        %5153 = vmatprep.subr.mxu0 0.0
        %5154 = vmatpush1.xpose.msra.mxu0 0.0
        %5155 = vmatprep.subr.mxu0 0.0
        %5156 = vmatpush1.xpose.msra.mxu0 0.0
        %5157 = vmatprep.subr.mxu0 0.0
        %5158 = vmatpush1.xpose.msra.mxu0 0.0
        %5159 = vmatprep.subr.mxu0 0.0
        %5160 = vmatpush1.xpose.msra.mxu0 0.0
        %5161 = vmatprep.subr.mxu0 0.0
        %5162 = vmatpush1.xpose.msra.mxu0 0.0
        %5163 = vmatprep.subr.mxu0 0.0
        %5164 = vmatpush1.xpose.msra.mxu0 0.0
        %5165 = vmatprep.subr.mxu0 0.0
        %5166 = vmatpush1.xpose.msra.mxu0 0.0
        %5167 = vmatprep.subr.mxu0 0.0
        %5168 = vmatpush1.xpose.msra.mxu0 0.0
        %5169 = vmatprep.subr.mxu0 0.0
        %5170 = vmatpush1.xpose.msra.mxu0 0.0
        %5171 = vmatprep.subr.mxu0 0.0
        %5172 = vmatpush1.xpose.msra.mxu0 0.0
        %5173 = vmatprep.subr.mxu0 0.0
        %5174 = vmatpush1.xpose.msra.mxu0 0.0
        %5175 = vmatprep.subr.mxu0 0.0
        %5176 = vmatpush1.xpose.msra.mxu0 0.0
        %5177 = vmatprep.subr.mxu0 0.0
        %5178 = vmatpush1.xpose.msra.mxu0 0.0
        %5179 = vmatprep.mubr.f32.mxu0 0.0
        %5180 = vmatmul.mubr.f32.gmra.mrb[0].mxu0 %v5095
        %v5181 = vpop.f32.mrb[0].mxu0
        %v5182 = vadd.f32 %v4788, %v5181
        %v5183 = vpop.f32.mrb[0].mxu0
        %5184 = vmatprep.mubr.f32.mxu0 0.0
        %5185 = vmatmul.mubr.f32.gmra.mrb[0].mxu0 %v5097
        %v5186 = vpop.f32.mrb[0].mxu0
        %v5187 = vadd.f32 %v4789, %v5186
        %v5188 = vpop.f32.mrb[0].mxu0
        %5189 = vmatprep.mubr.f32.mxu0 0.0
        %5190 = vmatmul.mubr.f32.gmra.mrb[0].mxu0 %v5099
        %v5191 = vpop.f32.mrb[0].mxu0
        %v5192 = vadd.f32 %v4790, %v5191
        %v5193 = vpop.f32.mrb[0].mxu0
        %5194 = vmatprep.mubr.f32.mxu0 0.0
        %5195 = vmatmul.mubr.f32.gmra.mrb[0].mxu0 %v5101
        %v5196 = vpop.f32.mrb[0].mxu0
        %v5197 = vadd.f32 %v4791, %v5196
        %v5198 = vpop.f32.mrb[0].mxu0
        %5199 = vmatprep.mubr.f32.mxu0 0.0
        %5200 = vmatmul.mubr.f32.gmra.mrb[0].mxu0 %v5103
        %v5201 = vpop.f32.mrb[0].mxu0
        %v5202 = vadd.f32 %v4792, %v5201
        %v5203 = vpop.f32.mrb[0].mxu0
        %5204 = vdwg.mxu0
        %v5205 = vsel %vm4914, %v5182, -inf
        %5206 = vmax.xlane.f32.xlu0 %v5205
        %v5207 = vpop.xlane.xlu0 %5206
        %v5208 = vsel %vm4914, %v5187, -inf
        %5209 = vmax.xlane.f32.xlu0 %v5208
        %v5210 = vpop.xlane.xlu0 %5209
        %v5211 = vsel %vm4914, %v5192, -inf
        %5212 = vmax.xlane.f32.xlu0 %v5211
        %v5213 = vpop.xlane.xlu0 %5212
        %v5214 = vsel %vm4914, %v5197, -inf
        %5215 = vmax.xlane.f32.xlu0 %v5214
        %v5216 = vpop.xlane.xlu0 %5215
        %v5217 = vsel %vm4914, %v5202, -inf
        %5218 = vmax.xlane.f32.xlu0 %v5217
        %v5219 = vpop.xlane.xlu0 %5218
        %v5220 = vsub.f32 %v5182, %v5207
        %v5221 = vsub.f32 %v5187, %v5210
        %v5222 = vsub.f32 %v5192, %v5213
        %v5223 = vsub.f32 %v5197, %v5216
        %v5224 = vsub.f32 %v5202, %v5219
        %v5225 = vmul.f32 %v5220, 1.442695
        %v5226 = vpow.pop %v5225
        %v5227 = vmul.f32 %v5221, 1.442695
        %v5228 = vpow.pop %v5227
        %v5229 = vmul.f32 %v5222, 1.442695
        %v5230 = vpow.pop %v5229
        %v5231 = vmul.f32 %v5223, 1.442695
        %v5232 = vpow.pop %v5231
        %v5233 = vmul.f32 %v5224, 1.442695
        %v5234 = vpow.pop %v5233
        %v5235 = vsel %vm4914, %v5226, 0.0
        %5236 = vadd.xlane.f32.xlu0 %v5235
        %v5237 = vpop.xlane.xlu0 %5236
        %v5238 = vsel %vm4914, %v5228, 0.0
        %5239 = vadd.xlane.f32.xlu0 %v5238
        %v5240 = vpop.xlane.xlu0 %5239
        %v5241 = vsel %vm4914, %v5230, 0.0
        %5242 = vadd.xlane.f32.xlu0 %v5241
        %v5243 = vpop.xlane.xlu0 %5242
        %v5244 = vsel %vm4914, %v5232, 0.0
        %5245 = vadd.xlane.f32.xlu0 %v5244
        %v5246 = vpop.xlane.xlu0 %5245
        %v5247 = vsel %vm4914, %v5234, 0.0
        %5248 = vadd.xlane.f32.xlu0 %v5247
        %v5249 = vpop.xlane.xlu0 %5248
        %v5250 = vrcp.pop %v5237
        %v5251 = vrcp.pop %v5240
        %v5252 = vrcp.pop %v5243
        %v5253 = vrcp.pop %v5246
        %v5254 = vrcp.pop %v5249
        %v5255 = vmul.f32 %v5226, %v5250
        %v5256 = vmul.f32 %v5228, %v5251
        %v5257 = vmul.f32 %v5230, %v5252
        %v5258 = vmul.f32 %v5232, %v5253
        %v5259 = vmul.f32 %v5234, %v5254
        %5265 = vrot.lane.b32.xlu0 %v4762, 96
        %v5266 = vpop.permute.xlu0 %5265
        %5267 = vrot.lane.b32.xlu0 %v4766, 96
        %v5268 = vpop.permute.xlu0 %5267
        %5269 = vrot.lane.b32.xlu0 %v4772, 96
        %v5270 = vpop.permute.xlu0 %5269
        %5271 = vrot.lane.b32.xlu0 %v4776, 96
        %v5272 = vpop.permute.xlu0 %5271
        %5273 = vrot.lane.b32.xlu0 %v4782, 96
        %v5274 = vpop.permute.xlu0 %5273
        %v5281 = vsel %vm4914, %v5255, 0
        %v5284 = vsel %vm4914, %v5256, 0
        %v5287 = vsel %vm4914, %v5257, 0
        %v5290 = vsel %vm4914, %v5258, 0
        %v5293 = vsel %vm4914, %v5259, 0
        %5295 = vmatprep.subr.mxu0 0.0
        %5296 = vmatpush1.msra.mxu0 %v5266
        %5297 = vmatprep.subr.mxu0 0.0
        %5298 = vmatpush1.msra.mxu0 %v5268
        %5299 = vmatprep.subr.mxu0 0.0
        %5300 = vmatpush1.msra.mxu0 %v5270
        %5301 = vmatprep.subr.mxu0 0.0
        %5302 = vmatpush1.msra.mxu0 %v5272
        %5303 = vmatprep.subr.mxu0 0.0
        %5304 = vmatpush1.msra.mxu0 %v5274
        %5305 = vmatprep.subr.mxu0 0.0
        %5306 = vmatpush1.msra.mxu0 0.0
        %5307 = vmatprep.subr.mxu0 0.0
        %5308 = vmatpush1.msra.mxu0 0.0
        %5309 = vmatprep.subr.mxu0 0.0
        %5310 = vmatpush1.msra.mxu0 0.0
        %5311 = vmatprep.subr.mxu0 0.0
        %5312 = vmatpush1.msra.mxu0 0.0
        %5313 = vmatprep.subr.mxu0 0.0
        %5314 = vmatpush1.msra.mxu0 0.0
        %5315 = vmatprep.subr.mxu0 0.0
        %5316 = vmatpush1.msra.mxu0 0.0
        %5317 = vmatprep.subr.mxu0 0.0
        %5318 = vmatpush1.msra.mxu0 0.0
        %5319 = vmatprep.subr.mxu0 0.0
        %5320 = vmatpush1.msra.mxu0 0.0
        %5321 = vmatprep.subr.mxu0 0.0
        %5322 = vmatpush1.msra.mxu0 0.0
        %5323 = vmatprep.subr.mxu0 0.0
        %5324 = vmatpush1.msra.mxu0 0.0
        %5325 = vmatprep.subr.mxu0 0.0
        %5326 = vmatpush1.msra.mxu0 0.0
        %5327 = vmatprep.subr.mxu0 0.0
        %5328 = vmatpush1.msra.mxu0 0.0
        %5329 = vmatprep.subr.mxu0 0.0
        %5330 = vmatpush1.msra.mxu0 0.0
        %5331 = vmatprep.subr.mxu0 0.0
        %5332 = vmatpush1.msra.mxu0 0.0
        %5333 = vmatprep.subr.mxu0 0.0
        %5334 = vmatpush1.msra.mxu0 0.0
        %5335 = vmatprep.subr.mxu0 0.0
        %5336 = vmatpush1.msra.mxu0 0.0
        %5337 = vmatprep.subr.mxu0 0.0
        %5338 = vmatpush1.msra.mxu0 0.0
        %5339 = vmatprep.subr.mxu0 0.0
        %5340 = vmatpush1.msra.mxu0 0.0
        %5341 = vmatprep.subr.mxu0 0.0
        %5342 = vmatpush1.msra.mxu0 0.0
        %5343 = vmatprep.subr.mxu0 0.0
        %5344 = vmatpush1.msra.mxu0 0.0
        %5345 = vmatprep.subr.mxu0 0.0
        %5346 = vmatpush1.msra.mxu0 0.0
        %5347 = vmatprep.subr.mxu0 0.0
        %5348 = vmatpush1.msra.mxu0 0.0
        %5349 = vmatprep.subr.mxu0 0.0
        %5350 = vmatpush1.msra.mxu0 0.0
        %5351 = vmatprep.subr.mxu0 0.0
        %5352 = vmatpush1.msra.mxu0 0.0
        %5353 = vmatprep.subr.mxu0 0.0
        %5354 = vmatpush1.msra.mxu0 0.0
        %5355 = vmatprep.subr.mxu0 0.0
        %5356 = vmatpush1.msra.mxu0 0.0
        %5357 = vmatprep.subr.mxu0 0.0
        %5358 = vmatpush1.msra.mxu0 0.0
        %5359 = vmatprep.mubr.f32.mxu0 0.0
        %5360 = vmatmul.mubr.f32.gmra.mrb[0].mxu0 %v5281
        %v5361 = vpop.f32.mrb[0].mxu0
        %v5362 = vadd.f32 0.0, %v5361
        %v5363 = vpop.f32.mrb[0].mxu0
        %5364 = vmatprep.mubr.f32.mxu0 0.0
        %5365 = vmatmul.mubr.f32.gmra.mrb[0].mxu0 %v5284
        %v5366 = vpop.f32.mrb[0].mxu0
        %v5367 = vadd.f32 0.0, %v5366
        %v5368 = vpop.f32.mrb[0].mxu0
        %5369 = vmatprep.mubr.f32.mxu0 0.0
        %5370 = vmatmul.mubr.f32.gmra.mrb[0].mxu0 %v5287
        %v5371 = vpop.f32.mrb[0].mxu0
        %v5372 = vadd.f32 0.0, %v5371
        %v5373 = vpop.f32.mrb[0].mxu0
        %5374 = vmatprep.mubr.f32.mxu0 0.0
        %5375 = vmatmul.mubr.f32.gmra.mrb[0].mxu0 %v5290
        %v5376 = vpop.f32.mrb[0].mxu0
        %v5377 = vadd.f32 0.0, %v5376
        %v5378 = vpop.f32.mrb[0].mxu0
        %5379 = vmatprep.mubr.f32.mxu0 0.0
        %5380 = vmatmul.mubr.f32.gmra.mrb[0].mxu0 %v5293
        %v5381 = vpop.f32.mrb[0].mxu0
        %v5382 = vadd.f32 0.0, %v5381
        %v5383 = vpop.f32.mrb[0].mxu0
        %5384 = vdwg.mxu0
        %5385 = vrot.lane.b32.xlu0 %v4640, 64
        %v5386 = vpop.permute.xlu0 %5385
        %5387 = vrot.lane.b32.xlu0 %v4644, 64
        %v5388 = vpop.permute.xlu0 %5387
        %5389 = vrot.lane.b32.xlu0 %v4650, 64
        %v5390 = vpop.permute.xlu0 %5389
        %5391 = vrot.lane.b32.xlu0 %v4654, 64
        %v5392 = vpop.permute.xlu0 %5391
        %5393 = vrot.lane.b32.xlu0 %v4660, 64
        %v5394 = vpop.permute.xlu0 %5393
        %5395 = vrot.lane.b32.xlu0 %v4701, 64
        %v5396 = vpop.permute.xlu0 %5395
        %5397 = vrot.lane.b32.xlu0 %v4705, 64
        %v5398 = vpop.permute.xlu0 %5397
        %5399 = vrot.lane.b32.xlu0 %v4711, 64
        %v5400 = vpop.permute.xlu0 %5399
        %5401 = vrot.lane.b32.xlu0 %v4715, 64
        %v5402 = vpop.permute.xlu0 %5401
        %5403 = vrot.lane.b32.xlu0 %v4721, 64
        %v5404 = vpop.permute.xlu0 %5403
        %v5405 = vsel %vm4793, %v5386, 0
        %v5407 = vsel %vm4793, %v5388, 0
        %v5409 = vsel %vm4793, %v5390, 0
        %v5411 = vsel %vm4793, %v5392, 0
        %v5413 = vsel %vm4793, %v5394, 0
        %v5415 = vsel %vm4793, %v5396, 0
        %v5417 = vsel %vm4793, %v5398, 0
        %v5419 = vsel %vm4793, %v5400, 0
        %v5421 = vsel %vm4793, %v5402, 0
        %v5423 = vsel %vm4793, %v5404, 0
        %5425 = vmatprep.subr.mxu0 0.0
        %5426 = vmatpush1.xpose.msra.mxu0 %v5415
        %5427 = vmatprep.subr.mxu0 0.0
        %5428 = vmatpush1.xpose.msra.mxu0 %v5417
        %5429 = vmatprep.subr.mxu0 0.0
        %5430 = vmatpush1.xpose.msra.mxu0 %v5419
        %5431 = vmatprep.subr.mxu0 0.0
        %5432 = vmatpush1.xpose.msra.mxu0 %v5421
        %5433 = vmatprep.subr.mxu0 0.0
        %5434 = vmatpush1.xpose.msra.mxu0 %v5423
        %5435 = vmatprep.subr.mxu0 0.0
        %5436 = vmatpush1.xpose.msra.mxu0 0.0
        %5437 = vmatprep.subr.mxu0 0.0
        %5438 = vmatpush1.xpose.msra.mxu0 0.0
        %5439 = vmatprep.subr.mxu0 0.0
        %5440 = vmatpush1.xpose.msra.mxu0 0.0
        %5441 = vmatprep.subr.mxu0 0.0
        %5442 = vmatpush1.xpose.msra.mxu0 0.0
        %5443 = vmatprep.subr.mxu0 0.0
        %5444 = vmatpush1.xpose.msra.mxu0 0.0
        %5445 = vmatprep.subr.mxu0 0.0
        %5446 = vmatpush1.xpose.msra.mxu0 0.0
        %5447 = vmatprep.subr.mxu0 0.0
        %5448 = vmatpush1.xpose.msra.mxu0 0.0
        %5449 = vmatprep.subr.mxu0 0.0
        %5450 = vmatpush1.xpose.msra.mxu0 0.0
        %5451 = vmatprep.subr.mxu0 0.0
        %5452 = vmatpush1.xpose.msra.mxu0 0.0
        %5453 = vmatprep.subr.mxu0 0.0
        %5454 = vmatpush1.xpose.msra.mxu0 0.0
        %5455 = vmatprep.subr.mxu0 0.0
        %5456 = vmatpush1.xpose.msra.mxu0 0.0
        %5457 = vmatprep.subr.mxu0 0.0
        %5458 = vmatpush1.xpose.msra.mxu0 0.0
        %5459 = vmatprep.subr.mxu0 0.0
        %5460 = vmatpush1.xpose.msra.mxu0 0.0
        %5461 = vmatprep.subr.mxu0 0.0
        %5462 = vmatpush1.xpose.msra.mxu0 0.0
        %5463 = vmatprep.subr.mxu0 0.0
        %5464 = vmatpush1.xpose.msra.mxu0 0.0
        %5465 = vmatprep.subr.mxu0 0.0
        %5466 = vmatpush1.xpose.msra.mxu0 0.0
        %5467 = vmatprep.subr.mxu0 0.0
        %5468 = vmatpush1.xpose.msra.mxu0 0.0
        %5469 = vmatprep.subr.mxu0 0.0
        %5470 = vmatpush1.xpose.msra.mxu0 0.0
        %5471 = vmatprep.subr.mxu0 0.0
        %5472 = vmatpush1.xpose.msra.mxu0 0.0
        %5473 = vmatprep.subr.mxu0 0.0
        %5474 = vmatpush1.xpose.msra.mxu0 0.0
        %5475 = vmatprep.subr.mxu0 0.0
        %5476 = vmatpush1.xpose.msra.mxu0 0.0
        %5477 = vmatprep.subr.mxu0 0.0
        %5478 = vmatpush1.xpose.msra.mxu0 0.0
        %5479 = vmatprep.subr.mxu0 0.0
        %5480 = vmatpush1.xpose.msra.mxu0 0.0
        %5481 = vmatprep.subr.mxu0 0.0
        %5482 = vmatpush1.xpose.msra.mxu0 0.0
        %5483 = vmatprep.subr.mxu0 0.0
        %5484 = vmatpush1.xpose.msra.mxu0 0.0
        %5485 = vmatprep.subr.mxu0 0.0
        %5486 = vmatpush1.xpose.msra.mxu0 0.0
        %5487 = vmatprep.subr.mxu0 0.0
        %5488 = vmatpush1.xpose.msra.mxu0 0.0
        %5489 = vmatprep.mubr.f32.mxu0 0.0
        %5490 = vmatmul.mubr.f32.gmra.mrb[0].mxu0 %v5405
        %v5491 = vpop.f32.mrb[0].mxu0
        %v5492 = vadd.f32 %v4788, %v5491
        %v5493 = vpop.f32.mrb[0].mxu0
        %5494 = vmatprep.mubr.f32.mxu0 0.0
        %5495 = vmatmul.mubr.f32.gmra.mrb[0].mxu0 %v5407
        %v5496 = vpop.f32.mrb[0].mxu0
        %v5497 = vadd.f32 %v4789, %v5496
        %v5498 = vpop.f32.mrb[0].mxu0
        %5499 = vmatprep.mubr.f32.mxu0 0.0
        %5500 = vmatmul.mubr.f32.gmra.mrb[0].mxu0 %v5409
        %v5501 = vpop.f32.mrb[0].mxu0
        %v5502 = vadd.f32 %v4790, %v5501
        %v5503 = vpop.f32.mrb[0].mxu0
        %5504 = vmatprep.mubr.f32.mxu0 0.0
        %5505 = vmatmul.mubr.f32.gmra.mrb[0].mxu0 %v5411
        %v5506 = vpop.f32.mrb[0].mxu0
        %v5507 = vadd.f32 %v4791, %v5506
        %v5508 = vpop.f32.mrb[0].mxu0
        %5509 = vmatprep.mubr.f32.mxu0 0.0
        %5510 = vmatmul.mubr.f32.gmra.mrb[0].mxu0 %v5413
        %v5511 = vpop.f32.mrb[0].mxu0
        %v5512 = vadd.f32 %v4792, %v5511
        %v5513 = vpop.f32.mrb[0].mxu0
        %5514 = vdwg.mxu0
        %v5515 = vsel %vm4914, %v5492, -inf
        %5516 = vmax.xlane.f32.xlu0 %v5515
        %v5517 = vpop.xlane.xlu0 %5516
        %v5518 = vsel %vm4914, %v5497, -inf
        %5519 = vmax.xlane.f32.xlu0 %v5518
        %v5520 = vpop.xlane.xlu0 %5519
        %v5521 = vsel %vm4914, %v5502, -inf
        %5522 = vmax.xlane.f32.xlu0 %v5521
        %v5523 = vpop.xlane.xlu0 %5522
        %v5524 = vsel %vm4914, %v5507, -inf
        %5525 = vmax.xlane.f32.xlu0 %v5524
        %v5526 = vpop.xlane.xlu0 %5525
        %v5527 = vsel %vm4914, %v5512, -inf
        %5528 = vmax.xlane.f32.xlu0 %v5527
        %v5529 = vpop.xlane.xlu0 %5528
        %v5530 = vsub.f32 %v5492, %v5517
        %v5531 = vsub.f32 %v5497, %v5520
        %v5532 = vsub.f32 %v5502, %v5523
        %v5533 = vsub.f32 %v5507, %v5526
        %v5534 = vsub.f32 %v5512, %v5529
        %v5535 = vmul.f32 %v5530, 1.442695
        %v5536 = vpow.pop %v5535
        %v5537 = vmul.f32 %v5531, 1.442695
        %v5538 = vpow.pop %v5537
        %v5539 = vmul.f32 %v5532, 1.442695
        %v5540 = vpow.pop %v5539
        %v5541 = vmul.f32 %v5533, 1.442695
        %v5542 = vpow.pop %v5541
        %v5543 = vmul.f32 %v5534, 1.442695
        %v5544 = vpow.pop %v5543
        %v5545 = vsel %vm4914, %v5536, 0.0
        %5546 = vadd.xlane.f32.xlu0 %v5545
        %v5547 = vpop.xlane.xlu0 %5546
        %v5548 = vsel %vm4914, %v5538, 0.0
        %5549 = vadd.xlane.f32.xlu0 %v5548
        %v5550 = vpop.xlane.xlu0 %5549
        %v5551 = vsel %vm4914, %v5540, 0.0
        %5552 = vadd.xlane.f32.xlu0 %v5551
        %v5553 = vpop.xlane.xlu0 %5552
        %v5554 = vsel %vm4914, %v5542, 0.0
        %5555 = vadd.xlane.f32.xlu0 %v5554
        %v5556 = vpop.xlane.xlu0 %5555
        %v5557 = vsel %vm4914, %v5544, 0.0
        %5558 = vadd.xlane.f32.xlu0 %v5557
        %v5559 = vpop.xlane.xlu0 %5558
        %v5560 = vrcp.pop %v5547
        %v5561 = vrcp.pop %v5550
        %v5562 = vrcp.pop %v5553
        %v5563 = vrcp.pop %v5556
        %v5564 = vrcp.pop %v5559
        %v5565 = vmul.f32 %v5536, %v5560
        %v5566 = vmul.f32 %v5538, %v5561
        %v5567 = vmul.f32 %v5540, %v5562
        %v5568 = vmul.f32 %v5542, %v5563
        %v5569 = vmul.f32 %v5544, %v5564
        %5570 = vrot.lane.b32.xlu0 %v4762, 64
        %v5571 = vpop.permute.xlu0 %5570
        %5572 = vrot.lane.b32.xlu0 %v4766, 64
        %v5573 = vpop.permute.xlu0 %5572
        %5574 = vrot.lane.b32.xlu0 %v4772, 64
        %v5575 = vpop.permute.xlu0 %5574
        %5576 = vrot.lane.b32.xlu0 %v4776, 64
        %v5577 = vpop.permute.xlu0 %5576
        %5578 = vrot.lane.b32.xlu0 %v4782, 64
        %v5579 = vpop.permute.xlu0 %5578
        %v5586 = vsel %vm4914, %v5565, 0
        %v5589 = vsel %vm4914, %v5566, 0
        %v5592 = vsel %vm4914, %v5567, 0
        %v5595 = vsel %vm4914, %v5568, 0
        %v5598 = vsel %vm4914, %v5569, 0
        %5600 = vmatprep.subr.mxu0 0.0
        %5601 = vmatpush1.msra.mxu0 %v5571
        %5602 = vmatprep.subr.mxu0 0.0
        %5603 = vmatpush1.msra.mxu0 %v5573
        %5604 = vmatprep.subr.mxu0 0.0
        %5605 = vmatpush1.msra.mxu0 %v5575
        %5606 = vmatprep.subr.mxu0 0.0
        %5607 = vmatpush1.msra.mxu0 %v5577
        %5608 = vmatprep.subr.mxu0 0.0
        %5609 = vmatpush1.msra.mxu0 %v5579
        %5610 = vmatprep.subr.mxu0 0.0
        %5611 = vmatpush1.msra.mxu0 0.0
        %5612 = vmatprep.subr.mxu0 0.0
        %5613 = vmatpush1.msra.mxu0 0.0
        %5614 = vmatprep.subr.mxu0 0.0
        %5615 = vmatpush1.msra.mxu0 0.0
        %5616 = vmatprep.subr.mxu0 0.0
        %5617 = vmatpush1.msra.mxu0 0.0
        %5618 = vmatprep.subr.mxu0 0.0
        %5619 = vmatpush1.msra.mxu0 0.0
        %5620 = vmatprep.subr.mxu0 0.0
        %5621 = vmatpush1.msra.mxu0 0.0
        %5622 = vmatprep.subr.mxu0 0.0
        %5623 = vmatpush1.msra.mxu0 0.0
        %5624 = vmatprep.subr.mxu0 0.0
        %5625 = vmatpush1.msra.mxu0 0.0
        %5626 = vmatprep.subr.mxu0 0.0
        %5627 = vmatpush1.msra.mxu0 0.0
        %5628 = vmatprep.subr.mxu0 0.0
        %5629 = vmatpush1.msra.mxu0 0.0
        %5630 = vmatprep.subr.mxu0 0.0
        %5631 = vmatpush1.msra.mxu0 0.0
        %5632 = vmatprep.subr.mxu0 0.0
        %5633 = vmatpush1.msra.mxu0 0.0
        %5634 = vmatprep.subr.mxu0 0.0
        %5635 = vmatpush1.msra.mxu0 0.0
        %5636 = vmatprep.subr.mxu0 0.0
        %5637 = vmatpush1.msra.mxu0 0.0
        %5638 = vmatprep.subr.mxu0 0.0
        %5639 = vmatpush1.msra.mxu0 0.0
        %5640 = vmatprep.subr.mxu0 0.0
        %5641 = vmatpush1.msra.mxu0 0.0
        %5642 = vmatprep.subr.mxu0 0.0
        %5643 = vmatpush1.msra.mxu0 0.0
        %5644 = vmatprep.subr.mxu0 0.0
        %5645 = vmatpush1.msra.mxu0 0.0
        %5646 = vmatprep.subr.mxu0 0.0
        %5647 = vmatpush1.msra.mxu0 0.0
        %5648 = vmatprep.subr.mxu0 0.0
        %5649 = vmatpush1.msra.mxu0 0.0
        %5650 = vmatprep.subr.mxu0 0.0
        %5651 = vmatpush1.msra.mxu0 0.0
        %5652 = vmatprep.subr.mxu0 0.0
        %5653 = vmatpush1.msra.mxu0 0.0
        %5654 = vmatprep.subr.mxu0 0.0
        %5655 = vmatpush1.msra.mxu0 0.0
        %5656 = vmatprep.subr.mxu0 0.0
        %5657 = vmatpush1.msra.mxu0 0.0
        %5658 = vmatprep.subr.mxu0 0.0
        %5659 = vmatpush1.msra.mxu0 0.0
        %5660 = vmatprep.subr.mxu0 0.0
        %5661 = vmatpush1.msra.mxu0 0.0
        %5662 = vmatprep.subr.mxu0 0.0
        %5663 = vmatpush1.msra.mxu0 0.0
        %5664 = vmatprep.mubr.f32.mxu0 0.0
        %5665 = vmatmul.mubr.f32.gmra.mrb[0].mxu0 %v5586
        %v5666 = vpop.f32.mrb[0].mxu0
        %v5667 = vadd.f32 0.0, %v5666
        %v5668 = vpop.f32.mrb[0].mxu0
        %5669 = vmatprep.mubr.f32.mxu0 0.0
        %5670 = vmatmul.mubr.f32.gmra.mrb[0].mxu0 %v5589
        %v5671 = vpop.f32.mrb[0].mxu0
        %v5672 = vadd.f32 0.0, %v5671
        %v5673 = vpop.f32.mrb[0].mxu0
        %5674 = vmatprep.mubr.f32.mxu0 0.0
        %5675 = vmatmul.mubr.f32.gmra.mrb[0].mxu0 %v5592
        %v5676 = vpop.f32.mrb[0].mxu0
        %v5677 = vadd.f32 0.0, %v5676
        %v5678 = vpop.f32.mrb[0].mxu0
        %5679 = vmatprep.mubr.f32.mxu0 0.0
        %5680 = vmatmul.mubr.f32.gmra.mrb[0].mxu0 %v5595
        %v5681 = vpop.f32.mrb[0].mxu0
        %v5682 = vadd.f32 0.0, %v5681
        %v5683 = vpop.f32.mrb[0].mxu0
        %5684 = vmatprep.mubr.f32.mxu0 0.0
        %5685 = vmatmul.mubr.f32.gmra.mrb[0].mxu0 %v5598
        %v5686 = vpop.f32.mrb[0].mxu0
        %v5687 = vadd.f32 0.0, %v5686
        %v5688 = vpop.f32.mrb[0].mxu0
        %5689 = vdwg.mxu0
        %5690 = vrot.lane.b32.xlu0 %v4640, 32
        %v5691 = vpop.permute.xlu0 %5690
        %5692 = vrot.lane.b32.xlu0 %v4644, 32
        %v5693 = vpop.permute.xlu0 %5692
        %5694 = vrot.lane.b32.xlu0 %v4650, 32
        %v5695 = vpop.permute.xlu0 %5694
        %5696 = vrot.lane.b32.xlu0 %v4654, 32
        %v5697 = vpop.permute.xlu0 %5696
        %5698 = vrot.lane.b32.xlu0 %v4660, 32
        %v5699 = vpop.permute.xlu0 %5698
        %5700 = vrot.lane.b32.xlu0 %v4701, 32
        %v5701 = vpop.permute.xlu0 %5700
        %5702 = vrot.lane.b32.xlu0 %v4705, 32
        %v5703 = vpop.permute.xlu0 %5702
        %5704 = vrot.lane.b32.xlu0 %v4711, 32
        %v5705 = vpop.permute.xlu0 %5704
        %5706 = vrot.lane.b32.xlu0 %v4715, 32
        %v5707 = vpop.permute.xlu0 %5706
        %5708 = vrot.lane.b32.xlu0 %v4721, 32
        %v5709 = vpop.permute.xlu0 %5708
        %v5710 = vsel %vm4793, %v5691, 0
        %v5712 = vsel %vm4793, %v5693, 0
        %v5714 = vsel %vm4793, %v5695, 0
        %v5716 = vsel %vm4793, %v5697, 0
        %v5718 = vsel %vm4793, %v5699, 0
        %v5720 = vsel %vm4793, %v5701, 0
        %v5722 = vsel %vm4793, %v5703, 0
        %v5724 = vsel %vm4793, %v5705, 0
        %v5726 = vsel %vm4793, %v5707, 0
        %v5728 = vsel %vm4793, %v5709, 0
        %5730 = vmatprep.subr.mxu0 0.0
        %5731 = vmatpush1.xpose.msra.mxu0 %v5720
        %5732 = vmatprep.subr.mxu0 0.0
        %5733 = vmatpush1.xpose.msra.mxu0 %v5722
        %5734 = vmatprep.subr.mxu0 0.0
        %5735 = vmatpush1.xpose.msra.mxu0 %v5724
        %5736 = vmatprep.subr.mxu0 0.0
        %5737 = vmatpush1.xpose.msra.mxu0 %v5726
        %5738 = vmatprep.subr.mxu0 0.0
        %5739 = vmatpush1.xpose.msra.mxu0 %v5728
        %5740 = vmatprep.subr.mxu0 0.0
        %5741 = vmatpush1.xpose.msra.mxu0 0.0
        %5742 = vmatprep.subr.mxu0 0.0
        %5743 = vmatpush1.xpose.msra.mxu0 0.0
        %5744 = vmatprep.subr.mxu0 0.0
        %5745 = vmatpush1.xpose.msra.mxu0 0.0
        %5746 = vmatprep.subr.mxu0 0.0
        %5747 = vmatpush1.xpose.msra.mxu0 0.0
        %5748 = vmatprep.subr.mxu0 0.0
        %5749 = vmatpush1.xpose.msra.mxu0 0.0
        %5750 = vmatprep.subr.mxu0 0.0
        %5751 = vmatpush1.xpose.msra.mxu0 0.0
        %5752 = vmatprep.subr.mxu0 0.0
        %5753 = vmatpush1.xpose.msra.mxu0 0.0
        %5754 = vmatprep.subr.mxu0 0.0
        %5755 = vmatpush1.xpose.msra.mxu0 0.0
        %5756 = vmatprep.subr.mxu0 0.0
        %5757 = vmatpush1.xpose.msra.mxu0 0.0
        %5758 = vmatprep.subr.mxu0 0.0
        %5759 = vmatpush1.xpose.msra.mxu0 0.0
        %5760 = vmatprep.subr.mxu0 0.0
        %5761 = vmatpush1.xpose.msra.mxu0 0.0
        %5762 = vmatprep.subr.mxu0 0.0
        %5763 = vmatpush1.xpose.msra.mxu0 0.0
        %5764 = vmatprep.subr.mxu0 0.0
        %5765 = vmatpush1.xpose.msra.mxu0 0.0
        %5766 = vmatprep.subr.mxu0 0.0
        %5767 = vmatpush1.xpose.msra.mxu0 0.0
        %5768 = vmatprep.subr.mxu0 0.0
        %5769 = vmatpush1.xpose.msra.mxu0 0.0
        %5770 = vmatprep.subr.mxu0 0.0
        %5771 = vmatpush1.xpose.msra.mxu0 0.0
        %5772 = vmatprep.subr.mxu0 0.0
        %5773 = vmatpush1.xpose.msra.mxu0 0.0
        %5774 = vmatprep.subr.mxu0 0.0
        %5775 = vmatpush1.xpose.msra.mxu0 0.0
        %5776 = vmatprep.subr.mxu0 0.0
        %5777 = vmatpush1.xpose.msra.mxu0 0.0
        %5778 = vmatprep.subr.mxu0 0.0
        %5779 = vmatpush1.xpose.msra.mxu0 0.0
        %5780 = vmatprep.subr.mxu0 0.0
        %5781 = vmatpush1.xpose.msra.mxu0 0.0
        %5782 = vmatprep.subr.mxu0 0.0
        %5783 = vmatpush1.xpose.msra.mxu0 0.0
        %5784 = vmatprep.subr.mxu0 0.0
        %5785 = vmatpush1.xpose.msra.mxu0 0.0
        %5786 = vmatprep.subr.mxu0 0.0
        %5787 = vmatpush1.xpose.msra.mxu0 0.0
        %5788 = vmatprep.subr.mxu0 0.0
        %5789 = vmatpush1.xpose.msra.mxu0 0.0
        %5790 = vmatprep.subr.mxu0 0.0
        %5791 = vmatpush1.xpose.msra.mxu0 0.0
        %5792 = vmatprep.subr.mxu0 0.0
        %5793 = vmatpush1.xpose.msra.mxu0 0.0
        %5794 = vmatprep.mubr.f32.mxu0 0.0
        %5795 = vmatmul.mubr.f32.gmra.mrb[0].mxu0 %v5710
        %v5796 = vpop.f32.mrb[0].mxu0
        %v5797 = vadd.f32 %v4788, %v5796
        %v5798 = vpop.f32.mrb[0].mxu0
        %5799 = vmatprep.mubr.f32.mxu0 0.0
        %5800 = vmatmul.mubr.f32.gmra.mrb[0].mxu0 %v5712
        %v5801 = vpop.f32.mrb[0].mxu0
        %v5802 = vadd.f32 %v4789, %v5801
        %v5803 = vpop.f32.mrb[0].mxu0
        %5804 = vmatprep.mubr.f32.mxu0 0.0
        %5805 = vmatmul.mubr.f32.gmra.mrb[0].mxu0 %v5714
        %v5806 = vpop.f32.mrb[0].mxu0
        %v5807 = vadd.f32 %v4790, %v5806
        %v5808 = vpop.f32.mrb[0].mxu0
        %5809 = vmatprep.mubr.f32.mxu0 0.0
        %5810 = vmatmul.mubr.f32.gmra.mrb[0].mxu0 %v5716
        %v5811 = vpop.f32.mrb[0].mxu0
        %v5812 = vadd.f32 %v4791, %v5811
        %v5813 = vpop.f32.mrb[0].mxu0
        %5814 = vmatprep.mubr.f32.mxu0 0.0
        %5815 = vmatmul.mubr.f32.gmra.mrb[0].mxu0 %v5718
        %v5816 = vpop.f32.mrb[0].mxu0
        %v5817 = vadd.f32 %v4792, %v5816
        %v5818 = vpop.f32.mrb[0].mxu0
        %5819 = vdwg.mxu0
        %v5820 = vsel %vm4914, %v5797, -inf
        %5821 = vmax.xlane.f32.xlu0 %v5820
        %v5822 = vpop.xlane.xlu0 %5821
        %v5823 = vsel %vm4914, %v5802, -inf
        %5824 = vmax.xlane.f32.xlu0 %v5823
        %v5825 = vpop.xlane.xlu0 %5824
        %v5826 = vsel %vm4914, %v5807, -inf
        %5827 = vmax.xlane.f32.xlu0 %v5826
        %v5828 = vpop.xlane.xlu0 %5827
        %v5829 = vsel %vm4914, %v5812, -inf
        %5830 = vmax.xlane.f32.xlu0 %v5829
        %v5831 = vpop.xlane.xlu0 %5830
        %v5832 = vsel %vm4914, %v5817, -inf
        %5833 = vmax.xlane.f32.xlu0 %v5832
        %v5834 = vpop.xlane.xlu0 %5833
        %v5835 = vsub.f32 %v5797, %v5822
        %v5836 = vsub.f32 %v5802, %v5825
        %v5837 = vsub.f32 %v5807, %v5828
        %v5838 = vsub.f32 %v5812, %v5831
        %v5839 = vsub.f32 %v5817, %v5834
        %v5840 = vmul.f32 %v5835, 1.442695
        %v5841 = vpow.pop %v5840
        %v5842 = vmul.f32 %v5836, 1.442695
        %v5843 = vpow.pop %v5842
        %v5844 = vmul.f32 %v5837, 1.442695
        %v5845 = vpow.pop %v5844
        %v5846 = vmul.f32 %v5838, 1.442695
        %v5847 = vpow.pop %v5846
        %v5848 = vmul.f32 %v5839, 1.442695
        %v5849 = vpow.pop %v5848
        %v5850 = vsel %vm4914, %v5841, 0.0
        %5851 = vadd.xlane.f32.xlu0 %v5850
        %v5852 = vpop.xlane.xlu0 %5851
        %v5853 = vsel %vm4914, %v5843, 0.0
        %5854 = vadd.xlane.f32.xlu0 %v5853
        %v5855 = vpop.xlane.xlu0 %5854
        %v5856 = vsel %vm4914, %v5845, 0.0
        %5857 = vadd.xlane.f32.xlu0 %v5856
        %v5858 = vpop.xlane.xlu0 %5857
        %v5859 = vsel %vm4914, %v5847, 0.0
        %5860 = vadd.xlane.f32.xlu0 %v5859
        %v5861 = vpop.xlane.xlu0 %5860
        %v5862 = vsel %vm4914, %v5849, 0.0
        %5863 = vadd.xlane.f32.xlu0 %v5862
        %v5864 = vpop.xlane.xlu0 %5863
        %v5865 = vrcp.pop %v5852
        %v5866 = vrcp.pop %v5855
        %v5867 = vrcp.pop %v5858
        %v5868 = vrcp.pop %v5861
        %v5869 = vrcp.pop %v5864
        %v5870 = vmul.f32 %v5841, %v5865
        %v5871 = vmul.f32 %v5843, %v5866
        %v5872 = vmul.f32 %v5845, %v5867
        %v5873 = vmul.f32 %v5847, %v5868
        %v5874 = vmul.f32 %v5849, %v5869
        %5875 = vrot.lane.b32.xlu0 %v4762, 32
        %v5876 = vpop.permute.xlu0 %5875
        %5877 = vrot.lane.b32.xlu0 %v4766, 32
        %v5878 = vpop.permute.xlu0 %5877
        %5879 = vrot.lane.b32.xlu0 %v4772, 32
        %v5880 = vpop.permute.xlu0 %5879
        %5881 = vrot.lane.b32.xlu0 %v4776, 32
        %v5882 = vpop.permute.xlu0 %5881
        %5883 = vrot.lane.b32.xlu0 %v4782, 32
        %v5884 = vpop.permute.xlu0 %5883
        %v5891 = vsel %vm4914, %v5870, 0
        %v5894 = vsel %vm4914, %v5871, 0
        %v5897 = vsel %vm4914, %v5872, 0
        %v5900 = vsel %vm4914, %v5873, 0
        %v5903 = vsel %vm4914, %v5874, 0
        %5905 = vmatprep.subr.mxu0 0.0
        %5906 = vmatpush1.msra.mxu0 %v5876
        %5907 = vmatprep.subr.mxu0 0.0
        %5908 = vmatpush1.msra.mxu0 %v5878
        %5909 = vmatprep.subr.mxu0 0.0
        %5910 = vmatpush1.msra.mxu0 %v5880
        %5911 = vmatprep.subr.mxu0 0.0
        %5912 = vmatpush1.msra.mxu0 %v5882
        %5913 = vmatprep.subr.mxu0 0.0
        %5914 = vmatpush1.msra.mxu0 %v5884
        %5915 = vmatprep.subr.mxu0 0.0
        %5916 = vmatpush1.msra.mxu0 0.0
        %5917 = vmatprep.subr.mxu0 0.0
        %5918 = vmatpush1.msra.mxu0 0.0
        %5919 = vmatprep.subr.mxu0 0.0
        %5920 = vmatpush1.msra.mxu0 0.0
        %5921 = vmatprep.subr.mxu0 0.0
        %5922 = vmatpush1.msra.mxu0 0.0
        %5923 = vmatprep.subr.mxu0 0.0
        %5924 = vmatpush1.msra.mxu0 0.0
        %5925 = vmatprep.subr.mxu0 0.0
        %5926 = vmatpush1.msra.mxu0 0.0
        %5927 = vmatprep.subr.mxu0 0.0
        %5928 = vmatpush1.msra.mxu0 0.0
        %5929 = vmatprep.subr.mxu0 0.0
        %5930 = vmatpush1.msra.mxu0 0.0
        %5931 = vmatprep.subr.mxu0 0.0
        %5932 = vmatpush1.msra.mxu0 0.0
        %5933 = vmatprep.subr.mxu0 0.0
        %5934 = vmatpush1.msra.mxu0 0.0
        %5935 = vmatprep.subr.mxu0 0.0
        %5936 = vmatpush1.msra.mxu0 0.0
        %5937 = vmatprep.subr.mxu0 0.0
        %5938 = vmatpush1.msra.mxu0 0.0
        %5939 = vmatprep.subr.mxu0 0.0
        %5940 = vmatpush1.msra.mxu0 0.0
        %5941 = vmatprep.subr.mxu0 0.0
        %5942 = vmatpush1.msra.mxu0 0.0
        %5943 = vmatprep.subr.mxu0 0.0
        %5944 = vmatpush1.msra.mxu0 0.0
        %5945 = vmatprep.subr.mxu0 0.0
        %5946 = vmatpush1.msra.mxu0 0.0
        %5947 = vmatprep.subr.mxu0 0.0
        %5948 = vmatpush1.msra.mxu0 0.0
        %5949 = vmatprep.subr.mxu0 0.0
        %5950 = vmatpush1.msra.mxu0 0.0
        %5951 = vmatprep.subr.mxu0 0.0
        %5952 = vmatpush1.msra.mxu0 0.0
        %5953 = vmatprep.subr.mxu0 0.0
        %5954 = vmatpush1.msra.mxu0 0.0
        %5955 = vmatprep.subr.mxu0 0.0
        %5956 = vmatpush1.msra.mxu0 0.0
        %5957 = vmatprep.subr.mxu0 0.0
        %5958 = vmatpush1.msra.mxu0 0.0
        %5959 = vmatprep.subr.mxu0 0.0
        %5960 = vmatpush1.msra.mxu0 0.0
        %5961 = vmatprep.subr.mxu0 0.0
        %5962 = vmatpush1.msra.mxu0 0.0
        %5963 = vmatprep.subr.mxu0 0.0
        %5964 = vmatpush1.msra.mxu0 0.0
        %5965 = vmatprep.subr.mxu0 0.0
        %5966 = vmatpush1.msra.mxu0 0.0
        %5967 = vmatprep.subr.mxu0 0.0
        %5968 = vmatpush1.msra.mxu0 0.0
        %5969 = vmatprep.mubr.f32.mxu0 0.0
        %5970 = vmatmul.mubr.f32.gmra.mrb[0].mxu0 %v5891
        %v5971 = vpop.f32.mrb[0].mxu0
        %v5972 = vadd.f32 0.0, %v5971
        %v5973 = vpop.f32.mrb[0].mxu0
        %5974 = vmatprep.mubr.f32.mxu0 0.0
        %5975 = vmatmul.mubr.f32.gmra.mrb[0].mxu0 %v5894
        %v5976 = vpop.f32.mrb[0].mxu0
        %v5977 = vadd.f32 0.0, %v5976
        %v5978 = vpop.f32.mrb[0].mxu0
        %5979 = vmatprep.mubr.f32.mxu0 0.0
        %5980 = vmatmul.mubr.f32.gmra.mrb[0].mxu0 %v5897
        %v5981 = vpop.f32.mrb[0].mxu0
        %v5982 = vadd.f32 0.0, %v5981
        %v5983 = vpop.f32.mrb[0].mxu0
        %5984 = vmatprep.mubr.f32.mxu0 0.0
        %5985 = vmatmul.mubr.f32.gmra.mrb[0].mxu0 %v5900
        %v5986 = vpop.f32.mrb[0].mxu0
        %v5987 = vadd.f32 0.0, %v5986
        %v5988 = vpop.f32.mrb[0].mxu0
        %5989 = vmatprep.mubr.f32.mxu0 0.0
        %5990 = vmatmul.mubr.f32.gmra.mrb[0].mxu0 %v5903
        %v5991 = vpop.f32.mrb[0].mxu0
        %v5992 = vadd.f32 0.0, %v5991
        %v5993 = vpop.f32.mrb[0].mxu0
        %5994 = vdwg.mxu0
        %v5996 = vsel %vm4793, %v4642, 0
        %v5999 = vsel %vm4793, %v4646, 0
        %v6002 = vsel %vm4793, %v4652, 0
        %v6005 = vsel %vm4793, %v4656, 0
        %v6008 = vsel %vm4793, %v4662, 0
        %v6011 = vsel %vm4793, %v4703, 0
        %v6014 = vsel %vm4793, %v4707, 0
        %v6017 = vsel %vm4793, %v4713, 0
        %v6020 = vsel %vm4793, %v4717, 0
        %v6023 = vsel %vm4793, %v4723, 0
        %6025 = vmatprep.subr.mxu0 0.0
        %6026 = vmatpush1.xpose.msra.mxu0 %v6011
        %6027 = vmatprep.subr.mxu0 0.0
        %6028 = vmatpush1.xpose.msra.mxu0 %v6014
        %6029 = vmatprep.subr.mxu0 0.0
        %6030 = vmatpush1.xpose.msra.mxu0 %v6017
        %6031 = vmatprep.subr.mxu0 0.0
        %6032 = vmatpush1.xpose.msra.mxu0 %v6020
        %6033 = vmatprep.subr.mxu0 0.0
        %6034 = vmatpush1.xpose.msra.mxu0 %v6023
        %6035 = vmatprep.subr.mxu0 0.0
        %6036 = vmatpush1.xpose.msra.mxu0 0.0
        %6037 = vmatprep.subr.mxu0 0.0
        %6038 = vmatpush1.xpose.msra.mxu0 0.0
        %6039 = vmatprep.subr.mxu0 0.0
        %6040 = vmatpush1.xpose.msra.mxu0 0.0
        %6041 = vmatprep.subr.mxu0 0.0
        %6042 = vmatpush1.xpose.msra.mxu0 0.0
        %6043 = vmatprep.subr.mxu0 0.0
        %6044 = vmatpush1.xpose.msra.mxu0 0.0
        %6045 = vmatprep.subr.mxu0 0.0
        %6046 = vmatpush1.xpose.msra.mxu0 0.0
        %6047 = vmatprep.subr.mxu0 0.0
        %6048 = vmatpush1.xpose.msra.mxu0 0.0
        %6049 = vmatprep.subr.mxu0 0.0
        %6050 = vmatpush1.xpose.msra.mxu0 0.0
        %6051 = vmatprep.subr.mxu0 0.0
        %6052 = vmatpush1.xpose.msra.mxu0 0.0
        %6053 = vmatprep.subr.mxu0 0.0
        %6054 = vmatpush1.xpose.msra.mxu0 0.0
        %6055 = vmatprep.subr.mxu0 0.0
        %6056 = vmatpush1.xpose.msra.mxu0 0.0
        %6057 = vmatprep.subr.mxu0 0.0
        %6058 = vmatpush1.xpose.msra.mxu0 0.0
        %6059 = vmatprep.subr.mxu0 0.0
        %6060 = vmatpush1.xpose.msra.mxu0 0.0
        %6061 = vmatprep.subr.mxu0 0.0
        %6062 = vmatpush1.xpose.msra.mxu0 0.0
        %6063 = vmatprep.subr.mxu0 0.0
        %6064 = vmatpush1.xpose.msra.mxu0 0.0
        %6065 = vmatprep.subr.mxu0 0.0
        %6066 = vmatpush1.xpose.msra.mxu0 0.0
        %6067 = vmatprep.subr.mxu0 0.0
        %6068 = vmatpush1.xpose.msra.mxu0 0.0
        %6069 = vmatprep.subr.mxu0 0.0
        %6070 = vmatpush1.xpose.msra.mxu0 0.0
        %6071 = vmatprep.subr.mxu0 0.0
        %6072 = vmatpush1.xpose.msra.mxu0 0.0
        %6073 = vmatprep.subr.mxu0 0.0
        %6074 = vmatpush1.xpose.msra.mxu0 0.0
        %6075 = vmatprep.subr.mxu0 0.0
        %6076 = vmatpush1.xpose.msra.mxu0 0.0
        %6077 = vmatprep.subr.mxu0 0.0
        %6078 = vmatpush1.xpose.msra.mxu0 0.0
        %6079 = vmatprep.subr.mxu0 0.0
        %6080 = vmatpush1.xpose.msra.mxu0 0.0
        %6081 = vmatprep.subr.mxu0 0.0
        %6082 = vmatpush1.xpose.msra.mxu0 0.0
        %6083 = vmatprep.subr.mxu0 0.0
        %6084 = vmatpush1.xpose.msra.mxu0 0.0
        %6085 = vmatprep.subr.mxu0 0.0
        %6086 = vmatpush1.xpose.msra.mxu0 0.0
        %6087 = vmatprep.subr.mxu0 0.0
        %6088 = vmatpush1.xpose.msra.mxu0 0.0
        %6089 = vmatprep.mubr.f32.mxu0 0.0
        %6090 = vmatmul.mubr.f32.gmra.mrb[0].mxu0 %v5996
        %v6091 = vpop.f32.mrb[0].mxu0
        %v6092 = vadd.f32 %v4788, %v6091
        %v6093 = vpop.f32.mrb[0].mxu0
        %6094 = vmatprep.mubr.f32.mxu0 0.0
        %6095 = vmatmul.mubr.f32.gmra.mrb[0].mxu0 %v5999
        %v6096 = vpop.f32.mrb[0].mxu0
        %v6097 = vadd.f32 %v4789, %v6096
        %v6098 = vpop.f32.mrb[0].mxu0
        %6099 = vmatprep.mubr.f32.mxu0 0.0
        %6100 = vmatmul.mubr.f32.gmra.mrb[0].mxu0 %v6002
        %v6101 = vpop.f32.mrb[0].mxu0
        %v6102 = vadd.f32 %v4790, %v6101
        %v6103 = vpop.f32.mrb[0].mxu0
        %6104 = vmatprep.mubr.f32.mxu0 0.0
        %6105 = vmatmul.mubr.f32.gmra.mrb[0].mxu0 %v6005
        %v6106 = vpop.f32.mrb[0].mxu0
        %v6107 = vadd.f32 %v4791, %v6106
        %v6108 = vpop.f32.mrb[0].mxu0
        %6109 = vmatprep.mubr.f32.mxu0 0.0
        %6110 = vmatmul.mubr.f32.gmra.mrb[0].mxu0 %v6008
        %v6111 = vpop.f32.mrb[0].mxu0
        %v6112 = vadd.f32 %v4792, %v6111
        %v6113 = vpop.f32.mrb[0].mxu0
        %6114 = vdwg.mxu0
        %v6115 = vsel %vm4914, %v6092, -inf
        %6116 = vmax.xlane.f32.xlu0 %v6115
        %v6117 = vpop.xlane.xlu0 %6116
        %v6118 = vsel %vm4914, %v6097, -inf
        %6119 = vmax.xlane.f32.xlu0 %v6118
        %v6120 = vpop.xlane.xlu0 %6119
        %v6121 = vsel %vm4914, %v6102, -inf
        %6122 = vmax.xlane.f32.xlu0 %v6121
        %v6123 = vpop.xlane.xlu0 %6122
        %v6124 = vsel %vm4914, %v6107, -inf
        %6125 = vmax.xlane.f32.xlu0 %v6124
        %v6126 = vpop.xlane.xlu0 %6125
        %v6127 = vsel %vm4914, %v6112, -inf
        %6128 = vmax.xlane.f32.xlu0 %v6127
        %v6129 = vpop.xlane.xlu0 %6128
        %v6130 = vsub.f32 %v6092, %v6117
        %v6131 = vsub.f32 %v6097, %v6120
        %v6132 = vsub.f32 %v6102, %v6123
        %v6133 = vsub.f32 %v6107, %v6126
        %v6134 = vsub.f32 %v6112, %v6129
        %v6135 = vmul.f32 %v6130, 1.442695
        %v6136 = vpow.pop %v6135
        %v6137 = vmul.f32 %v6131, 1.442695
        %v6138 = vpow.pop %v6137
        %v6139 = vmul.f32 %v6132, 1.442695
        %v6140 = vpow.pop %v6139
        %v6141 = vmul.f32 %v6133, 1.442695
        %v6142 = vpow.pop %v6141
        %v6143 = vmul.f32 %v6134, 1.442695
        %v6144 = vpow.pop %v6143
        %v6145 = vsel %vm4914, %v6136, 0.0
        %6146 = vadd.xlane.f32.xlu0 %v6145
        %v6147 = vpop.xlane.xlu0 %6146
        %v6148 = vsel %vm4914, %v6138, 0.0
        %6149 = vadd.xlane.f32.xlu0 %v6148
        %v6150 = vpop.xlane.xlu0 %6149
        %v6151 = vsel %vm4914, %v6140, 0.0
        %6152 = vadd.xlane.f32.xlu0 %v6151
        %v6153 = vpop.xlane.xlu0 %6152
        %v6154 = vsel %vm4914, %v6142, 0.0
        %6155 = vadd.xlane.f32.xlu0 %v6154
        %v6156 = vpop.xlane.xlu0 %6155
        %v6157 = vsel %vm4914, %v6144, 0.0
        %6158 = vadd.xlane.f32.xlu0 %v6157
        %v6159 = vpop.xlane.xlu0 %6158
        %v6160 = vrcp.pop %v6147
        %v6161 = vrcp.pop %v6150
        %v6162 = vrcp.pop %v6153
        %v6163 = vrcp.pop %v6156
        %v6164 = vrcp.pop %v6159
        %v6165 = vmul.f32 %v6136, %v6160
        %v6166 = vmul.f32 %v6138, %v6161
        %v6167 = vmul.f32 %v6140, %v6162
        %v6168 = vmul.f32 %v6142, %v6163
        %v6169 = vmul.f32 %v6144, %v6164
        %v6171 = vsel %vm4914, %v6165, 0
        %v6174 = vsel %vm4914, %v6166, 0
        %v6177 = vsel %vm4914, %v6167, 0
        %v6180 = vsel %vm4914, %v6168, 0
        %v6183 = vsel %vm4914, %v6169, 0
        %6185 = vmatprep.subr.mxu0 0.0
        %6186 = vmatpush1.msra.mxu0 %v4764
        %6187 = vmatprep.subr.mxu0 0.0
        %6188 = vmatpush1.msra.mxu0 %v4768
        %6189 = vmatprep.subr.mxu0 0.0
        %6190 = vmatpush1.msra.mxu0 %v4774
        %6191 = vmatprep.subr.mxu0 0.0
        %6192 = vmatpush1.msra.mxu0 %v4778
        %6193 = vmatprep.subr.mxu0 0.0
        %6194 = vmatpush1.msra.mxu0 %v4784
        %6195 = vmatprep.subr.mxu0 0.0
        %6196 = vmatpush1.msra.mxu0 0.0
        %6197 = vmatprep.subr.mxu0 0.0
        %6198 = vmatpush1.msra.mxu0 0.0
        %6199 = vmatprep.subr.mxu0 0.0
        %6200 = vmatpush1.msra.mxu0 0.0
        %6201 = vmatprep.subr.mxu0 0.0
        %6202 = vmatpush1.msra.mxu0 0.0
        %6203 = vmatprep.subr.mxu0 0.0
        %6204 = vmatpush1.msra.mxu0 0.0
        %6205 = vmatprep.subr.mxu0 0.0
        %6206 = vmatpush1.msra.mxu0 0.0
        %6207 = vmatprep.subr.mxu0 0.0
        %6208 = vmatpush1.msra.mxu0 0.0
        %6209 = vmatprep.subr.mxu0 0.0
        %6210 = vmatpush1.msra.mxu0 0.0
        %6211 = vmatprep.subr.mxu0 0.0
        %6212 = vmatpush1.msra.mxu0 0.0
        %6213 = vmatprep.subr.mxu0 0.0
        %6214 = vmatpush1.msra.mxu0 0.0
        %6215 = vmatprep.subr.mxu0 0.0
        %6216 = vmatpush1.msra.mxu0 0.0
        %6217 = vmatprep.subr.mxu0 0.0
        %6218 = vmatpush1.msra.mxu0 0.0
        %6219 = vmatprep.subr.mxu0 0.0
        %6220 = vmatpush1.msra.mxu0 0.0
        %6221 = vmatprep.subr.mxu0 0.0
        %6222 = vmatpush1.msra.mxu0 0.0
        %6223 = vmatprep.subr.mxu0 0.0
        %6224 = vmatpush1.msra.mxu0 0.0
        %6225 = vmatprep.subr.mxu0 0.0
        %6226 = vmatpush1.msra.mxu0 0.0
        %6227 = vmatprep.subr.mxu0 0.0
        %6228 = vmatpush1.msra.mxu0 0.0
        %6229 = vmatprep.subr.mxu0 0.0
        %6230 = vmatpush1.msra.mxu0 0.0
        %6231 = vmatprep.subr.mxu0 0.0
        %6232 = vmatpush1.msra.mxu0 0.0
        %6233 = vmatprep.subr.mxu0 0.0
        %6234 = vmatpush1.msra.mxu0 0.0
        %6235 = vmatprep.subr.mxu0 0.0
        %6236 = vmatpush1.msra.mxu0 0.0
        %6237 = vmatprep.subr.mxu0 0.0
        %6238 = vmatpush1.msra.mxu0 0.0
        %6239 = vmatprep.subr.mxu0 0.0
        %6240 = vmatpush1.msra.mxu0 0.0
        %6241 = vmatprep.subr.mxu0 0.0
        %6242 = vmatpush1.msra.mxu0 0.0
        %6243 = vmatprep.subr.mxu0 0.0
        %6244 = vmatpush1.msra.mxu0 0.0
        %6245 = vmatprep.subr.mxu0 0.0
        %6246 = vmatpush1.msra.mxu0 0.0
        %6247 = vmatprep.subr.mxu0 0.0
        %6248 = vmatpush1.msra.mxu0 0.0
        %6249 = vmatprep.mubr.f32.mxu0 0.0
        %6250 = vmatmul.mubr.f32.gmra.mrb[0].mxu0 %v6171
        %v6251 = vpop.f32.mrb[0].mxu0
        %v6252 = vadd.f32 0.0, %v6251
        %v6253 = vpop.f32.mrb[0].mxu0
        %6254 = vmatprep.mubr.f32.mxu0 0.0
        %6255 = vmatmul.mubr.f32.gmra.mrb[0].mxu0 %v6174
        %v6256 = vpop.f32.mrb[0].mxu0
        %v6257 = vadd.f32 0.0, %v6256
        %v6258 = vpop.f32.mrb[0].mxu0
        %6259 = vmatprep.mubr.f32.mxu0 0.0
        %6260 = vmatmul.mubr.f32.gmra.mrb[0].mxu0 %v6177
        %v6261 = vpop.f32.mrb[0].mxu0
        %v6262 = vadd.f32 0.0, %v6261
        %v6263 = vpop.f32.mrb[0].mxu0
        %6264 = vmatprep.mubr.f32.mxu0 0.0
        %6265 = vmatmul.mubr.f32.gmra.mrb[0].mxu0 %v6180
        %v6266 = vpop.f32.mrb[0].mxu0
        %v6267 = vadd.f32 0.0, %v6266
        %v6268 = vpop.f32.mrb[0].mxu0
        %6269 = vmatprep.mubr.f32.mxu0 0.0
        %6270 = vmatmul.mubr.f32.gmra.mrb[0].mxu0 %v6183
        %v6271 = vpop.f32.mrb[0].mxu0
        %v6272 = vadd.f32 0.0, %v6271
        %v6273 = vpop.f32.mrb[0].mxu0
        %6274 = vdwg.mxu0
        %6275 = vrot.lane.b32.xlu0 %v4642, 96
        %v6276 = vpop.permute.xlu0 %6275
        %6277 = vrot.lane.b32.xlu0 %v4646, 96
        %v6278 = vpop.permute.xlu0 %6277
        %6279 = vrot.lane.b32.xlu0 %v4652, 96
        %v6280 = vpop.permute.xlu0 %6279
        %6281 = vrot.lane.b32.xlu0 %v4656, 96
        %v6282 = vpop.permute.xlu0 %6281
        %6283 = vrot.lane.b32.xlu0 %v4662, 96
        %v6284 = vpop.permute.xlu0 %6283
        %6285 = vrot.lane.b32.xlu0 %v4703, 96
        %v6286 = vpop.permute.xlu0 %6285
        %6287 = vrot.lane.b32.xlu0 %v4707, 96
        %v6288 = vpop.permute.xlu0 %6287
        %6289 = vrot.lane.b32.xlu0 %v4713, 96
        %v6290 = vpop.permute.xlu0 %6289
        %6291 = vrot.lane.b32.xlu0 %v4717, 96
        %v6292 = vpop.permute.xlu0 %6291
        %6293 = vrot.lane.b32.xlu0 %v4723, 96
        %v6294 = vpop.permute.xlu0 %6293
        %v6295 = vsel %vm4793, %v6276, 0
        %v6297 = vsel %vm4793, %v6278, 0
        %v6299 = vsel %vm4793, %v6280, 0
        %v6301 = vsel %vm4793, %v6282, 0
        %v6303 = vsel %vm4793, %v6284, 0
        %v6305 = vsel %vm4793, %v6286, 0
        %v6307 = vsel %vm4793, %v6288, 0
        %v6309 = vsel %vm4793, %v6290, 0
        %v6311 = vsel %vm4793, %v6292, 0
        %v6313 = vsel %vm4793, %v6294, 0
        %6315 = vmatprep.subr.mxu0 0.0
        %6316 = vmatpush1.xpose.msra.mxu0 %v6305
        %6317 = vmatprep.subr.mxu0 0.0
        %6318 = vmatpush1.xpose.msra.mxu0 %v6307
        %6319 = vmatprep.subr.mxu0 0.0
        %6320 = vmatpush1.xpose.msra.mxu0 %v6309
        %6321 = vmatprep.subr.mxu0 0.0
        %6322 = vmatpush1.xpose.msra.mxu0 %v6311
        %6323 = vmatprep.subr.mxu0 0.0
        %6324 = vmatpush1.xpose.msra.mxu0 %v6313
        %6325 = vmatprep.subr.mxu0 0.0
        %6326 = vmatpush1.xpose.msra.mxu0 0.0
        %6327 = vmatprep.subr.mxu0 0.0
        %6328 = vmatpush1.xpose.msra.mxu0 0.0
        %6329 = vmatprep.subr.mxu0 0.0
        %6330 = vmatpush1.xpose.msra.mxu0 0.0
        %6331 = vmatprep.subr.mxu0 0.0
        %6332 = vmatpush1.xpose.msra.mxu0 0.0
        %6333 = vmatprep.subr.mxu0 0.0
        %6334 = vmatpush1.xpose.msra.mxu0 0.0
        %6335 = vmatprep.subr.mxu0 0.0
        %6336 = vmatpush1.xpose.msra.mxu0 0.0
        %6337 = vmatprep.subr.mxu0 0.0
        %6338 = vmatpush1.xpose.msra.mxu0 0.0
        %6339 = vmatprep.subr.mxu0 0.0
        %6340 = vmatpush1.xpose.msra.mxu0 0.0
        %6341 = vmatprep.subr.mxu0 0.0
        %6342 = vmatpush1.xpose.msra.mxu0 0.0
        %6343 = vmatprep.subr.mxu0 0.0
        %6344 = vmatpush1.xpose.msra.mxu0 0.0
        %6345 = vmatprep.subr.mxu0 0.0
        %6346 = vmatpush1.xpose.msra.mxu0 0.0
        %6347 = vmatprep.subr.mxu0 0.0
        %6348 = vmatpush1.xpose.msra.mxu0 0.0
        %6349 = vmatprep.subr.mxu0 0.0
        %6350 = vmatpush1.xpose.msra.mxu0 0.0
        %6351 = vmatprep.subr.mxu0 0.0
        %6352 = vmatpush1.xpose.msra.mxu0 0.0
        %6353 = vmatprep.subr.mxu0 0.0
        %6354 = vmatpush1.xpose.msra.mxu0 0.0
        %6355 = vmatprep.subr.mxu0 0.0
        %6356 = vmatpush1.xpose.msra.mxu0 0.0
        %6357 = vmatprep.subr.mxu0 0.0
        %6358 = vmatpush1.xpose.msra.mxu0 0.0
        %6359 = vmatprep.subr.mxu0 0.0
        %6360 = vmatpush1.xpose.msra.mxu0 0.0
        %6361 = vmatprep.subr.mxu0 0.0
        %6362 = vmatpush1.xpose.msra.mxu0 0.0
        %6363 = vmatprep.subr.mxu0 0.0
        %6364 = vmatpush1.xpose.msra.mxu0 0.0
        %6365 = vmatprep.subr.mxu0 0.0
        %6366 = vmatpush1.xpose.msra.mxu0 0.0
        %6367 = vmatprep.subr.mxu0 0.0
        %6368 = vmatpush1.xpose.msra.mxu0 0.0
        %6369 = vmatprep.subr.mxu0 0.0
        %6370 = vmatpush1.xpose.msra.mxu0 0.0
        %6371 = vmatprep.subr.mxu0 0.0
        %6372 = vmatpush1.xpose.msra.mxu0 0.0
        %6373 = vmatprep.subr.mxu0 0.0
        %6374 = vmatpush1.xpose.msra.mxu0 0.0
        %6375 = vmatprep.subr.mxu0 0.0
        %6376 = vmatpush1.xpose.msra.mxu0 0.0
        %6377 = vmatprep.subr.mxu0 0.0
        %6378 = vmatpush1.xpose.msra.mxu0 0.0
        %6379 = vmatprep.mubr.f32.mxu0 0.0
        %6380 = vmatmul.mubr.f32.gmra.mrb[0].mxu0 %v6295
        %v6381 = vpop.f32.mrb[0].mxu0
        %v6382 = vadd.f32 %v4788, %v6381
        %v6383 = vpop.f32.mrb[0].mxu0
        %6384 = vmatprep.mubr.f32.mxu0 0.0
        %6385 = vmatmul.mubr.f32.gmra.mrb[0].mxu0 %v6297
        %v6386 = vpop.f32.mrb[0].mxu0
        %v6387 = vadd.f32 %v4789, %v6386
        %v6388 = vpop.f32.mrb[0].mxu0
        %6389 = vmatprep.mubr.f32.mxu0 0.0
        %6390 = vmatmul.mubr.f32.gmra.mrb[0].mxu0 %v6299
        %v6391 = vpop.f32.mrb[0].mxu0
        %v6392 = vadd.f32 %v4790, %v6391
        %v6393 = vpop.f32.mrb[0].mxu0
        %6394 = vmatprep.mubr.f32.mxu0 0.0
        %6395 = vmatmul.mubr.f32.gmra.mrb[0].mxu0 %v6301
        %v6396 = vpop.f32.mrb[0].mxu0
        %v6397 = vadd.f32 %v4791, %v6396
        %v6398 = vpop.f32.mrb[0].mxu0
        %6399 = vmatprep.mubr.f32.mxu0 0.0
        %6400 = vmatmul.mubr.f32.gmra.mrb[0].mxu0 %v6303
        %v6401 = vpop.f32.mrb[0].mxu0
        %v6402 = vadd.f32 %v4792, %v6401
        %v6403 = vpop.f32.mrb[0].mxu0
        %6404 = vdwg.mxu0
        %v6405 = vsel %vm4914, %v6382, -inf
        %6406 = vmax.xlane.f32.xlu0 %v6405
        %v6407 = vpop.xlane.xlu0 %6406
        %v6408 = vsel %vm4914, %v6387, -inf
        %6409 = vmax.xlane.f32.xlu0 %v6408
        %v6410 = vpop.xlane.xlu0 %6409
        %v6411 = vsel %vm4914, %v6392, -inf
        %6412 = vmax.xlane.f32.xlu0 %v6411
        %v6413 = vpop.xlane.xlu0 %6412
        %v6414 = vsel %vm4914, %v6397, -inf
        %6415 = vmax.xlane.f32.xlu0 %v6414
        %v6416 = vpop.xlane.xlu0 %6415
        %v6417 = vsel %vm4914, %v6402, -inf
        %6418 = vmax.xlane.f32.xlu0 %v6417
        %v6419 = vpop.xlane.xlu0 %6418
        %v6420 = vsub.f32 %v6382, %v6407
        %v6421 = vsub.f32 %v6387, %v6410
        %v6422 = vsub.f32 %v6392, %v6413
        %v6423 = vsub.f32 %v6397, %v6416
        %v6424 = vsub.f32 %v6402, %v6419
        %v6425 = vmul.f32 %v6420, 1.442695
        %v6426 = vpow.pop %v6425
        %v6427 = vmul.f32 %v6421, 1.442695
        %v6428 = vpow.pop %v6427
        %v6429 = vmul.f32 %v6422, 1.442695
        %v6430 = vpow.pop %v6429
        %v6431 = vmul.f32 %v6423, 1.442695
        %v6432 = vpow.pop %v6431
        %v6433 = vmul.f32 %v6424, 1.442695
        %v6434 = vpow.pop %v6433
        %v6435 = vsel %vm4914, %v6426, 0.0
        %6436 = vadd.xlane.f32.xlu0 %v6435
        %v6437 = vpop.xlane.xlu0 %6436
        %v6438 = vsel %vm4914, %v6428, 0.0
        %6439 = vadd.xlane.f32.xlu0 %v6438
        %v6440 = vpop.xlane.xlu0 %6439
        %v6441 = vsel %vm4914, %v6430, 0.0
        %6442 = vadd.xlane.f32.xlu0 %v6441
        %v6443 = vpop.xlane.xlu0 %6442
        %v6444 = vsel %vm4914, %v6432, 0.0
        %6445 = vadd.xlane.f32.xlu0 %v6444
        %v6446 = vpop.xlane.xlu0 %6445
        %v6447 = vsel %vm4914, %v6434, 0.0
        %6448 = vadd.xlane.f32.xlu0 %v6447
        %v6449 = vpop.xlane.xlu0 %6448
        %v6450 = vrcp.pop %v6437
        %v6451 = vrcp.pop %v6440
        %v6452 = vrcp.pop %v6443
        %v6453 = vrcp.pop %v6446
        %v6454 = vrcp.pop %v6449
        %v6455 = vmul.f32 %v6426, %v6450
        %v6456 = vmul.f32 %v6428, %v6451
        %v6457 = vmul.f32 %v6430, %v6452
        %v6458 = vmul.f32 %v6432, %v6453
        %v6459 = vmul.f32 %v6434, %v6454
        %6465 = vrot.lane.b32.xlu0 %v4764, 96
        %v6466 = vpop.permute.xlu0 %6465
        %6467 = vrot.lane.b32.xlu0 %v4768, 96
        %v6468 = vpop.permute.xlu0 %6467
        %6469 = vrot.lane.b32.xlu0 %v4774, 96
        %v6470 = vpop.permute.xlu0 %6469
        %6471 = vrot.lane.b32.xlu0 %v4778, 96
        %v6472 = vpop.permute.xlu0 %6471
        %6473 = vrot.lane.b32.xlu0 %v4784, 96
        %v6474 = vpop.permute.xlu0 %6473
        %v6481 = vsel %vm4914, %v6455, 0
        %v6484 = vsel %vm4914, %v6456, 0
        %v6487 = vsel %vm4914, %v6457, 0
        %v6490 = vsel %vm4914, %v6458, 0
        %v6493 = vsel %vm4914, %v6459, 0
        %6495 = vmatprep.subr.mxu0 0.0
        %6496 = vmatpush1.msra.mxu0 %v6466
        %6497 = vmatprep.subr.mxu0 0.0
        %6498 = vmatpush1.msra.mxu0 %v6468
        %6499 = vmatprep.subr.mxu0 0.0
        %6500 = vmatpush1.msra.mxu0 %v6470
        %6501 = vmatprep.subr.mxu0 0.0
        %6502 = vmatpush1.msra.mxu0 %v6472
        %6503 = vmatprep.subr.mxu0 0.0
        %6504 = vmatpush1.msra.mxu0 %v6474
        %6505 = vmatprep.subr.mxu0 0.0
        %6506 = vmatpush1.msra.mxu0 0.0
        %6507 = vmatprep.subr.mxu0 0.0
        %6508 = vmatpush1.msra.mxu0 0.0
        %6509 = vmatprep.subr.mxu0 0.0
        %6510 = vmatpush1.msra.mxu0 0.0
        %6511 = vmatprep.subr.mxu0 0.0
        %6512 = vmatpush1.msra.mxu0 0.0
        %6513 = vmatprep.subr.mxu0 0.0
        %6514 = vmatpush1.msra.mxu0 0.0
        %6515 = vmatprep.subr.mxu0 0.0
        %6516 = vmatpush1.msra.mxu0 0.0
        %6517 = vmatprep.subr.mxu0 0.0
        %6518 = vmatpush1.msra.mxu0 0.0
        %6519 = vmatprep.subr.mxu0 0.0
        %6520 = vmatpush1.msra.mxu0 0.0
        %6521 = vmatprep.subr.mxu0 0.0
        %6522 = vmatpush1.msra.mxu0 0.0
        %6523 = vmatprep.subr.mxu0 0.0
        %6524 = vmatpush1.msra.mxu0 0.0
        %6525 = vmatprep.subr.mxu0 0.0
        %6526 = vmatpush1.msra.mxu0 0.0
        %6527 = vmatprep.subr.mxu0 0.0
        %6528 = vmatpush1.msra.mxu0 0.0
        %6529 = vmatprep.subr.mxu0 0.0
        %6530 = vmatpush1.msra.mxu0 0.0
        %6531 = vmatprep.subr.mxu0 0.0
        %6532 = vmatpush1.msra.mxu0 0.0
        %6533 = vmatprep.subr.mxu0 0.0
        %6534 = vmatpush1.msra.mxu0 0.0
        %6535 = vmatprep.subr.mxu0 0.0
        %6536 = vmatpush1.msra.mxu0 0.0
        %6537 = vmatprep.subr.mxu0 0.0
        %6538 = vmatpush1.msra.mxu0 0.0
        %6539 = vmatprep.subr.mxu0 0.0
        %6540 = vmatpush1.msra.mxu0 0.0
        %6541 = vmatprep.subr.mxu0 0.0
        %6542 = vmatpush1.msra.mxu0 0.0
        %6543 = vmatprep.subr.mxu0 0.0
        %6544 = vmatpush1.msra.mxu0 0.0
        %6545 = vmatprep.subr.mxu0 0.0
        %6546 = vmatpush1.msra.mxu0 0.0
        %6547 = vmatprep.subr.mxu0 0.0
        %6548 = vmatpush1.msra.mxu0 0.0
        %6549 = vmatprep.subr.mxu0 0.0
        %6550 = vmatpush1.msra.mxu0 0.0
        %6551 = vmatprep.subr.mxu0 0.0
        %6552 = vmatpush1.msra.mxu0 0.0
        %6553 = vmatprep.subr.mxu0 0.0
        %6554 = vmatpush1.msra.mxu0 0.0
        %6555 = vmatprep.subr.mxu0 0.0
        %6556 = vmatpush1.msra.mxu0 0.0
        %6557 = vmatprep.subr.mxu0 0.0
        %6558 = vmatpush1.msra.mxu0 0.0
        %6559 = vmatprep.mubr.f32.mxu0 0.0
        %6560 = vmatmul.mubr.f32.gmra.mrb[0].mxu0 %v6481
        %v6561 = vpop.f32.mrb[0].mxu0
        %v6562 = vadd.f32 0.0, %v6561
        %v6563 = vpop.f32.mrb[0].mxu0
        %6564 = vmatprep.mubr.f32.mxu0 0.0
        %6565 = vmatmul.mubr.f32.gmra.mrb[0].mxu0 %v6484
        %v6566 = vpop.f32.mrb[0].mxu0
        %v6567 = vadd.f32 0.0, %v6566
        %v6568 = vpop.f32.mrb[0].mxu0
        %6569 = vmatprep.mubr.f32.mxu0 0.0
        %6570 = vmatmul.mubr.f32.gmra.mrb[0].mxu0 %v6487
        %v6571 = vpop.f32.mrb[0].mxu0
        %v6572 = vadd.f32 0.0, %v6571
        %v6573 = vpop.f32.mrb[0].mxu0
        %6574 = vmatprep.mubr.f32.mxu0 0.0
        %6575 = vmatmul.mubr.f32.gmra.mrb[0].mxu0 %v6490
        %v6576 = vpop.f32.mrb[0].mxu0
        %v6577 = vadd.f32 0.0, %v6576
        %v6578 = vpop.f32.mrb[0].mxu0
        %6579 = vmatprep.mubr.f32.mxu0 0.0
        %6580 = vmatmul.mubr.f32.gmra.mrb[0].mxu0 %v6493
        %v6581 = vpop.f32.mrb[0].mxu0
        %v6582 = vadd.f32 0.0, %v6581
        %v6583 = vpop.f32.mrb[0].mxu0
        %6584 = vdwg.mxu0
        %6585 = vrot.lane.b32.xlu0 %v4642, 64
        %v6586 = vpop.permute.xlu0 %6585
        %6587 = vrot.lane.b32.xlu0 %v4646, 64
        %v6588 = vpop.permute.xlu0 %6587
        %6589 = vrot.lane.b32.xlu0 %v4652, 64
        %v6590 = vpop.permute.xlu0 %6589
        %6591 = vrot.lane.b32.xlu0 %v4656, 64
        %v6592 = vpop.permute.xlu0 %6591
        %6593 = vrot.lane.b32.xlu0 %v4662, 64
        %v6594 = vpop.permute.xlu0 %6593
        %6595 = vrot.lane.b32.xlu0 %v4703, 64
        %v6596 = vpop.permute.xlu0 %6595
        %6597 = vrot.lane.b32.xlu0 %v4707, 64
        %v6598 = vpop.permute.xlu0 %6597
        %6599 = vrot.lane.b32.xlu0 %v4713, 64
        %v6600 = vpop.permute.xlu0 %6599
        %6601 = vrot.lane.b32.xlu0 %v4717, 64
        %v6602 = vpop.permute.xlu0 %6601
        %6603 = vrot.lane.b32.xlu0 %v4723, 64
        %v6604 = vpop.permute.xlu0 %6603
        %v6605 = vsel %vm4793, %v6586, 0
        %v6607 = vsel %vm4793, %v6588, 0
        %v6609 = vsel %vm4793, %v6590, 0
        %v6611 = vsel %vm4793, %v6592, 0
        %v6613 = vsel %vm4793, %v6594, 0
        %v6615 = vsel %vm4793, %v6596, 0
        %v6617 = vsel %vm4793, %v6598, 0
        %v6619 = vsel %vm4793, %v6600, 0
        %v6621 = vsel %vm4793, %v6602, 0
        %v6623 = vsel %vm4793, %v6604, 0
        %6625 = vmatprep.subr.mxu0 0.0
        %6626 = vmatpush1.xpose.msra.mxu0 %v6615
        %6627 = vmatprep.subr.mxu0 0.0
        %6628 = vmatpush1.xpose.msra.mxu0 %v6617
        %6629 = vmatprep.subr.mxu0 0.0
        %6630 = vmatpush1.xpose.msra.mxu0 %v6619
        %6631 = vmatprep.subr.mxu0 0.0
        %6632 = vmatpush1.xpose.msra.mxu0 %v6621
        %6633 = vmatprep.subr.mxu0 0.0
        %6634 = vmatpush1.xpose.msra.mxu0 %v6623
        %6635 = vmatprep.subr.mxu0 0.0
        %6636 = vmatpush1.xpose.msra.mxu0 0.0
        %6637 = vmatprep.subr.mxu0 0.0
        %6638 = vmatpush1.xpose.msra.mxu0 0.0
        %6639 = vmatprep.subr.mxu0 0.0
        %6640 = vmatpush1.xpose.msra.mxu0 0.0
        %6641 = vmatprep.subr.mxu0 0.0
        %6642 = vmatpush1.xpose.msra.mxu0 0.0
        %6643 = vmatprep.subr.mxu0 0.0
        %6644 = vmatpush1.xpose.msra.mxu0 0.0
        %6645 = vmatprep.subr.mxu0 0.0
        %6646 = vmatpush1.xpose.msra.mxu0 0.0
        %6647 = vmatprep.subr.mxu0 0.0
        %6648 = vmatpush1.xpose.msra.mxu0 0.0
        %6649 = vmatprep.subr.mxu0 0.0
        %6650 = vmatpush1.xpose.msra.mxu0 0.0
        %6651 = vmatprep.subr.mxu0 0.0
        %6652 = vmatpush1.xpose.msra.mxu0 0.0
        %6653 = vmatprep.subr.mxu0 0.0
        %6654 = vmatpush1.xpose.msra.mxu0 0.0
        %6655 = vmatprep.subr.mxu0 0.0
        %6656 = vmatpush1.xpose.msra.mxu0 0.0
        %6657 = vmatprep.subr.mxu0 0.0
        %6658 = vmatpush1.xpose.msra.mxu0 0.0
        %6659 = vmatprep.subr.mxu0 0.0
        %6660 = vmatpush1.xpose.msra.mxu0 0.0
        %6661 = vmatprep.subr.mxu0 0.0
        %6662 = vmatpush1.xpose.msra.mxu0 0.0
        %6663 = vmatprep.subr.mxu0 0.0
        %6664 = vmatpush1.xpose.msra.mxu0 0.0
        %6665 = vmatprep.subr.mxu0 0.0
        %6666 = vmatpush1.xpose.msra.mxu0 0.0
        %6667 = vmatprep.subr.mxu0 0.0
        %6668 = vmatpush1.xpose.msra.mxu0 0.0
        %6669 = vmatprep.subr.mxu0 0.0
        %6670 = vmatpush1.xpose.msra.mxu0 0.0
        %6671 = vmatprep.subr.mxu0 0.0
        %6672 = vmatpush1.xpose.msra.mxu0 0.0
        %6673 = vmatprep.subr.mxu0 0.0
        %6674 = vmatpush1.xpose.msra.mxu0 0.0
        %6675 = vmatprep.subr.mxu0 0.0
        %6676 = vmatpush1.xpose.msra.mxu0 0.0
        %6677 = vmatprep.subr.mxu0 0.0
        %6678 = vmatpush1.xpose.msra.mxu0 0.0
        %6679 = vmatprep.subr.mxu0 0.0
        %6680 = vmatpush1.xpose.msra.mxu0 0.0
        %6681 = vmatprep.subr.mxu0 0.0
        %6682 = vmatpush1.xpose.msra.mxu0 0.0
        %6683 = vmatprep.subr.mxu0 0.0
        %6684 = vmatpush1.xpose.msra.mxu0 0.0
        %6685 = vmatprep.subr.mxu0 0.0
        %6686 = vmatpush1.xpose.msra.mxu0 0.0
        %6687 = vmatprep.subr.mxu0 0.0
        %6688 = vmatpush1.xpose.msra.mxu0 0.0
        %6689 = vmatprep.mubr.f32.mxu0 0.0
        %6690 = vmatmul.mubr.f32.gmra.mrb[0].mxu0 %v6605
        %v6691 = vpop.f32.mrb[0].mxu0
        %v6692 = vadd.f32 %v4788, %v6691
        %v6693 = vpop.f32.mrb[0].mxu0
        %6694 = vmatprep.mubr.f32.mxu0 0.0
        %6695 = vmatmul.mubr.f32.gmra.mrb[0].mxu0 %v6607
        %v6696 = vpop.f32.mrb[0].mxu0
        %v6697 = vadd.f32 %v4789, %v6696
        %v6698 = vpop.f32.mrb[0].mxu0
        %6699 = vmatprep.mubr.f32.mxu0 0.0
        %6700 = vmatmul.mubr.f32.gmra.mrb[0].mxu0 %v6609
        %v6701 = vpop.f32.mrb[0].mxu0
        %v6702 = vadd.f32 %v4790, %v6701
        %v6703 = vpop.f32.mrb[0].mxu0
        %6704 = vmatprep.mubr.f32.mxu0 0.0
        %6705 = vmatmul.mubr.f32.gmra.mrb[0].mxu0 %v6611
        %v6706 = vpop.f32.mrb[0].mxu0
        %v6707 = vadd.f32 %v4791, %v6706
        %v6708 = vpop.f32.mrb[0].mxu0
        %6709 = vmatprep.mubr.f32.mxu0 0.0
        %6710 = vmatmul.mubr.f32.gmra.mrb[0].mxu0 %v6613
        %v6711 = vpop.f32.mrb[0].mxu0
        %v6712 = vadd.f32 %v4792, %v6711
        %v6713 = vpop.f32.mrb[0].mxu0
        %6714 = vdwg.mxu0
        %v6715 = vsel %vm4914, %v6692, -inf
        %6716 = vmax.xlane.f32.xlu0 %v6715
        %v6717 = vpop.xlane.xlu0 %6716
        %v6718 = vsel %vm4914, %v6697, -inf
        %6719 = vmax.xlane.f32.xlu0 %v6718
        %v6720 = vpop.xlane.xlu0 %6719
        %v6721 = vsel %vm4914, %v6702, -inf
        %6722 = vmax.xlane.f32.xlu0 %v6721
        %v6723 = vpop.xlane.xlu0 %6722
        %v6724 = vsel %vm4914, %v6707, -inf
        %6725 = vmax.xlane.f32.xlu0 %v6724
        %v6726 = vpop.xlane.xlu0 %6725
        %v6727 = vsel %vm4914, %v6712, -inf
        %6728 = vmax.xlane.f32.xlu0 %v6727
        %v6729 = vpop.xlane.xlu0 %6728
        %v6730 = vsub.f32 %v6692, %v6717
        %v6731 = vsub.f32 %v6697, %v6720
        %v6732 = vsub.f32 %v6702, %v6723
        %v6733 = vsub.f32 %v6707, %v6726
        %v6734 = vsub.f32 %v6712, %v6729
        %v6735 = vmul.f32 %v6730, 1.442695
        %v6736 = vpow.pop %v6735
        %v6737 = vmul.f32 %v6731, 1.442695
        %v6738 = vpow.pop %v6737
        %v6739 = vmul.f32 %v6732, 1.442695
        %v6740 = vpow.pop %v6739
        %v6741 = vmul.f32 %v6733, 1.442695
        %v6742 = vpow.pop %v6741
        %v6743 = vmul.f32 %v6734, 1.442695
        %v6744 = vpow.pop %v6743
        %v6745 = vsel %vm4914, %v6736, 0.0
        %6746 = vadd.xlane.f32.xlu0 %v6745
        %v6747 = vpop.xlane.xlu0 %6746
        %v6748 = vsel %vm4914, %v6738, 0.0
        %6749 = vadd.xlane.f32.xlu0 %v6748
        %v6750 = vpop.xlane.xlu0 %6749
        %v6751 = vsel %vm4914, %v6740, 0.0
        %6752 = vadd.xlane.f32.xlu0 %v6751
        %v6753 = vpop.xlane.xlu0 %6752
        %v6754 = vsel %vm4914, %v6742, 0.0
        %6755 = vadd.xlane.f32.xlu0 %v6754
        %v6756 = vpop.xlane.xlu0 %6755
        %v6757 = vsel %vm4914, %v6744, 0.0
        %6758 = vadd.xlane.f32.xlu0 %v6757
        %v6759 = vpop.xlane.xlu0 %6758
        %v6760 = vrcp.pop %v6747
        %v6761 = vrcp.pop %v6750
        %v6762 = vrcp.pop %v6753
        %v6763 = vrcp.pop %v6756
        %v6764 = vrcp.pop %v6759
        %v6765 = vmul.f32 %v6736, %v6760
        %v6766 = vmul.f32 %v6738, %v6761
        %v6767 = vmul.f32 %v6740, %v6762
        %v6768 = vmul.f32 %v6742, %v6763
        %v6769 = vmul.f32 %v6744, %v6764
        %6770 = vrot.lane.b32.xlu0 %v4764, 64
        %v6771 = vpop.permute.xlu0 %6770
        %6772 = vrot.lane.b32.xlu0 %v4768, 64
        %v6773 = vpop.permute.xlu0 %6772
        %6774 = vrot.lane.b32.xlu0 %v4774, 64
        %v6775 = vpop.permute.xlu0 %6774
        %6776 = vrot.lane.b32.xlu0 %v4778, 64
        %v6777 = vpop.permute.xlu0 %6776
        %6778 = vrot.lane.b32.xlu0 %v4784, 64
        %v6779 = vpop.permute.xlu0 %6778
        %v6786 = vsel %vm4914, %v6765, 0
        %v6789 = vsel %vm4914, %v6766, 0
        %v6792 = vsel %vm4914, %v6767, 0
        %v6795 = vsel %vm4914, %v6768, 0
        %v6798 = vsel %vm4914, %v6769, 0
        %6800 = vmatprep.subr.mxu0 0.0
        %6801 = vmatpush1.msra.mxu0 %v6771
        %6802 = vmatprep.subr.mxu0 0.0
        %6803 = vmatpush1.msra.mxu0 %v6773
        %6804 = vmatprep.subr.mxu0 0.0
        %6805 = vmatpush1.msra.mxu0 %v6775
        %6806 = vmatprep.subr.mxu0 0.0
        %6807 = vmatpush1.msra.mxu0 %v6777
        %6808 = vmatprep.subr.mxu0 0.0
        %6809 = vmatpush1.msra.mxu0 %v6779
        %6810 = vmatprep.subr.mxu0 0.0
        %6811 = vmatpush1.msra.mxu0 0.0
        %6812 = vmatprep.subr.mxu0 0.0
        %6813 = vmatpush1.msra.mxu0 0.0
        %6814 = vmatprep.subr.mxu0 0.0
        %6815 = vmatpush1.msra.mxu0 0.0
        %6816 = vmatprep.subr.mxu0 0.0
        %6817 = vmatpush1.msra.mxu0 0.0
        %6818 = vmatprep.subr.mxu0 0.0
        %6819 = vmatpush1.msra.mxu0 0.0
        %6820 = vmatprep.subr.mxu0 0.0
        %6821 = vmatpush1.msra.mxu0 0.0
        %6822 = vmatprep.subr.mxu0 0.0
        %6823 = vmatpush1.msra.mxu0 0.0
        %6824 = vmatprep.subr.mxu0 0.0
        %6825 = vmatpush1.msra.mxu0 0.0
        %6826 = vmatprep.subr.mxu0 0.0
        %6827 = vmatpush1.msra.mxu0 0.0
        %6828 = vmatprep.subr.mxu0 0.0
        %6829 = vmatpush1.msra.mxu0 0.0
        %6830 = vmatprep.subr.mxu0 0.0
        %6831 = vmatpush1.msra.mxu0 0.0
        %6832 = vmatprep.subr.mxu0 0.0
        %6833 = vmatpush1.msra.mxu0 0.0
        %6834 = vmatprep.subr.mxu0 0.0
        %6835 = vmatpush1.msra.mxu0 0.0
        %6836 = vmatprep.subr.mxu0 0.0
        %6837 = vmatpush1.msra.mxu0 0.0
        %6838 = vmatprep.subr.mxu0 0.0
        %6839 = vmatpush1.msra.mxu0 0.0
        %6840 = vmatprep.subr.mxu0 0.0
        %6841 = vmatpush1.msra.mxu0 0.0
        %6842 = vmatprep.subr.mxu0 0.0
        %6843 = vmatpush1.msra.mxu0 0.0
        %6844 = vmatprep.subr.mxu0 0.0
        %6845 = vmatpush1.msra.mxu0 0.0
        %6846 = vmatprep.subr.mxu0 0.0
        %6847 = vmatpush1.msra.mxu0 0.0
        %6848 = vmatprep.subr.mxu0 0.0
        %6849 = vmatpush1.msra.mxu0 0.0
        %6850 = vmatprep.subr.mxu0 0.0
        %6851 = vmatpush1.msra.mxu0 0.0
        %6852 = vmatprep.subr.mxu0 0.0
        %6853 = vmatpush1.msra.mxu0 0.0
        %6854 = vmatprep.subr.mxu0 0.0
        %6855 = vmatpush1.msra.mxu0 0.0
        %6856 = vmatprep.subr.mxu0 0.0
        %6857 = vmatpush1.msra.mxu0 0.0
        %6858 = vmatprep.subr.mxu0 0.0
        %6859 = vmatpush1.msra.mxu0 0.0
        %6860 = vmatprep.subr.mxu0 0.0
        %6861 = vmatpush1.msra.mxu0 0.0
        %6862 = vmatprep.subr.mxu0 0.0
        %6863 = vmatpush1.msra.mxu0 0.0
        %6864 = vmatprep.mubr.f32.mxu0 0.0
        %6865 = vmatmul.mubr.f32.gmra.mrb[0].mxu0 %v6786
        %v6866 = vpop.f32.mrb[0].mxu0
        %v6867 = vadd.f32 0.0, %v6866
        %v6868 = vpop.f32.mrb[0].mxu0
        %6869 = vmatprep.mubr.f32.mxu0 0.0
        %6870 = vmatmul.mubr.f32.gmra.mrb[0].mxu0 %v6789
        %v6871 = vpop.f32.mrb[0].mxu0
        %v6872 = vadd.f32 0.0, %v6871
        %v6873 = vpop.f32.mrb[0].mxu0
        %6874 = vmatprep.mubr.f32.mxu0 0.0
        %6875 = vmatmul.mubr.f32.gmra.mrb[0].mxu0 %v6792
        %v6876 = vpop.f32.mrb[0].mxu0
        %v6877 = vadd.f32 0.0, %v6876
        %v6878 = vpop.f32.mrb[0].mxu0
        %6879 = vmatprep.mubr.f32.mxu0 0.0
        %6880 = vmatmul.mubr.f32.gmra.mrb[0].mxu0 %v6795
        %v6881 = vpop.f32.mrb[0].mxu0
        %v6882 = vadd.f32 0.0, %v6881
        %v6883 = vpop.f32.mrb[0].mxu0
        %6884 = vmatprep.mubr.f32.mxu0 0.0
        %6885 = vmatmul.mubr.f32.gmra.mrb[0].mxu0 %v6798
        %v6886 = vpop.f32.mrb[0].mxu0
        %v6887 = vadd.f32 0.0, %v6886
        %v6888 = vpop.f32.mrb[0].mxu0
        %6889 = vdwg.mxu0
        %6890 = vrot.lane.b32.xlu0 %v4642, 32
        %v6891 = vpop.permute.xlu0 %6890
        %6892 = vrot.lane.b32.xlu0 %v4646, 32
        %v6893 = vpop.permute.xlu0 %6892
        %6894 = vrot.lane.b32.xlu0 %v4652, 32
        %v6895 = vpop.permute.xlu0 %6894
        %6896 = vrot.lane.b32.xlu0 %v4656, 32
        %v6897 = vpop.permute.xlu0 %6896
        %6898 = vrot.lane.b32.xlu0 %v4662, 32
        %v6899 = vpop.permute.xlu0 %6898
        %6900 = vrot.lane.b32.xlu0 %v4703, 32
        %v6901 = vpop.permute.xlu0 %6900
        %6902 = vrot.lane.b32.xlu0 %v4707, 32
        %v6903 = vpop.permute.xlu0 %6902
        %6904 = vrot.lane.b32.xlu0 %v4713, 32
        %v6905 = vpop.permute.xlu0 %6904
        %6906 = vrot.lane.b32.xlu0 %v4717, 32
        %v6907 = vpop.permute.xlu0 %6906
        %6908 = vrot.lane.b32.xlu0 %v4723, 32
        %v6909 = vpop.permute.xlu0 %6908
        %v6910 = vsel %vm4793, %v6891, 0
        %v6912 = vsel %vm4793, %v6893, 0
        %v6914 = vsel %vm4793, %v6895, 0
        %v6916 = vsel %vm4793, %v6897, 0
        %v6918 = vsel %vm4793, %v6899, 0
        %v6920 = vsel %vm4793, %v6901, 0
        %v6922 = vsel %vm4793, %v6903, 0
        %v6924 = vsel %vm4793, %v6905, 0
        %v6926 = vsel %vm4793, %v6907, 0
        %v6928 = vsel %vm4793, %v6909, 0
        %6930 = vmatprep.subr.mxu0 0.0
        %6931 = vmatpush1.xpose.msra.mxu0 %v6920
        %6932 = vmatprep.subr.mxu0 0.0
        %6933 = vmatpush1.xpose.msra.mxu0 %v6922
        %6934 = vmatprep.subr.mxu0 0.0
        %6935 = vmatpush1.xpose.msra.mxu0 %v6924
        %6936 = vmatprep.subr.mxu0 0.0
        %6937 = vmatpush1.xpose.msra.mxu0 %v6926
        %6938 = vmatprep.subr.mxu0 0.0
        %6939 = vmatpush1.xpose.msra.mxu0 %v6928
        %6940 = vmatprep.subr.mxu0 0.0
        %6941 = vmatpush1.xpose.msra.mxu0 0.0
        %6942 = vmatprep.subr.mxu0 0.0
        %6943 = vmatpush1.xpose.msra.mxu0 0.0
        %6944 = vmatprep.subr.mxu0 0.0
        %6945 = vmatpush1.xpose.msra.mxu0 0.0
        %6946 = vmatprep.subr.mxu0 0.0
        %6947 = vmatpush1.xpose.msra.mxu0 0.0
        %6948 = vmatprep.subr.mxu0 0.0
        %6949 = vmatpush1.xpose.msra.mxu0 0.0
        %6950 = vmatprep.subr.mxu0 0.0
        %6951 = vmatpush1.xpose.msra.mxu0 0.0
        %6952 = vmatprep.subr.mxu0 0.0
        %6953 = vmatpush1.xpose.msra.mxu0 0.0
        %6954 = vmatprep.subr.mxu0 0.0
        %6955 = vmatpush1.xpose.msra.mxu0 0.0
        %6956 = vmatprep.subr.mxu0 0.0
        %6957 = vmatpush1.xpose.msra.mxu0 0.0
        %6958 = vmatprep.subr.mxu0 0.0
        %6959 = vmatpush1.xpose.msra.mxu0 0.0
        %6960 = vmatprep.subr.mxu0 0.0
        %6961 = vmatpush1.xpose.msra.mxu0 0.0
        %6962 = vmatprep.subr.mxu0 0.0
        %6963 = vmatpush1.xpose.msra.mxu0 0.0
        %6964 = vmatprep.subr.mxu0 0.0
        %6965 = vmatpush1.xpose.msra.mxu0 0.0
        %6966 = vmatprep.subr.mxu0 0.0
        %6967 = vmatpush1.xpose.msra.mxu0 0.0
        %6968 = vmatprep.subr.mxu0 0.0
        %6969 = vmatpush1.xpose.msra.mxu0 0.0
        %6970 = vmatprep.subr.mxu0 0.0
        %6971 = vmatpush1.xpose.msra.mxu0 0.0
        %6972 = vmatprep.subr.mxu0 0.0
        %6973 = vmatpush1.xpose.msra.mxu0 0.0
        %6974 = vmatprep.subr.mxu0 0.0
        %6975 = vmatpush1.xpose.msra.mxu0 0.0
        %6976 = vmatprep.subr.mxu0 0.0
        %6977 = vmatpush1.xpose.msra.mxu0 0.0
        %6978 = vmatprep.subr.mxu0 0.0
        %6979 = vmatpush1.xpose.msra.mxu0 0.0
        %6980 = vmatprep.subr.mxu0 0.0
        %6981 = vmatpush1.xpose.msra.mxu0 0.0
        %6982 = vmatprep.subr.mxu0 0.0
        %6983 = vmatpush1.xpose.msra.mxu0 0.0
        %6984 = vmatprep.subr.mxu0 0.0
        %6985 = vmatpush1.xpose.msra.mxu0 0.0
        %6986 = vmatprep.subr.mxu0 0.0
        %6987 = vmatpush1.xpose.msra.mxu0 0.0
        %6988 = vmatprep.subr.mxu0 0.0
        %6989 = vmatpush1.xpose.msra.mxu0 0.0
        %6990 = vmatprep.subr.mxu0 0.0
        %6991 = vmatpush1.xpose.msra.mxu0 0.0
        %6992 = vmatprep.subr.mxu0 0.0
        %6993 = vmatpush1.xpose.msra.mxu0 0.0
        %6994 = vmatprep.mubr.f32.mxu0 0.0
        %6995 = vmatmul.mubr.f32.gmra.mrb[0].mxu0 %v6910
        %v6996 = vpop.f32.mrb[0].mxu0
        %v6997 = vadd.f32 %v4788, %v6996
        %v6998 = vpop.f32.mrb[0].mxu0
        %6999 = vmatprep.mubr.f32.mxu0 0.0
        %7000 = vmatmul.mubr.f32.gmra.mrb[0].mxu0 %v6912
        %v7001 = vpop.f32.mrb[0].mxu0
        %v7002 = vadd.f32 %v4789, %v7001
        %v7003 = vpop.f32.mrb[0].mxu0
        %7004 = vmatprep.mubr.f32.mxu0 0.0
        %7005 = vmatmul.mubr.f32.gmra.mrb[0].mxu0 %v6914
        %v7006 = vpop.f32.mrb[0].mxu0
        %v7007 = vadd.f32 %v4790, %v7006
        %v7008 = vpop.f32.mrb[0].mxu0
        %7009 = vmatprep.mubr.f32.mxu0 0.0
        %7010 = vmatmul.mubr.f32.gmra.mrb[0].mxu0 %v6916
        %v7011 = vpop.f32.mrb[0].mxu0
        %v7012 = vadd.f32 %v4791, %v7011
        %v7013 = vpop.f32.mrb[0].mxu0
        %7014 = vmatprep.mubr.f32.mxu0 0.0
        %7015 = vmatmul.mubr.f32.gmra.mrb[0].mxu0 %v6918
        %v7016 = vpop.f32.mrb[0].mxu0
        %v7017 = vadd.f32 %v4792, %v7016
        %v7018 = vpop.f32.mrb[0].mxu0
        %7019 = vdwg.mxu0
        %v7020 = vsel %vm4914, %v6997, -inf
        %7021 = vmax.xlane.f32.xlu0 %v7020
        %v7022 = vpop.xlane.xlu0 %7021
        %v7023 = vsel %vm4914, %v7002, -inf
        %7024 = vmax.xlane.f32.xlu0 %v7023
        %v7025 = vpop.xlane.xlu0 %7024
        %v7026 = vsel %vm4914, %v7007, -inf
        %7027 = vmax.xlane.f32.xlu0 %v7026
        %v7028 = vpop.xlane.xlu0 %7027
        %v7029 = vsel %vm4914, %v7012, -inf
        %7030 = vmax.xlane.f32.xlu0 %v7029
        %v7031 = vpop.xlane.xlu0 %7030
        %v7032 = vsel %vm4914, %v7017, -inf
        %7033 = vmax.xlane.f32.xlu0 %v7032
        %v7034 = vpop.xlane.xlu0 %7033
        %v7035 = vsub.f32 %v6997, %v7022
        %v7036 = vsub.f32 %v7002, %v7025
        %v7037 = vsub.f32 %v7007, %v7028
        %v7038 = vsub.f32 %v7012, %v7031
        %v7039 = vsub.f32 %v7017, %v7034
        %v7040 = vmul.f32 %v7035, 1.442695
        %v7041 = vpow.pop %v7040
        %v7042 = vmul.f32 %v7036, 1.442695
        %v7043 = vpow.pop %v7042
        %v7044 = vmul.f32 %v7037, 1.442695
        %v7045 = vpow.pop %v7044
        %v7046 = vmul.f32 %v7038, 1.442695
        %v7047 = vpow.pop %v7046
        %v7048 = vmul.f32 %v7039, 1.442695
        %v7049 = vpow.pop %v7048
        %v7050 = vsel %vm4914, %v7041, 0.0
        %7051 = vadd.xlane.f32.xlu0 %v7050
        %v7052 = vpop.xlane.xlu0 %7051
        %v7053 = vsel %vm4914, %v7043, 0.0
        %7054 = vadd.xlane.f32.xlu0 %v7053
        %v7055 = vpop.xlane.xlu0 %7054
        %v7056 = vsel %vm4914, %v7045, 0.0
        %7057 = vadd.xlane.f32.xlu0 %v7056
        %v7058 = vpop.xlane.xlu0 %7057
        %v7059 = vsel %vm4914, %v7047, 0.0
        %7060 = vadd.xlane.f32.xlu0 %v7059
        %v7061 = vpop.xlane.xlu0 %7060
        %v7062 = vsel %vm4914, %v7049, 0.0
        %7063 = vadd.xlane.f32.xlu0 %v7062
        %v7064 = vpop.xlane.xlu0 %7063
        %v7065 = vrcp.pop %v7052
        %v7066 = vrcp.pop %v7055
        %v7067 = vrcp.pop %v7058
        %v7068 = vrcp.pop %v7061
        %v7069 = vrcp.pop %v7064
        %v7070 = vmul.f32 %v7041, %v7065
        %v7071 = vmul.f32 %v7043, %v7066
        %v7072 = vmul.f32 %v7045, %v7067
        %v7073 = vmul.f32 %v7047, %v7068
        %v7074 = vmul.f32 %v7049, %v7069
        %7075 = vrot.lane.b32.xlu0 %v4764, 32
        %v7076 = vpop.permute.xlu0 %7075
        %7077 = vrot.lane.b32.xlu0 %v4768, 32
        %v7078 = vpop.permute.xlu0 %7077
        %7079 = vrot.lane.b32.xlu0 %v4774, 32
        %v7080 = vpop.permute.xlu0 %7079
        %7081 = vrot.lane.b32.xlu0 %v4778, 32
        %v7082 = vpop.permute.xlu0 %7081
        %7083 = vrot.lane.b32.xlu0 %v4784, 32
        %v7084 = vpop.permute.xlu0 %7083
        %v7091 = vsel %vm4914, %v7070, 0
        %v7094 = vsel %vm4914, %v7071, 0
        %v7097 = vsel %vm4914, %v7072, 0
        %v7100 = vsel %vm4914, %v7073, 0
        %v7103 = vsel %vm4914, %v7074, 0
        %7105 = vmatprep.subr.mxu0 0.0
        %7106 = vmatpush1.msra.mxu0 %v7076
        %7107 = vmatprep.subr.mxu0 0.0
        %7108 = vmatpush1.msra.mxu0 %v7078
        %7109 = vmatprep.subr.mxu0 0.0
        %7110 = vmatpush1.msra.mxu0 %v7080
        %7111 = vmatprep.subr.mxu0 0.0
        %7112 = vmatpush1.msra.mxu0 %v7082
        %7113 = vmatprep.subr.mxu0 0.0
        %7114 = vmatpush1.msra.mxu0 %v7084
        %7115 = vmatprep.subr.mxu0 0.0
        %7116 = vmatpush1.msra.mxu0 0.0
        %7117 = vmatprep.subr.mxu0 0.0
        %7118 = vmatpush1.msra.mxu0 0.0
        %7119 = vmatprep.subr.mxu0 0.0
        %7120 = vmatpush1.msra.mxu0 0.0
        %7121 = vmatprep.subr.mxu0 0.0
        %7122 = vmatpush1.msra.mxu0 0.0
        %7123 = vmatprep.subr.mxu0 0.0
        %7124 = vmatpush1.msra.mxu0 0.0
        %7125 = vmatprep.subr.mxu0 0.0
        %7126 = vmatpush1.msra.mxu0 0.0
        %7127 = vmatprep.subr.mxu0 0.0
        %7128 = vmatpush1.msra.mxu0 0.0
        %7129 = vmatprep.subr.mxu0 0.0
        %7130 = vmatpush1.msra.mxu0 0.0
        %7131 = vmatprep.subr.mxu0 0.0
        %7132 = vmatpush1.msra.mxu0 0.0
        %7133 = vmatprep.subr.mxu0 0.0
        %7134 = vmatpush1.msra.mxu0 0.0
        %7135 = vmatprep.subr.mxu0 0.0
        %7136 = vmatpush1.msra.mxu0 0.0
        %7137 = vmatprep.subr.mxu0 0.0
        %7138 = vmatpush1.msra.mxu0 0.0
        %7139 = vmatprep.subr.mxu0 0.0
        %7140 = vmatpush1.msra.mxu0 0.0
        %7141 = vmatprep.subr.mxu0 0.0
        %7142 = vmatpush1.msra.mxu0 0.0
        %7143 = vmatprep.subr.mxu0 0.0
        %7144 = vmatpush1.msra.mxu0 0.0
        %7145 = vmatprep.subr.mxu0 0.0
        %7146 = vmatpush1.msra.mxu0 0.0
        %7147 = vmatprep.subr.mxu0 0.0
        %7148 = vmatpush1.msra.mxu0 0.0
        %7149 = vmatprep.subr.mxu0 0.0
        %7150 = vmatpush1.msra.mxu0 0.0
        %7151 = vmatprep.subr.mxu0 0.0
        %7152 = vmatpush1.msra.mxu0 0.0
        %7153 = vmatprep.subr.mxu0 0.0
        %7154 = vmatpush1.msra.mxu0 0.0
        %7155 = vmatprep.subr.mxu0 0.0
        %7156 = vmatpush1.msra.mxu0 0.0
        %7157 = vmatprep.subr.mxu0 0.0
        %7158 = vmatpush1.msra.mxu0 0.0
        %7159 = vmatprep.subr.mxu0 0.0
        %7160 = vmatpush1.msra.mxu0 0.0
        %7161 = vmatprep.subr.mxu0 0.0
        %7162 = vmatpush1.msra.mxu0 0.0
        %7163 = vmatprep.subr.mxu0 0.0
        %7164 = vmatpush1.msra.mxu0 0.0
        %7165 = vmatprep.subr.mxu0 0.0
        %7166 = vmatpush1.msra.mxu0 0.0
        %7167 = vmatprep.subr.mxu0 0.0
        %7168 = vmatpush1.msra.mxu0 0.0
        %7169 = vmatprep.mubr.f32.mxu0 0.0
        %7170 = vmatmul.mubr.f32.gmra.mrb[0].mxu0 %v7091
        %v7171 = vpop.f32.mrb[0].mxu0
        %v7172 = vadd.f32 0.0, %v7171
        %v7173 = vpop.f32.mrb[0].mxu0
        %7174 = vmatprep.mubr.f32.mxu0 0.0
        %7175 = vmatmul.mubr.f32.gmra.mrb[0].mxu0 %v7094
        %v7176 = vpop.f32.mrb[0].mxu0
        %v7177 = vadd.f32 0.0, %v7176
        %v7178 = vpop.f32.mrb[0].mxu0
        %7179 = vmatprep.mubr.f32.mxu0 0.0
        %7180 = vmatmul.mubr.f32.gmra.mrb[0].mxu0 %v7097
        %v7181 = vpop.f32.mrb[0].mxu0
        %v7182 = vadd.f32 0.0, %v7181
        %v7183 = vpop.f32.mrb[0].mxu0
        %7184 = vmatprep.mubr.f32.mxu0 0.0
        %7185 = vmatmul.mubr.f32.gmra.mrb[0].mxu0 %v7100
        %v7186 = vpop.f32.mrb[0].mxu0
        %v7187 = vadd.f32 0.0, %v7186
        %v7188 = vpop.f32.mrb[0].mxu0
        %7189 = vmatprep.mubr.f32.mxu0 0.0
        %7190 = vmatmul.mubr.f32.gmra.mrb[0].mxu0 %v7103
        %v7191 = vpop.f32.mrb[0].mxu0
        %v7192 = vadd.f32 0.0, %v7191
        %v7193 = vpop.f32.mrb[0].mxu0
        %7194 = vdwg.mxu0
        %7200 = vrot.lane.b32.xlu0 %v5362, 32
        %v7201 = vpop.permute.xlu0 %7200
        %7202 = vrot.lane.b32.xlu0 %v5367, 32
        %v7203 = vpop.permute.xlu0 %7202
        %7204 = vrot.lane.b32.xlu0 %v5372, 32
        %v7205 = vpop.permute.xlu0 %7204
        %7206 = vrot.lane.b32.xlu0 %v5377, 32
        %v7207 = vpop.permute.xlu0 %7206
        %7208 = vrot.lane.b32.xlu0 %v5382, 32
        %v7209 = vpop.permute.xlu0 %7208
        %7220 = vrot.lane.b32.xlu0 %v5667, 64
        %v7221 = vpop.permute.xlu0 %7220
        %7222 = vrot.lane.b32.xlu0 %v5672, 64
        %v7223 = vpop.permute.xlu0 %7222
        %7224 = vrot.lane.b32.xlu0 %v5677, 64
        %v7225 = vpop.permute.xlu0 %7224
        %7226 = vrot.lane.b32.xlu0 %v5682, 64
        %v7227 = vpop.permute.xlu0 %7226
        %7228 = vrot.lane.b32.xlu0 %v5687, 64
        %v7229 = vpop.permute.xlu0 %7228
        %7240 = vrot.lane.b32.xlu0 %v5972, 96
        %v7241 = vpop.permute.xlu0 %7240
        %7242 = vrot.lane.b32.xlu0 %v5977, 96
        %v7243 = vpop.permute.xlu0 %7242
        %7244 = vrot.lane.b32.xlu0 %v5982, 96
        %v7245 = vpop.permute.xlu0 %7244
        %7246 = vrot.lane.b32.xlu0 %v5987, 96
        %v7247 = vpop.permute.xlu0 %7246
        %7248 = vrot.lane.b32.xlu0 %v5992, 96
        %v7249 = vpop.permute.xlu0 %7248
        %7260 = vrot.lane.b32.xlu0 %v6562, 32
        %v7261 = vpop.permute.xlu0 %7260
        %7262 = vrot.lane.b32.xlu0 %v6567, 32
        %v7263 = vpop.permute.xlu0 %7262
        %7264 = vrot.lane.b32.xlu0 %v6572, 32
        %v7265 = vpop.permute.xlu0 %7264
        %7266 = vrot.lane.b32.xlu0 %v6577, 32
        %v7267 = vpop.permute.xlu0 %7266
        %7268 = vrot.lane.b32.xlu0 %v6582, 32
        %v7269 = vpop.permute.xlu0 %7268
        %7280 = vrot.lane.b32.xlu0 %v6867, 64
        %v7281 = vpop.permute.xlu0 %7280
        %7282 = vrot.lane.b32.xlu0 %v6872, 64
        %v7283 = vpop.permute.xlu0 %7282
        %7284 = vrot.lane.b32.xlu0 %v6877, 64
        %v7285 = vpop.permute.xlu0 %7284
        %7286 = vrot.lane.b32.xlu0 %v6882, 64
        %v7287 = vpop.permute.xlu0 %7286
        %7288 = vrot.lane.b32.xlu0 %v6887, 64
        %v7289 = vpop.permute.xlu0 %7288
        %7300 = vrot.lane.b32.xlu0 %v7172, 96
        %v7301 = vpop.permute.xlu0 %7300
        %7302 = vrot.lane.b32.xlu0 %v7177, 96
        %v7303 = vpop.permute.xlu0 %7302
        %7304 = vrot.lane.b32.xlu0 %v7182, 96
        %v7305 = vpop.permute.xlu0 %7304
        %7306 = vrot.lane.b32.xlu0 %v7187, 96
        %v7307 = vpop.permute.xlu0 %7306
        %7308 = vrot.lane.b32.xlu0 %v7192, 96
        %v7309 = vpop.permute.xlu0 %7308
        %v7315 = vsel %vm4793, %v5052, %v7201
        %v7316 = vsel %vm4793, %v5057, %v7203
        %v7317 = vsel %vm4793, %v5062, %v7205
        %v7318 = vsel %vm4793, %v5067, %v7207
        %v7319 = vsel %vm4793, %v5072, %v7209
        %vm7320 = vcmask 523264
        %v7321 = vsel %vm7320, %v7315, %v7221
        %v7322 = vsel %vm7320, %v7316, %v7223
        %v7323 = vsel %vm7320, %v7317, %v7225
        %v7324 = vsel %vm7320, %v7318, %v7227
        %v7325 = vsel %vm7320, %v7319, %v7229
        %vm7326 = vcmask 785408
        %v7327 = vsel %vm7326, %v7321, %v7241
        %v7328 = vsel %vm7326, %v7322, %v7243
        %v7329 = vsel %vm7326, %v7323, %v7245
        %v7330 = vsel %vm7326, %v7324, %v7247
        %v7331 = vsel %vm7326, %v7325, %v7249
        %v7332 = vsel %vm4793, %v6252, %v7261
        %v7333 = vsel %vm4793, %v6257, %v7263
        %v7334 = vsel %vm4793, %v6262, %v7265
        %v7335 = vsel %vm4793, %v6267, %v7267
        %v7336 = vsel %vm4793, %v6272, %v7269
        %v7337 = vsel %vm7320, %v7332, %v7281
        %v7338 = vsel %vm7320, %v7333, %v7283
        %v7339 = vsel %vm7320, %v7334, %v7285
        %v7340 = vsel %vm7320, %v7335, %v7287
        %v7341 = vsel %vm7320, %v7336, %v7289
        %v7342 = vsel %vm7326, %v7337, %v7301
        %v7343 = vsel %vm7326, %v7338, %v7303
        %v7344 = vsel %vm7326, %v7339, %v7305
        %v7345 = vsel %vm7326, %v7340, %v7307
        %v7346 = vsel %vm7326, %v7341, %v7309
        %v7347 = vld [vmem:[%s1572] sm:$0xff]
        %v7348 = vld [vmem:[%s1572 + $0x8] sm:$0xff]
        %v7349 = vld [vmem:[%s1572 + $0x10] sm:$0xff]
        %v7350 = vld [vmem:[%s1572 + $0x18] sm:$0xff]
        %v7351 = vld [vmem:[%s1572 + $0x20] sm:$0xff]
        %v7352 = vld [vmem:[%s1572 + $0x28] sm:$0xff]
        %v7353 = vld [vmem:[%s1572 + $0x30] sm:$0xff]
        %v7354 = vld [vmem:[%s1572 + $0x38] sm:$0xff]
        %v7355 = vld [vmem:[%s1572 + $0x40] sm:$0xff]
        %v7356 = vld [vmem:[%s1572 + $0x48] sm:$0xff]
        %v7357 = vld [vmem:[%s1572 + $0x50] sm:$0xff]
        %v7358 = vld [vmem:[%s1572 + $0x58] sm:$0xff]
        %v7359 = vld [vmem:[%s1572 + $0x60] sm:$0xff]
        %v7360 = vld [vmem:[%s1572 + $0x68] sm:$0xff]
        %v7361 = vld [vmem:[%s1572 + $0x70] sm:$0xff]
        %v7362 = vld [vmem:[%s1572 + $0x78] sm:$0xff]
        %v7363 = vld [vmem:[%s1572 + $0x80] sm:$0xff]
        %v7364 = vld [vmem:[%s1572 + $0x88] sm:$0xff]
        %v7365 = vld [vmem:[%s1572 + $0x90] sm:$0xff]
        %v7366 = vld [vmem:[%s1572 + $0x98] sm:$0xff]
        %v7367 = vld [vmem:[%s1572 + $0xa0] sm:$0xff]
        %v7368 = vld [vmem:[%s1572 + $0xa8] sm:$0xff]
        %v7369 = vld [vmem:[%s1572 + $0xb0] sm:$0xff]
        %v7370 = vld [vmem:[%s1572 + $0xb8] sm:$0xff]
        %v7371 = vld [vmem:[%s1572 + $0xc0] sm:$0xff]
        %v7372 = vld [vmem:[%s1572 + $0xc8] sm:$0xff]
        %v7373 = vld [vmem:[%s1572 + $0xd0] sm:$0xff]
        %v7374 = vld [vmem:[%s1572 + $0xd8] sm:$0xff]
        %v7375 = vld [vmem:[%s1572 + $0xe0] sm:$0xff]
        %v7376 = vld [vmem:[%s1572 + $0xe8] sm:$0xff]
        %v7377 = vld [vmem:[%s1572 + $0xf0] sm:$0xff]
        %v7378 = vld [vmem:[%s1572 + $0xf8] sm:$0xff]
        %v7379 = vpack.c.bf16 %v7328, %v7327
        %v7380 = vpack.c.bf16 %v7343, %v7342
        %v7381 = vpack.c.bf16 %v7330, %v7329
        %v7382 = vpack.c.bf16 %v7345, %v7344
        %v7383 = vpack.c.bf16 %v7331, %v7331
        %v7384 = vpack.c.bf16 %v7346, %v7346
        %v7385 = vld [vmem:[%s1581] sm:$0x3]
        %v7387 = vlaneseq
        %v7388 = vshrl.u32 %v7387, 7
        %v7389 = vsub.s32 0, %v7388
        %v7390 = vrot.slane %v7385, %v7389
        %v7391 = vlaneseq
        %v7392 = vshrl.u32 %v7391, 7
        %v7393 = vsub.s32 1, %v7392
        %v7394 = vrot.slane %v7385, %v7393
        %v7429 = vunpack.c.l.b16 %v7347
        %v7430 = vunpack.c.h.b16 %v7347
        %v7431 = vunpack.c.l.b16 %v7348
        %v7432 = vunpack.c.h.b16 %v7348
        %v7433 = vunpack.c.l.b16 %v7349
        %v7434 = vunpack.c.h.b16 %v7349
        %v7435 = vunpack.c.l.b16 %v7350
        %v7436 = vunpack.c.h.b16 %v7350
        %v7437 = vunpack.c.l.b16 %v7351
        %v7438 = vunpack.c.h.b16 %v7351
        %v7439 = vunpack.c.l.b16 %v7352
        %v7440 = vunpack.c.h.b16 %v7352
        %v7441 = vunpack.c.l.b16 %v7353
        %v7442 = vunpack.c.h.b16 %v7353
        %v7443 = vunpack.c.l.b16 %v7354
        %v7444 = vunpack.c.h.b16 %v7354
        %v7445 = vunpack.c.l.b16 %v7355
        %v7446 = vunpack.c.h.b16 %v7355
        %v7447 = vunpack.c.l.b16 %v7356
        %v7448 = vunpack.c.h.b16 %v7356
        %v7449 = vunpack.c.l.b16 %v7357
        %v7450 = vunpack.c.h.b16 %v7357
        %v7451 = vunpack.c.l.b16 %v7358
        %v7452 = vunpack.c.h.b16 %v7358
        %v7453 = vunpack.c.l.b16 %v7359
        %v7454 = vunpack.c.h.b16 %v7359
        %v7455 = vunpack.c.l.b16 %v7360
        %v7456 = vunpack.c.h.b16 %v7360
        %v7457 = vunpack.c.l.b16 %v7361
        %v7458 = vunpack.c.h.b16 %v7361
        %v7459 = vunpack.c.l.b16 %v7362
        %v7460 = vunpack.c.h.b16 %v7362
        %v7461 = vunpack.c.l.b16 %v7363
        %v7462 = vunpack.c.h.b16 %v7363
        %v7463 = vunpack.c.l.b16 %v7364
        %v7464 = vunpack.c.h.b16 %v7364
        %v7465 = vunpack.c.l.b16 %v7365
        %v7466 = vunpack.c.h.b16 %v7365
        %v7467 = vunpack.c.l.b16 %v7366
        %v7468 = vunpack.c.h.b16 %v7366
        %v7469 = vunpack.c.l.b16 %v7367
        %v7470 = vunpack.c.h.b16 %v7367
        %v7471 = vunpack.c.l.b16 %v7368
        %v7472 = vunpack.c.h.b16 %v7368
        %v7473 = vunpack.c.l.b16 %v7369
        %v7474 = vunpack.c.h.b16 %v7369
        %v7475 = vunpack.c.l.b16 %v7370
        %v7476 = vunpack.c.h.b16 %v7370
        %v7477 = vunpack.c.l.b16 %v7371
        %v7478 = vunpack.c.h.b16 %v7371
        %v7479 = vunpack.c.l.b16 %v7372
        %v7480 = vunpack.c.h.b16 %v7372
        %v7481 = vunpack.c.l.b16 %v7373
        %v7482 = vunpack.c.h.b16 %v7373
        %v7483 = vunpack.c.l.b16 %v7374
        %v7484 = vunpack.c.h.b16 %v7374
        %v7485 = vunpack.c.l.b16 %v7375
        %v7486 = vunpack.c.h.b16 %v7375
        %v7487 = vunpack.c.l.b16 %v7376
        %v7488 = vunpack.c.h.b16 %v7376
        %v7489 = vunpack.c.l.b16 %v7377
        %v7490 = vunpack.c.h.b16 %v7377
        %v7491 = vunpack.c.l.b16 %v7378
        %v7492 = vunpack.c.h.b16 %v7378
        %v7493 = vpack.c.b16 %v7431, %v7429
        %v7494 = vpack.c.b16 %v7432, %v7430
        %v7495 = vpack.c.b16 %v7435, %v7433
        %v7496 = vpack.c.b16 %v7436, %v7434
        %v7497 = vpack.c.b16 %v7439, %v7437
        %v7498 = vpack.c.b16 %v7440, %v7438
        %v7499 = vpack.c.b16 %v7443, %v7441
        %v7500 = vpack.c.b16 %v7444, %v7442
        %v7501 = vpack.c.b16 %v7447, %v7445
        %v7502 = vpack.c.b16 %v7448, %v7446
        %v7503 = vpack.c.b16 %v7451, %v7449
        %v7504 = vpack.c.b16 %v7452, %v7450
        %v7505 = vpack.c.b16 %v7455, %v7453
        %v7506 = vpack.c.b16 %v7456, %v7454
        %v7507 = vpack.c.b16 %v7459, %v7457
        %v7508 = vpack.c.b16 %v7460, %v7458
        %v7509 = vpack.c.b16 %v7463, %v7461
        %v7510 = vpack.c.b16 %v7464, %v7462
        %v7511 = vpack.c.b16 %v7467, %v7465
        %v7512 = vpack.c.b16 %v7468, %v7466
        %v7513 = vpack.c.b16 %v7471, %v7469
        %v7514 = vpack.c.b16 %v7472, %v7470
        %v7515 = vpack.c.b16 %v7475, %v7473
        %v7516 = vpack.c.b16 %v7476, %v7474
        %v7517 = vpack.c.b16 %v7479, %v7477
        %v7518 = vpack.c.b16 %v7480, %v7478
        %v7519 = vpack.c.b16 %v7483, %v7481
        %v7520 = vpack.c.b16 %v7484, %v7482
        %v7521 = vpack.c.b16 %v7487, %v7485
        %v7522 = vpack.c.b16 %v7488, %v7486
        %v7523 = vpack.c.b16 %v7491, %v7489
        %v7524 = vpack.c.b16 %v7492, %v7490
        %7557 = vmatprep.subr.bf16.mxu0 %v7494
        %7558 = vmatpush1.bf16.msra.mxu0 %v7493
        %7559 = vmatprep.subr.bf16.mxu0 %v7496
        %7560 = vmatpush1.bf16.msra.mxu0 %v7495
        %7561 = vmatprep.subr.bf16.mxu0 %v7498
        %7562 = vmatpush1.bf16.msra.mxu0 %v7497
        %7563 = vmatprep.subr.bf16.mxu0 %v7500
        %7564 = vmatpush1.bf16.msra.mxu0 %v7499
        %7565 = vmatprep.subr.bf16.mxu0 %v7502
        %7566 = vmatpush1.bf16.msra.mxu0 %v7501
        %7567 = vmatprep.subr.bf16.mxu0 %v7504
        %7568 = vmatpush1.bf16.msra.mxu0 %v7503
        %7569 = vmatprep.subr.bf16.mxu0 %v7506
        %7570 = vmatpush1.bf16.msra.mxu0 %v7505
        %7571 = vmatprep.subr.bf16.mxu0 %v7508
        %7572 = vmatpush1.bf16.msra.mxu0 %v7507
        %7573 = vmatprep.subr.bf16.mxu0 %v7510
        %7574 = vmatpush1.bf16.msra.mxu0 %v7509
        %7575 = vmatprep.subr.bf16.mxu0 %v7512
        %7576 = vmatpush1.bf16.msra.mxu0 %v7511
        %7577 = vmatprep.subr.bf16.mxu0 %v7514
        %7578 = vmatpush1.bf16.msra.mxu0 %v7513
        %7579 = vmatprep.subr.bf16.mxu0 %v7516
        %7580 = vmatpush1.bf16.msra.mxu0 %v7515
        %7581 = vmatprep.subr.bf16.mxu0 %v7518
        %7582 = vmatpush1.bf16.msra.mxu0 %v7517
        %7583 = vmatprep.subr.bf16.mxu0 %v7520
        %7584 = vmatpush1.bf16.msra.mxu0 %v7519
        %7585 = vmatprep.subr.bf16.mxu0 %v7522
        %7586 = vmatpush1.bf16.msra.mxu0 %v7521
        %7587 = vmatprep.subr.bf16.mxu0 %v7524
        %7588 = vmatpush1.bf16.msra.mxu0 %v7523
        %7589 = vmatprep.mubr.bf16.mxu0 %v7380
        %7590 = vmatmul.mubr.bf16.gmra.mrb[0].mxu0 %v7379
        %v7591 = vpop.f32.mrb[0].mxu0
        %v7592 = vadd.f32 %v7390, %v7591
        %v7593 = vpop.f32.mrb[0].mxu0
        %v7594 = vadd.f32 %v7394, %v7593
        %v7595 = vpop.f32.mrb[0].mxu0
        %v7596 = vadd.f32 %v7390, %v7595
        %v7597 = vpop.f32.mrb[0].mxu0
        %v7598 = vadd.f32 %v7394, %v7597
        %7599 = vmatprep.mubr.bf16.mxu0 %v7382
        %7600 = vmatmul.mubr.bf16.gmra.mrb[0].mxu0 %v7381
        %v7601 = vpop.f32.mrb[0].mxu0
        %v7602 = vadd.f32 %v7390, %v7601
        %v7603 = vpop.f32.mrb[0].mxu0
        %v7604 = vadd.f32 %v7394, %v7603
        %v7605 = vpop.f32.mrb[0].mxu0
        %v7606 = vadd.f32 %v7390, %v7605
        %v7607 = vpop.f32.mrb[0].mxu0
        %v7608 = vadd.f32 %v7394, %v7607
        %7609 = vmatprep.mubr.bf16.mxu0 %v7384
        %7610 = vmatmul.mubr.bf16.gmra.mrb[0].mxu0 %v7383
        %v7611 = vpop.f32.mrb[0].mxu0
        %v7612 = vadd.f32 %v7390, %v7611
        %v7613 = vpop.f32.mrb[0].mxu0
        %v7614 = vadd.f32 %v7394, %v7613
        %v7615 = vpop.f32.mrb[0].mxu0
        %v7616 = vpop.f32.mrb[0].mxu0
        %7617 = vdwg.mxu0
        %v7618 = vadd.f32 %v7592, %v3856
        %v7619 = vadd.f32 %v7594, %v3857
        %v7620 = vadd.f32 %v7596, %v3858
        %v7621 = vadd.f32 %v7598, %v3859
        %v7622 = vadd.f32 %v7602, %v3860
        %v7623 = vadd.f32 %v7604, %v3861
        %v7624 = vadd.f32 %v7606, %v3862
        %v7625 = vadd.f32 %v7608, %v3863
        %v7626 = vadd.f32 %v7612, %v3864
        %v7627 = vadd.f32 %v7614, %v3865
        %v7628 = vld [vmem:[%s1590] sm:$0x3]
        %v7629 = vld [vmem:[%s1599] sm:$0x3]
        %v7630 = vadd.f32 %v7618, %v7619
        %7631 = vadd.xlane.f32.xlu0 %v7630
        %v7632 = vpop.xlane.xlu0 %7631
        %v7633 = vadd.f32 %v7620, %v7621
        %7634 = vadd.xlane.f32.xlu0 %v7633
        %v7635 = vpop.xlane.xlu0 %7634
        %v7636 = vadd.f32 %v7622, %v7623
        %7637 = vadd.xlane.f32.xlu0 %v7636
        %v7638 = vpop.xlane.xlu0 %7637
        %v7639 = vadd.f32 %v7624, %v7625
        %7640 = vadd.xlane.f32.xlu0 %v7639
        %v7641 = vpop.xlane.xlu0 %7640
        %v7642 = vadd.f32 %v7626, %v7627
        %7643 = vadd.xlane.f32.xlu0 %v7642
        %v7644 = vpop.xlane.xlu0 %7643
        %v7645 = vmul.f32 %v7632, %v3883
        %v7646 = vmul.f32 %v7635, %v3883
        %v7647 = vmul.f32 %v7638, %v3883
        %v7648 = vmul.f32 %v7641, %v3883
        %v7649 = vmul.f32 %v7644, %v3883
        %v7650 = vsub.f32 %v7618, %v7645
        %v7651 = vsub.f32 %v7619, %v7645
        %v7652 = vsub.f32 %v7620, %v7646
        %v7653 = vsub.f32 %v7621, %v7646
        %v7654 = vsub.f32 %v7622, %v7647
        %v7655 = vsub.f32 %v7623, %v7647
        %v7656 = vsub.f32 %v7624, %v7648
        %v7657 = vsub.f32 %v7625, %v7648
        %v7658 = vsub.f32 %v7626, %v7649
        %v7659 = vsub.f32 %v7627, %v7649
        %v7660 = vmul.f32 %v7650, %v7650
        %v7661 = vmul.f32 %v7651, %v7651
        %v7662 = vmul.f32 %v7652, %v7652
        %v7663 = vmul.f32 %v7653, %v7653
        %v7664 = vmul.f32 %v7654, %v7654
        %v7665 = vmul.f32 %v7655, %v7655
        %v7666 = vmul.f32 %v7656, %v7656
        %v7667 = vmul.f32 %v7657, %v7657
        %v7668 = vmul.f32 %v7658, %v7658
        %v7669 = vmul.f32 %v7659, %v7659
        %v7670 = vadd.f32 %v7660, %v7661
        %7671 = vadd.xlane.f32.xlu0 %v7670
        %v7672 = vpop.xlane.xlu0 %7671
        %v7673 = vadd.f32 %v7662, %v7663
        %7674 = vadd.xlane.f32.xlu0 %v7673
        %v7675 = vpop.xlane.xlu0 %7674
        %v7676 = vadd.f32 %v7664, %v7665
        %7677 = vadd.xlane.f32.xlu0 %v7676
        %v7678 = vpop.xlane.xlu0 %7677
        %v7679 = vadd.f32 %v7666, %v7667
        %7680 = vadd.xlane.f32.xlu0 %v7679
        %v7681 = vpop.xlane.xlu0 %7680
        %v7682 = vadd.f32 %v7668, %v7669
        %7683 = vadd.xlane.f32.xlu0 %v7682
        %v7684 = vpop.xlane.xlu0 %7683
        %v7685 = vmul.f32 %v7672, %v3883
        %v7686 = vmul.f32 %v7675, %v3883
        %v7687 = vmul.f32 %v7678, %v3883
        %v7688 = vmul.f32 %v7681, %v3883
        %v7689 = vmul.f32 %v7684, %v3883
        %v7690 = vadd.f32 %v7685, 1e-05
        %v7691 = vadd.f32 %v7686, 1e-05
        %v7692 = vadd.f32 %v7687, 1e-05
        %v7693 = vadd.f32 %v7688, 1e-05
        %v7694 = vadd.f32 %v7689, 1e-05
        %v7695 = vrsqrt.pop %v7690
        %v7696 = vrsqrt.pop %v7691
        %v7697 = vrsqrt.pop %v7692
        %v7698 = vrsqrt.pop %v7693
        %v7699 = vrsqrt.pop %v7694
        %v7700 = vmul.f32 %v7650, %v7695
        %v7701 = vmul.f32 %v7651, %v7695
        %v7702 = vmul.f32 %v7652, %v7696
        %v7703 = vmul.f32 %v7653, %v7696
        %v7704 = vmul.f32 %v7654, %v7697
        %v7705 = vmul.f32 %v7655, %v7697
        %v7706 = vmul.f32 %v7656, %v7698
        %v7707 = vmul.f32 %v7657, %v7698
        %v7708 = vmul.f32 %v7658, %v7699
        %v7709 = vmul.f32 %v7659, %v7699
        %v7711 = vlaneseq
        %v7712 = vshrl.u32 %v7711, 7
        %v7713 = vsub.s32 0, %v7712
        %v7714 = vrot.slane %v7628, %v7713
        %v7715 = vlaneseq
        %v7716 = vshrl.u32 %v7715, 7
        %v7717 = vsub.s32 1, %v7716
        %v7718 = vrot.slane %v7628, %v7717
        %v7721 = vmul.f32 %v7700, %v7714
        %v7722 = vmul.f32 %v7701, %v7718
        %v7723 = vmul.f32 %v7702, %v7714
        %v7724 = vmul.f32 %v7703, %v7718
        %v7725 = vmul.f32 %v7704, %v7714
        %v7726 = vmul.f32 %v7705, %v7718
        %v7727 = vmul.f32 %v7706, %v7714
        %v7728 = vmul.f32 %v7707, %v7718
        %v7729 = vmul.f32 %v7708, %v7714
        %v7730 = vmul.f32 %v7709, %v7718
        %v7732 = vlaneseq
        %v7733 = vshrl.u32 %v7732, 7
        %v7734 = vsub.s32 0, %v7733
        %v7735 = vrot.slane %v7629, %v7734
        %v7736 = vlaneseq
        %v7737 = vshrl.u32 %v7736, 7
        %v7738 = vsub.s32 1, %v7737
        %v7739 = vrot.slane %v7629, %v7738
        %v7742 = vadd.f32 %v7721, %v7735
        %v7743 = vadd.f32 %v7722, %v7739
        %v7744 = vadd.f32 %v7723, %v7735
        %v7745 = vadd.f32 %v7724, %v7739
        %v7746 = vadd.f32 %v7725, %v7735
        %v7747 = vadd.f32 %v7726, %v7739
        %v7748 = vadd.f32 %v7727, %v7735
        %v7749 = vadd.f32 %v7728, %v7739
        %v7750 = vadd.f32 %v7729, %v7735
        %v7751 = vadd.f32 %v7730, %v7739
        %v7752 = vld [vmem:[%s1608] sm:$0xff]
        %v7753 = vld [vmem:[%s1608 + $0x8] sm:$0xff]
        %v7754 = vld [vmem:[%s1608 + $0x10] sm:$0xff]
        %v7755 = vld [vmem:[%s1608 + $0x18] sm:$0xff]
        %v7756 = vld [vmem:[%s1608 + $0x20] sm:$0xff]
        %v7757 = vld [vmem:[%s1608 + $0x28] sm:$0xff]
        %v7758 = vld [vmem:[%s1608 + $0x30] sm:$0xff]
        %v7759 = vld [vmem:[%s1608 + $0x38] sm:$0xff]
        %v7760 = vld [vmem:[%s1608 + $0x40] sm:$0xff]
        %v7761 = vld [vmem:[%s1608 + $0x48] sm:$0xff]
        %v7762 = vld [vmem:[%s1608 + $0x50] sm:$0xff]
        %v7763 = vld [vmem:[%s1608 + $0x58] sm:$0xff]
        %v7764 = vld [vmem:[%s1608 + $0x60] sm:$0xff]
        %v7765 = vld [vmem:[%s1608 + $0x68] sm:$0xff]
        %v7766 = vld [vmem:[%s1608 + $0x70] sm:$0xff]
        %v7767 = vld [vmem:[%s1608 + $0x78] sm:$0xff]
        %v7768 = vld [vmem:[%s1608 + $0x80] sm:$0xff]
        %v7769 = vld [vmem:[%s1608 + $0x88] sm:$0xff]
        %v7770 = vld [vmem:[%s1608 + $0x90] sm:$0xff]
        %v7771 = vld [vmem:[%s1608 + $0x98] sm:$0xff]
        %v7772 = vld [vmem:[%s1608 + $0xa0] sm:$0xff]
        %v7773 = vld [vmem:[%s1608 + $0xa8] sm:$0xff]
        %v7774 = vld [vmem:[%s1608 + $0xb0] sm:$0xff]
        %v7775 = vld [vmem:[%s1608 + $0xb8] sm:$0xff]
        %v7776 = vld [vmem:[%s1608 + $0xc0] sm:$0xff]
        %v7777 = vld [vmem:[%s1608 + $0xc8] sm:$0xff]
        %v7778 = vld [vmem:[%s1608 + $0xd0] sm:$0xff]
        %v7779 = vld [vmem:[%s1608 + $0xd8] sm:$0xff]
        %v7780 = vld [vmem:[%s1608 + $0xe0] sm:$0xff]
        %v7781 = vld [vmem:[%s1608 + $0xe8] sm:$0xff]
        %v7782 = vld [vmem:[%s1608 + $0xf0] sm:$0xff]
        %v7783 = vld [vmem:[%s1608 + $0xf8] sm:$0xff]
        %v7784 = vld [vmem:[%s1608 + $0x100] sm:$0xff]
        %v7785 = vld [vmem:[%s1608 + $0x108] sm:$0xff]
        %v7786 = vld [vmem:[%s1608 + $0x110] sm:$0xff]
        %v7787 = vld [vmem:[%s1608 + $0x118] sm:$0xff]
        %v7788 = vld [vmem:[%s1608 + $0x120] sm:$0xff]
        %v7789 = vld [vmem:[%s1608 + $0x128] sm:$0xff]
        %v7790 = vld [vmem:[%s1608 + $0x130] sm:$0xff]
        %v7791 = vld [vmem:[%s1608 + $0x138] sm:$0xff]
        %v7792 = vld [vmem:[%s1608 + $0x140] sm:$0xff]
        %v7793 = vld [vmem:[%s1608 + $0x148] sm:$0xff]
        %v7794 = vld [vmem:[%s1608 + $0x150] sm:$0xff]
        %v7795 = vld [vmem:[%s1608 + $0x158] sm:$0xff]
        %v7796 = vld [vmem:[%s1608 + $0x160] sm:$0xff]
        %v7797 = vld [vmem:[%s1608 + $0x168] sm:$0xff]
        %v7798 = vld [vmem:[%s1608 + $0x170] sm:$0xff]
        %v7799 = vld [vmem:[%s1608 + $0x178] sm:$0xff]
        %v7800 = vld [vmem:[%s1608 + $0x180] sm:$0xff]
        %v7801 = vld [vmem:[%s1608 + $0x188] sm:$0xff]
        %v7802 = vld [vmem:[%s1608 + $0x190] sm:$0xff]
        %v7803 = vld [vmem:[%s1608 + $0x198] sm:$0xff]
        %v7804 = vld [vmem:[%s1608 + $0x1a0] sm:$0xff]
        %v7805 = vld [vmem:[%s1608 + $0x1a8] sm:$0xff]
        %v7806 = vld [vmem:[%s1608 + $0x1b0] sm:$0xff]
        %v7807 = vld [vmem:[%s1608 + $0x1b8] sm:$0xff]
        %v7808 = vld [vmem:[%s1608 + $0x1c0] sm:$0xff]
        %v7809 = vld [vmem:[%s1608 + $0x1c8] sm:$0xff]
        %v7810 = vld [vmem:[%s1608 + $0x1d0] sm:$0xff]
        %v7811 = vld [vmem:[%s1608 + $0x1d8] sm:$0xff]
        %v7812 = vld [vmem:[%s1608 + $0x1e0] sm:$0xff]
        %v7813 = vld [vmem:[%s1608 + $0x1e8] sm:$0xff]
        %v7814 = vld [vmem:[%s1608 + $0x1f0] sm:$0xff]
        %v7815 = vld [vmem:[%s1608 + $0x1f8] sm:$0xff]
        %v7816 = vld [vmem:[%s1608 + $0x200] sm:$0xff]
        %v7817 = vld [vmem:[%s1608 + $0x208] sm:$0xff]
        %v7818 = vld [vmem:[%s1608 + $0x210] sm:$0xff]
        %v7819 = vld [vmem:[%s1608 + $0x218] sm:$0xff]
        %v7820 = vld [vmem:[%s1608 + $0x220] sm:$0xff]
        %v7821 = vld [vmem:[%s1608 + $0x228] sm:$0xff]
        %v7822 = vld [vmem:[%s1608 + $0x230] sm:$0xff]
        %v7823 = vld [vmem:[%s1608 + $0x238] sm:$0xff]
        %v7824 = vld [vmem:[%s1608 + $0x240] sm:$0xff]
        %v7825 = vld [vmem:[%s1608 + $0x248] sm:$0xff]
        %v7826 = vld [vmem:[%s1608 + $0x250] sm:$0xff]
        %v7827 = vld [vmem:[%s1608 + $0x258] sm:$0xff]
        %v7828 = vld [vmem:[%s1608 + $0x260] sm:$0xff]
        %v7829 = vld [vmem:[%s1608 + $0x268] sm:$0xff]
        %v7830 = vld [vmem:[%s1608 + $0x270] sm:$0xff]
        %v7831 = vld [vmem:[%s1608 + $0x278] sm:$0xff]
        %v7832 = vld [vmem:[%s1608 + $0x280] sm:$0xff]
        %v7833 = vld [vmem:[%s1608 + $0x288] sm:$0xff]
        %v7834 = vld [vmem:[%s1608 + $0x290] sm:$0xff]
        %v7835 = vld [vmem:[%s1608 + $0x298] sm:$0xff]
        %v7836 = vld [vmem:[%s1608 + $0x2a0] sm:$0xff]
        %v7837 = vld [vmem:[%s1608 + $0x2a8] sm:$0xff]
        %v7838 = vld [vmem:[%s1608 + $0x2b0] sm:$0xff]
        %v7839 = vld [vmem:[%s1608 + $0x2b8] sm:$0xff]
        %v7840 = vld [vmem:[%s1608 + $0x2c0] sm:$0xff]
        %v7841 = vld [vmem:[%s1608 + $0x2c8] sm:$0xff]
        %v7842 = vld [vmem:[%s1608 + $0x2d0] sm:$0xff]
        %v7843 = vld [vmem:[%s1608 + $0x2d8] sm:$0xff]
        %v7844 = vld [vmem:[%s1608 + $0x2e0] sm:$0xff]
        %v7845 = vld [vmem:[%s1608 + $0x2e8] sm:$0xff]
        %v7846 = vld [vmem:[%s1608 + $0x2f0] sm:$0xff]
        %v7847 = vld [vmem:[%s1608 + $0x2f8] sm:$0xff]
        %v7848 = vpack.c.bf16 %v7744, %v7742
        %v7849 = vpack.c.bf16 %v7745, %v7743
        %v7850 = vpack.c.bf16 %v7748, %v7746
        %v7851 = vpack.c.bf16 %v7749, %v7747
        %v7852 = vpack.c.bf16 %v7750, %v7750
        %v7853 = vpack.c.bf16 %v7751, %v7751
        %v7854 = vld [vmem:[%s1617] sm:$0x3f]
        %v7856 = vlaneseq
        %v7857 = vshrl.u32 %v7856, 7
        %v7858 = vsub.s32 0, %v7857
        %v7859 = vrot.slane %v7854, %v7858
        %v7860 = vlaneseq
        %v7861 = vshrl.u32 %v7860, 7
        %v7862 = vsub.s32 1, %v7861
        %v7863 = vrot.slane %v7854, %v7862
        %v7864 = vlaneseq
        %v7865 = vshrl.u32 %v7864, 7
        %v7866 = vsub.s32 2, %v7865
        %v7867 = vrot.slane %v7854, %v7866
        %v7868 = vlaneseq
        %v7869 = vshrl.u32 %v7868, 7
        %v7870 = vsub.s32 3, %v7869
        %v7871 = vrot.slane %v7854, %v7870
        %v7872 = vlaneseq
        %v7873 = vshrl.u32 %v7872, 7
        %v7874 = vsub.s32 4, %v7873
        %v7875 = vrot.slane %v7854, %v7874
        %v7876 = vlaneseq
        %v7877 = vshrl.u32 %v7876, 7
        %v7878 = vsub.s32 5, %v7877
        %v7879 = vrot.slane %v7854, %v7878
        %v7982 = vunpack.c.l.b16 %v7752
        %v7983 = vunpack.c.h.b16 %v7752
        %v7984 = vunpack.c.l.b16 %v7753
        %v7985 = vunpack.c.h.b16 %v7753
        %v7986 = vunpack.c.l.b16 %v7754
        %v7987 = vunpack.c.h.b16 %v7754
        %v7988 = vunpack.c.l.b16 %v7755
        %v7989 = vunpack.c.h.b16 %v7755
        %v7990 = vunpack.c.l.b16 %v7756
        %v7991 = vunpack.c.h.b16 %v7756
        %v7992 = vunpack.c.l.b16 %v7757
        %v7993 = vunpack.c.h.b16 %v7757
        %v7994 = vunpack.c.l.b16 %v7758
        %v7995 = vunpack.c.h.b16 %v7758
        %v7996 = vunpack.c.l.b16 %v7759
        %v7997 = vunpack.c.h.b16 %v7759
        %v7998 = vunpack.c.l.b16 %v7760
        %v7999 = vunpack.c.h.b16 %v7760
        %v8000 = vunpack.c.l.b16 %v7761
        %v8001 = vunpack.c.h.b16 %v7761
        %v8002 = vunpack.c.l.b16 %v7762
        %v8003 = vunpack.c.h.b16 %v7762
        %v8004 = vunpack.c.l.b16 %v7763
        %v8005 = vunpack.c.h.b16 %v7763
        %v8006 = vunpack.c.l.b16 %v7764
        %v8007 = vunpack.c.h.b16 %v7764
        %v8008 = vunpack.c.l.b16 %v7765
        %v8009 = vunpack.c.h.b16 %v7765
        %v8010 = vunpack.c.l.b16 %v7766
        %v8011 = vunpack.c.h.b16 %v7766
        %v8012 = vunpack.c.l.b16 %v7767
        %v8013 = vunpack.c.h.b16 %v7767
        %v8014 = vunpack.c.l.b16 %v7768
        %v8015 = vunpack.c.h.b16 %v7768
        %v8016 = vunpack.c.l.b16 %v7769
        %v8017 = vunpack.c.h.b16 %v7769
        %v8018 = vunpack.c.l.b16 %v7770
        %v8019 = vunpack.c.h.b16 %v7770
        %v8020 = vunpack.c.l.b16 %v7771
        %v8021 = vunpack.c.h.b16 %v7771
        %v8022 = vunpack.c.l.b16 %v7772
        %v8023 = vunpack.c.h.b16 %v7772
        %v8024 = vunpack.c.l.b16 %v7773
        %v8025 = vunpack.c.h.b16 %v7773
        %v8026 = vunpack.c.l.b16 %v7774
        %v8027 = vunpack.c.h.b16 %v7774
        %v8028 = vunpack.c.l.b16 %v7775
        %v8029 = vunpack.c.h.b16 %v7775
        %v8030 = vunpack.c.l.b16 %v7776
        %v8031 = vunpack.c.h.b16 %v7776
        %v8032 = vunpack.c.l.b16 %v7777
        %v8033 = vunpack.c.h.b16 %v7777
        %v8034 = vunpack.c.l.b16 %v7778
        %v8035 = vunpack.c.h.b16 %v7778
        %v8036 = vunpack.c.l.b16 %v7779
        %v8037 = vunpack.c.h.b16 %v7779
        %v8038 = vunpack.c.l.b16 %v7780
        %v8039 = vunpack.c.h.b16 %v7780
        %v8040 = vunpack.c.l.b16 %v7781
        %v8041 = vunpack.c.h.b16 %v7781
        %v8042 = vunpack.c.l.b16 %v7782
        %v8043 = vunpack.c.h.b16 %v7782
        %v8044 = vunpack.c.l.b16 %v7783
        %v8045 = vunpack.c.h.b16 %v7783
        %v8046 = vunpack.c.l.b16 %v7784
        %v8047 = vunpack.c.h.b16 %v7784
        %v8048 = vunpack.c.l.b16 %v7785
        %v8049 = vunpack.c.h.b16 %v7785
        %v8050 = vunpack.c.l.b16 %v7786
        %v8051 = vunpack.c.h.b16 %v7786
        %v8052 = vunpack.c.l.b16 %v7787
        %v8053 = vunpack.c.h.b16 %v7787
        %v8054 = vunpack.c.l.b16 %v7788
        %v8055 = vunpack.c.h.b16 %v7788
        %v8056 = vunpack.c.l.b16 %v7789
        %v8057 = vunpack.c.h.b16 %v7789
        %v8058 = vunpack.c.l.b16 %v7790
        %v8059 = vunpack.c.h.b16 %v7790
        %v8060 = vunpack.c.l.b16 %v7791
        %v8061 = vunpack.c.h.b16 %v7791
        %v8062 = vunpack.c.l.b16 %v7792
        %v8063 = vunpack.c.h.b16 %v7792
        %v8064 = vunpack.c.l.b16 %v7793
        %v8065 = vunpack.c.h.b16 %v7793
        %v8066 = vunpack.c.l.b16 %v7794
        %v8067 = vunpack.c.h.b16 %v7794
        %v8068 = vunpack.c.l.b16 %v7795
        %v8069 = vunpack.c.h.b16 %v7795
        %v8070 = vunpack.c.l.b16 %v7796
        %v8071 = vunpack.c.h.b16 %v7796
        %v8072 = vunpack.c.l.b16 %v7797
        %v8073 = vunpack.c.h.b16 %v7797
        %v8074 = vunpack.c.l.b16 %v7798
        %v8075 = vunpack.c.h.b16 %v7798
        %v8076 = vunpack.c.l.b16 %v7799
        %v8077 = vunpack.c.h.b16 %v7799
        %v8078 = vunpack.c.l.b16 %v7800
        %v8079 = vunpack.c.h.b16 %v7800
        %v8080 = vunpack.c.l.b16 %v7801
        %v8081 = vunpack.c.h.b16 %v7801
        %v8082 = vunpack.c.l.b16 %v7802
        %v8083 = vunpack.c.h.b16 %v7802
        %v8084 = vunpack.c.l.b16 %v7803
        %v8085 = vunpack.c.h.b16 %v7803
        %v8086 = vunpack.c.l.b16 %v7804
        %v8087 = vunpack.c.h.b16 %v7804
        %v8088 = vunpack.c.l.b16 %v7805
        %v8089 = vunpack.c.h.b16 %v7805
        %v8090 = vunpack.c.l.b16 %v7806
        %v8091 = vunpack.c.h.b16 %v7806
        %v8092 = vunpack.c.l.b16 %v7807
        %v8093 = vunpack.c.h.b16 %v7807
        %v8094 = vunpack.c.l.b16 %v7808
        %v8095 = vunpack.c.h.b16 %v7808
        %v8096 = vunpack.c.l.b16 %v7809
        %v8097 = vunpack.c.h.b16 %v7809
        %v8098 = vunpack.c.l.b16 %v7810
        %v8099 = vunpack.c.h.b16 %v7810
        %v8100 = vunpack.c.l.b16 %v7811
        %v8101 = vunpack.c.h.b16 %v7811
        %v8102 = vunpack.c.l.b16 %v7812
        %v8103 = vunpack.c.h.b16 %v7812
        %v8104 = vunpack.c.l.b16 %v7813
        %v8105 = vunpack.c.h.b16 %v7813
        %v8106 = vunpack.c.l.b16 %v7814
        %v8107 = vunpack.c.h.b16 %v7814
        %v8108 = vunpack.c.l.b16 %v7815
        %v8109 = vunpack.c.h.b16 %v7815
        %v8110 = vunpack.c.l.b16 %v7816
        %v8111 = vunpack.c.h.b16 %v7816
        %v8112 = vunpack.c.l.b16 %v7817
        %v8113 = vunpack.c.h.b16 %v7817
        %v8114 = vunpack.c.l.b16 %v7818
        %v8115 = vunpack.c.h.b16 %v7818
        %v8116 = vunpack.c.l.b16 %v7819
        %v8117 = vunpack.c.h.b16 %v7819
        %v8118 = vunpack.c.l.b16 %v7820
        %v8119 = vunpack.c.h.b16 %v7820
        %v8120 = vunpack.c.l.b16 %v7821
        %v8121 = vunpack.c.h.b16 %v7821
        %v8122 = vunpack.c.l.b16 %v7822
        %v8123 = vunpack.c.h.b16 %v7822
        %v8124 = vunpack.c.l.b16 %v7823
        %v8125 = vunpack.c.h.b16 %v7823
        %v8126 = vunpack.c.l.b16 %v7824
        %v8127 = vunpack.c.h.b16 %v7824
        %v8128 = vunpack.c.l.b16 %v7825
        %v8129 = vunpack.c.h.b16 %v7825
        %v8130 = vunpack.c.l.b16 %v7826
        %v8131 = vunpack.c.h.b16 %v7826
        %v8132 = vunpack.c.l.b16 %v7827
        %v8133 = vunpack.c.h.b16 %v7827
        %v8134 = vunpack.c.l.b16 %v7828
        %v8135 = vunpack.c.h.b16 %v7828
        %v8136 = vunpack.c.l.b16 %v7829
        %v8137 = vunpack.c.h.b16 %v7829
        %v8138 = vunpack.c.l.b16 %v7830
        %v8139 = vunpack.c.h.b16 %v7830
        %v8140 = vunpack.c.l.b16 %v7831
        %v8141 = vunpack.c.h.b16 %v7831
        %v8142 = vunpack.c.l.b16 %v7832
        %v8143 = vunpack.c.h.b16 %v7832
        %v8144 = vunpack.c.l.b16 %v7833
        %v8145 = vunpack.c.h.b16 %v7833
        %v8146 = vunpack.c.l.b16 %v7834
        %v8147 = vunpack.c.h.b16 %v7834
        %v8148 = vunpack.c.l.b16 %v7835
        %v8149 = vunpack.c.h.b16 %v7835
        %v8150 = vunpack.c.l.b16 %v7836
        %v8151 = vunpack.c.h.b16 %v7836
        %v8152 = vunpack.c.l.b16 %v7837
        %v8153 = vunpack.c.h.b16 %v7837
        %v8154 = vunpack.c.l.b16 %v7838
        %v8155 = vunpack.c.h.b16 %v7838
        %v8156 = vunpack.c.l.b16 %v7839
        %v8157 = vunpack.c.h.b16 %v7839
        %v8158 = vunpack.c.l.b16 %v7840
        %v8159 = vunpack.c.h.b16 %v7840
        %v8160 = vunpack.c.l.b16 %v7841
        %v8161 = vunpack.c.h.b16 %v7841
        %v8162 = vunpack.c.l.b16 %v7842
        %v8163 = vunpack.c.h.b16 %v7842
        %v8164 = vunpack.c.l.b16 %v7843
        %v8165 = vunpack.c.h.b16 %v7843
        %v8166 = vunpack.c.l.b16 %v7844
        %v8167 = vunpack.c.h.b16 %v7844
        %v8168 = vunpack.c.l.b16 %v7845
        %v8169 = vunpack.c.h.b16 %v7845
        %v8170 = vunpack.c.l.b16 %v7846
        %v8171 = vunpack.c.h.b16 %v7846
        %v8172 = vunpack.c.l.b16 %v7847
        %v8173 = vunpack.c.h.b16 %v7847
        %v8174 = vpack.c.b16 %v7988, %v7982
        %v8175 = vpack.c.b16 %v7989, %v7983
        %v8176 = vpack.c.b16 %v7990, %v7984
        %v8177 = vpack.c.b16 %v7991, %v7985
        %v8178 = vpack.c.b16 %v7992, %v7986
        %v8179 = vpack.c.b16 %v7993, %v7987
        %v8180 = vpack.c.b16 %v8000, %v7994
        %v8181 = vpack.c.b16 %v8001, %v7995
        %v8182 = vpack.c.b16 %v8002, %v7996
        %v8183 = vpack.c.b16 %v8003, %v7997
        %v8184 = vpack.c.b16 %v8004, %v7998
        %v8185 = vpack.c.b16 %v8005, %v7999
        %v8186 = vpack.c.b16 %v8012, %v8006
        %v8187 = vpack.c.b16 %v8013, %v8007
        %v8188 = vpack.c.b16 %v8014, %v8008
        %v8189 = vpack.c.b16 %v8015, %v8009
        %v8190 = vpack.c.b16 %v8016, %v8010
        %v8191 = vpack.c.b16 %v8017, %v8011
        %v8192 = vpack.c.b16 %v8024, %v8018
        %v8193 = vpack.c.b16 %v8025, %v8019
        %v8194 = vpack.c.b16 %v8026, %v8020
        %v8195 = vpack.c.b16 %v8027, %v8021
        %v8196 = vpack.c.b16 %v8028, %v8022
        %v8197 = vpack.c.b16 %v8029, %v8023
        %v8198 = vpack.c.b16 %v8036, %v8030
        %v8199 = vpack.c.b16 %v8037, %v8031
        %v8200 = vpack.c.b16 %v8038, %v8032
        %v8201 = vpack.c.b16 %v8039, %v8033
        %v8202 = vpack.c.b16 %v8040, %v8034
        %v8203 = vpack.c.b16 %v8041, %v8035
        %v8204 = vpack.c.b16 %v8048, %v8042
        %v8205 = vpack.c.b16 %v8049, %v8043
        %v8206 = vpack.c.b16 %v8050, %v8044
        %v8207 = vpack.c.b16 %v8051, %v8045
        %v8208 = vpack.c.b16 %v8052, %v8046
        %v8209 = vpack.c.b16 %v8053, %v8047
        %v8210 = vpack.c.b16 %v8060, %v8054
        %v8211 = vpack.c.b16 %v8061, %v8055
        %v8212 = vpack.c.b16 %v8062, %v8056
        %v8213 = vpack.c.b16 %v8063, %v8057
        %v8214 = vpack.c.b16 %v8064, %v8058
        %v8215 = vpack.c.b16 %v8065, %v8059
        %v8216 = vpack.c.b16 %v8072, %v8066
        %v8217 = vpack.c.b16 %v8073, %v8067
        %v8218 = vpack.c.b16 %v8074, %v8068
        %v8219 = vpack.c.b16 %v8075, %v8069
        %v8220 = vpack.c.b16 %v8076, %v8070
        %v8221 = vpack.c.b16 %v8077, %v8071
        %v8222 = vpack.c.b16 %v8084, %v8078
        %v8223 = vpack.c.b16 %v8085, %v8079
        %v8224 = vpack.c.b16 %v8086, %v8080
        %v8225 = vpack.c.b16 %v8087, %v8081
        %v8226 = vpack.c.b16 %v8088, %v8082
        %v8227 = vpack.c.b16 %v8089, %v8083
        %v8228 = vpack.c.b16 %v8096, %v8090
        %v8229 = vpack.c.b16 %v8097, %v8091
        %v8230 = vpack.c.b16 %v8098, %v8092
        %v8231 = vpack.c.b16 %v8099, %v8093
        %v8232 = vpack.c.b16 %v8100, %v8094
        %v8233 = vpack.c.b16 %v8101, %v8095
        %v8234 = vpack.c.b16 %v8108, %v8102
        %v8235 = vpack.c.b16 %v8109, %v8103
        %v8236 = vpack.c.b16 %v8110, %v8104
        %v8237 = vpack.c.b16 %v8111, %v8105
        %v8238 = vpack.c.b16 %v8112, %v8106
        %v8239 = vpack.c.b16 %v8113, %v8107
        %v8240 = vpack.c.b16 %v8120, %v8114
        %v8241 = vpack.c.b16 %v8121, %v8115
        %v8242 = vpack.c.b16 %v8122, %v8116
        %v8243 = vpack.c.b16 %v8123, %v8117
        %v8244 = vpack.c.b16 %v8124, %v8118
        %v8245 = vpack.c.b16 %v8125, %v8119
        %v8246 = vpack.c.b16 %v8132, %v8126
        %v8247 = vpack.c.b16 %v8133, %v8127
        %v8248 = vpack.c.b16 %v8134, %v8128
        %v8249 = vpack.c.b16 %v8135, %v8129
        %v8250 = vpack.c.b16 %v8136, %v8130
        %v8251 = vpack.c.b16 %v8137, %v8131
        %v8252 = vpack.c.b16 %v8144, %v8138
        %v8253 = vpack.c.b16 %v8145, %v8139
        %v8254 = vpack.c.b16 %v8146, %v8140
        %v8255 = vpack.c.b16 %v8147, %v8141
        %v8256 = vpack.c.b16 %v8148, %v8142
        %v8257 = vpack.c.b16 %v8149, %v8143
        %v8258 = vpack.c.b16 %v8156, %v8150
        %v8259 = vpack.c.b16 %v8157, %v8151
        %v8260 = vpack.c.b16 %v8158, %v8152
        %v8261 = vpack.c.b16 %v8159, %v8153
        %v8262 = vpack.c.b16 %v8160, %v8154
        %v8263 = vpack.c.b16 %v8161, %v8155
        %v8264 = vpack.c.b16 %v8168, %v8162
        %v8265 = vpack.c.b16 %v8169, %v8163
        %v8266 = vpack.c.b16 %v8170, %v8164
        %v8267 = vpack.c.b16 %v8171, %v8165
        %v8268 = vpack.c.b16 %v8172, %v8166
        %v8269 = vpack.c.b16 %v8173, %v8167
        %8366 = vmatprep.subr.bf16.mxu0 %v8175
        %8367 = vmatpush1.bf16.msra.mxu0 %v8174
        %8368 = vmatprep.subr.bf16.mxu0 %v8181
        %8369 = vmatpush1.bf16.msra.mxu0 %v8180
        %8370 = vmatprep.subr.bf16.mxu0 %v8187
        %8371 = vmatpush1.bf16.msra.mxu0 %v8186
        %8372 = vmatprep.subr.bf16.mxu0 %v8193
        %8373 = vmatpush1.bf16.msra.mxu0 %v8192
        %8374 = vmatprep.subr.bf16.mxu0 %v8199
        %8375 = vmatpush1.bf16.msra.mxu0 %v8198
        %8376 = vmatprep.subr.bf16.mxu0 %v8205
        %8377 = vmatpush1.bf16.msra.mxu0 %v8204
        %8378 = vmatprep.subr.bf16.mxu0 %v8211
        %8379 = vmatpush1.bf16.msra.mxu0 %v8210
        %8380 = vmatprep.subr.bf16.mxu0 %v8217
        %8381 = vmatpush1.bf16.msra.mxu0 %v8216
        %8382 = vmatprep.subr.bf16.mxu0 %v8223
        %8383 = vmatpush1.bf16.msra.mxu0 %v8222
        %8384 = vmatprep.subr.bf16.mxu0 %v8229
        %8385 = vmatpush1.bf16.msra.mxu0 %v8228
        %8386 = vmatprep.subr.bf16.mxu0 %v8235
        %8387 = vmatpush1.bf16.msra.mxu0 %v8234
        %8388 = vmatprep.subr.bf16.mxu0 %v8241
        %8389 = vmatpush1.bf16.msra.mxu0 %v8240
        %8390 = vmatprep.subr.bf16.mxu0 %v8247
        %8391 = vmatpush1.bf16.msra.mxu0 %v8246
        %8392 = vmatprep.subr.bf16.mxu0 %v8253
        %8393 = vmatpush1.bf16.msra.mxu0 %v8252
        %8394 = vmatprep.subr.bf16.mxu0 %v8259
        %8395 = vmatpush1.bf16.msra.mxu0 %v8258
        %8396 = vmatprep.subr.bf16.mxu0 %v8265
        %8397 = vmatpush1.bf16.msra.mxu0 %v8264
        %8398 = vmatprep.mubr.bf16.mxu0 %v7849
        %8399 = vmatmul.mubr.bf16.gmra.mrb[0].mxu0 %v7848
        %v8400 = vpop.f32.mrb[0].mxu0
        %v8401 = vadd.f32 %v7859, %v8400
        %v8402 = vpop.f32.mrb[0].mxu0
        %v8403 = vadd.f32 %v7863, %v8402
        %v8404 = vpop.f32.mrb[0].mxu0
        %v8405 = vadd.f32 %v7859, %v8404
        %v8406 = vpop.f32.mrb[0].mxu0
        %v8407 = vadd.f32 %v7863, %v8406
        %8408 = vmatprep.mubr.bf16.mxu0 %v7851
        %8409 = vmatmul.mubr.bf16.gmra.mrb[0].mxu0 %v7850
        %v8410 = vpop.f32.mrb[0].mxu0
        %v8411 = vadd.f32 %v7859, %v8410
        %v8412 = vpop.f32.mrb[0].mxu0
        %v8413 = vadd.f32 %v7863, %v8412
        %v8414 = vpop.f32.mrb[0].mxu0
        %v8415 = vadd.f32 %v7859, %v8414
        %v8416 = vpop.f32.mrb[0].mxu0
        %v8417 = vadd.f32 %v7863, %v8416
        %8418 = vmatprep.mubr.bf16.mxu0 %v7853
        %8419 = vmatmul.mubr.bf16.gmra.mrb[0].mxu0 %v7852
        %v8420 = vpop.f32.mrb[0].mxu0
        %v8421 = vadd.f32 %v7859, %v8420
        %v8422 = vpop.f32.mrb[0].mxu0
        %v8423 = vadd.f32 %v7863, %v8422
        %v8424 = vpop.f32.mrb[0].mxu0
        %v8425 = vpop.f32.mrb[0].mxu0
        %8426 = vdwg.mxu0
        %8427 = vmatprep.subr.bf16.mxu0 %v8177
        %8428 = vmatpush1.bf16.msra.mxu0 %v8176
        %8429 = vmatprep.subr.bf16.mxu0 %v8183
        %8430 = vmatpush1.bf16.msra.mxu0 %v8182
        %8431 = vmatprep.subr.bf16.mxu0 %v8189
        %8432 = vmatpush1.bf16.msra.mxu0 %v8188
        %8433 = vmatprep.subr.bf16.mxu0 %v8195
        %8434 = vmatpush1.bf16.msra.mxu0 %v8194
        %8435 = vmatprep.subr.bf16.mxu0 %v8201
        %8436 = vmatpush1.bf16.msra.mxu0 %v8200
        %8437 = vmatprep.subr.bf16.mxu0 %v8207
        %8438 = vmatpush1.bf16.msra.mxu0 %v8206
        %8439 = vmatprep.subr.bf16.mxu0 %v8213
        %8440 = vmatpush1.bf16.msra.mxu0 %v8212
        %8441 = vmatprep.subr.bf16.mxu0 %v8219
        %8442 = vmatpush1.bf16.msra.mxu0 %v8218
        %8443 = vmatprep.subr.bf16.mxu0 %v8225
        %8444 = vmatpush1.bf16.msra.mxu0 %v8224
        %8445 = vmatprep.subr.bf16.mxu0 %v8231
        %8446 = vmatpush1.bf16.msra.mxu0 %v8230
        %8447 = vmatprep.subr.bf16.mxu0 %v8237
        %8448 = vmatpush1.bf16.msra.mxu0 %v8236
        %8449 = vmatprep.subr.bf16.mxu0 %v8243
        %8450 = vmatpush1.bf16.msra.mxu0 %v8242
        %8451 = vmatprep.subr.bf16.mxu0 %v8249
        %8452 = vmatpush1.bf16.msra.mxu0 %v8248
        %8453 = vmatprep.subr.bf16.mxu0 %v8255
        %8454 = vmatpush1.bf16.msra.mxu0 %v8254
        %8455 = vmatprep.subr.bf16.mxu0 %v8261
        %8456 = vmatpush1.bf16.msra.mxu0 %v8260
        %8457 = vmatprep.subr.bf16.mxu0 %v8267
        %8458 = vmatpush1.bf16.msra.mxu0 %v8266
        %8459 = vmatprep.mubr.bf16.mxu0 %v7849
        %8460 = vmatmul.mubr.bf16.gmra.mrb[0].mxu0 %v7848
        %v8461 = vpop.f32.mrb[0].mxu0
        %v8462 = vadd.f32 %v7867, %v8461
        %v8463 = vpop.f32.mrb[0].mxu0
        %v8464 = vadd.f32 %v7871, %v8463
        %v8465 = vpop.f32.mrb[0].mxu0
        %v8466 = vadd.f32 %v7867, %v8465
        %v8467 = vpop.f32.mrb[0].mxu0
        %v8468 = vadd.f32 %v7871, %v8467
        %8469 = vmatprep.mubr.bf16.mxu0 %v7851
        %8470 = vmatmul.mubr.bf16.gmra.mrb[0].mxu0 %v7850
        %v8471 = vpop.f32.mrb[0].mxu0
        %v8472 = vadd.f32 %v7867, %v8471
        %v8473 = vpop.f32.mrb[0].mxu0
        %v8474 = vadd.f32 %v7871, %v8473
        %v8475 = vpop.f32.mrb[0].mxu0
        %v8476 = vadd.f32 %v7867, %v8475
        %v8477 = vpop.f32.mrb[0].mxu0
        %v8478 = vadd.f32 %v7871, %v8477
        %8479 = vmatprep.mubr.bf16.mxu0 %v7853
        %8480 = vmatmul.mubr.bf16.gmra.mrb[0].mxu0 %v7852
        %v8481 = vpop.f32.mrb[0].mxu0
        %v8482 = vadd.f32 %v7867, %v8481
        %v8483 = vpop.f32.mrb[0].mxu0
        %v8484 = vadd.f32 %v7871, %v8483
        %v8485 = vpop.f32.mrb[0].mxu0
        %v8486 = vpop.f32.mrb[0].mxu0
        %8487 = vdwg.mxu0
        %8488 = vmatprep.subr.bf16.mxu0 %v8179
        %8489 = vmatpush1.bf16.msra.mxu0 %v8178
        %8490 = vmatprep.subr.bf16.mxu0 %v8185
        %8491 = vmatpush1.bf16.msra.mxu0 %v8184
        %8492 = vmatprep.subr.bf16.mxu0 %v8191
        %8493 = vmatpush1.bf16.msra.mxu0 %v8190
        %8494 = vmatprep.subr.bf16.mxu0 %v8197
        %8495 = vmatpush1.bf16.msra.mxu0 %v8196
        %8496 = vmatprep.subr.bf16.mxu0 %v8203
        %8497 = vmatpush1.bf16.msra.mxu0 %v8202
        %8498 = vmatprep.subr.bf16.mxu0 %v8209
        %8499 = vmatpush1.bf16.msra.mxu0 %v8208
        %8500 = vmatprep.subr.bf16.mxu0 %v8215
        %8501 = vmatpush1.bf16.msra.mxu0 %v8214
        %8502 = vmatprep.subr.bf16.mxu0 %v8221
        %8503 = vmatpush1.bf16.msra.mxu0 %v8220
        %8504 = vmatprep.subr.bf16.mxu0 %v8227
        %8505 = vmatpush1.bf16.msra.mxu0 %v8226
        %8506 = vmatprep.subr.bf16.mxu0 %v8233
        %8507 = vmatpush1.bf16.msra.mxu0 %v8232
        %8508 = vmatprep.subr.bf16.mxu0 %v8239
        %8509 = vmatpush1.bf16.msra.mxu0 %v8238
        %8510 = vmatprep.subr.bf16.mxu0 %v8245
        %8511 = vmatpush1.bf16.msra.mxu0 %v8244
        %8512 = vmatprep.subr.bf16.mxu0 %v8251
        %8513 = vmatpush1.bf16.msra.mxu0 %v8250
        %8514 = vmatprep.subr.bf16.mxu0 %v8257
        %8515 = vmatpush1.bf16.msra.mxu0 %v8256
        %8516 = vmatprep.subr.bf16.mxu0 %v8263
        %8517 = vmatpush1.bf16.msra.mxu0 %v8262
        %8518 = vmatprep.subr.bf16.mxu0 %v8269
        %8519 = vmatpush1.bf16.msra.mxu0 %v8268
        %8520 = vmatprep.mubr.bf16.mxu0 %v7849
        %8521 = vmatmul.mubr.bf16.gmra.mrb[0].mxu0 %v7848
        %v8522 = vpop.f32.mrb[0].mxu0
        %v8523 = vadd.f32 %v7875, %v8522
        %v8524 = vpop.f32.mrb[0].mxu0
        %v8525 = vadd.f32 %v7879, %v8524
        %v8526 = vpop.f32.mrb[0].mxu0
        %v8527 = vadd.f32 %v7875, %v8526
        %v8528 = vpop.f32.mrb[0].mxu0
        %v8529 = vadd.f32 %v7879, %v8528
        %8530 = vmatprep.mubr.bf16.mxu0 %v7851
        %8531 = vmatmul.mubr.bf16.gmra.mrb[0].mxu0 %v7850
        %v8532 = vpop.f32.mrb[0].mxu0
        %v8533 = vadd.f32 %v7875, %v8532
        %v8534 = vpop.f32.mrb[0].mxu0
        %v8535 = vadd.f32 %v7879, %v8534
        %v8536 = vpop.f32.mrb[0].mxu0
        %v8537 = vadd.f32 %v7875, %v8536
        %v8538 = vpop.f32.mrb[0].mxu0
        %v8539 = vadd.f32 %v7879, %v8538
        %8540 = vmatprep.mubr.bf16.mxu0 %v7853
        %8541 = vmatmul.mubr.bf16.gmra.mrb[0].mxu0 %v7852
        %v8542 = vpop.f32.mrb[0].mxu0
        %v8543 = vadd.f32 %v7875, %v8542
        %v8544 = vpop.f32.mrb[0].mxu0
        %v8545 = vadd.f32 %v7879, %v8544
        %v8546 = vpop.f32.mrb[0].mxu0
        %v8547 = vpop.f32.mrb[0].mxu0
        %8548 = vdwg.mxu0
        %v8549 = vmul.f32 %v8401, %v8401
        %v8550 = vmul.f32 %v8403, %v8403
        %v8551 = vmul.f32 %v8462, %v8462
        %v8552 = vmul.f32 %v8464, %v8464
        %v8553 = vmul.f32 %v8523, %v8523
        %v8554 = vmul.f32 %v8525, %v8525
        %v8555 = vmul.f32 %v8405, %v8405
        %v8556 = vmul.f32 %v8407, %v8407
        %v8557 = vmul.f32 %v8466, %v8466
        %v8558 = vmul.f32 %v8468, %v8468
        %v8559 = vmul.f32 %v8527, %v8527
        %v8560 = vmul.f32 %v8529, %v8529
        %v8561 = vmul.f32 %v8411, %v8411
        %v8562 = vmul.f32 %v8413, %v8413
        %v8563 = vmul.f32 %v8472, %v8472
        %v8564 = vmul.f32 %v8474, %v8474
        %v8565 = vmul.f32 %v8533, %v8533
        %v8566 = vmul.f32 %v8535, %v8535
        %v8567 = vmul.f32 %v8415, %v8415
        %v8568 = vmul.f32 %v8417, %v8417
        %v8569 = vmul.f32 %v8476, %v8476
        %v8570 = vmul.f32 %v8478, %v8478
        %v8571 = vmul.f32 %v8537, %v8537
        %v8572 = vmul.f32 %v8539, %v8539
        %v8573 = vmul.f32 %v8421, %v8421
        %v8574 = vmul.f32 %v8423, %v8423
        %v8575 = vmul.f32 %v8482, %v8482
        %v8576 = vmul.f32 %v8484, %v8484
        %v8577 = vmul.f32 %v8543, %v8543
        %v8578 = vmul.f32 %v8545, %v8545
        %v8579 = vmul.f32 %v8401, %v8549
        %v8580 = vmul.f32 %v8403, %v8550
        %v8581 = vmul.f32 %v8462, %v8551
        %v8582 = vmul.f32 %v8464, %v8552
        %v8583 = vmul.f32 %v8523, %v8553
        %v8584 = vmul.f32 %v8525, %v8554
        %v8585 = vmul.f32 %v8405, %v8555
        %v8586 = vmul.f32 %v8407, %v8556
        %v8587 = vmul.f32 %v8466, %v8557
        %v8588 = vmul.f32 %v8468, %v8558
        %v8589 = vmul.f32 %v8527, %v8559
        %v8590 = vmul.f32 %v8529, %v8560
        %v8591 = vmul.f32 %v8411, %v8561
        %v8592 = vmul.f32 %v8413, %v8562
        %v8593 = vmul.f32 %v8472, %v8563
        %v8594 = vmul.f32 %v8474, %v8564
        %v8595 = vmul.f32 %v8533, %v8565
        %v8596 = vmul.f32 %v8535, %v8566
        %v8597 = vmul.f32 %v8415, %v8567
        %v8598 = vmul.f32 %v8417, %v8568
        %v8599 = vmul.f32 %v8476, %v8569
        %v8600 = vmul.f32 %v8478, %v8570
        %v8601 = vmul.f32 %v8537, %v8571
        %v8602 = vmul.f32 %v8539, %v8572
        %v8603 = vmul.f32 %v8421, %v8573
        %v8604 = vmul.f32 %v8423, %v8574
        %v8605 = vmul.f32 %v8482, %v8575
        %v8606 = vmul.f32 %v8484, %v8576
        %v8607 = vmul.f32 %v8543, %v8577
        %v8608 = vmul.f32 %v8545, %v8578
        %v8609 = vmul.f32 %v8579, 0.044715
        %v8610 = vmul.f32 %v8580, 0.044715
        %v8611 = vmul.f32 %v8581, 0.044715
        %v8612 = vmul.f32 %v8582, 0.044715
        %v8613 = vmul.f32 %v8583, 0.044715
        %v8614 = vmul.f32 %v8584, 0.044715
        %v8615 = vmul.f32 %v8585, 0.044715
        %v8616 = vmul.f32 %v8586, 0.044715
        %v8617 = vmul.f32 %v8587, 0.044715
        %v8618 = vmul.f32 %v8588, 0.044715
        %v8619 = vmul.f32 %v8589, 0.044715
        %v8620 = vmul.f32 %v8590, 0.044715
        %v8621 = vmul.f32 %v8591, 0.044715
        %v8622 = vmul.f32 %v8592, 0.044715
        %v8623 = vmul.f32 %v8593, 0.044715
        %v8624 = vmul.f32 %v8594, 0.044715
        %v8625 = vmul.f32 %v8595, 0.044715
        %v8626 = vmul.f32 %v8596, 0.044715
        %v8627 = vmul.f32 %v8597, 0.044715
        %v8628 = vmul.f32 %v8598, 0.044715
        %v8629 = vmul.f32 %v8599, 0.044715
        %v8630 = vmul.f32 %v8600, 0.044715
        %v8631 = vmul.f32 %v8601, 0.044715
        %v8632 = vmul.f32 %v8602, 0.044715
        %v8633 = vmul.f32 %v8603, 0.044715
        %v8634 = vmul.f32 %v8604, 0.044715
        %v8635 = vmul.f32 %v8605, 0.044715
        %v8636 = vmul.f32 %v8606, 0.044715
        %v8637 = vmul.f32 %v8607, 0.044715
        %v8638 = vmul.f32 %v8608, 0.044715
        %v8639 = vadd.f32 %v8401, %v8609
        %v8640 = vadd.f32 %v8403, %v8610
        %v8641 = vadd.f32 %v8462, %v8611
        %v8642 = vadd.f32 %v8464, %v8612
        %v8643 = vadd.f32 %v8523, %v8613
        %v8644 = vadd.f32 %v8525, %v8614
        %v8645 = vadd.f32 %v8405, %v8615
        %v8646 = vadd.f32 %v8407, %v8616
        %v8647 = vadd.f32 %v8466, %v8617
        %v8648 = vadd.f32 %v8468, %v8618
        %v8649 = vadd.f32 %v8527, %v8619
        %v8650 = vadd.f32 %v8529, %v8620
        %v8651 = vadd.f32 %v8411, %v8621
        %v8652 = vadd.f32 %v8413, %v8622
        %v8653 = vadd.f32 %v8472, %v8623
        %v8654 = vadd.f32 %v8474, %v8624
        %v8655 = vadd.f32 %v8533, %v8625
        %v8656 = vadd.f32 %v8535, %v8626
        %v8657 = vadd.f32 %v8415, %v8627
        %v8658 = vadd.f32 %v8417, %v8628
        %v8659 = vadd.f32 %v8476, %v8629
        %v8660 = vadd.f32 %v8478, %v8630
        %v8661 = vadd.f32 %v8537, %v8631
        %v8662 = vadd.f32 %v8539, %v8632
        %v8663 = vadd.f32 %v8421, %v8633
        %v8664 = vadd.f32 %v8423, %v8634
        %v8665 = vadd.f32 %v8482, %v8635
        %v8666 = vadd.f32 %v8484, %v8636
        %v8667 = vadd.f32 %v8543, %v8637
        %v8668 = vadd.f32 %v8545, %v8638
        %v8669 = vmul.f32 %v8639, 0.7978846
        %v8670 = vmul.f32 %v8640, 0.7978846
        %v8671 = vmul.f32 %v8641, 0.7978846
        %v8672 = vmul.f32 %v8642, 0.7978846
        %v8673 = vmul.f32 %v8643, 0.7978846
        %v8674 = vmul.f32 %v8644, 0.7978846
        %v8675 = vmul.f32 %v8645, 0.7978846
        %v8676 = vmul.f32 %v8646, 0.7978846
        %v8677 = vmul.f32 %v8647, 0.7978846
        %v8678 = vmul.f32 %v8648, 0.7978846
        %v8679 = vmul.f32 %v8649, 0.7978846
        %v8680 = vmul.f32 %v8650, 0.7978846
        %v8681 = vmul.f32 %v8651, 0.7978846
        %v8682 = vmul.f32 %v8652, 0.7978846
        %v8683 = vmul.f32 %v8653, 0.7978846
        %v8684 = vmul.f32 %v8654, 0.7978846
        %v8685 = vmul.f32 %v8655, 0.7978846
        %v8686 = vmul.f32 %v8656, 0.7978846
        %v8687 = vmul.f32 %v8657, 0.7978846
        %v8688 = vmul.f32 %v8658, 0.7978846
        %v8689 = vmul.f32 %v8659, 0.7978846
        %v8690 = vmul.f32 %v8660, 0.7978846
        %v8691 = vmul.f32 %v8661, 0.7978846
        %v8692 = vmul.f32 %v8662, 0.7978846
        %v8693 = vmul.f32 %v8663, 0.7978846
        %v8694 = vmul.f32 %v8664, 0.7978846
        %v8695 = vmul.f32 %v8665, 0.7978846
        %v8696 = vmul.f32 %v8666, 0.7978846
        %v8697 = vmul.f32 %v8667, 0.7978846
        %v8698 = vmul.f32 %v8668, 0.7978846
        %v8699 = vtanh.pop %v8669
        %v8700 = vtanh.pop %v8670
        %v8701 = vtanh.pop %v8671
        %v8702 = vtanh.pop %v8672
        %v8703 = vtanh.pop %v8673
        %v8704 = vtanh.pop %v8674
        %v8705 = vtanh.pop %v8675
        %v8706 = vtanh.pop %v8676
        %v8707 = vtanh.pop %v8677
        %v8708 = vtanh.pop %v8678
        %v8709 = vtanh.pop %v8679
        %v8710 = vtanh.pop %v8680
        %v8711 = vtanh.pop %v8681
        %v8712 = vtanh.pop %v8682
        %v8713 = vtanh.pop %v8683
        %v8714 = vtanh.pop %v8684
        %v8715 = vtanh.pop %v8685
        %v8716 = vtanh.pop %v8686
        %v8717 = vtanh.pop %v8687
        %v8718 = vtanh.pop %v8688
        %v8719 = vtanh.pop %v8689
        %v8720 = vtanh.pop %v8690
        %v8721 = vtanh.pop %v8691
        %v8722 = vtanh.pop %v8692
        %v8723 = vtanh.pop %v8693
        %v8724 = vtanh.pop %v8694
        %v8725 = vtanh.pop %v8695
        %v8726 = vtanh.pop %v8696
        %v8727 = vtanh.pop %v8697
        %v8728 = vtanh.pop %v8698
        %v8729 = vadd.f32 %v8699, 1.0
        %v8730 = vadd.f32 %v8700, 1.0
        %v8731 = vadd.f32 %v8701, 1.0
        %v8732 = vadd.f32 %v8702, 1.0
        %v8733 = vadd.f32 %v8703, 1.0
        %v8734 = vadd.f32 %v8704, 1.0
        %v8735 = vadd.f32 %v8705, 1.0
        %v8736 = vadd.f32 %v8706, 1.0
        %v8737 = vadd.f32 %v8707, 1.0
        %v8738 = vadd.f32 %v8708, 1.0
        %v8739 = vadd.f32 %v8709, 1.0
        %v8740 = vadd.f32 %v8710, 1.0
        %v8741 = vadd.f32 %v8711, 1.0
        %v8742 = vadd.f32 %v8712, 1.0
        %v8743 = vadd.f32 %v8713, 1.0
        %v8744 = vadd.f32 %v8714, 1.0
        %v8745 = vadd.f32 %v8715, 1.0
        %v8746 = vadd.f32 %v8716, 1.0
        %v8747 = vadd.f32 %v8717, 1.0
        %v8748 = vadd.f32 %v8718, 1.0
        %v8749 = vadd.f32 %v8719, 1.0
        %v8750 = vadd.f32 %v8720, 1.0
        %v8751 = vadd.f32 %v8721, 1.0
        %v8752 = vadd.f32 %v8722, 1.0
        %v8753 = vadd.f32 %v8723, 1.0
        %v8754 = vadd.f32 %v8724, 1.0
        %v8755 = vadd.f32 %v8725, 1.0
        %v8756 = vadd.f32 %v8726, 1.0
        %v8757 = vadd.f32 %v8727, 1.0
        %v8758 = vadd.f32 %v8728, 1.0
        %v8759 = vmul.f32 %v8729, 0.5
        %v8760 = vmul.f32 %v8730, 0.5
        %v8761 = vmul.f32 %v8731, 0.5
        %v8762 = vmul.f32 %v8732, 0.5
        %v8763 = vmul.f32 %v8733, 0.5
        %v8764 = vmul.f32 %v8734, 0.5
        %v8765 = vmul.f32 %v8735, 0.5
        %v8766 = vmul.f32 %v8736, 0.5
        %v8767 = vmul.f32 %v8737, 0.5
        %v8768 = vmul.f32 %v8738, 0.5
        %v8769 = vmul.f32 %v8739, 0.5
        %v8770 = vmul.f32 %v8740, 0.5
        %v8771 = vmul.f32 %v8741, 0.5
        %v8772 = vmul.f32 %v8742, 0.5
        %v8773 = vmul.f32 %v8743, 0.5
        %v8774 = vmul.f32 %v8744, 0.5
        %v8775 = vmul.f32 %v8745, 0.5
        %v8776 = vmul.f32 %v8746, 0.5
        %v8777 = vmul.f32 %v8747, 0.5
        %v8778 = vmul.f32 %v8748, 0.5
        %v8779 = vmul.f32 %v8749, 0.5
        %v8780 = vmul.f32 %v8750, 0.5
        %v8781 = vmul.f32 %v8751, 0.5
        %v8782 = vmul.f32 %v8752, 0.5
        %v8783 = vmul.f32 %v8753, 0.5
        %v8784 = vmul.f32 %v8754, 0.5
        %v8785 = vmul.f32 %v8755, 0.5
        %v8786 = vmul.f32 %v8756, 0.5
        %v8787 = vmul.f32 %v8757, 0.5
        %v8788 = vmul.f32 %v8758, 0.5
        %v8789 = vmul.f32 %v8401, %v8759
        %v8790 = vmul.f32 %v8403, %v8760
        %v8791 = vmul.f32 %v8462, %v8761
        %v8792 = vmul.f32 %v8464, %v8762
        %v8793 = vmul.f32 %v8523, %v8763
        %v8794 = vmul.f32 %v8525, %v8764
        %v8795 = vmul.f32 %v8405, %v8765
        %v8796 = vmul.f32 %v8407, %v8766
        %v8797 = vmul.f32 %v8466, %v8767
        %v8798 = vmul.f32 %v8468, %v8768
        %v8799 = vmul.f32 %v8527, %v8769
        %v8800 = vmul.f32 %v8529, %v8770
        %v8801 = vmul.f32 %v8411, %v8771
        %v8802 = vmul.f32 %v8413, %v8772
        %v8803 = vmul.f32 %v8472, %v8773
        %v8804 = vmul.f32 %v8474, %v8774
        %v8805 = vmul.f32 %v8533, %v8775
        %v8806 = vmul.f32 %v8535, %v8776
        %v8807 = vmul.f32 %v8415, %v8777
        %v8808 = vmul.f32 %v8417, %v8778
        %v8809 = vmul.f32 %v8476, %v8779
        %v8810 = vmul.f32 %v8478, %v8780
        %v8811 = vmul.f32 %v8537, %v8781
        %v8812 = vmul.f32 %v8539, %v8782
        %v8813 = vmul.f32 %v8421, %v8783
        %v8814 = vmul.f32 %v8423, %v8784
        %v8815 = vmul.f32 %v8482, %v8785
        %v8816 = vmul.f32 %v8484, %v8786
        %v8817 = vmul.f32 %v8543, %v8787
        %v8818 = vmul.f32 %v8545, %v8788
        %v8819 = vld [vmem:[%s1626] sm:$0xff]
        %v8820 = vld [vmem:[%s1626 + $0x8] sm:$0xff]
        %v8821 = vld [vmem:[%s1626 + $0x10] sm:$0xff]
        %v8822 = vld [vmem:[%s1626 + $0x18] sm:$0xff]
        %v8823 = vld [vmem:[%s1626 + $0x20] sm:$0xff]
        %v8824 = vld [vmem:[%s1626 + $0x28] sm:$0xff]
        %v8825 = vld [vmem:[%s1626 + $0x30] sm:$0xff]
        %v8826 = vld [vmem:[%s1626 + $0x38] sm:$0xff]
        %v8827 = vld [vmem:[%s1626 + $0x40] sm:$0xff]
        %v8828 = vld [vmem:[%s1626 + $0x48] sm:$0xff]
        %v8829 = vld [vmem:[%s1626 + $0x50] sm:$0xff]
        %v8830 = vld [vmem:[%s1626 + $0x58] sm:$0xff]
        %v8831 = vld [vmem:[%s1626 + $0x60] sm:$0xff]
        %v8832 = vld [vmem:[%s1626 + $0x68] sm:$0xff]
        %v8833 = vld [vmem:[%s1626 + $0x70] sm:$0xff]
        %v8834 = vld [vmem:[%s1626 + $0x78] sm:$0xff]
        %v8835 = vld [vmem:[%s1626 + $0x80] sm:$0xff]
        %v8836 = vld [vmem:[%s1626 + $0x88] sm:$0xff]
        %v8837 = vld [vmem:[%s1626 + $0x90] sm:$0xff]
        %v8838 = vld [vmem:[%s1626 + $0x98] sm:$0xff]
        %v8839 = vld [vmem:[%s1626 + $0xa0] sm:$0xff]
        %v8840 = vld [vmem:[%s1626 + $0xa8] sm:$0xff]
        %v8841 = vld [vmem:[%s1626 + $0xb0] sm:$0xff]
        %v8842 = vld [vmem:[%s1626 + $0xb8] sm:$0xff]
        %v8843 = vld [vmem:[%s1626 + $0xc0] sm:$0xff]
        %v8844 = vld [vmem:[%s1626 + $0xc8] sm:$0xff]
        %v8845 = vld [vmem:[%s1626 + $0xd0] sm:$0xff]
        %v8846 = vld [vmem:[%s1626 + $0xd8] sm:$0xff]
        %v8847 = vld [vmem:[%s1626 + $0xe0] sm:$0xff]
        %v8848 = vld [vmem:[%s1626 + $0xe8] sm:$0xff]
        %v8849 = vld [vmem:[%s1626 + $0xf0] sm:$0xff]
        %v8850 = vld [vmem:[%s1626 + $0xf8] sm:$0xff]
        %v8851 = vld [vmem:[%s1626 + $0x100] sm:$0xff]
        %v8852 = vld [vmem:[%s1626 + $0x108] sm:$0xff]
        %v8853 = vld [vmem:[%s1626 + $0x110] sm:$0xff]
        %v8854 = vld [vmem:[%s1626 + $0x118] sm:$0xff]
        %v8855 = vld [vmem:[%s1626 + $0x120] sm:$0xff]
        %v8856 = vld [vmem:[%s1626 + $0x128] sm:$0xff]
        %v8857 = vld [vmem:[%s1626 + $0x130] sm:$0xff]
        %v8858 = vld [vmem:[%s1626 + $0x138] sm:$0xff]
        %v8859 = vld [vmem:[%s1626 + $0x140] sm:$0xff]
        %v8860 = vld [vmem:[%s1626 + $0x148] sm:$0xff]
        %v8861 = vld [vmem:[%s1626 + $0x150] sm:$0xff]
        %v8862 = vld [vmem:[%s1626 + $0x158] sm:$0xff]
        %v8863 = vld [vmem:[%s1626 + $0x160] sm:$0xff]
        %v8864 = vld [vmem:[%s1626 + $0x168] sm:$0xff]
        %v8865 = vld [vmem:[%s1626 + $0x170] sm:$0xff]
        %v8866 = vld [vmem:[%s1626 + $0x178] sm:$0xff]
        %v8867 = vld [vmem:[%s1626 + $0x180] sm:$0xff]
        %v8868 = vld [vmem:[%s1626 + $0x188] sm:$0xff]
        %v8869 = vld [vmem:[%s1626 + $0x190] sm:$0xff]
        %v8870 = vld [vmem:[%s1626 + $0x198] sm:$0xff]
        %v8871 = vld [vmem:[%s1626 + $0x1a0] sm:$0xff]
        %v8872 = vld [vmem:[%s1626 + $0x1a8] sm:$0xff]
        %v8873 = vld [vmem:[%s1626 + $0x1b0] sm:$0xff]
        %v8874 = vld [vmem:[%s1626 + $0x1b8] sm:$0xff]
        %v8875 = vld [vmem:[%s1626 + $0x1c0] sm:$0xff]
        %v8876 = vld [vmem:[%s1626 + $0x1c8] sm:$0xff]
        %v8877 = vld [vmem:[%s1626 + $0x1d0] sm:$0xff]
        %v8878 = vld [vmem:[%s1626 + $0x1d8] sm:$0xff]
        %v8879 = vld [vmem:[%s1626 + $0x1e0] sm:$0xff]
        %v8880 = vld [vmem:[%s1626 + $0x1e8] sm:$0xff]
        %v8881 = vld [vmem:[%s1626 + $0x1f0] sm:$0xff]
        %v8882 = vld [vmem:[%s1626 + $0x1f8] sm:$0xff]
        %v8883 = vld [vmem:[%s1626 + $0x200] sm:$0xff]
        %v8884 = vld [vmem:[%s1626 + $0x208] sm:$0xff]
        %v8885 = vld [vmem:[%s1626 + $0x210] sm:$0xff]
        %v8886 = vld [vmem:[%s1626 + $0x218] sm:$0xff]
        %v8887 = vld [vmem:[%s1626 + $0x220] sm:$0xff]
        %v8888 = vld [vmem:[%s1626 + $0x228] sm:$0xff]
        %v8889 = vld [vmem:[%s1626 + $0x230] sm:$0xff]
        %v8890 = vld [vmem:[%s1626 + $0x238] sm:$0xff]
        %v8891 = vld [vmem:[%s1626 + $0x240] sm:$0xff]
        %v8892 = vld [vmem:[%s1626 + $0x248] sm:$0xff]
        %v8893 = vld [vmem:[%s1626 + $0x250] sm:$0xff]
        %v8894 = vld [vmem:[%s1626 + $0x258] sm:$0xff]
        %v8895 = vld [vmem:[%s1626 + $0x260] sm:$0xff]
        %v8896 = vld [vmem:[%s1626 + $0x268] sm:$0xff]
        %v8897 = vld [vmem:[%s1626 + $0x270] sm:$0xff]
        %v8898 = vld [vmem:[%s1626 + $0x278] sm:$0xff]
        %v8899 = vld [vmem:[%s1626 + $0x280] sm:$0xff]
        %v8900 = vld [vmem:[%s1626 + $0x288] sm:$0xff]
        %v8901 = vld [vmem:[%s1626 + $0x290] sm:$0xff]
        %v8902 = vld [vmem:[%s1626 + $0x298] sm:$0xff]
        %v8903 = vld [vmem:[%s1626 + $0x2a0] sm:$0xff]
        %v8904 = vld [vmem:[%s1626 + $0x2a8] sm:$0xff]
        %v8905 = vld [vmem:[%s1626 + $0x2b0] sm:$0xff]
        %v8906 = vld [vmem:[%s1626 + $0x2b8] sm:$0xff]
        %v8907 = vld [vmem:[%s1626 + $0x2c0] sm:$0xff]
        %v8908 = vld [vmem:[%s1626 + $0x2c8] sm:$0xff]
        %v8909 = vld [vmem:[%s1626 + $0x2d0] sm:$0xff]
        %v8910 = vld [vmem:[%s1626 + $0x2d8] sm:$0xff]
        %v8911 = vld [vmem:[%s1626 + $0x2e0] sm:$0xff]
        %v8912 = vld [vmem:[%s1626 + $0x2e8] sm:$0xff]
        %v8913 = vld [vmem:[%s1626 + $0x2f0] sm:$0xff]
        %v8914 = vld [vmem:[%s1626 + $0x2f8] sm:$0xff]
        %v8915 = vpack.c.bf16 %v8795, %v8789
        %v8916 = vpack.c.bf16 %v8796, %v8790
        %v8917 = vpack.c.bf16 %v8797, %v8791
        %v8918 = vpack.c.bf16 %v8798, %v8792
        %v8919 = vpack.c.bf16 %v8799, %v8793
        %v8920 = vpack.c.bf16 %v8800, %v8794
        %v8921 = vpack.c.bf16 %v8807, %v8801
        %v8922 = vpack.c.bf16 %v8808, %v8802
        %v8923 = vpack.c.bf16 %v8809, %v8803
        %v8924 = vpack.c.bf16 %v8810, %v8804
        %v8925 = vpack.c.bf16 %v8811, %v8805
        %v8926 = vpack.c.bf16 %v8812, %v8806
        %v8927 = vpack.c.bf16 %v8813, %v8813
        %v8928 = vpack.c.bf16 %v8814, %v8814
        %v8929 = vpack.c.bf16 %v8815, %v8815
        %v8930 = vpack.c.bf16 %v8816, %v8816
        %v8931 = vpack.c.bf16 %v8817, %v8817
        %v8932 = vpack.c.bf16 %v8818, %v8818
        %v8933 = vld [vmem:[%s1635] sm:$0x3]
        %v8935 = vlaneseq
        %v8936 = vshrl.u32 %v8935, 7
        %v8937 = vsub.s32 0, %v8936
        %v8938 = vrot.slane %v8933, %v8937
        %v8939 = vlaneseq
        %v8940 = vshrl.u32 %v8939, 7
        %v8941 = vsub.s32 1, %v8940
        %v8942 = vrot.slane %v8933, %v8941
        %v9041 = vunpack.c.l.b16 %v8819
        %v9042 = vunpack.c.h.b16 %v8819
        %v9043 = vunpack.c.l.b16 %v8820
        %v9044 = vunpack.c.h.b16 %v8820
        %v9045 = vunpack.c.l.b16 %v8821
        %v9046 = vunpack.c.h.b16 %v8821
        %v9047 = vunpack.c.l.b16 %v8822
        %v9048 = vunpack.c.h.b16 %v8822
        %v9049 = vunpack.c.l.b16 %v8823
        %v9050 = vunpack.c.h.b16 %v8823
        %v9051 = vunpack.c.l.b16 %v8824
        %v9052 = vunpack.c.h.b16 %v8824
        %v9053 = vunpack.c.l.b16 %v8825
        %v9054 = vunpack.c.h.b16 %v8825
        %v9055 = vunpack.c.l.b16 %v8826
        %v9056 = vunpack.c.h.b16 %v8826
        %v9057 = vunpack.c.l.b16 %v8827
        %v9058 = vunpack.c.h.b16 %v8827
        %v9059 = vunpack.c.l.b16 %v8828
        %v9060 = vunpack.c.h.b16 %v8828
        %v9061 = vunpack.c.l.b16 %v8829
        %v9062 = vunpack.c.h.b16 %v8829
        %v9063 = vunpack.c.l.b16 %v8830
        %v9064 = vunpack.c.h.b16 %v8830
        %v9065 = vunpack.c.l.b16 %v8831
        %v9066 = vunpack.c.h.b16 %v8831
        %v9067 = vunpack.c.l.b16 %v8832
        %v9068 = vunpack.c.h.b16 %v8832
        %v9069 = vunpack.c.l.b16 %v8833
        %v9070 = vunpack.c.h.b16 %v8833
        %v9071 = vunpack.c.l.b16 %v8834
        %v9072 = vunpack.c.h.b16 %v8834
        %v9073 = vunpack.c.l.b16 %v8835
        %v9074 = vunpack.c.h.b16 %v8835
        %v9075 = vunpack.c.l.b16 %v8836
        %v9076 = vunpack.c.h.b16 %v8836
        %v9077 = vunpack.c.l.b16 %v8837
        %v9078 = vunpack.c.h.b16 %v8837
        %v9079 = vunpack.c.l.b16 %v8838
        %v9080 = vunpack.c.h.b16 %v8838
        %v9081 = vunpack.c.l.b16 %v8839
        %v9082 = vunpack.c.h.b16 %v8839
        %v9083 = vunpack.c.l.b16 %v8840
        %v9084 = vunpack.c.h.b16 %v8840
        %v9085 = vunpack.c.l.b16 %v8841
        %v9086 = vunpack.c.h.b16 %v8841
        %v9087 = vunpack.c.l.b16 %v8842
        %v9088 = vunpack.c.h.b16 %v8842
        %v9089 = vunpack.c.l.b16 %v8843
        %v9090 = vunpack.c.h.b16 %v8843
        %v9091 = vunpack.c.l.b16 %v8844
        %v9092 = vunpack.c.h.b16 %v8844
        %v9093 = vunpack.c.l.b16 %v8845
        %v9094 = vunpack.c.h.b16 %v8845
        %v9095 = vunpack.c.l.b16 %v8846
        %v9096 = vunpack.c.h.b16 %v8846
        %v9097 = vunpack.c.l.b16 %v8847
        %v9098 = vunpack.c.h.b16 %v8847
        %v9099 = vunpack.c.l.b16 %v8848
        %v9100 = vunpack.c.h.b16 %v8848
        %v9101 = vunpack.c.l.b16 %v8849
        %v9102 = vunpack.c.h.b16 %v8849
        %v9103 = vunpack.c.l.b16 %v8850
        %v9104 = vunpack.c.h.b16 %v8850
        %v9105 = vunpack.c.l.b16 %v8851
        %v9106 = vunpack.c.h.b16 %v8851
        %v9107 = vunpack.c.l.b16 %v8852
        %v9108 = vunpack.c.h.b16 %v8852
        %v9109 = vunpack.c.l.b16 %v8853
        %v9110 = vunpack.c.h.b16 %v8853
        %v9111 = vunpack.c.l.b16 %v8854
        %v9112 = vunpack.c.h.b16 %v8854
        %v9113 = vunpack.c.l.b16 %v8855
        %v9114 = vunpack.c.h.b16 %v8855
        %v9115 = vunpack.c.l.b16 %v8856
        %v9116 = vunpack.c.h.b16 %v8856
        %v9117 = vunpack.c.l.b16 %v8857
        %v9118 = vunpack.c.h.b16 %v8857
        %v9119 = vunpack.c.l.b16 %v8858
        %v9120 = vunpack.c.h.b16 %v8858
        %v9121 = vunpack.c.l.b16 %v8859
        %v9122 = vunpack.c.h.b16 %v8859
        %v9123 = vunpack.c.l.b16 %v8860
        %v9124 = vunpack.c.h.b16 %v8860
        %v9125 = vunpack.c.l.b16 %v8861
        %v9126 = vunpack.c.h.b16 %v8861
        %v9127 = vunpack.c.l.b16 %v8862
        %v9128 = vunpack.c.h.b16 %v8862
        %v9129 = vunpack.c.l.b16 %v8863
        %v9130 = vunpack.c.h.b16 %v8863
        %v9131 = vunpack.c.l.b16 %v8864
        %v9132 = vunpack.c.h.b16 %v8864
        %v9133 = vunpack.c.l.b16 %v8865
        %v9134 = vunpack.c.h.b16 %v8865
        %v9135 = vunpack.c.l.b16 %v8866
        %v9136 = vunpack.c.h.b16 %v8866
        %v9137 = vunpack.c.l.b16 %v8867
        %v9138 = vunpack.c.h.b16 %v8867
        %v9139 = vunpack.c.l.b16 %v8868
        %v9140 = vunpack.c.h.b16 %v8868
        %v9141 = vunpack.c.l.b16 %v8869
        %v9142 = vunpack.c.h.b16 %v8869
        %v9143 = vunpack.c.l.b16 %v8870
        %v9144 = vunpack.c.h.b16 %v8870
        %v9145 = vunpack.c.l.b16 %v8871
        %v9146 = vunpack.c.h.b16 %v8871
        %v9147 = vunpack.c.l.b16 %v8872
        %v9148 = vunpack.c.h.b16 %v8872
        %v9149 = vunpack.c.l.b16 %v8873
        %v9150 = vunpack.c.h.b16 %v8873
        %v9151 = vunpack.c.l.b16 %v8874
        %v9152 = vunpack.c.h.b16 %v8874
        %v9153 = vunpack.c.l.b16 %v8875
        %v9154 = vunpack.c.h.b16 %v8875
        %v9155 = vunpack.c.l.b16 %v8876
        %v9156 = vunpack.c.h.b16 %v8876
        %v9157 = vunpack.c.l.b16 %v8877
        %v9158 = vunpack.c.h.b16 %v8877
        %v9159 = vunpack.c.l.b16 %v8878
        %v9160 = vunpack.c.h.b16 %v8878
        %v9161 = vunpack.c.l.b16 %v8879
        %v9162 = vunpack.c.h.b16 %v8879
        %v9163 = vunpack.c.l.b16 %v8880
        %v9164 = vunpack.c.h.b16 %v8880
        %v9165 = vunpack.c.l.b16 %v8881
        %v9166 = vunpack.c.h.b16 %v8881
        %v9167 = vunpack.c.l.b16 %v8882
        %v9168 = vunpack.c.h.b16 %v8882
        %v9169 = vunpack.c.l.b16 %v8883
        %v9170 = vunpack.c.h.b16 %v8883
        %v9171 = vunpack.c.l.b16 %v8884
        %v9172 = vunpack.c.h.b16 %v8884
        %v9173 = vunpack.c.l.b16 %v8885
        %v9174 = vunpack.c.h.b16 %v8885
        %v9175 = vunpack.c.l.b16 %v8886
        %v9176 = vunpack.c.h.b16 %v8886
        %v9177 = vunpack.c.l.b16 %v8887
        %v9178 = vunpack.c.h.b16 %v8887
        %v9179 = vunpack.c.l.b16 %v8888
        %v9180 = vunpack.c.h.b16 %v8888
        %v9181 = vunpack.c.l.b16 %v8889
        %v9182 = vunpack.c.h.b16 %v8889
        %v9183 = vunpack.c.l.b16 %v8890
        %v9184 = vunpack.c.h.b16 %v8890
        %v9185 = vunpack.c.l.b16 %v8891
        %v9186 = vunpack.c.h.b16 %v8891
        %v9187 = vunpack.c.l.b16 %v8892
        %v9188 = vunpack.c.h.b16 %v8892
        %v9189 = vunpack.c.l.b16 %v8893
        %v9190 = vunpack.c.h.b16 %v8893
        %v9191 = vunpack.c.l.b16 %v8894
        %v9192 = vunpack.c.h.b16 %v8894
        %v9193 = vunpack.c.l.b16 %v8895
        %v9194 = vunpack.c.h.b16 %v8895
        %v9195 = vunpack.c.l.b16 %v8896
        %v9196 = vunpack.c.h.b16 %v8896
        %v9197 = vunpack.c.l.b16 %v8897
        %v9198 = vunpack.c.h.b16 %v8897
        %v9199 = vunpack.c.l.b16 %v8898
        %v9200 = vunpack.c.h.b16 %v8898
        %v9201 = vunpack.c.l.b16 %v8899
        %v9202 = vunpack.c.h.b16 %v8899
        %v9203 = vunpack.c.l.b16 %v8900
        %v9204 = vunpack.c.h.b16 %v8900
        %v9205 = vunpack.c.l.b16 %v8901
        %v9206 = vunpack.c.h.b16 %v8901
        %v9207 = vunpack.c.l.b16 %v8902
        %v9208 = vunpack.c.h.b16 %v8902
        %v9209 = vunpack.c.l.b16 %v8903
        %v9210 = vunpack.c.h.b16 %v8903
        %v9211 = vunpack.c.l.b16 %v8904
        %v9212 = vunpack.c.h.b16 %v8904
        %v9213 = vunpack.c.l.b16 %v8905
        %v9214 = vunpack.c.h.b16 %v8905
        %v9215 = vunpack.c.l.b16 %v8906
        %v9216 = vunpack.c.h.b16 %v8906
        %v9217 = vunpack.c.l.b16 %v8907
        %v9218 = vunpack.c.h.b16 %v8907
        %v9219 = vunpack.c.l.b16 %v8908
        %v9220 = vunpack.c.h.b16 %v8908
        %v9221 = vunpack.c.l.b16 %v8909
        %v9222 = vunpack.c.h.b16 %v8909
        %v9223 = vunpack.c.l.b16 %v8910
        %v9224 = vunpack.c.h.b16 %v8910
        %v9225 = vunpack.c.l.b16 %v8911
        %v9226 = vunpack.c.h.b16 %v8911
        %v9227 = vunpack.c.l.b16 %v8912
        %v9228 = vunpack.c.h.b16 %v8912
        %v9229 = vunpack.c.l.b16 %v8913
        %v9230 = vunpack.c.h.b16 %v8913
        %v9231 = vunpack.c.l.b16 %v8914
        %v9232 = vunpack.c.h.b16 %v8914
        %v9233 = vpack.c.b16 %v9043, %v9041
        %v9234 = vpack.c.b16 %v9044, %v9042
        %v9235 = vpack.c.b16 %v9047, %v9045
        %v9236 = vpack.c.b16 %v9048, %v9046
        %v9237 = vpack.c.b16 %v9051, %v9049
        %v9238 = vpack.c.b16 %v9052, %v9050
        %v9239 = vpack.c.b16 %v9055, %v9053
        %v9240 = vpack.c.b16 %v9056, %v9054
        %v9241 = vpack.c.b16 %v9059, %v9057
        %v9242 = vpack.c.b16 %v9060, %v9058
        %v9243 = vpack.c.b16 %v9063, %v9061
        %v9244 = vpack.c.b16 %v9064, %v9062
        %v9245 = vpack.c.b16 %v9067, %v9065
        %v9246 = vpack.c.b16 %v9068, %v9066
        %v9247 = vpack.c.b16 %v9071, %v9069
        %v9248 = vpack.c.b16 %v9072, %v9070
        %v9249 = vpack.c.b16 %v9075, %v9073
        %v9250 = vpack.c.b16 %v9076, %v9074
        %v9251 = vpack.c.b16 %v9079, %v9077
        %v9252 = vpack.c.b16 %v9080, %v9078
        %v9253 = vpack.c.b16 %v9083, %v9081
        %v9254 = vpack.c.b16 %v9084, %v9082
        %v9255 = vpack.c.b16 %v9087, %v9085
        %v9256 = vpack.c.b16 %v9088, %v9086
        %v9257 = vpack.c.b16 %v9091, %v9089
        %v9258 = vpack.c.b16 %v9092, %v9090
        %v9259 = vpack.c.b16 %v9095, %v9093
        %v9260 = vpack.c.b16 %v9096, %v9094
        %v9261 = vpack.c.b16 %v9099, %v9097
        %v9262 = vpack.c.b16 %v9100, %v9098
        %v9263 = vpack.c.b16 %v9103, %v9101
        %v9264 = vpack.c.b16 %v9104, %v9102
        %v9265 = vpack.c.b16 %v9107, %v9105
        %v9266 = vpack.c.b16 %v9108, %v9106
        %v9267 = vpack.c.b16 %v9111, %v9109
        %v9268 = vpack.c.b16 %v9112, %v9110
        %v9269 = vpack.c.b16 %v9115, %v9113
        %v9270 = vpack.c.b16 %v9116, %v9114
        %v9271 = vpack.c.b16 %v9119, %v9117
        %v9272 = vpack.c.b16 %v9120, %v9118
        %v9273 = vpack.c.b16 %v9123, %v9121
        %v9274 = vpack.c.b16 %v9124, %v9122
        %v9275 = vpack.c.b16 %v9127, %v9125
        %v9276 = vpack.c.b16 %v9128, %v9126
        %v9277 = vpack.c.b16 %v9131, %v9129
        %v9278 = vpack.c.b16 %v9132, %v9130
        %v9279 = vpack.c.b16 %v9135, %v9133
        %v9280 = vpack.c.b16 %v9136, %v9134
        %v9281 = vpack.c.b16 %v9139, %v9137
        %v9282 = vpack.c.b16 %v9140, %v9138
        %v9283 = vpack.c.b16 %v9143, %v9141
        %v9284 = vpack.c.b16 %v9144, %v9142
        %v9285 = vpack.c.b16 %v9147, %v9145
        %v9286 = vpack.c.b16 %v9148, %v9146
        %v9287 = vpack.c.b16 %v9151, %v9149
        %v9288 = vpack.c.b16 %v9152, %v9150
        %v9289 = vpack.c.b16 %v9155, %v9153
        %v9290 = vpack.c.b16 %v9156, %v9154
        %v9291 = vpack.c.b16 %v9159, %v9157
        %v9292 = vpack.c.b16 %v9160, %v9158
        %v9293 = vpack.c.b16 %v9163, %v9161
        %v9294 = vpack.c.b16 %v9164, %v9162
        %v9295 = vpack.c.b16 %v9167, %v9165
        %v9296 = vpack.c.b16 %v9168, %v9166
        %v9297 = vpack.c.b16 %v9171, %v9169
        %v9298 = vpack.c.b16 %v9172, %v9170
        %v9299 = vpack.c.b16 %v9175, %v9173
        %v9300 = vpack.c.b16 %v9176, %v9174
        %v9301 = vpack.c.b16 %v9179, %v9177
        %v9302 = vpack.c.b16 %v9180, %v9178
        %v9303 = vpack.c.b16 %v9183, %v9181
        %v9304 = vpack.c.b16 %v9184, %v9182
        %v9305 = vpack.c.b16 %v9187, %v9185
        %v9306 = vpack.c.b16 %v9188, %v9186
        %v9307 = vpack.c.b16 %v9191, %v9189
        %v9308 = vpack.c.b16 %v9192, %v9190
        %v9309 = vpack.c.b16 %v9195, %v9193
        %v9310 = vpack.c.b16 %v9196, %v9194
        %v9311 = vpack.c.b16 %v9199, %v9197
        %v9312 = vpack.c.b16 %v9200, %v9198
        %v9313 = vpack.c.b16 %v9203, %v9201
        %v9314 = vpack.c.b16 %v9204, %v9202
        %v9315 = vpack.c.b16 %v9207, %v9205
        %v9316 = vpack.c.b16 %v9208, %v9206
        %v9317 = vpack.c.b16 %v9211, %v9209
        %v9318 = vpack.c.b16 %v9212, %v9210
        %v9319 = vpack.c.b16 %v9215, %v9213
        %v9320 = vpack.c.b16 %v9216, %v9214
        %v9321 = vpack.c.b16 %v9219, %v9217
        %v9322 = vpack.c.b16 %v9220, %v9218
        %v9323 = vpack.c.b16 %v9223, %v9221
        %v9324 = vpack.c.b16 %v9224, %v9222
        %v9325 = vpack.c.b16 %v9227, %v9225
        %v9326 = vpack.c.b16 %v9228, %v9226
        %v9327 = vpack.c.b16 %v9231, %v9229
        %v9328 = vpack.c.b16 %v9232, %v9230
        %9425 = vmatprep.subr.bf16.mxu0 %v9234
        %9426 = vmatpush1.bf16.msra.mxu0 %v9233
        %9427 = vmatprep.subr.bf16.mxu0 %v9236
        %9428 = vmatpush1.bf16.msra.mxu0 %v9235
        %9429 = vmatprep.subr.bf16.mxu0 %v9238
        %9430 = vmatpush1.bf16.msra.mxu0 %v9237
        %9431 = vmatprep.subr.bf16.mxu0 %v9240
        %9432 = vmatpush1.bf16.msra.mxu0 %v9239
        %9433 = vmatprep.subr.bf16.mxu0 %v9242
        %9434 = vmatpush1.bf16.msra.mxu0 %v9241
        %9435 = vmatprep.subr.bf16.mxu0 %v9244
        %9436 = vmatpush1.bf16.msra.mxu0 %v9243
        %9437 = vmatprep.subr.bf16.mxu0 %v9246
        %9438 = vmatpush1.bf16.msra.mxu0 %v9245
        %9439 = vmatprep.subr.bf16.mxu0 %v9248
        %9440 = vmatpush1.bf16.msra.mxu0 %v9247
        %9441 = vmatprep.subr.bf16.mxu0 %v9250
        %9442 = vmatpush1.bf16.msra.mxu0 %v9249
        %9443 = vmatprep.subr.bf16.mxu0 %v9252
        %9444 = vmatpush1.bf16.msra.mxu0 %v9251
        %9445 = vmatprep.subr.bf16.mxu0 %v9254
        %9446 = vmatpush1.bf16.msra.mxu0 %v9253
        %9447 = vmatprep.subr.bf16.mxu0 %v9256
        %9448 = vmatpush1.bf16.msra.mxu0 %v9255
        %9449 = vmatprep.subr.bf16.mxu0 %v9258
        %9450 = vmatpush1.bf16.msra.mxu0 %v9257
        %9451 = vmatprep.subr.bf16.mxu0 %v9260
        %9452 = vmatpush1.bf16.msra.mxu0 %v9259
        %9453 = vmatprep.subr.bf16.mxu0 %v9262
        %9454 = vmatpush1.bf16.msra.mxu0 %v9261
        %9455 = vmatprep.subr.bf16.mxu0 %v9264
        %9456 = vmatpush1.bf16.msra.mxu0 %v9263
        %9457 = vmatprep.mubr.bf16.mxu0 %v8916
        %9458 = vmatmul.mubr.bf16.gmra.mrb[0].mxu0 %v8915
        %v9459 = vpop.f32.mrb[0].mxu0
        %v9460 = vadd.f32 %v8938, %v9459
        %v9461 = vpop.f32.mrb[0].mxu0
        %v9462 = vadd.f32 %v8942, %v9461
        %v9463 = vpop.f32.mrb[0].mxu0
        %v9464 = vadd.f32 %v8938, %v9463
        %v9465 = vpop.f32.mrb[0].mxu0
        %v9466 = vadd.f32 %v8942, %v9465
        %9467 = vmatprep.mubr.bf16.mxu0 %v8922
        %9468 = vmatmul.mubr.bf16.gmra.mrb[0].mxu0 %v8921
        %v9469 = vpop.f32.mrb[0].mxu0
        %v9470 = vadd.f32 %v8938, %v9469
        %v9471 = vpop.f32.mrb[0].mxu0
        %v9472 = vadd.f32 %v8942, %v9471
        %v9473 = vpop.f32.mrb[0].mxu0
        %v9474 = vadd.f32 %v8938, %v9473
        %v9475 = vpop.f32.mrb[0].mxu0
        %v9476 = vadd.f32 %v8942, %v9475
        %9477 = vmatprep.mubr.bf16.mxu0 %v8928
        %9478 = vmatmul.mubr.bf16.gmra.mrb[0].mxu0 %v8927
        %v9479 = vpop.f32.mrb[0].mxu0
        %v9480 = vadd.f32 %v8938, %v9479
        %v9481 = vpop.f32.mrb[0].mxu0
        %v9482 = vadd.f32 %v8942, %v9481
        %v9483 = vpop.f32.mrb[0].mxu0
        %v9484 = vpop.f32.mrb[0].mxu0
        %9485 = vdwg.mxu0
        %9486 = vmatprep.subr.bf16.mxu0 %v9266
        %9487 = vmatpush1.bf16.msra.mxu0 %v9265
        %9488 = vmatprep.subr.bf16.mxu0 %v9268
        %9489 = vmatpush1.bf16.msra.mxu0 %v9267
        %9490 = vmatprep.subr.bf16.mxu0 %v9270
        %9491 = vmatpush1.bf16.msra.mxu0 %v9269
        %9492 = vmatprep.subr.bf16.mxu0 %v9272
        %9493 = vmatpush1.bf16.msra.mxu0 %v9271
        %9494 = vmatprep.subr.bf16.mxu0 %v9274
        %9495 = vmatpush1.bf16.msra.mxu0 %v9273
        %9496 = vmatprep.subr.bf16.mxu0 %v9276
        %9497 = vmatpush1.bf16.msra.mxu0 %v9275
        %9498 = vmatprep.subr.bf16.mxu0 %v9278
        %9499 = vmatpush1.bf16.msra.mxu0 %v9277
        %9500 = vmatprep.subr.bf16.mxu0 %v9280
        %9501 = vmatpush1.bf16.msra.mxu0 %v9279
        %9502 = vmatprep.subr.bf16.mxu0 %v9282
        %9503 = vmatpush1.bf16.msra.mxu0 %v9281
        %9504 = vmatprep.subr.bf16.mxu0 %v9284
        %9505 = vmatpush1.bf16.msra.mxu0 %v9283
        %9506 = vmatprep.subr.bf16.mxu0 %v9286
        %9507 = vmatpush1.bf16.msra.mxu0 %v9285
        %9508 = vmatprep.subr.bf16.mxu0 %v9288
        %9509 = vmatpush1.bf16.msra.mxu0 %v9287
        %9510 = vmatprep.subr.bf16.mxu0 %v9290
        %9511 = vmatpush1.bf16.msra.mxu0 %v9289
        %9512 = vmatprep.subr.bf16.mxu0 %v9292
        %9513 = vmatpush1.bf16.msra.mxu0 %v9291
        %9514 = vmatprep.subr.bf16.mxu0 %v9294
        %9515 = vmatpush1.bf16.msra.mxu0 %v9293
        %9516 = vmatprep.subr.bf16.mxu0 %v9296
        %9517 = vmatpush1.bf16.msra.mxu0 %v9295
        %9518 = vmatprep.mubr.bf16.mxu0 %v8918
        %9519 = vmatmul.mubr.bf16.gmra.mrb[0].mxu0 %v8917
        %v9520 = vpop.f32.mrb[0].mxu0
        %v9521 = vadd.f32 %v9460, %v9520
        %v9522 = vpop.f32.mrb[0].mxu0
        %v9523 = vadd.f32 %v9462, %v9522
        %v9524 = vpop.f32.mrb[0].mxu0
        %v9525 = vadd.f32 %v9464, %v9524
        %v9526 = vpop.f32.mrb[0].mxu0
        %v9527 = vadd.f32 %v9466, %v9526
        %9528 = vmatprep.mubr.bf16.mxu0 %v8924
        %9529 = vmatmul.mubr.bf16.gmra.mrb[0].mxu0 %v8923
        %v9530 = vpop.f32.mrb[0].mxu0
        %v9531 = vadd.f32 %v9470, %v9530
        %v9532 = vpop.f32.mrb[0].mxu0
        %v9533 = vadd.f32 %v9472, %v9532
        %v9534 = vpop.f32.mrb[0].mxu0
        %v9535 = vadd.f32 %v9474, %v9534
        %v9536 = vpop.f32.mrb[0].mxu0
        %v9537 = vadd.f32 %v9476, %v9536
        %9538 = vmatprep.mubr.bf16.mxu0 %v8930
        %9539 = vmatmul.mubr.bf16.gmra.mrb[0].mxu0 %v8929
        %v9540 = vpop.f32.mrb[0].mxu0
        %v9541 = vadd.f32 %v9480, %v9540
        %v9542 = vpop.f32.mrb[0].mxu0
        %v9543 = vadd.f32 %v9482, %v9542
        %v9544 = vpop.f32.mrb[0].mxu0
        %v9545 = vpop.f32.mrb[0].mxu0
        %9546 = vdwg.mxu0
        %9547 = vmatprep.subr.bf16.mxu0 %v9298
        %9548 = vmatpush1.bf16.msra.mxu0 %v9297
        %9549 = vmatprep.subr.bf16.mxu0 %v9300
        %9550 = vmatpush1.bf16.msra.mxu0 %v9299
        %9551 = vmatprep.subr.bf16.mxu0 %v9302
        %9552 = vmatpush1.bf16.msra.mxu0 %v9301
        %9553 = vmatprep.subr.bf16.mxu0 %v9304
        %9554 = vmatpush1.bf16.msra.mxu0 %v9303
        %9555 = vmatprep.subr.bf16.mxu0 %v9306
        %9556 = vmatpush1.bf16.msra.mxu0 %v9305
        %9557 = vmatprep.subr.bf16.mxu0 %v9308
        %9558 = vmatpush1.bf16.msra.mxu0 %v9307
        %9559 = vmatprep.subr.bf16.mxu0 %v9310
        %9560 = vmatpush1.bf16.msra.mxu0 %v9309
        %9561 = vmatprep.subr.bf16.mxu0 %v9312
        %9562 = vmatpush1.bf16.msra.mxu0 %v9311
        %9563 = vmatprep.subr.bf16.mxu0 %v9314
        %9564 = vmatpush1.bf16.msra.mxu0 %v9313
        %9565 = vmatprep.subr.bf16.mxu0 %v9316
        %9566 = vmatpush1.bf16.msra.mxu0 %v9315
        %9567 = vmatprep.subr.bf16.mxu0 %v9318
        %9568 = vmatpush1.bf16.msra.mxu0 %v9317
        %9569 = vmatprep.subr.bf16.mxu0 %v9320
        %9570 = vmatpush1.bf16.msra.mxu0 %v9319
        %9571 = vmatprep.subr.bf16.mxu0 %v9322
        %9572 = vmatpush1.bf16.msra.mxu0 %v9321
        %9573 = vmatprep.subr.bf16.mxu0 %v9324
        %9574 = vmatpush1.bf16.msra.mxu0 %v9323
        %9575 = vmatprep.subr.bf16.mxu0 %v9326
        %9576 = vmatpush1.bf16.msra.mxu0 %v9325
        %9577 = vmatprep.subr.bf16.mxu0 %v9328
        %9578 = vmatpush1.bf16.msra.mxu0 %v9327
        %9579 = vmatprep.mubr.bf16.mxu0 %v8920
        %9580 = vmatmul.mubr.bf16.gmra.mrb[0].mxu0 %v8919
        %v9581 = vpop.f32.mrb[0].mxu0
        %v9582 = vadd.f32 %v9521, %v9581
        %v9583 = vpop.f32.mrb[0].mxu0
        %v9584 = vadd.f32 %v9523, %v9583
        %v9585 = vpop.f32.mrb[0].mxu0
        %v9586 = vadd.f32 %v9525, %v9585
        %v9587 = vpop.f32.mrb[0].mxu0
        %v9588 = vadd.f32 %v9527, %v9587
        %9589 = vmatprep.mubr.bf16.mxu0 %v8926
        %9590 = vmatmul.mubr.bf16.gmra.mrb[0].mxu0 %v8925
        %v9591 = vpop.f32.mrb[0].mxu0
        %v9592 = vadd.f32 %v9531, %v9591
        %v9593 = vpop.f32.mrb[0].mxu0
        %v9594 = vadd.f32 %v9533, %v9593
        %v9595 = vpop.f32.mrb[0].mxu0
        %v9596 = vadd.f32 %v9535, %v9595
        %v9597 = vpop.f32.mrb[0].mxu0
        %v9598 = vadd.f32 %v9537, %v9597
        %9599 = vmatprep.mubr.bf16.mxu0 %v8932
        %9600 = vmatmul.mubr.bf16.gmra.mrb[0].mxu0 %v8931
        %v9601 = vpop.f32.mrb[0].mxu0
        %v9602 = vadd.f32 %v9541, %v9601
        %v9603 = vpop.f32.mrb[0].mxu0
        %v9604 = vadd.f32 %v9543, %v9603
        %v9605 = vpop.f32.mrb[0].mxu0
        %v9606 = vpop.f32.mrb[0].mxu0
        %9607 = vdwg.mxu0
        %v9608 = vadd.f32 %v9582, %v7618
        %v9609 = vadd.f32 %v9584, %v7619
        %v9610 = vadd.f32 %v9586, %v7620
        %v9611 = vadd.f32 %v9588, %v7621
        %v9612 = vadd.f32 %v9592, %v7622
        %v9613 = vadd.f32 %v9594, %v7623
        %v9614 = vadd.f32 %v9596, %v7624
        %v9615 = vadd.f32 %v9598, %v7625
        %v9616 = vadd.f32 %v9602, %v7626
        %v9617 = vadd.f32 %v9604, %v7627
        %9618 = vst [vmem:[#allocation2] sm:$0xff] %v9608
        %9619 = vst [vmem:[#allocation2 + $0x8] sm:$0xff] %v9609
        %9620 = vst [vmem:[#allocation2 + $0x10] sm:$0xff] %v9610
        %9621 = vst [vmem:[#allocation2 + $0x18] sm:$0xff] %v9611
        %9622 = vst [vmem:[#allocation2 + $0x20] sm:$0xff] %v9612
        %9623 = vst [vmem:[#allocation2 + $0x28] sm:$0xff] %v9613
        %9624 = vst [vmem:[#allocation2 + $0x30] sm:$0xff] %v9614
        %9625 = vst [vmem:[#allocation2 + $0x38] sm:$0xff] %v9615
        %9626 = vst [vmem:[#allocation2 + $0x40] sm:$0xff] %v9616
        %9627 = vst [vmem:[#allocation2 + $0x48] sm:$0xff] %v9617
        %p9628 = scmp.eq.s32.totalorder %s115, 3
        // Predicated region
        $region293: #{tpu_custom_call.1} parent=155 // pred_check
          %p9629 = pneg %p9628
        $region294: #{tpu_custom_call.1} parent=155 // pred_check_branch
          %9631 = sbr.rel (%p9629) target = $region296
        $region295: #{tpu_custom_call.1} parent=155 // pred_region
          %v9632 = vld [vmem:[#allocation48] sm:$0xff]
          %v9633 = vld [vmem:[#allocation48 + $0x8] sm:$0xff]
          %v9634 = vld [vmem:[#allocation48 + $0x10] sm:$0xff]
          %v9635 = vld [vmem:[#allocation48 + $0x18] sm:$0xff]
          %v9636 = vld [vmem:[#allocation48 + $0x20] sm:$0xff]
          %v9637 = vld [vmem:[#allocation48 + $0x28] sm:$0xff]
          %v9638 = vld [vmem:[#allocation48 + $0x30] sm:$0xff]
          %v9639 = vld [vmem:[#allocation48 + $0x38] sm:$0xff]
          %v9640 = vld [vmem:[#allocation48 + $0x40] sm:$0xff]
          %v9641 = vld [vmem:[#allocation48 + $0x48] sm:$0xff]
          %v9642 = vld [vmem:[#allocation48 + $0x50] sm:$0xff]
          %v9643 = vld [vmem:[#allocation48 + $0x58] sm:$0xff]
          %v9644 = vld [vmem:[#allocation48 + $0x60] sm:$0xff]
          %v9645 = vld [vmem:[#allocation48 + $0x68] sm:$0xff]
          %v9646 = vld [vmem:[#allocation48 + $0x70] sm:$0xff]
          %v9647 = vld [vmem:[#allocation48 + $0x78] sm:$0xff]
          %v9648 = vld [vmem:[#allocation48 + $0x80] sm:$0xff]
          %v9649 = vld [vmem:[#allocation48 + $0x88] sm:$0xff]
          %v9650 = vld [vmem:[#allocation48 + $0x90] sm:$0xff]
          %v9651 = vld [vmem:[#allocation48 + $0x98] sm:$0xff]
          %v9652 = vld [vmem:[#allocation48 + $0xa0] sm:$0xff]
          %v9653 = vld [vmem:[#allocation48 + $0xa8] sm:$0xff]
          %v9654 = vld [vmem:[#allocation48 + $0xb0] sm:$0xff]
          %v9655 = vld [vmem:[#allocation48 + $0xb8] sm:$0xff]
          %v9656 = vld [vmem:[#allocation48 + $0xc0] sm:$0xff]
          %v9657 = vld [vmem:[#allocation48 + $0xc8] sm:$0xff]
          %v9658 = vld [vmem:[#allocation48 + $0xd0] sm:$0xff]
          %v9659 = vld [vmem:[#allocation48 + $0xd8] sm:$0xff]
          %v9660 = vld [vmem:[#allocation48 + $0xe0] sm:$0xff]
          %v9661 = vld [vmem:[#allocation48 + $0xe8] sm:$0xff]
          %v9662 = vld [vmem:[#allocation48 + $0xf0] sm:$0xff]
          %v9663 = vld [vmem:[#allocation48 + $0xf8] sm:$0xff]
          %v9664 = vpack.c.bf16 %v9610, %v9608
          %v9665 = vpack.c.bf16 %v9611, %v9609
          %v9666 = vpack.c.bf16 %v9614, %v9612
          %v9667 = vpack.c.bf16 %v9615, %v9613
          %v9668 = vpack.c.bf16 %v9616, %v9616
          %v9669 = vpack.c.bf16 %v9617, %v9617
          %v9670 = vld [vmem:[#allocation50] sm:$0x3]
          %v9672 = vlaneseq
          %v9673 = vshrl.u32 %v9672, 7
          %v9674 = vsub.s32 0, %v9673
          %v9675 = vrot.slane %v9670, %v9674
          %v9676 = vlaneseq
          %v9677 = vshrl.u32 %v9676, 7
          %v9678 = vsub.s32 1, %v9677
          %v9679 = vrot.slane %v9670, %v9678
          %v9714 = vunpack.c.l.b16 %v9632
          %v9715 = vunpack.c.h.b16 %v9632
          %v9716 = vunpack.c.l.b16 %v9633
          %v9717 = vunpack.c.h.b16 %v9633
          %v9718 = vunpack.c.l.b16 %v9634
          %v9719 = vunpack.c.h.b16 %v9634
          %v9720 = vunpack.c.l.b16 %v9635
          %v9721 = vunpack.c.h.b16 %v9635
          %v9722 = vunpack.c.l.b16 %v9636
          %v9723 = vunpack.c.h.b16 %v9636
          %v9724 = vunpack.c.l.b16 %v9637
          %v9725 = vunpack.c.h.b16 %v9637
          %v9726 = vunpack.c.l.b16 %v9638
          %v9727 = vunpack.c.h.b16 %v9638
          %v9728 = vunpack.c.l.b16 %v9639
          %v9729 = vunpack.c.h.b16 %v9639
          %v9730 = vunpack.c.l.b16 %v9640
          %v9731 = vunpack.c.h.b16 %v9640
          %v9732 = vunpack.c.l.b16 %v9641
          %v9733 = vunpack.c.h.b16 %v9641
          %v9734 = vunpack.c.l.b16 %v9642
          %v9735 = vunpack.c.h.b16 %v9642
          %v9736 = vunpack.c.l.b16 %v9643
          %v9737 = vunpack.c.h.b16 %v9643
          %v9738 = vunpack.c.l.b16 %v9644
          %v9739 = vunpack.c.h.b16 %v9644
          %v9740 = vunpack.c.l.b16 %v9645
          %v9741 = vunpack.c.h.b16 %v9645
          %v9742 = vunpack.c.l.b16 %v9646
          %v9743 = vunpack.c.h.b16 %v9646
          %v9744 = vunpack.c.l.b16 %v9647
          %v9745 = vunpack.c.h.b16 %v9647
          %v9746 = vunpack.c.l.b16 %v9648
          %v9747 = vunpack.c.h.b16 %v9648
          %v9748 = vunpack.c.l.b16 %v9649
          %v9749 = vunpack.c.h.b16 %v9649
          %v9750 = vunpack.c.l.b16 %v9650
          %v9751 = vunpack.c.h.b16 %v9650
          %v9752 = vunpack.c.l.b16 %v9651
          %v9753 = vunpack.c.h.b16 %v9651
          %v9754 = vunpack.c.l.b16 %v9652
          %v9755 = vunpack.c.h.b16 %v9652
          %v9756 = vunpack.c.l.b16 %v9653
          %v9757 = vunpack.c.h.b16 %v9653
          %v9758 = vunpack.c.l.b16 %v9654
          %v9759 = vunpack.c.h.b16 %v9654
          %v9760 = vunpack.c.l.b16 %v9655
          %v9761 = vunpack.c.h.b16 %v9655
          %v9762 = vunpack.c.l.b16 %v9656
          %v9763 = vunpack.c.h.b16 %v9656
          %v9764 = vunpack.c.l.b16 %v9657
          %v9765 = vunpack.c.h.b16 %v9657
          %v9766 = vunpack.c.l.b16 %v9658
          %v9767 = vunpack.c.h.b16 %v9658
          %v9768 = vunpack.c.l.b16 %v9659
          %v9769 = vunpack.c.h.b16 %v9659
          %v9770 = vunpack.c.l.b16 %v9660
          %v9771 = vunpack.c.h.b16 %v9660
          %v9772 = vunpack.c.l.b16 %v9661
          %v9773 = vunpack.c.h.b16 %v9661
          %v9774 = vunpack.c.l.b16 %v9662
          %v9775 = vunpack.c.h.b16 %v9662
          %v9776 = vunpack.c.l.b16 %v9663
          %v9777 = vunpack.c.h.b16 %v9663
          %v9778 = vpack.c.b16 %v9716, %v9714
          %v9779 = vpack.c.b16 %v9717, %v9715
          %v9780 = vpack.c.b16 %v9720, %v9718
          %v9781 = vpack.c.b16 %v9721, %v9719
          %v9782 = vpack.c.b16 %v9724, %v9722
          %v9783 = vpack.c.b16 %v9725, %v9723
          %v9784 = vpack.c.b16 %v9728, %v9726
          %v9785 = vpack.c.b16 %v9729, %v9727
          %v9786 = vpack.c.b16 %v9732, %v9730
          %v9787 = vpack.c.b16 %v9733, %v9731
          %v9788 = vpack.c.b16 %v9736, %v9734
          %v9789 = vpack.c.b16 %v9737, %v9735
          %v9790 = vpack.c.b16 %v9740, %v9738
          %v9791 = vpack.c.b16 %v9741, %v9739
          %v9792 = vpack.c.b16 %v9744, %v9742
          %v9793 = vpack.c.b16 %v9745, %v9743
          %v9794 = vpack.c.b16 %v9748, %v9746
          %v9795 = vpack.c.b16 %v9749, %v9747
          %v9796 = vpack.c.b16 %v9752, %v9750
          %v9797 = vpack.c.b16 %v9753, %v9751
          %v9798 = vpack.c.b16 %v9756, %v9754
          %v9799 = vpack.c.b16 %v9757, %v9755
          %v9800 = vpack.c.b16 %v9760, %v9758
          %v9801 = vpack.c.b16 %v9761, %v9759
          %v9802 = vpack.c.b16 %v9764, %v9762
          %v9803 = vpack.c.b16 %v9765, %v9763
          %v9804 = vpack.c.b16 %v9768, %v9766
          %v9805 = vpack.c.b16 %v9769, %v9767
          %v9806 = vpack.c.b16 %v9772, %v9770
          %v9807 = vpack.c.b16 %v9773, %v9771
          %v9808 = vpack.c.b16 %v9776, %v9774
          %v9809 = vpack.c.b16 %v9777, %v9775
          %9842 = vmatprep.subr.bf16.mxu0 %v9779
          %9843 = vmatpush1.bf16.msra.mxu0 %v9778
          %9844 = vmatprep.subr.bf16.mxu0 %v9781
          %9845 = vmatpush1.bf16.msra.mxu0 %v9780
          %9846 = vmatprep.subr.bf16.mxu0 %v9783
          %9847 = vmatpush1.bf16.msra.mxu0 %v9782
          %9848 = vmatprep.subr.bf16.mxu0 %v9785
          %9849 = vmatpush1.bf16.msra.mxu0 %v9784
          %9850 = vmatprep.subr.bf16.mxu0 %v9787
          %9851 = vmatpush1.bf16.msra.mxu0 %v9786
          %9852 = vmatprep.subr.bf16.mxu0 %v9789
          %9853 = vmatpush1.bf16.msra.mxu0 %v9788
          %9854 = vmatprep.subr.bf16.mxu0 %v9791
          %9855 = vmatpush1.bf16.msra.mxu0 %v9790
          %9856 = vmatprep.subr.bf16.mxu0 %v9793
          %9857 = vmatpush1.bf16.msra.mxu0 %v9792
          %9858 = vmatprep.subr.bf16.mxu0 %v9795
          %9859 = vmatpush1.bf16.msra.mxu0 %v9794
          %9860 = vmatprep.subr.bf16.mxu0 %v9797
          %9861 = vmatpush1.bf16.msra.mxu0 %v9796
          %9862 = vmatprep.subr.bf16.mxu0 %v9799
          %9863 = vmatpush1.bf16.msra.mxu0 %v9798
          %9864 = vmatprep.subr.bf16.mxu0 %v9801
          %9865 = vmatpush1.bf16.msra.mxu0 %v9800
          %9866 = vmatprep.subr.bf16.mxu0 %v9803
          %9867 = vmatpush1.bf16.msra.mxu0 %v9802
          %9868 = vmatprep.subr.bf16.mxu0 %v9805
          %9869 = vmatpush1.bf16.msra.mxu0 %v9804
          %9870 = vmatprep.subr.bf16.mxu0 %v9807
          %9871 = vmatpush1.bf16.msra.mxu0 %v9806
          %9872 = vmatprep.subr.bf16.mxu0 %v9809
          %9873 = vmatpush1.bf16.msra.mxu0 %v9808
          %9874 = vmatprep.mubr.bf16.mxu0 %v9665
          %9875 = vmatmul.mubr.bf16.gmra.mrb[0].mxu0 %v9664
          %v9876 = vpop.f32.mrb[0].mxu0
          %v9877 = vadd.f32 %v9675, %v9876
          %v9878 = vpop.f32.mrb[0].mxu0
          %v9879 = vadd.f32 %v9679, %v9878
          %v9880 = vpop.f32.mrb[0].mxu0
          %v9881 = vadd.f32 %v9675, %v9880
          %v9882 = vpop.f32.mrb[0].mxu0
          %v9883 = vadd.f32 %v9679, %v9882
          %9884 = vmatprep.mubr.bf16.mxu0 %v9667
          %9885 = vmatmul.mubr.bf16.gmra.mrb[0].mxu0 %v9666
          %v9886 = vpop.f32.mrb[0].mxu0
          %v9887 = vadd.f32 %v9675, %v9886
          %v9888 = vpop.f32.mrb[0].mxu0
          %v9889 = vadd.f32 %v9679, %v9888
          %v9890 = vpop.f32.mrb[0].mxu0
          %v9891 = vadd.f32 %v9675, %v9890
          %v9892 = vpop.f32.mrb[0].mxu0
          %v9893 = vadd.f32 %v9679, %v9892
          %9894 = vmatprep.mubr.bf16.mxu0 %v9669
          %9895 = vmatmul.mubr.bf16.gmra.mrb[0].mxu0 %v9668
          %v9896 = vpop.f32.mrb[0].mxu0
          %v9897 = vadd.f32 %v9675, %v9896
          %v9898 = vpop.f32.mrb[0].mxu0
          %v9899 = vadd.f32 %v9679, %v9898
          %v9900 = vpop.f32.mrb[0].mxu0
          %v9901 = vpop.f32.mrb[0].mxu0
          %9902 = vdwg.mxu0
          %v9903 = vmul.f32 %v9877, %v9877
          %v9904 = vmul.f32 %v9879, %v9879
          %v9905 = vmul.f32 %v9881, %v9881
          %v9906 = vmul.f32 %v9883, %v9883
          %v9907 = vmul.f32 %v9887, %v9887
          %v9908 = vmul.f32 %v9889, %v9889
          %v9909 = vmul.f32 %v9891, %v9891
          %v9910 = vmul.f32 %v9893, %v9893
          %v9911 = vmul.f32 %v9897, %v9897
          %v9912 = vmul.f32 %v9899, %v9899
          %v9913 = vmul.f32 %v9877, %v9903
          %v9914 = vmul.f32 %v9879, %v9904
          %v9915 = vmul.f32 %v9881, %v9905
          %v9916 = vmul.f32 %v9883, %v9906
          %v9917 = vmul.f32 %v9887, %v9907
          %v9918 = vmul.f32 %v9889, %v9908
          %v9919 = vmul.f32 %v9891, %v9909
          %v9920 = vmul.f32 %v9893, %v9910
          %v9921 = vmul.f32 %v9897, %v9911
          %v9922 = vmul.f32 %v9899, %v9912
          %v9923 = vmul.f32 %v9913, 0.044715
          %v9924 = vmul.f32 %v9914, 0.044715
          %v9925 = vmul.f32 %v9915, 0.044715
          %v9926 = vmul.f32 %v9916, 0.044715
          %v9927 = vmul.f32 %v9917, 0.044715
          %v9928 = vmul.f32 %v9918, 0.044715
          %v9929 = vmul.f32 %v9919, 0.044715
          %v9930 = vmul.f32 %v9920, 0.044715
          %v9931 = vmul.f32 %v9921, 0.044715
          %v9932 = vmul.f32 %v9922, 0.044715
          %v9933 = vadd.f32 %v9877, %v9923
          %v9934 = vadd.f32 %v9879, %v9924
          %v9935 = vadd.f32 %v9881, %v9925
          %v9936 = vadd.f32 %v9883, %v9926
          %v9937 = vadd.f32 %v9887, %v9927
          %v9938 = vadd.f32 %v9889, %v9928
          %v9939 = vadd.f32 %v9891, %v9929
          %v9940 = vadd.f32 %v9893, %v9930
          %v9941 = vadd.f32 %v9897, %v9931
          %v9942 = vadd.f32 %v9899, %v9932
          %v9943 = vmul.f32 %v9933, 0.7978846
          %v9944 = vmul.f32 %v9934, 0.7978846
          %v9945 = vmul.f32 %v9935, 0.7978846
          %v9946 = vmul.f32 %v9936, 0.7978846
          %v9947 = vmul.f32 %v9937, 0.7978846
          %v9948 = vmul.f32 %v9938, 0.7978846
          %v9949 = vmul.f32 %v9939, 0.7978846
          %v9950 = vmul.f32 %v9940, 0.7978846
          %v9951 = vmul.f32 %v9941, 0.7978846
          %v9952 = vmul.f32 %v9942, 0.7978846
          %v9953 = vtanh.pop %v9943
          %v9954 = vtanh.pop %v9944
          %v9955 = vtanh.pop %v9945
          %v9956 = vtanh.pop %v9946
          %v9957 = vtanh.pop %v9947
          %v9958 = vtanh.pop %v9948
          %v9959 = vtanh.pop %v9949
          %v9960 = vtanh.pop %v9950
          %v9961 = vtanh.pop %v9951
          %v9962 = vtanh.pop %v9952
          %v9963 = vadd.f32 %v9953, 1.0
          %v9964 = vadd.f32 %v9954, 1.0
          %v9965 = vadd.f32 %v9955, 1.0
          %v9966 = vadd.f32 %v9956, 1.0
          %v9967 = vadd.f32 %v9957, 1.0
          %v9968 = vadd.f32 %v9958, 1.0
          %v9969 = vadd.f32 %v9959, 1.0
          %v9970 = vadd.f32 %v9960, 1.0
          %v9971 = vadd.f32 %v9961, 1.0
          %v9972 = vadd.f32 %v9962, 1.0
          %v9973 = vmul.f32 %v9963, 0.5
          %v9974 = vmul.f32 %v9964, 0.5
          %v9975 = vmul.f32 %v9965, 0.5
          %v9976 = vmul.f32 %v9966, 0.5
          %v9977 = vmul.f32 %v9967, 0.5
          %v9978 = vmul.f32 %v9968, 0.5
          %v9979 = vmul.f32 %v9969, 0.5
          %v9980 = vmul.f32 %v9970, 0.5
          %v9981 = vmul.f32 %v9971, 0.5
          %v9982 = vmul.f32 %v9972, 0.5
          %v9983 = vmul.f32 %v9877, %v9973
          %v9984 = vmul.f32 %v9879, %v9974
          %v9985 = vmul.f32 %v9881, %v9975
          %v9986 = vmul.f32 %v9883, %v9976
          %v9987 = vmul.f32 %v9887, %v9977
          %v9988 = vmul.f32 %v9889, %v9978
          %v9989 = vmul.f32 %v9891, %v9979
          %v9990 = vmul.f32 %v9893, %v9980
          %v9991 = vmul.f32 %v9897, %v9981
          %v9992 = vmul.f32 %v9899, %v9982
          %v9993 = vld [vmem:[#allocation51] sm:$0xf]
          %v9994 = vld [vmem:[#allocation51 + $0x4] sm:$0xf]
          %v9995 = vld [vmem:[#allocation51 + $0x8] sm:$0xf]
          %v9996 = vld [vmem:[#allocation51 + $0xc] sm:$0xf]
          %v9997 = vld [vmem:[#allocation51 + $0x10] sm:$0xf]
          %v9998 = vld [vmem:[#allocation51 + $0x14] sm:$0xf]
          %v9999 = vld [vmem:[#allocation51 + $0x18] sm:$0xf]
          %v10000 = vld [vmem:[#allocation51 + $0x1c] sm:$0xf]
          %v10001 = vld [vmem:[#allocation51 + $0x20] sm:$0xf]
          %v10002 = vld [vmem:[#allocation51 + $0x24] sm:$0xf]
          %v10003 = vld [vmem:[#allocation51 + $0x28] sm:$0xf]
          %v10004 = vld [vmem:[#allocation51 + $0x2c] sm:$0xf]
          %v10005 = vld [vmem:[#allocation51 + $0x30] sm:$0xf]
          %v10006 = vld [vmem:[#allocation51 + $0x34] sm:$0xf]
          %v10007 = vld [vmem:[#allocation51 + $0x38] sm:$0xf]
          %v10008 = vld [vmem:[#allocation51 + $0x3c] sm:$0xf]
          %v10009 = vld [vmem:[#allocation51 + $0x40] sm:$0xf]
          %v10010 = vld [vmem:[#allocation51 + $0x44] sm:$0xf]
          %v10011 = vld [vmem:[#allocation51 + $0x48] sm:$0xf]
          %v10012 = vld [vmem:[#allocation51 + $0x4c] sm:$0xf]
          %v10013 = vld [vmem:[#allocation51 + $0x50] sm:$0xf]
          %v10014 = vld [vmem:[#allocation51 + $0x54] sm:$0xf]
          %v10015 = vld [vmem:[#allocation51 + $0x58] sm:$0xf]
          %v10016 = vld [vmem:[#allocation51 + $0x5c] sm:$0xf]
          %v10017 = vld [vmem:[#allocation51 + $0x60] sm:$0xf]
          %v10018 = vld [vmem:[#allocation51 + $0x64] sm:$0xf]
          %v10019 = vld [vmem:[#allocation51 + $0x68] sm:$0xf]
          %v10020 = vld [vmem:[#allocation51 + $0x6c] sm:$0xf]
          %v10021 = vld [vmem:[#allocation51 + $0x70] sm:$0xf]
          %v10022 = vld [vmem:[#allocation51 + $0x74] sm:$0xf]
          %v10023 = vld [vmem:[#allocation51 + $0x78] sm:$0xf]
          %v10024 = vld [vmem:[#allocation51 + $0x7c] sm:$0xf]
          %v10025 = vpack.c.bf16 %v9985, %v9983
          %v10026 = vpack.c.bf16 %v9986, %v9984
          %v10027 = vpack.c.bf16 %v9989, %v9987
          %v10028 = vpack.c.bf16 %v9990, %v9988
          %v10029 = vpack.c.bf16 %v9991, %v9991
          %v10030 = vpack.c.bf16 %v9992, %v9992
          %v10031 = vld [vmem:[#allocation53] sm:$0x1]
          %v10033 = vlaneseq
          %v10034 = vshrl.u32 %v10033, 7
          %v10035 = vsub.s32 0, %v10034
          %v10036 = vrot.slane %v10031, %v10035
          %v10070 = vunpack.c.l.b16 %v9993
          %v10071 = vunpack.c.l.b16 %v9994
          %v10072 = vunpack.c.l.b16 %v9995
          %v10073 = vunpack.c.l.b16 %v9996
          %v10074 = vunpack.c.l.b16 %v9997
          %v10075 = vunpack.c.l.b16 %v9998
          %v10076 = vunpack.c.l.b16 %v9999
          %v10077 = vunpack.c.l.b16 %v10000
          %v10078 = vunpack.c.l.b16 %v10001
          %v10079 = vunpack.c.l.b16 %v10002
          %v10080 = vunpack.c.l.b16 %v10003
          %v10081 = vunpack.c.l.b16 %v10004
          %v10082 = vunpack.c.l.b16 %v10005
          %v10083 = vunpack.c.l.b16 %v10006
          %v10084 = vunpack.c.l.b16 %v10007
          %v10085 = vunpack.c.l.b16 %v10008
          %v10086 = vunpack.c.l.b16 %v10009
          %v10087 = vunpack.c.l.b16 %v10010
          %v10088 = vunpack.c.l.b16 %v10011
          %v10089 = vunpack.c.l.b16 %v10012
          %v10090 = vunpack.c.l.b16 %v10013
          %v10091 = vunpack.c.l.b16 %v10014
          %v10092 = vunpack.c.l.b16 %v10015
          %v10093 = vunpack.c.l.b16 %v10016
          %v10094 = vunpack.c.l.b16 %v10017
          %v10095 = vunpack.c.l.b16 %v10018
          %v10096 = vunpack.c.l.b16 %v10019
          %v10097 = vunpack.c.l.b16 %v10020
          %v10098 = vunpack.c.l.b16 %v10021
          %v10099 = vunpack.c.l.b16 %v10022
          %v10100 = vunpack.c.l.b16 %v10023
          %v10101 = vunpack.c.l.b16 %v10024
          %v10102 = vpack.c.b16 %v10071, %v10070
          %v10103 = vpack.c.b16 %v10073, %v10072
          %v10104 = vpack.c.b16 %v10075, %v10074
          %v10105 = vpack.c.b16 %v10077, %v10076
          %v10106 = vpack.c.b16 %v10079, %v10078
          %v10107 = vpack.c.b16 %v10081, %v10080
          %v10108 = vpack.c.b16 %v10083, %v10082
          %v10109 = vpack.c.b16 %v10085, %v10084
          %v10110 = vpack.c.b16 %v10087, %v10086
          %v10111 = vpack.c.b16 %v10089, %v10088
          %v10112 = vpack.c.b16 %v10091, %v10090
          %v10113 = vpack.c.b16 %v10093, %v10092
          %v10114 = vpack.c.b16 %v10095, %v10094
          %v10115 = vpack.c.b16 %v10097, %v10096
          %v10116 = vpack.c.b16 %v10099, %v10098
          %v10117 = vpack.c.b16 %v10101, %v10100
          %10134 = vmatprep.subr.bf16.mxu0 0
          %10135 = vmatpush1.bf16.msra.mxu0 %v10102
          %10136 = vmatprep.subr.bf16.mxu0 0
          %10137 = vmatpush1.bf16.msra.mxu0 %v10103
          %10138 = vmatprep.subr.bf16.mxu0 0
          %10139 = vmatpush1.bf16.msra.mxu0 %v10104
          %10140 = vmatprep.subr.bf16.mxu0 0
          %10141 = vmatpush1.bf16.msra.mxu0 %v10105
          %10142 = vmatprep.subr.bf16.mxu0 0
          %10143 = vmatpush1.bf16.msra.mxu0 %v10106
          %10144 = vmatprep.subr.bf16.mxu0 0
          %10145 = vmatpush1.bf16.msra.mxu0 %v10107
          %10146 = vmatprep.subr.bf16.mxu0 0
          %10147 = vmatpush1.bf16.msra.mxu0 %v10108
          %10148 = vmatprep.subr.bf16.mxu0 0
          %10149 = vmatpush1.bf16.msra.mxu0 %v10109
          %10150 = vmatprep.subr.bf16.mxu0 0
          %10151 = vmatpush1.bf16.msra.mxu0 %v10110
          %10152 = vmatprep.subr.bf16.mxu0 0
          %10153 = vmatpush1.bf16.msra.mxu0 %v10111
          %10154 = vmatprep.subr.bf16.mxu0 0
          %10155 = vmatpush1.bf16.msra.mxu0 %v10112
          %10156 = vmatprep.subr.bf16.mxu0 0
          %10157 = vmatpush1.bf16.msra.mxu0 %v10113
          %10158 = vmatprep.subr.bf16.mxu0 0
          %10159 = vmatpush1.bf16.msra.mxu0 %v10114
          %10160 = vmatprep.subr.bf16.mxu0 0
          %10161 = vmatpush1.bf16.msra.mxu0 %v10115
          %10162 = vmatprep.subr.bf16.mxu0 0
          %10163 = vmatpush1.bf16.msra.mxu0 %v10116
          %10164 = vmatprep.subr.bf16.mxu0 0
          %10165 = vmatpush1.bf16.msra.mxu0 %v10117
          %10166 = vmatprep.mubr.bf16.mxu0 %v10026
          %10167 = vmatmul.mubr.bf16.gmra.mrb[0].mxu0 %v10025
          %v10168 = vpop.f32.mrb[0].mxu0
          %v10169 = vadd.f32 %v10036, %v10168
          %v10170 = vpop.f32.mrb[0].mxu0
          %v10171 = vpop.f32.mrb[0].mxu0
          %v10172 = vadd.f32 %v10036, %v10171
          %v10173 = vpop.f32.mrb[0].mxu0
          %10174 = vmatprep.mubr.bf16.mxu0 %v10028
          %10175 = vmatmul.mubr.bf16.gmra.mrb[0].mxu0 %v10027
          %v10176 = vpop.f32.mrb[0].mxu0
          %v10177 = vadd.f32 %v10036, %v10176
          %v10178 = vpop.f32.mrb[0].mxu0
          %v10179 = vpop.f32.mrb[0].mxu0
          %v10180 = vadd.f32 %v10036, %v10179
          %v10181 = vpop.f32.mrb[0].mxu0
          %10182 = vmatprep.mubr.bf16.mxu0 %v10030
          %10183 = vmatmul.mubr.bf16.gmra.mrb[0].mxu0 %v10029
          %v10184 = vpop.f32.mrb[0].mxu0
          %v10185 = vadd.f32 %v10036, %v10184
          %v10186 = vpop.f32.mrb[0].mxu0
          %v10187 = vpop.f32.mrb[0].mxu0
          %v10188 = vpop.f32.mrb[0].mxu0
          %10189 = vdwg.mxu0
          %10190 = vst [vmem:[#allocation54] sm:$0xff] %v10169
          %10191 = vst [vmem:[#allocation54 + $0x8] sm:$0xff] %v10172
          %10192 = vst [vmem:[#allocation54 + $0x10] sm:$0xff] %v10177
          %10193 = vst [vmem:[#allocation54 + $0x18] sm:$0xff] %v10180
          %10194 = vst [vmem:[#allocation54 + $0x20] sm:$0xff] %v10185
        $region296: #{tpu_custom_call.1} parent=155 // pred_fallthru
          _
        // Predicated region
        $region297: #{tpu_custom_call.1} parent=155 // pred_check
          %p10195 = pneg %p929
        $region298: #{tpu_custom_call.1} parent=155 // pred_check_branch
          %10197 = sbr.rel (%p10195) target = $region300
        $region299: #{tpu_custom_call.1} parent=155 // pred_region
          %s10198 = smul.u32 5, %s114
          %s10200 = ssub.s32 640, 640
          %10201 = vsyncadd [#allocation5], %s10200
          %s10202 = smul.addr %s10198, 128
          %s10203 = scalar_lea.hbm %s69, %s10202
          %s10204 = sshll.u32 [#allocation54], 4
          %s10205 = int_to_ptr.vmem [resolvable:$true] %s10204
          %10210 = dma.vmem_to_hbm [thread:$0]  %s10205, 640, %s10203, [#allocation5], 128, 128, 8
        $region300: #{tpu_custom_call.1} parent=155 // pred_fallthru
          _
        // Predicated region
        $region301: #{tpu_custom_call.1} parent=155 // pred_check
          %p10211 = pneg %p929
        $region302: #{tpu_custom_call.1} parent=155 // pred_check_branch
          %10213 = sbr.rel (%p10211) target = $region304
        $region303: #{tpu_custom_call.1} parent=155 // pred_region
          %10214 = dma.done [#allocation5], 640
        $region304: #{tpu_custom_call.1} parent=155 // pred_fallthru
          _
      $region156: #{tpu_custom_call.1} parent=5 // pred_fallthru
        _
      %p10215 = scmp.le.s32.totalorder 2, %s105
      // Predicated region
      $region305: #{tpu_custom_call.1} parent=5 // pred_check
        %p10216 = pneg %p10215
      $region306: #{tpu_custom_call.1} parent=5 // pred_check_branch
        %10218 = sbr.rel (%p10216) target = $region308
      $region307: #{tpu_custom_call.1} parent=5 // pred_region
        %s10219 = ssub.s32 %s105, 2
      $region308: #{tpu_custom_call.1} parent=5 // pred_fallthru
        _
    $region6: #{tpu_custom_call.1} parent=1 // loop_footer
      %s109 = sadd.s32 1, %s105
    $region7: #{tpu_custom_call.1} parent=1 // loop_footer_branch
      %104 = sbr.rel target = $region3
    $region8: #{tpu_custom_call.1} parent=1 // loop_exit
      _
    %10220 = vsyncpa [#allocation4], 1
    %s10221 = scalar_lea.sflag [#allocation4], 1
    %10222 = vsyncpa %s10221, 1
    %10223 = vsyncpa [#allocation7], 1
    %10224 = vsyncpa [#allocation10], 1
    %10225 = vsyncpa [#allocation13], 1
    %10226 = vsyncpa [#allocation16], 1
    %10227 = vsyncpa [#allocation19], 1
    %10228 = vsyncpa [#allocation22], 1
    %10229 = vsyncpa [#allocation25], 1
    %10230 = vsyncpa [#allocation28], 1
    %10231 = vsyncpa [#allocation31], 1
    %s10232 = scalar_lea.sflag [#allocation31], 1
    %10233 = vsyncpa %s10232, 1
    %10234 = vsyncpa [#allocation34], 1
    %s10235 = scalar_lea.sflag [#allocation34], 1
    %10236 = vsyncpa %s10235, 1
    %10237 = vsyncpa [#allocation37], 1
    %s10238 = scalar_lea.sflag [#allocation37], 1
    %10239 = vsyncpa %s10238, 1
    %10240 = vsyncpa [#allocation40], 1
    %s10241 = scalar_lea.sflag [#allocation40], 1
    %10242 = vsyncpa %s10241, 1
    %10243 = vsyncpa [#allocation43], 1
    %s10244 = scalar_lea.sflag [#allocation43], 1
    %10245 = vsyncpa %s10244, 1
    %10246 = vsyncpa [#allocation46], 1
    %s10247 = scalar_lea.sflag [#allocation46], 1
    %10248 = vsyncpa %s10247, 1
    %10249 = vsyncpa [#allocation49], 1
    %10250 = vsyncpa [#allocation52], 1
    %10251 = vsyncpa [#allocation5], 1
    %s10252 = scalar_lea.sflag [#allocation5], 1
    %10253 = vsyncpa %s10252, 1

</llo_original>
